<compile_context>
chip_gen: v7x
topology: tpu7x:2x2x1
jax: 0.10.0
libtpu: 0.0.40
codegen_flags: <defaults>
</compile_context>

<pallas_src>
import jax
import jax.numpy as jnp
import numpy as np
from jax import lax
from jax.experimental import pallas as pl
from jax.experimental.pallas import tpu as pltpu


def _round_up(v, m):
    return ((v + m - 1) // m) * m


# Images per grid step.  128 keeps the step (~6 MiB: double-buffered
# (TB,14,224) patch block + (14,TB,448) conv1 scratch + (TB,1568) hidden
# scratch + resident weights) inside every generation's default scoped VMEM.
_TB_MAX = 128


# ----------------------------------------------------------------------------
# Fused whole-network kernel (one grid step == TB images)
# ----------------------------------------------------------------------------
def _cnn_kernel(x_ref, wc1_ref, bc1_ref, wc2_ref, bc2_ref,
                wfc1_ref, bfc1_ref, wfc2_ref, bfc2_ref,
                o_ref, c1_ref, h2_ref):
    tb = x_ref.shape[0]

    # ---- conv1 + ReLU -------------------------------------------------------
    # x_ref[:, h] is the im2col row for conv1 output row h: (TB, 14*16) with
    # column order (ow, k), k = (kh, kw, c) padded 9 -> 16.  wc1 is the
    # block-diagonal kron(I_14, W_conv1), so one (TB,224)@(224,448) matmul
    # produces the whole 14-pixel output row lane-dense in (ow, oc) order.
    # Stored to the c1 scratch laid out (row, TB, 448) so all later reads
    # only index the leading dimension.
    wc1 = wc1_ref[...]
    bc1 = bc1_ref[...]
    for h in range(14):
        acc = jnp.dot(x_ref[:, h], wc1, preferred_element_type=jnp.float32)
        c1_ref[h] = jnp.maximum(acc + bc1, 0.0).astype(jnp.bfloat16)

    # ---- conv2 + ReLU (im2col assembled in VMEM, never hits HBM) ------------
    wc2 = wc2_ref[...]
    bc2 = bc2_ref[...]
    zspan = jnp.zeros((tb, 96), jnp.bfloat16)   # whole 3-tap row out of range
    zcol = jnp.zeros((tb, 32), jnp.bfloat16)    # single left-padding tap
    for oh in range(7):
        for ow in range(7):
            spans = []
            for i in range(3):
                r = 2 * oh + i - 1              # conv1-output row of this tap row
                if r < 0:                       # top padding (only r == -1 occurs)
                    spans.append(zspan)
                elif ow == 0:                   # left padding column
                    spans.append(jnp.concatenate(
                        [zcol, c1_ref[r, :, 0:64]], axis=-1))
                else:
                    lo = (2 * ow - 1) * 32
                    spans.append(c1_ref[r, :, lo:lo + 96])
            patch = jnp.concatenate(spans, axis=-1)          # (TB,288), (kh,kw,c)
            acc = jnp.dot(patch, wc2, preferred_element_type=jnp.float32)
            acc = jnp.maximum(acc + bc2, 0.0)
            p = oh * 7 + ow
            h2_ref[:, p * 32:(p + 1) * 32] = acc.astype(jnp.bfloat16)

    # ---- fc1 + ReLU, fc2 + ReLU (reference module ReLUs fc2's output too) ---
    h1 = jnp.dot(h2_ref[...], wfc1_ref[...], preferred_element_type=jnp.float32)
    h1 = jnp.maximum(h1 + bfc1_ref[...], 0.0).astype(jnp.bfloat16)
    logits = jnp.dot(h1, wfc2_ref[...], preferred_element_type=jnp.float32)
    o_ref[...] = jnp.maximum(logits + bfc2_ref[...], 0.0)


def _fused_forward(patches, prep, tb):
    bp = patches.shape[0]
    full2 = lambda i: (0, 0)
    return pl.pallas_call(
        _cnn_kernel,
        out_shape=jax.ShapeDtypeStruct((bp, 10), jnp.float32),
        grid_spec=pltpu.PrefetchScalarGridSpec(
            num_scalar_prefetch=0,
            grid=(bp // tb,),
            in_specs=[
                pl.BlockSpec((tb, 14, 224), lambda i: (i, 0, 0)),  # conv1 patches
                pl.BlockSpec((224, 448), full2),                   # kron(I14, conv1_w)
                pl.BlockSpec((1, 448), full2),                     # conv1 bias (tiled)
                pl.BlockSpec((288, 32), full2),                    # conv2 weight
                pl.BlockSpec((1, 32), full2),                      # conv2 bias
                pl.BlockSpec((1568, 128), full2),                  # fc1 weight
                pl.BlockSpec((1, 128), full2),                     # fc1 bias
                pl.BlockSpec((128, 10), full2),                    # fc2 weight
                pl.BlockSpec((1, 10), full2),                      # fc2 bias
            ],
            out_specs=pl.BlockSpec((tb, 10), lambda i: (i, 0)),
            scratch_shapes=[
                pltpu.VMEM((14, tb, 448), jnp.bfloat16),   # conv1 activations
                pltpu.VMEM((tb, 1568), jnp.bfloat16),      # flattened conv2 act.
            ],
        ),
        compiler_params=pltpu.CompilerParams(
            dimension_semantics=("parallel",)),
    )(patches, prep["c1_w"], prep["c1_b"], prep["c2_w"], prep["c2_b"],
      prep["fc1_w"], prep["fc1_b"], prep["fc2_w"], prep["fc2_b"])


# ----------------------------------------------------------------------------
# XLA glue: conv1 im2col on the 1-channel input (tiny; K padded 9->16 inside
# the same concatenate so there is no extra pad pass).
# TODO(synk): pulling this 1-channel patch extraction into the kernel needs a
# lane-strided gather on a C=1 NHWC layout; kept as cheap XLA glue instead.
# ----------------------------------------------------------------------------
def _conv1_patches(x, bp):
    """(B,1,28,28) f32 NCHW -> (Bp, 14, 224) bf16 conv1 im2col patches.

    Row = (image, conv1 output row); columns ordered (ow, k), k = (kh,kw,c).
    """
    b = x.shape[0]
    xs = x.reshape(b, 28, 28).astype(jnp.bfloat16)
    if bp > b:
        xs = jnp.pad(xs, ((0, bp - b), (0, 0), (0, 0)))
    xp = jnp.pad(xs, ((0, 0), (1, 1), (1, 1)))                     # (Bp,30,30)
    cols = []
    for i in range(3):
        for j in range(3):
            cols.append(xp[:, i:i + 28:2, j:j + 28:2][..., None])  # (Bp,14,14,1)
    cols.append(jnp.zeros((bp, 14, 14, 7), jnp.bfloat16))          # K: 9 -> 16
    patches = jnp.concatenate(cols, axis=-1)                       # (Bp,14,14,16)
    return patches.reshape(bp, 14, 224)


# ----------------------------------------------------------------------------
# Parameters (PyTorch layout) + one-time kernel-friendly re-layout
# ----------------------------------------------------------------------------
def init_params(key):
    """Parameters in PyTorch layout (Conv2d: (OC,C,KH,KW); Linear: (out,in))."""
    k1, k2, k3, k4, k5, k6, k7, k8 = jax.random.split(key, 8)

    def u(k, shape, fan_in):
        bound = 1.0 / jnp.sqrt(fan_in)
        return jax.random.uniform(k, shape, jnp.float32, -bound, bound)

    return {
        "conv1_w": u(k1, (32, 1, 3, 3), 1 * 3 * 3),
        "conv1_b": u(k2, (32,), 1 * 3 * 3),
        "conv2_w": u(k3, (32, 32, 3, 3), 32 * 3 * 3),
        "conv2_b": u(k4, (32,), 32 * 3 * 3),
        "fc1_w": u(k5, (128, 1568), 1568),
        "fc1_b": u(k6, (128,), 1568),
        "fc2_w": u(k7, (10, 128), 128),
        "fc2_b": u(k8, (10,), 128),
    }


def prepare_params(params):
    """One-time re-layout of PyTorch-layout params into kernel-friendly form."""
    prep = {}
    # conv1: (32,1,3,3) -> rows (kh,kw,c) -> (9,32) -> K pad to 16 ->
    # block-diagonal kron(I_14, W) so one matmul emits a whole 14-pixel row.
    w1 = params["conv1_w"].transpose(2, 3, 1, 0).reshape(9, 32)
    w1 = jnp.pad(w1, ((0, 7), (0, 0)))                                   # (16,32)
    prep["c1_w"] = jnp.kron(jnp.eye(14, dtype=jnp.float32), w1).astype(jnp.bfloat16)
    prep["c1_b"] = jnp.tile(params["conv1_b"], 14).reshape(1, 448).astype(jnp.float32)
    # conv2: (32,32,3,3) -> rows ordered (kh,kw,cin) -> (288,32)
    prep["c2_w"] = params["conv2_w"].transpose(2, 3, 1, 0).reshape(288, 32).astype(jnp.bfloat16)
    prep["c2_b"] = params["conv2_b"].reshape(1, 32).astype(jnp.float32)
    # fc1: PyTorch flatten order is (c,h,w); kernel flattens (h,w,c) -> permute.
    wf1 = params["fc1_w"].reshape(128, 32, 7, 7).transpose(0, 2, 3, 1).reshape(128, 1568)
    prep["fc1_w"] = wf1.T.astype(jnp.bfloat16)                           # (1568,128)
    prep["fc1_b"] = params["fc1_b"].reshape(1, 128).astype(jnp.float32)
    # fc2: (10,128) -> (128,10); output stays 10 wide (no pad, no slice pass).
    prep["fc2_w"] = params["fc2_w"].T.astype(jnp.bfloat16)
    prep["fc2_b"] = params["fc2_b"].reshape(1, 10).astype(jnp.float32)
    return prep


# ----------------------------------------------------------------------------
# Forward
# ----------------------------------------------------------------------------
@jax.jit
def cnn_forward(prep, x):
    """x: (B, 1, 28, 28) f32 NCHW (PyTorch convention)."""
    assert x.shape[1:] == (1, 28, 28), x.shape     # fc1 in_features pins 28x28
    b = x.shape[0]
    tb = min(_TB_MAX, _round_up(b, 8))
    bp = _round_up(b, tb)
    patches = _conv1_patches(x, bp)                # (Bp, 14, 224) bf16
    logits = _fused_forward(patches, prep, tb)     # (Bp, 10) f32
    return logits[:b]


def _reference_forward(params, x):
    """Pure-JAX f32 reference mirroring the PyTorch module exactly."""
    dn = ("NCHW", "OIHW", "NCHW")
    y = lax.conv_general_dilated(x, params["conv1_w"], (2, 2), ((1, 1), (1, 1)),
                                 dimension_numbers=dn)
    y = jnp.maximum(y + params["conv1_b"][None, :, None, None], 0.0)
    y = lax.conv_general_dilated(y, params["conv2_w"], (2, 2), ((1, 1), (1, 1)),
                                 dimension_numbers=dn)
    y = jnp.maximum(y + params["conv2_b"][None, :, None, None], 0.0)
    y = y.reshape(y.shape[0], -1)
    y = jnp.maximum(y @ params["fc1_w"].T + params["fc1_b"], 0.0)
    y = jnp.maximum(y @ params["fc2_w"].T + params["fc2_b"], 0.0)
    return y


if __name__ == "__main__":
    key = jax.random.PRNGKey(0)
    pkey, xkey = jax.random.split(key)
    params = init_params(pkey)
    prep = prepare_params(params)

    x = jax.random.normal(xkey, (2, 1, 28, 28), jnp.float32)

    out = jax.block_until_ready(cnn_forward(prep, x))
    assert out.shape == (2, 10), out.shape

    # Loose parity check vs. the f32 reference (kernel runs matmuls in bf16).
    ref = _reference_forward(params, x)
    np.testing.assert_allclose(np.asarray(out), np.asarray(ref), rtol=0.1, atol=0.05)

    print("KERNEL_OK")
</pallas_src>

<mosaic_0001>
module attributes {stable_mosaic.version = 11 : i64} {
  func.func @_cnn_kernel(%arg0: i32, %arg1: memref<8x14x224xbf16, #tpu.memory_space<vmem>>, %arg2: memref<224x448xbf16, #tpu.memory_space<vmem>>, %arg3: memref<1x448xf32, #tpu.memory_space<vmem>>, %arg4: memref<288x32xbf16, #tpu.memory_space<vmem>>, %arg5: memref<1x32xf32, #tpu.memory_space<vmem>>, %arg6: memref<1568x128xbf16, #tpu.memory_space<vmem>>, %arg7: memref<1x128xf32, #tpu.memory_space<vmem>>, %arg8: memref<128x10xbf16, #tpu.memory_space<vmem>>, %arg9: memref<1x10xf32, #tpu.memory_space<vmem>>, %arg10: memref<8x10xf32, #tpu.memory_space<vmem>>, %arg11: memref<14x8x448xbf16, #tpu.memory_space<vmem>>, %arg12: memref<8x1568xbf16, #tpu.memory_space<vmem>>) attributes {dimension_semantics = [#tpu.dimension_semantics<parallel>], iteration_bounds = array<i64: 1>, scalar_prefetch = 0 : i64, scratch_operands = 2 : i64, tpu.core_type = #tpu.core_type<tc>, window_params = [{transform_indices = @transform_0, window_bounds = array<i64: 8, 14, 224>}, {pipeline_mode = #tpu.pipeline_mode<synchronous>, transform_indices = @transform_1, window_bounds = array<i64: 224, 448>}, {pipeline_mode = #tpu.pipeline_mode<synchronous>, transform_indices = @transform_2, window_bounds = array<i64: 1, 448>}, {pipeline_mode = #tpu.pipeline_mode<synchronous>, transform_indices = @transform_3, window_bounds = array<i64: 288, 32>}, {pipeline_mode = #tpu.pipeline_mode<synchronous>, transform_indices = @transform_4, window_bounds = array<i64: 1, 32>}, {pipeline_mode = #tpu.pipeline_mode<synchronous>, transform_indices = @transform_5, window_bounds = array<i64: 1568, 128>}, {pipeline_mode = #tpu.pipeline_mode<synchronous>, transform_indices = @transform_6, window_bounds = array<i64: 1, 128>}, {pipeline_mode = #tpu.pipeline_mode<synchronous>, transform_indices = @transform_7, window_bounds = array<i64: 128, 10>}, {pipeline_mode = #tpu.pipeline_mode<synchronous>, transform_indices = @transform_8, window_bounds = array<i64: 1, 10>}, {transform_indices = @transform_9, window_bounds = array<i64: 8, 10>}]} {
    %c0 = arith.constant 0 : index
    %c0_0 = arith.constant 0 : index
    %0 = vector.load %arg2[%c0, %c0_0] : memref<224x448xbf16, #tpu.memory_space<vmem>>, vector<224x448xbf16>
    %c0_1 = arith.constant 0 : index
    %c0_2 = arith.constant 0 : index
    %1 = vector.load %arg3[%c0_1, %c0_2] : memref<1x448xf32, #tpu.memory_space<vmem>>, vector<1x448xf32>
    %c0_3 = arith.constant 0 : index
    %c0_4 = arith.constant 0 : index
    %c0_5 = arith.constant 0 : index
    %2 = vector.load %arg1[%c0_3, %c0_4, %c0_5] : memref<8x14x224xbf16, #tpu.memory_space<vmem>>, vector<8x1x224xbf16>
    %3 = vector.shape_cast %2 : vector<8x1x224xbf16> to vector<8x224xbf16>
    %cst = arith.constant dense<0.000000e+00> : vector<8x448xf32>
    %4 = tpu.matmul %3, %0, %cst {dimension_numbers = #tpu.dot_dimension_numbers<[1], [0], [0], [1], [0, 0, 1, 1], [], []>} : vector<8x224xbf16>, vector<224x448xbf16>, vector<8x448xf32> -> vector<8x448xf32>
    %5 = vector.broadcast %1 : vector<1x448xf32> to vector<8x448xf32>
    %6 = arith.addf %4, %5 : vector<8x448xf32>
    %cst_6 = arith.constant 0.000000e+00 : f32
    %7 = vector.broadcast %cst_6 : f32 to vector<8x448xf32>
    %8 = arith.maximumf %6, %7 : vector<8x448xf32>
    %9 = arith.truncf %8 : vector<8x448xf32> to vector<8x448xbf16>
    %c0_7 = arith.constant 0 : index
    %c0_8 = arith.constant 0 : index
    %c0_9 = arith.constant 0 : index
    %10 = vector.load %arg11[%c0_7, %c0_8, %c0_9] : memref<14x8x448xbf16, #tpu.memory_space<vmem>>, vector<1x8x448xbf16>
    %11 = vector.shape_cast %10 : vector<1x8x448xbf16> to vector<8x448xbf16>
    %12 = vector.shape_cast %9 : vector<8x448xbf16> to vector<1x8x448xbf16>
    tpu.vector_store %arg11[%c0_7, %c0_8, %c0_9], %12 {strides = array<i32>} : memref<14x8x448xbf16, #tpu.memory_space<vmem>>, vector<1x8x448xbf16>,
    %c0_10 = arith.constant 0 : index
    %c1 = arith.constant 1 : index
    %c0_11 = arith.constant 0 : index
    %13 = vector.load %arg1[%c0_10, %c1, %c0_11] : memref<8x14x224xbf16, #tpu.memory_space<vmem>>, vector<8x1x224xbf16>
    %14 = vector.shape_cast %13 : vector<8x1x224xbf16> to vector<8x224xbf16>
    %cst_12 = arith.constant dense<0.000000e+00> : vector<8x448xf32>
    %15 = tpu.matmul %14, %0, %cst_12 {dimension_numbers = #tpu.dot_dimension_numbers<[1], [0], [0], [1], [0, 0, 1, 1], [], []>} : vector<8x224xbf16>, vector<224x448xbf16>, vector<8x448xf32> -> vector<8x448xf32>
    %16 = vector.broadcast %1 : vector<1x448xf32> to vector<8x448xf32>
    %17 = arith.addf %15, %16 : vector<8x448xf32>
    %cst_13 = arith.constant 0.000000e+00 : f32
    %18 = vector.broadcast %cst_13 : f32 to vector<8x448xf32>
    %19 = arith.maximumf %17, %18 : vector<8x448xf32>
    %20 = arith.truncf %19 : vector<8x448xf32> to vector<8x448xbf16>
    %c1_14 = arith.constant 1 : index
    %c0_15 = arith.constant 0 : index
    %c0_16 = arith.constant 0 : index
    %21 = vector.load %arg11[%c1_14, %c0_15, %c0_16] : memref<14x8x448xbf16, #tpu.memory_space<vmem>>, vector<1x8x448xbf16>
    %22 = vector.shape_cast %21 : vector<1x8x448xbf16> to vector<8x448xbf16>
    %23 = vector.shape_cast %20 : vector<8x448xbf16> to vector<1x8x448xbf16>
    tpu.vector_store %arg11[%c1_14, %c0_15, %c0_16], %23 {strides = array<i32>} : memref<14x8x448xbf16, #tpu.memory_space<vmem>>, vector<1x8x448xbf16>,
    %c0_17 = arith.constant 0 : index
    %c2 = arith.constant 2 : index
    %c0_18 = arith.constant 0 : index
    %24 = vector.load %arg1[%c0_17, %c2, %c0_18] : memref<8x14x224xbf16, #tpu.memory_space<vmem>>, vector<8x1x224xbf16>
    %25 = vector.shape_cast %24 : vector<8x1x224xbf16> to vector<8x224xbf16>
    %cst_19 = arith.constant dense<0.000000e+00> : vector<8x448xf32>
    %26 = tpu.matmul %25, %0, %cst_19 {dimension_numbers = #tpu.dot_dimension_numbers<[1], [0], [0], [1], [0, 0, 1, 1], [], []>} : vector<8x224xbf16>, vector<224x448xbf16>, vector<8x448xf32> -> vector<8x448xf32>
    %27 = vector.broadcast %1 : vector<1x448xf32> to vector<8x448xf32>
    %28 = arith.addf %26, %27 : vector<8x448xf32>
    %cst_20 = arith.constant 0.000000e+00 : f32
    %29 = vector.broadcast %cst_20 : f32 to vector<8x448xf32>
    %30 = arith.maximumf %28, %29 : vector<8x448xf32>
    %31 = arith.truncf %30 : vector<8x448xf32> to vector<8x448xbf16>
    %c2_21 = arith.constant 2 : index
    %c0_22 = arith.constant 0 : index
    %c0_23 = arith.constant 0 : index
    %32 = vector.load %arg11[%c2_21, %c0_22, %c0_23] : memref<14x8x448xbf16, #tpu.memory_space<vmem>>, vector<1x8x448xbf16>
    %33 = vector.shape_cast %32 : vector<1x8x448xbf16> to vector<8x448xbf16>
    %34 = vector.shape_cast %31 : vector<8x448xbf16> to vector<1x8x448xbf16>
    tpu.vector_store %arg11[%c2_21, %c0_22, %c0_23], %34 {strides = array<i32>} : memref<14x8x448xbf16, #tpu.memory_space<vmem>>, vector<1x8x448xbf16>,
    %c0_24 = arith.constant 0 : index
    %c3 = arith.constant 3 : index
    %c0_25 = arith.constant 0 : index
    %35 = vector.load %arg1[%c0_24, %c3, %c0_25] : memref<8x14x224xbf16, #tpu.memory_space<vmem>>, vector<8x1x224xbf16>
    %36 = vector.shape_cast %35 : vector<8x1x224xbf16> to vector<8x224xbf16>
    %cst_26 = arith.constant dense<0.000000e+00> : vector<8x448xf32>
    %37 = tpu.matmul %36, %0, %cst_26 {dimension_numbers = #tpu.dot_dimension_numbers<[1], [0], [0], [1], [0, 0, 1, 1], [], []>} : vector<8x224xbf16>, vector<224x448xbf16>, vector<8x448xf32> -> vector<8x448xf32>
    %38 = vector.broadcast %1 : vector<1x448xf32> to vector<8x448xf32>
    %39 = arith.addf %37, %38 : vector<8x448xf32>
    %cst_27 = arith.constant 0.000000e+00 : f32
    %40 = vector.broadcast %cst_27 : f32 to vector<8x448xf32>
    %41 = arith.maximumf %39, %40 : vector<8x448xf32>
    %42 = arith.truncf %41 : vector<8x448xf32> to vector<8x448xbf16>
    %c3_28 = arith.constant 3 : index
    %c0_29 = arith.constant 0 : index
    %c0_30 = arith.constant 0 : index
    %43 = vector.load %arg11[%c3_28, %c0_29, %c0_30] : memref<14x8x448xbf16, #tpu.memory_space<vmem>>, vector<1x8x448xbf16>
    %44 = vector.shape_cast %43 : vector<1x8x448xbf16> to vector<8x448xbf16>
    %45 = vector.shape_cast %42 : vector<8x448xbf16> to vector<1x8x448xbf16>
    tpu.vector_store %arg11[%c3_28, %c0_29, %c0_30], %45 {strides = array<i32>} : memref<14x8x448xbf16, #tpu.memory_space<vmem>>, vector<1x8x448xbf16>,
    %c0_31 = arith.constant 0 : index
    %c4 = arith.constant 4 : index
    %c0_32 = arith.constant 0 : index
    %46 = vector.load %arg1[%c0_31, %c4, %c0_32] : memref<8x14x224xbf16, #tpu.memory_space<vmem>>, vector<8x1x224xbf16>
    %47 = vector.shape_cast %46 : vector<8x1x224xbf16> to vector<8x224xbf16>
    %cst_33 = arith.constant dense<0.000000e+00> : vector<8x448xf32>
    %48 = tpu.matmul %47, %0, %cst_33 {dimension_numbers = #tpu.dot_dimension_numbers<[1], [0], [0], [1], [0, 0, 1, 1], [], []>} : vector<8x224xbf16>, vector<224x448xbf16>, vector<8x448xf32> -> vector<8x448xf32>
    %49 = vector.broadcast %1 : vector<1x448xf32> to vector<8x448xf32>
    %50 = arith.addf %48, %49 : vector<8x448xf32>
    %cst_34 = arith.constant 0.000000e+00 : f32
    %51 = vector.broadcast %cst_34 : f32 to vector<8x448xf32>
    %52 = arith.maximumf %50, %51 : vector<8x448xf32>
    %53 = arith.truncf %52 : vector<8x448xf32> to vector<8x448xbf16>
    %c4_35 = arith.constant 4 : index
    %c0_36 = arith.constant 0 : index
    %c0_37 = arith.constant 0 : index
    %54 = vector.load %arg11[%c4_35, %c0_36, %c0_37] : memref<14x8x448xbf16, #tpu.memory_space<vmem>>, vector<1x8x448xbf16>
    %55 = vector.shape_cast %54 : vector<1x8x448xbf16> to vector<8x448xbf16>
    %56 = vector.shape_cast %53 : vector<8x448xbf16> to vector<1x8x448xbf16>
    tpu.vector_store %arg11[%c4_35, %c0_36, %c0_37], %56 {strides = array<i32>} : memref<14x8x448xbf16, #tpu.memory_space<vmem>>, vector<1x8x448xbf16>,
    %c0_38 = arith.constant 0 : index
    %c5 = arith.constant 5 : index
    %c0_39 = arith.constant 0 : index
    %57 = vector.load %arg1[%c0_38, %c5, %c0_39] : memref<8x14x224xbf16, #tpu.memory_space<vmem>>, vector<8x1x224xbf16>
    %58 = vector.shape_cast %57 : vector<8x1x224xbf16> to vector<8x224xbf16>
    %cst_40 = arith.constant dense<0.000000e+00> : vector<8x448xf32>
    %59 = tpu.matmul %58, %0, %cst_40 {dimension_numbers = #tpu.dot_dimension_numbers<[1], [0], [0], [1], [0, 0, 1, 1], [], []>} : vector<8x224xbf16>, vector<224x448xbf16>, vector<8x448xf32> -> vector<8x448xf32>
    %60 = vector.broadcast %1 : vector<1x448xf32> to vector<8x448xf32>
    %61 = arith.addf %59, %60 : vector<8x448xf32>
    %cst_41 = arith.constant 0.000000e+00 : f32
    %62 = vector.broadcast %cst_41 : f32 to vector<8x448xf32>
    %63 = arith.maximumf %61, %62 : vector<8x448xf32>
    %64 = arith.truncf %63 : vector<8x448xf32> to vector<8x448xbf16>
    %c5_42 = arith.constant 5 : index
    %c0_43 = arith.constant 0 : index
    %c0_44 = arith.constant 0 : index
    %65 = vector.load %arg11[%c5_42, %c0_43, %c0_44] : memref<14x8x448xbf16, #tpu.memory_space<vmem>>, vector<1x8x448xbf16>
    %66 = vector.shape_cast %65 : vector<1x8x448xbf16> to vector<8x448xbf16>
    %67 = vector.shape_cast %64 : vector<8x448xbf16> to vector<1x8x448xbf16>
    tpu.vector_store %arg11[%c5_42, %c0_43, %c0_44], %67 {strides = array<i32>} : memref<14x8x448xbf16, #tpu.memory_space<vmem>>, vector<1x8x448xbf16>,
    %c0_45 = arith.constant 0 : index
    %c6 = arith.constant 6 : index
    %c0_46 = arith.constant 0 : index
    %68 = vector.load %arg1[%c0_45, %c6, %c0_46] : memref<8x14x224xbf16, #tpu.memory_space<vmem>>, vector<8x1x224xbf16>
    %69 = vector.shape_cast %68 : vector<8x1x224xbf16> to vector<8x224xbf16>
    %cst_47 = arith.constant dense<0.000000e+00> : vector<8x448xf32>
    %70 = tpu.matmul %69, %0, %cst_47 {dimension_numbers = #tpu.dot_dimension_numbers<[1], [0], [0], [1], [0, 0, 1, 1], [], []>} : vector<8x224xbf16>, vector<224x448xbf16>, vector<8x448xf32> -> vector<8x448xf32>
    %71 = vector.broadcast %1 : vector<1x448xf32> to vector<8x448xf32>
    %72 = arith.addf %70, %71 : vector<8x448xf32>
    %cst_48 = arith.constant 0.000000e+00 : f32
    %73 = vector.broadcast %cst_48 : f32 to vector<8x448xf32>
    %74 = arith.maximumf %72, %73 : vector<8x448xf32>
    %75 = arith.truncf %74 : vector<8x448xf32> to vector<8x448xbf16>
    %c6_49 = arith.constant 6 : index
    %c0_50 = arith.constant 0 : index
    %c0_51 = arith.constant 0 : index
    %76 = vector.load %arg11[%c6_49, %c0_50, %c0_51] : memref<14x8x448xbf16, #tpu.memory_space<vmem>>, vector<1x8x448xbf16>
    %77 = vector.shape_cast %76 : vector<1x8x448xbf16> to vector<8x448xbf16>
    %78 = vector.shape_cast %75 : vector<8x448xbf16> to vector<1x8x448xbf16>
    tpu.vector_store %arg11[%c6_49, %c0_50, %c0_51], %78 {strides = array<i32>} : memref<14x8x448xbf16, #tpu.memory_space<vmem>>, vector<1x8x448xbf16>,
    %c0_52 = arith.constant 0 : index
    %c7 = arith.constant 7 : index
    %c0_53 = arith.constant 0 : index
    %79 = vector.load %arg1[%c0_52, %c7, %c0_53] : memref<8x14x224xbf16, #tpu.memory_space<vmem>>, vector<8x1x224xbf16>
    %80 = vector.shape_cast %79 : vector<8x1x224xbf16> to vector<8x224xbf16>
    %cst_54 = arith.constant dense<0.000000e+00> : vector<8x448xf32>
    %81 = tpu.matmul %80, %0, %cst_54 {dimension_numbers = #tpu.dot_dimension_numbers<[1], [0], [0], [1], [0, 0, 1, 1], [], []>} : vector<8x224xbf16>, vector<224x448xbf16>, vector<8x448xf32> -> vector<8x448xf32>
    %82 = vector.broadcast %1 : vector<1x448xf32> to vector<8x448xf32>
    %83 = arith.addf %81, %82 : vector<8x448xf32>
    %cst_55 = arith.constant 0.000000e+00 : f32
    %84 = vector.broadcast %cst_55 : f32 to vector<8x448xf32>
    %85 = arith.maximumf %83, %84 : vector<8x448xf32>
    %86 = arith.truncf %85 : vector<8x448xf32> to vector<8x448xbf16>
    %c7_56 = arith.constant 7 : index
    %c0_57 = arith.constant 0 : index
    %c0_58 = arith.constant 0 : index
    %87 = vector.load %arg11[%c7_56, %c0_57, %c0_58] : memref<14x8x448xbf16, #tpu.memory_space<vmem>>, vector<1x8x448xbf16>
    %88 = vector.shape_cast %87 : vector<1x8x448xbf16> to vector<8x448xbf16>
    %89 = vector.shape_cast %86 : vector<8x448xbf16> to vector<1x8x448xbf16>
    tpu.vector_store %arg11[%c7_56, %c0_57, %c0_58], %89 {strides = array<i32>} : memref<14x8x448xbf16, #tpu.memory_space<vmem>>, vector<1x8x448xbf16>,
    %c0_59 = arith.constant 0 : index
    %c8 = arith.constant 8 : index
    %c0_60 = arith.constant 0 : index
    %90 = vector.load %arg1[%c0_59, %c8, %c0_60] : memref<8x14x224xbf16, #tpu.memory_space<vmem>>, vector<8x1x224xbf16>
    %91 = vector.shape_cast %90 : vector<8x1x224xbf16> to vector<8x224xbf16>
    %cst_61 = arith.constant dense<0.000000e+00> : vector<8x448xf32>
    %92 = tpu.matmul %91, %0, %cst_61 {dimension_numbers = #tpu.dot_dimension_numbers<[1], [0], [0], [1], [0, 0, 1, 1], [], []>} : vector<8x224xbf16>, vector<224x448xbf16>, vector<8x448xf32> -> vector<8x448xf32>
    %93 = vector.broadcast %1 : vector<1x448xf32> to vector<8x448xf32>
    %94 = arith.addf %92, %93 : vector<8x448xf32>
    %cst_62 = arith.constant 0.000000e+00 : f32
    %95 = vector.broadcast %cst_62 : f32 to vector<8x448xf32>
    %96 = arith.maximumf %94, %95 : vector<8x448xf32>
    %97 = arith.truncf %96 : vector<8x448xf32> to vector<8x448xbf16>
    %c8_63 = arith.constant 8 : index
    %c0_64 = arith.constant 0 : index
    %c0_65 = arith.constant 0 : index
    %98 = vector.load %arg11[%c8_63, %c0_64, %c0_65] : memref<14x8x448xbf16, #tpu.memory_space<vmem>>, vector<1x8x448xbf16>
    %99 = vector.shape_cast %98 : vector<1x8x448xbf16> to vector<8x448xbf16>
    %100 = vector.shape_cast %97 : vector<8x448xbf16> to vector<1x8x448xbf16>
    tpu.vector_store %arg11[%c8_63, %c0_64, %c0_65], %100 {strides = array<i32>} : memref<14x8x448xbf16, #tpu.memory_space<vmem>>, vector<1x8x448xbf16>,
    %c0_66 = arith.constant 0 : index
    %c9 = arith.constant 9 : index
    %c0_67 = arith.constant 0 : index
    %101 = vector.load %arg1[%c0_66, %c9, %c0_67] : memref<8x14x224xbf16, #tpu.memory_space<vmem>>, vector<8x1x224xbf16>
    %102 = vector.shape_cast %101 : vector<8x1x224xbf16> to vector<8x224xbf16>
    %cst_68 = arith.constant dense<0.000000e+00> : vector<8x448xf32>
    %103 = tpu.matmul %102, %0, %cst_68 {dimension_numbers = #tpu.dot_dimension_numbers<[1], [0], [0], [1], [0, 0, 1, 1], [], []>} : vector<8x224xbf16>, vector<224x448xbf16>, vector<8x448xf32> -> vector<8x448xf32>
    %104 = vector.broadcast %1 : vector<1x448xf32> to vector<8x448xf32>
    %105 = arith.addf %103, %104 : vector<8x448xf32>
    %cst_69 = arith.constant 0.000000e+00 : f32
    %106 = vector.broadcast %cst_69 : f32 to vector<8x448xf32>
    %107 = arith.maximumf %105, %106 : vector<8x448xf32>
    %108 = arith.truncf %107 : vector<8x448xf32> to vector<8x448xbf16>
    %c9_70 = arith.constant 9 : index
    %c0_71 = arith.constant 0 : index
    %c0_72 = arith.constant 0 : index
    %109 = vector.load %arg11[%c9_70, %c0_71, %c0_72] : memref<14x8x448xbf16, #tpu.memory_space<vmem>>, vector<1x8x448xbf16>
    %110 = vector.shape_cast %109 : vector<1x8x448xbf16> to vector<8x448xbf16>
    %111 = vector.shape_cast %108 : vector<8x448xbf16> to vector<1x8x448xbf16>
    tpu.vector_store %arg11[%c9_70, %c0_71, %c0_72], %111 {strides = array<i32>} : memref<14x8x448xbf16, #tpu.memory_space<vmem>>, vector<1x8x448xbf16>,
    %c0_73 = arith.constant 0 : index
    %c10 = arith.constant 10 : index
    %c0_74 = arith.constant 0 : index
    %112 = vector.load %arg1[%c0_73, %c10, %c0_74] : memref<8x14x224xbf16, #tpu.memory_space<vmem>>, vector<8x1x224xbf16>
    %113 = vector.shape_cast %112 : vector<8x1x224xbf16> to vector<8x224xbf16>
    %cst_75 = arith.constant dense<0.000000e+00> : vector<8x448xf32>
    %114 = tpu.matmul %113, %0, %cst_75 {dimension_numbers = #tpu.dot_dimension_numbers<[1], [0], [0], [1], [0, 0, 1, 1], [], []>} : vector<8x224xbf16>, vector<224x448xbf16>, vector<8x448xf32> -> vector<8x448xf32>
    %115 = vector.broadcast %1 : vector<1x448xf32> to vector<8x448xf32>
    %116 = arith.addf %114, %115 : vector<8x448xf32>
    %cst_76 = arith.constant 0.000000e+00 : f32
    %117 = vector.broadcast %cst_76 : f32 to vector<8x448xf32>
    %118 = arith.maximumf %116, %117 : vector<8x448xf32>
    %119 = arith.truncf %118 : vector<8x448xf32> to vector<8x448xbf16>
    %c10_77 = arith.constant 10 : index
    %c0_78 = arith.constant 0 : index
    %c0_79 = arith.constant 0 : index
    %120 = vector.load %arg11[%c10_77, %c0_78, %c0_79] : memref<14x8x448xbf16, #tpu.memory_space<vmem>>, vector<1x8x448xbf16>
    %121 = vector.shape_cast %120 : vector<1x8x448xbf16> to vector<8x448xbf16>
    %122 = vector.shape_cast %119 : vector<8x448xbf16> to vector<1x8x448xbf16>
    tpu.vector_store %arg11[%c10_77, %c0_78, %c0_79], %122 {strides = array<i32>} : memref<14x8x448xbf16, #tpu.memory_space<vmem>>, vector<1x8x448xbf16>,
    %c0_80 = arith.constant 0 : index
    %c11 = arith.constant 11 : index
    %c0_81 = arith.constant 0 : index
    %123 = vector.load %arg1[%c0_80, %c11, %c0_81] : memref<8x14x224xbf16, #tpu.memory_space<vmem>>, vector<8x1x224xbf16>
    %124 = vector.shape_cast %123 : vector<8x1x224xbf16> to vector<8x224xbf16>
    %cst_82 = arith.constant dense<0.000000e+00> : vector<8x448xf32>
    %125 = tpu.matmul %124, %0, %cst_82 {dimension_numbers = #tpu.dot_dimension_numbers<[1], [0], [0], [1], [0, 0, 1, 1], [], []>} : vector<8x224xbf16>, vector<224x448xbf16>, vector<8x448xf32> -> vector<8x448xf32>
    %126 = vector.broadcast %1 : vector<1x448xf32> to vector<8x448xf32>
    %127 = arith.addf %125, %126 : vector<8x448xf32>
    %cst_83 = arith.constant 0.000000e+00 : f32
    %128 = vector.broadcast %cst_83 : f32 to vector<8x448xf32>
    %129 = arith.maximumf %127, %128 : vector<8x448xf32>
    %130 = arith.truncf %129 : vector<8x448xf32> to vector<8x448xbf16>
    %c11_84 = arith.constant 11 : index
    %c0_85 = arith.constant 0 : index
    %c0_86 = arith.constant 0 : index
    %131 = vector.load %arg11[%c11_84, %c0_85, %c0_86] : memref<14x8x448xbf16, #tpu.memory_space<vmem>>, vector<1x8x448xbf16>
    %132 = vector.shape_cast %131 : vector<1x8x448xbf16> to vector<8x448xbf16>
    %133 = vector.shape_cast %130 : vector<8x448xbf16> to vector<1x8x448xbf16>
    tpu.vector_store %arg11[%c11_84, %c0_85, %c0_86], %133 {strides = array<i32>} : memref<14x8x448xbf16, #tpu.memory_space<vmem>>, vector<1x8x448xbf16>,
    %c0_87 = arith.constant 0 : index
    %c12 = arith.constant 12 : index
    %c0_88 = arith.constant 0 : index
    %134 = vector.load %arg1[%c0_87, %c12, %c0_88] : memref<8x14x224xbf16, #tpu.memory_space<vmem>>, vector<8x1x224xbf16>
    %135 = vector.shape_cast %134 : vector<8x1x224xbf16> to vector<8x224xbf16>
    %cst_89 = arith.constant dense<0.000000e+00> : vector<8x448xf32>
    %136 = tpu.matmul %135, %0, %cst_89 {dimension_numbers = #tpu.dot_dimension_numbers<[1], [0], [0], [1], [0, 0, 1, 1], [], []>} : vector<8x224xbf16>, vector<224x448xbf16>, vector<8x448xf32> -> vector<8x448xf32>
    %137 = vector.broadcast %1 : vector<1x448xf32> to vector<8x448xf32>
    %138 = arith.addf %136, %137 : vector<8x448xf32>
    %cst_90 = arith.constant 0.000000e+00 : f32
    %139 = vector.broadcast %cst_90 : f32 to vector<8x448xf32>
    %140 = arith.maximumf %138, %139 : vector<8x448xf32>
    %141 = arith.truncf %140 : vector<8x448xf32> to vector<8x448xbf16>
    %c12_91 = arith.constant 12 : index
    %c0_92 = arith.constant 0 : index
    %c0_93 = arith.constant 0 : index
    %142 = vector.load %arg11[%c12_91, %c0_92, %c0_93] : memref<14x8x448xbf16, #tpu.memory_space<vmem>>, vector<1x8x448xbf16>
    %143 = vector.shape_cast %142 : vector<1x8x448xbf16> to vector<8x448xbf16>
    %144 = vector.shape_cast %141 : vector<8x448xbf16> to vector<1x8x448xbf16>
    tpu.vector_store %arg11[%c12_91, %c0_92, %c0_93], %144 {strides = array<i32>} : memref<14x8x448xbf16, #tpu.memory_space<vmem>>, vector<1x8x448xbf16>,
    %c0_94 = arith.constant 0 : index
    %c13 = arith.constant 13 : index
    %c0_95 = arith.constant 0 : index
    %145 = vector.load %arg1[%c0_94, %c13, %c0_95] : memref<8x14x224xbf16, #tpu.memory_space<vmem>>, vector<8x1x224xbf16>
    %146 = vector.shape_cast %145 : vector<8x1x224xbf16> to vector<8x224xbf16>
    %cst_96 = arith.constant dense<0.000000e+00> : vector<8x448xf32>
    %147 = tpu.matmul %146, %0, %cst_96 {dimension_numbers = #tpu.dot_dimension_numbers<[1], [0], [0], [1], [0, 0, 1, 1], [], []>} : vector<8x224xbf16>, vector<224x448xbf16>, vector<8x448xf32> -> vector<8x448xf32>
    %148 = vector.broadcast %1 : vector<1x448xf32> to vector<8x448xf32>
    %149 = arith.addf %147, %148 : vector<8x448xf32>
    %cst_97 = arith.constant 0.000000e+00 : f32
    %150 = vector.broadcast %cst_97 : f32 to vector<8x448xf32>
    %151 = arith.maximumf %149, %150 : vector<8x448xf32>
    %152 = arith.truncf %151 : vector<8x448xf32> to vector<8x448xbf16>
    %c13_98 = arith.constant 13 : index
    %c0_99 = arith.constant 0 : index
    %c0_100 = arith.constant 0 : index
    %153 = vector.load %arg11[%c13_98, %c0_99, %c0_100] : memref<14x8x448xbf16, #tpu.memory_space<vmem>>, vector<1x8x448xbf16>
    %154 = vector.shape_cast %153 : vector<1x8x448xbf16> to vector<8x448xbf16>
    %155 = vector.shape_cast %152 : vector<8x448xbf16> to vector<1x8x448xbf16>
    tpu.vector_store %arg11[%c13_98, %c0_99, %c0_100], %155 {strides = array<i32>} : memref<14x8x448xbf16, #tpu.memory_space<vmem>>, vector<1x8x448xbf16>,
    %c0_101 = arith.constant 0 : index
    %c0_102 = arith.constant 0 : index
    %156 = vector.load %arg4[%c0_101, %c0_102] : memref<288x32xbf16, #tpu.memory_space<vmem>>, vector<288x32xbf16>
    %c0_103 = arith.constant 0 : index
    %c0_104 = arith.constant 0 : index
    %157 = vector.load %arg5[%c0_103, %c0_104] : memref<1x32xf32, #tpu.memory_space<vmem>>, vector<1x32xf32>
    %cst_105 = arith.constant 0.000000e+00 : bf16
    %158 = vector.broadcast %cst_105 : bf16 to vector<8x96xbf16>
    %cst_106 = arith.constant 0.000000e+00 : bf16
    %159 = vector.broadcast %cst_106 : bf16 to vector<8x32xbf16>
    %c0_107 = arith.constant 0 : index
    %c0_108 = arith.constant 0 : index
    %c0_109 = arith.constant 0 : index
    %160 = vector.load %arg11[%c0_107, %c0_108, %c0_109] : memref<14x8x448xbf16, #tpu.memory_space<vmem>>, vector<1x8x64xbf16>
    %161 = vector.shape_cast %160 : vector<1x8x64xbf16> to vector<8x64xbf16>
    %162 = tpu.concatenate %159, %161 in 1 : vector<8x32xbf16>, vector<8x64xbf16> -> vector<8x96xbf16>
    %c1_110 = arith.constant 1 : index
    %c0_111 = arith.constant 0 : index
    %c0_112 = arith.constant 0 : index
    %163 = vector.load %arg11[%c1_110, %c0_111, %c0_112] : memref<14x8x448xbf16, #tpu.memory_space<vmem>>, vector<1x8x64xbf16>
    %164 = vector.shape_cast %163 : vector<1x8x64xbf16> to vector<8x64xbf16>
    %165 = tpu.concatenate %159, %164 in 1 : vector<8x32xbf16>, vector<8x64xbf16> -> vector<8x96xbf16>
    %166 = tpu.concatenate %158, %162, %165 in 1 : vector<8x96xbf16>, vector<8x96xbf16>, vector<8x96xbf16> -> vector<8x288xbf16>
    %cst_113 = arith.constant dense<0.000000e+00> : vector<8x32xf32>
    %167 = tpu.matmul %166, %156, %cst_113 {dimension_numbers = #tpu.dot_dimension_numbers<[1], [0], [0], [1], [0, 0, 1, 1], [], []>} : vector<8x288xbf16>, vector<288x32xbf16>, vector<8x32xf32> -> vector<8x32xf32>
    %168 = vector.broadcast %157 : vector<1x32xf32> to vector<8x32xf32>
    %169 = arith.addf %167, %168 : vector<8x32xf32>
    %cst_114 = arith.constant 0.000000e+00 : f32
    %170 = vector.broadcast %cst_114 : f32 to vector<8x32xf32>
    %171 = arith.maximumf %169, %170 : vector<8x32xf32>
    %172 = arith.truncf %171 : vector<8x32xf32> to vector<8x32xbf16>
    %c0_115 = arith.constant 0 : index
    %c0_116 = arith.constant 0 : index
    %173 = vector.load %arg12[%c0_115, %c0_116] : memref<8x1568xbf16, #tpu.memory_space<vmem>>, vector<8x32xbf16>
    tpu.vector_store %arg12[%c0_115, %c0_116], %172 {strides = array<i32>} : memref<8x1568xbf16, #tpu.memory_space<vmem>>, vector<8x32xbf16>,
    %c0_117 = arith.constant 0 : index
    %c0_118 = arith.constant 0 : index
    %c32 = arith.constant 32 : index
    %174 = vector.load %arg11[%c0_117, %c0_118, %c32] : memref<14x8x448xbf16, #tpu.memory_space<vmem>>, vector<1x8x96xbf16>
    %175 = vector.shape_cast %174 : vector<1x8x96xbf16> to vector<8x96xbf16>
    %c1_119 = arith.constant 1 : index
    %c0_120 = arith.constant 0 : index
    %c32_121 = arith.constant 32 : index
    %176 = vector.load %arg11[%c1_119, %c0_120, %c32_121] : memref<14x8x448xbf16, #tpu.memory_space<vmem>>, vector<1x8x96xbf16>
    %177 = vector.shape_cast %176 : vector<1x8x96xbf16> to vector<8x96xbf16>
    %178 = tpu.concatenate %158, %175, %177 in 1 : vector<8x96xbf16>, vector<8x96xbf16>, vector<8x96xbf16> -> vector<8x288xbf16>
    %cst_122 = arith.constant dense<0.000000e+00> : vector<8x32xf32>
    %179 = tpu.matmul %178, %156, %cst_122 {dimension_numbers = #tpu.dot_dimension_numbers<[1], [0], [0], [1], [0, 0, 1, 1], [], []>} : vector<8x288xbf16>, vector<288x32xbf16>, vector<8x32xf32> -> vector<8x32xf32>
    %180 = vector.broadcast %157 : vector<1x32xf32> to vector<8x32xf32>
    %181 = arith.addf %179, %180 : vector<8x32xf32>
    %cst_123 = arith.constant 0.000000e+00 : f32
    %182 = vector.broadcast %cst_123 : f32 to vector<8x32xf32>
    %183 = arith.maximumf %181, %182 : vector<8x32xf32>
    %184 = arith.truncf %183 : vector<8x32xf32> to vector<8x32xbf16>
    %c0_124 = arith.constant 0 : index
    %c32_125 = arith.constant 32 : index
    %185 = vector.load %arg12[%c0_124, %c32_125] : memref<8x1568xbf16, #tpu.memory_space<vmem>>, vector<8x32xbf16>
    tpu.vector_store %arg12[%c0_124, %c32_125], %184 {strides = array<i32>} : memref<8x1568xbf16, #tpu.memory_space<vmem>>, vector<8x32xbf16>,
    %c0_126 = arith.constant 0 : index
    %c0_127 = arith.constant 0 : index
    %c96 = arith.constant 96 : index
    %186 = vector.load %arg11[%c0_126, %c0_127, %c96] : memref<14x8x448xbf16, #tpu.memory_space<vmem>>, vector<1x8x96xbf16>
    %187 = vector.shape_cast %186 : vector<1x8x96xbf16> to vector<8x96xbf16>
    %c1_128 = arith.constant 1 : index
    %c0_129 = arith.constant 0 : index
    %c96_130 = arith.constant 96 : index
    %188 = vector.load %arg11[%c1_128, %c0_129, %c96_130] : memref<14x8x448xbf16, #tpu.memory_space<vmem>>, vector<1x8x96xbf16>
    %189 = vector.shape_cast %188 : vector<1x8x96xbf16> to vector<8x96xbf16>
    %190 = tpu.concatenate %158, %187, %189 in 1 : vector<8x96xbf16>, vector<8x96xbf16>, vector<8x96xbf16> -> vector<8x288xbf16>
    %cst_131 = arith.constant dense<0.000000e+00> : vector<8x32xf32>
    %191 = tpu.matmul %190, %156, %cst_131 {dimension_numbers = #tpu.dot_dimension_numbers<[1], [0], [0], [1], [0, 0, 1, 1], [], []>} : vector<8x288xbf16>, vector<288x32xbf16>, vector<8x32xf32> -> vector<8x32xf32>
    %192 = vector.broadcast %157 : vector<1x32xf32> to vector<8x32xf32>
    %193 = arith.addf %191, %192 : vector<8x32xf32>
    %cst_132 = arith.constant 0.000000e+00 : f32
    %194 = vector.broadcast %cst_132 : f32 to vector<8x32xf32>
    %195 = arith.maximumf %193, %194 : vector<8x32xf32>
    %196 = arith.truncf %195 : vector<8x32xf32> to vector<8x32xbf16>
    %c0_133 = arith.constant 0 : index
    %c64 = arith.constant 64 : index
    %197 = vector.load %arg12[%c0_133, %c64] : memref<8x1568xbf16, #tpu.memory_space<vmem>>, vector<8x32xbf16>
    tpu.vector_store %arg12[%c0_133, %c64], %196 {strides = array<i32>} : memref<8x1568xbf16, #tpu.memory_space<vmem>>, vector<8x32xbf16>,
    %c0_134 = arith.constant 0 : index
    %c0_135 = arith.constant 0 : index
    %c160 = arith.constant 160 : index
    %198 = vector.load %arg11[%c0_134, %c0_135, %c160] : memref<14x8x448xbf16, #tpu.memory_space<vmem>>, vector<1x8x96xbf16>
    %199 = vector.shape_cast %198 : vector<1x8x96xbf16> to vector<8x96xbf16>
    %c1_136 = arith.constant 1 : index
    %c0_137 = arith.constant 0 : index
    %c160_138 = arith.constant 160 : index
    %200 = vector.load %arg11[%c1_136, %c0_137, %c160_138] : memref<14x8x448xbf16, #tpu.memory_space<vmem>>, vector<1x8x96xbf16>
    %201 = vector.shape_cast %200 : vector<1x8x96xbf16> to vector<8x96xbf16>
    %202 = tpu.concatenate %158, %199, %201 in 1 : vector<8x96xbf16>, vector<8x96xbf16>, vector<8x96xbf16> -> vector<8x288xbf16>
    %cst_139 = arith.constant dense<0.000000e+00> : vector<8x32xf32>
    %203 = tpu.matmul %202, %156, %cst_139 {dimension_numbers = #tpu.dot_dimension_numbers<[1], [0], [0], [1], [0, 0, 1, 1], [], []>} : vector<8x288xbf16>, vector<288x32xbf16>, vector<8x32xf32> -> vector<8x32xf32>
    %204 = vector.broadcast %157 : vector<1x32xf32> to vector<8x32xf32>
    %205 = arith.addf %203, %204 : vector<8x32xf32>
    %cst_140 = arith.constant 0.000000e+00 : f32
    %206 = vector.broadcast %cst_140 : f32 to vector<8x32xf32>
    %207 = arith.maximumf %205, %206 : vector<8x32xf32>
    %208 = arith.truncf %207 : vector<8x32xf32> to vector<8x32xbf16>
    %c0_141 = arith.constant 0 : index
    %c96_142 = arith.constant 96 : index
    %209 = vector.load %arg12[%c0_141, %c96_142] : memref<8x1568xbf16, #tpu.memory_space<vmem>>, vector<8x32xbf16>
    tpu.vector_store %arg12[%c0_141, %c96_142], %208 {strides = array<i32>} : memref<8x1568xbf16, #tpu.memory_space<vmem>>, vector<8x32xbf16>,
    %c0_143 = arith.constant 0 : index
    %c0_144 = arith.constant 0 : index
    %c224 = arith.constant 224 : index
    %210 = vector.load %arg11[%c0_143, %c0_144, %c224] : memref<14x8x448xbf16, #tpu.memory_space<vmem>>, vector<1x8x96xbf16>
    %211 = vector.shape_cast %210 : vector<1x8x96xbf16> to vector<8x96xbf16>
    %c1_145 = arith.constant 1 : index
    %c0_146 = arith.constant 0 : index
    %c224_147 = arith.constant 224 : index
    %212 = vector.load %arg11[%c1_145, %c0_146, %c224_147] : memref<14x8x448xbf16, #tpu.memory_space<vmem>>, vector<1x8x96xbf16>
    %213 = vector.shape_cast %212 : vector<1x8x96xbf16> to vector<8x96xbf16>
    %214 = tpu.concatenate %158, %211, %213 in 1 : vector<8x96xbf16>, vector<8x96xbf16>, vector<8x96xbf16> -> vector<8x288xbf16>
    %cst_148 = arith.constant dense<0.000000e+00> : vector<8x32xf32>
    %215 = tpu.matmul %214, %156, %cst_148 {dimension_numbers = #tpu.dot_dimension_numbers<[1], [0], [0], [1], [0, 0, 1, 1], [], []>} : vector<8x288xbf16>, vector<288x32xbf16>, vector<8x32xf32> -> vector<8x32xf32>
    %216 = vector.broadcast %157 : vector<1x32xf32> to vector<8x32xf32>
    %217 = arith.addf %215, %216 : vector<8x32xf32>
    %cst_149 = arith.constant 0.000000e+00 : f32
    %218 = vector.broadcast %cst_149 : f32 to vector<8x32xf32>
    %219 = arith.maximumf %217, %218 : vector<8x32xf32>
    %220 = arith.truncf %219 : vector<8x32xf32> to vector<8x32xbf16>
    %c0_150 = arith.constant 0 : index
    %c128 = arith.constant 128 : index
    %221 = vector.load %arg12[%c0_150, %c128] : memref<8x1568xbf16, #tpu.memory_space<vmem>>, vector<8x32xbf16>
    tpu.vector_store %arg12[%c0_150, %c128], %220 {strides = array<i32>} : memref<8x1568xbf16, #tpu.memory_space<vmem>>, vector<8x32xbf16>,
    %c0_151 = arith.constant 0 : index
    %c0_152 = arith.constant 0 : index
    %c288 = arith.constant 288 : index
    %222 = vector.load %arg11[%c0_151, %c0_152, %c288] : memref<14x8x448xbf16, #tpu.memory_space<vmem>>, vector<1x8x96xbf16>
    %223 = vector.shape_cast %222 : vector<1x8x96xbf16> to vector<8x96xbf16>
    %c1_153 = arith.constant 1 : index
    %c0_154 = arith.constant 0 : index
    %c288_155 = arith.constant 288 : index
    %224 = vector.load %arg11[%c1_153, %c0_154, %c288_155] : memref<14x8x448xbf16, #tpu.memory_space<vmem>>, vector<1x8x96xbf16>
    %225 = vector.shape_cast %224 : vector<1x8x96xbf16> to vector<8x96xbf16>
    %226 = tpu.concatenate %158, %223, %225 in 1 : vector<8x96xbf16>, vector<8x96xbf16>, vector<8x96xbf16> -> vector<8x288xbf16>
    %cst_156 = arith.constant dense<0.000000e+00> : vector<8x32xf32>
    %227 = tpu.matmul %226, %156, %cst_156 {dimension_numbers = #tpu.dot_dimension_numbers<[1], [0], [0], [1], [0, 0, 1, 1], [], []>} : vector<8x288xbf16>, vector<288x32xbf16>, vector<8x32xf32> -> vector<8x32xf32>
    %228 = vector.broadcast %157 : vector<1x32xf32> to vector<8x32xf32>
    %229 = arith.addf %227, %228 : vector<8x32xf32>
    %cst_157 = arith.constant 0.000000e+00 : f32
    %230 = vector.broadcast %cst_157 : f32 to vector<8x32xf32>
    %231 = arith.maximumf %229, %230 : vector<8x32xf32>
    %232 = arith.truncf %231 : vector<8x32xf32> to vector<8x32xbf16>
    %c0_158 = arith.constant 0 : index
    %c160_159 = arith.constant 160 : index
    %233 = vector.load %arg12[%c0_158, %c160_159] : memref<8x1568xbf16, #tpu.memory_space<vmem>>, vector<8x32xbf16>
    tpu.vector_store %arg12[%c0_158, %c160_159], %232 {strides = array<i32>} : memref<8x1568xbf16, #tpu.memory_space<vmem>>, vector<8x32xbf16>,
    %c0_160 = arith.constant 0 : index
    %c0_161 = arith.constant 0 : index
    %c352 = arith.constant 352 : index
    %234 = vector.load %arg11[%c0_160, %c0_161, %c352] : memref<14x8x448xbf16, #tpu.memory_space<vmem>>, vector<1x8x96xbf16>
    %235 = vector.shape_cast %234 : vector<1x8x96xbf16> to vector<8x96xbf16>
    %c1_162 = arith.constant 1 : index
    %c0_163 = arith.constant 0 : index
    %c352_164 = arith.constant 352 : index
    %236 = vector.load %arg11[%c1_162, %c0_163, %c352_164] : memref<14x8x448xbf16, #tpu.memory_space<vmem>>, vector<1x8x96xbf16>
    %237 = vector.shape_cast %236 : vector<1x8x96xbf16> to vector<8x96xbf16>
    %238 = tpu.concatenate %158, %235, %237 in 1 : vector<8x96xbf16>, vector<8x96xbf16>, vector<8x96xbf16> -> vector<8x288xbf16>
    %cst_165 = arith.constant dense<0.000000e+00> : vector<8x32xf32>
    %239 = tpu.matmul %238, %156, %cst_165 {dimension_numbers = #tpu.dot_dimension_numbers<[1], [0], [0], [1], [0, 0, 1, 1], [], []>} : vector<8x288xbf16>, vector<288x32xbf16>, vector<8x32xf32> -> vector<8x32xf32>
    %240 = vector.broadcast %157 : vector<1x32xf32> to vector<8x32xf32>
    %241 = arith.addf %239, %240 : vector<8x32xf32>
    %cst_166 = arith.constant 0.000000e+00 : f32
    %242 = vector.broadcast %cst_166 : f32 to vector<8x32xf32>
    %243 = arith.maximumf %241, %242 : vector<8x32xf32>
    %244 = arith.truncf %243 : vector<8x32xf32> to vector<8x32xbf16>
    %c0_167 = arith.constant 0 : index
    %c192 = arith.constant 192 : index
    %245 = vector.load %arg12[%c0_167, %c192] : memref<8x1568xbf16, #tpu.memory_space<vmem>>, vector<8x32xbf16>
    tpu.vector_store %arg12[%c0_167, %c192], %244 {strides = array<i32>} : memref<8x1568xbf16, #tpu.memory_space<vmem>>, vector<8x32xbf16>,
    %c1_168 = arith.constant 1 : index
    %c0_169 = arith.constant 0 : index
    %c0_170 = arith.constant 0 : index
    %246 = vector.load %arg11[%c1_168, %c0_169, %c0_170] : memref<14x8x448xbf16, #tpu.memory_space<vmem>>, vector<1x8x64xbf16>
    %247 = vector.shape_cast %246 : vector<1x8x64xbf16> to vector<8x64xbf16>
    %248 = tpu.concatenate %159, %247 in 1 : vector<8x32xbf16>, vector<8x64xbf16> -> vector<8x96xbf16>
    %c2_171 = arith.constant 2 : index
    %c0_172 = arith.constant 0 : index
    %c0_173 = arith.constant 0 : index
    %249 = vector.load %arg11[%c2_171, %c0_172, %c0_173] : memref<14x8x448xbf16, #tpu.memory_space<vmem>>, vector<1x8x64xbf16>
    %250 = vector.shape_cast %249 : vector<1x8x64xbf16> to vector<8x64xbf16>
    %251 = tpu.concatenate %159, %250 in 1 : vector<8x32xbf16>, vector<8x64xbf16> -> vector<8x96xbf16>
    %c3_174 = arith.constant 3 : index
    %c0_175 = arith.constant 0 : index
    %c0_176 = arith.constant 0 : index
    %252 = vector.load %arg11[%c3_174, %c0_175, %c0_176] : memref<14x8x448xbf16, #tpu.memory_space<vmem>>, vector<1x8x64xbf16>
    %253 = vector.shape_cast %252 : vector<1x8x64xbf16> to vector<8x64xbf16>
    %254 = tpu.concatenate %159, %253 in 1 : vector<8x32xbf16>, vector<8x64xbf16> -> vector<8x96xbf16>
    %255 = tpu.concatenate %248, %251, %254 in 1 : vector<8x96xbf16>, vector<8x96xbf16>, vector<8x96xbf16> -> vector<8x288xbf16>
    %cst_177 = arith.constant dense<0.000000e+00> : vector<8x32xf32>
    %256 = tpu.matmul %255, %156, %cst_177 {dimension_numbers = #tpu.dot_dimension_numbers<[1], [0], [0], [1], [0, 0, 1, 1], [], []>} : vector<8x288xbf16>, vector<288x32xbf16>, vector<8x32xf32> -> vector<8x32xf32>
    %257 = vector.broadcast %157 : vector<1x32xf32> to vector<8x32xf32>
    %258 = arith.addf %256, %257 : vector<8x32xf32>
    %cst_178 = arith.constant 0.000000e+00 : f32
    %259 = vector.broadcast %cst_178 : f32 to vector<8x32xf32>
    %260 = arith.maximumf %258, %259 : vector<8x32xf32>
    %261 = arith.truncf %260 : vector<8x32xf32> to vector<8x32xbf16>
    %c0_179 = arith.constant 0 : index
    %c224_180 = arith.constant 224 : index
    %262 = vector.load %arg12[%c0_179, %c224_180] : memref<8x1568xbf16, #tpu.memory_space<vmem>>, vector<8x32xbf16>
    tpu.vector_store %arg12[%c0_179, %c224_180], %261 {strides = array<i32>} : memref<8x1568xbf16, #tpu.memory_space<vmem>>, vector<8x32xbf16>,
    %c1_181 = arith.constant 1 : index
    %c0_182 = arith.constant 0 : index
    %c32_183 = arith.constant 32 : index
    %263 = vector.load %arg11[%c1_181, %c0_182, %c32_183] : memref<14x8x448xbf16, #tpu.memory_space<vmem>>, vector<1x8x96xbf16>
    %264 = vector.shape_cast %263 : vector<1x8x96xbf16> to vector<8x96xbf16>
    %c2_184 = arith.constant 2 : index
    %c0_185 = arith.constant 0 : index
    %c32_186 = arith.constant 32 : index
    %265 = vector.load %arg11[%c2_184, %c0_185, %c32_186] : memref<14x8x448xbf16, #tpu.memory_space<vmem>>, vector<1x8x96xbf16>
    %266 = vector.shape_cast %265 : vector<1x8x96xbf16> to vector<8x96xbf16>
    %c3_187 = arith.constant 3 : index
    %c0_188 = arith.constant 0 : index
    %c32_189 = arith.constant 32 : index
    %267 = vector.load %arg11[%c3_187, %c0_188, %c32_189] : memref<14x8x448xbf16, #tpu.memory_space<vmem>>, vector<1x8x96xbf16>
    %268 = vector.shape_cast %267 : vector<1x8x96xbf16> to vector<8x96xbf16>
    %269 = tpu.concatenate %264, %266, %268 in 1 : vector<8x96xbf16>, vector<8x96xbf16>, vector<8x96xbf16> -> vector<8x288xbf16>
    %cst_190 = arith.constant dense<0.000000e+00> : vector<8x32xf32>
    %270 = tpu.matmul %269, %156, %cst_190 {dimension_numbers = #tpu.dot_dimension_numbers<[1], [0], [0], [1], [0, 0, 1, 1], [], []>} : vector<8x288xbf16>, vector<288x32xbf16>, vector<8x32xf32> -> vector<8x32xf32>
    %271 = vector.broadcast %157 : vector<1x32xf32> to vector<8x32xf32>
    %272 = arith.addf %270, %271 : vector<8x32xf32>
    %cst_191 = arith.constant 0.000000e+00 : f32
    %273 = vector.broadcast %cst_191 : f32 to vector<8x32xf32>
    %274 = arith.maximumf %272, %273 : vector<8x32xf32>
    %275 = arith.truncf %274 : vector<8x32xf32> to vector<8x32xbf16>
    %c0_192 = arith.constant 0 : index
    %c256 = arith.constant 256 : index
    %276 = vector.load %arg12[%c0_192, %c256] : memref<8x1568xbf16, #tpu.memory_space<vmem>>, vector<8x32xbf16>
    tpu.vector_store %arg12[%c0_192, %c256], %275 {strides = array<i32>} : memref<8x1568xbf16, #tpu.memory_space<vmem>>, vector<8x32xbf16>,
    %c1_193 = arith.constant 1 : index
    %c0_194 = arith.constant 0 : index
    %c96_195 = arith.constant 96 : index
    %277 = vector.load %arg11[%c1_193, %c0_194, %c96_195] : memref<14x8x448xbf16, #tpu.memory_space<vmem>>, vector<1x8x96xbf16>
    %278 = vector.shape_cast %277 : vector<1x8x96xbf16> to vector<8x96xbf16>
    %c2_196 = arith.constant 2 : index
    %c0_197 = arith.constant 0 : index
    %c96_198 = arith.constant 96 : index
    %279 = vector.load %arg11[%c2_196, %c0_197, %c96_198] : memref<14x8x448xbf16, #tpu.memory_space<vmem>>, vector<1x8x96xbf16>
    %280 = vector.shape_cast %279 : vector<1x8x96xbf16> to vector<8x96xbf16>
    %c3_199 = arith.constant 3 : index
    %c0_200 = arith.constant 0 : index
    %c96_201 = arith.constant 96 : index
    %281 = vector.load %arg11[%c3_199, %c0_200, %c96_201] : memref<14x8x448xbf16, #tpu.memory_space<vmem>>, vector<1x8x96xbf16>
    %282 = vector.shape_cast %281 : vector<1x8x96xbf16> to vector<8x96xbf16>
    %283 = tpu.concatenate %278, %280, %282 in 1 : vector<8x96xbf16>, vector<8x96xbf16>, vector<8x96xbf16> -> vector<8x288xbf16>
    %cst_202 = arith.constant dense<0.000000e+00> : vector<8x32xf32>
    %284 = tpu.matmul %283, %156, %cst_202 {dimension_numbers = #tpu.dot_dimension_numbers<[1], [0], [0], [1], [0, 0, 1, 1], [], []>} : vector<8x288xbf16>, vector<288x32xbf16>, vector<8x32xf32> -> vector<8x32xf32>
    %285 = vector.broadcast %157 : vector<1x32xf32> to vector<8x32xf32>
    %286 = arith.addf %284, %285 : vector<8x32xf32>
    %cst_203 = arith.constant 0.000000e+00 : f32
    %287 = vector.broadcast %cst_203 : f32 to vector<8x32xf32>
    %288 = arith.maximumf %286, %287 : vector<8x32xf32>
    %289 = arith.truncf %288 : vector<8x32xf32> to vector<8x32xbf16>
    %c0_204 = arith.constant 0 : index
    %c288_205 = arith.constant 288 : index
    %290 = vector.load %arg12[%c0_204, %c288_205] : memref<8x1568xbf16, #tpu.memory_space<vmem>>, vector<8x32xbf16>
    tpu.vector_store %arg12[%c0_204, %c288_205], %289 {strides = array<i32>} : memref<8x1568xbf16, #tpu.memory_space<vmem>>, vector<8x32xbf16>,
    %c1_206 = arith.constant 1 : index
    %c0_207 = arith.constant 0 : index
    %c160_208 = arith.constant 160 : index
    %291 = vector.load %arg11[%c1_206, %c0_207, %c160_208] : memref<14x8x448xbf16, #tpu.memory_space<vmem>>, vector<1x8x96xbf16>
    %292 = vector.shape_cast %291 : vector<1x8x96xbf16> to vector<8x96xbf16>
    %c2_209 = arith.constant 2 : index
    %c0_210 = arith.constant 0 : index
    %c160_211 = arith.constant 160 : index
    %293 = vector.load %arg11[%c2_209, %c0_210, %c160_211] : memref<14x8x448xbf16, #tpu.memory_space<vmem>>, vector<1x8x96xbf16>
    %294 = vector.shape_cast %293 : vector<1x8x96xbf16> to vector<8x96xbf16>
    %c3_212 = arith.constant 3 : index
    %c0_213 = arith.constant 0 : index
    %c160_214 = arith.constant 160 : index
    %295 = vector.load %arg11[%c3_212, %c0_213, %c160_214] : memref<14x8x448xbf16, #tpu.memory_space<vmem>>, vector<1x8x96xbf16>
    %296 = vector.shape_cast %295 : vector<1x8x96xbf16> to vector<8x96xbf16>
    %297 = tpu.concatenate %292, %294, %296 in 1 : vector<8x96xbf16>, vector<8x96xbf16>, vector<8x96xbf16> -> vector<8x288xbf16>
    %cst_215 = arith.constant dense<0.000000e+00> : vector<8x32xf32>
    %298 = tpu.matmul %297, %156, %cst_215 {dimension_numbers = #tpu.dot_dimension_numbers<[1], [0], [0], [1], [0, 0, 1, 1], [], []>} : vector<8x288xbf16>, vector<288x32xbf16>, vector<8x32xf32> -> vector<8x32xf32>
    %299 = vector.broadcast %157 : vector<1x32xf32> to vector<8x32xf32>
    %300 = arith.addf %298, %299 : vector<8x32xf32>
    %cst_216 = arith.constant 0.000000e+00 : f32
    %301 = vector.broadcast %cst_216 : f32 to vector<8x32xf32>
    %302 = arith.maximumf %300, %301 : vector<8x32xf32>
    %303 = arith.truncf %302 : vector<8x32xf32> to vector<8x32xbf16>
    %c0_217 = arith.constant 0 : index
    %c320 = arith.constant 320 : index
    %304 = vector.load %arg12[%c0_217, %c320] : memref<8x1568xbf16, #tpu.memory_space<vmem>>, vector<8x32xbf16>
    tpu.vector_store %arg12[%c0_217, %c320], %303 {strides = array<i32>} : memref<8x1568xbf16, #tpu.memory_space<vmem>>, vector<8x32xbf16>,
    %c1_218 = arith.constant 1 : index
    %c0_219 = arith.constant 0 : index
    %c224_220 = arith.constant 224 : index
    %305 = vector.load %arg11[%c1_218, %c0_219, %c224_220] : memref<14x8x448xbf16, #tpu.memory_space<vmem>>, vector<1x8x96xbf16>
    %306 = vector.shape_cast %305 : vector<1x8x96xbf16> to vector<8x96xbf16>
    %c2_221 = arith.constant 2 : index
    %c0_222 = arith.constant 0 : index
    %c224_223 = arith.constant 224 : index
    %307 = vector.load %arg11[%c2_221, %c0_222, %c224_223] : memref<14x8x448xbf16, #tpu.memory_space<vmem>>, vector<1x8x96xbf16>
    %308 = vector.shape_cast %307 : vector<1x8x96xbf16> to vector<8x96xbf16>
    %c3_224 = arith.constant 3 : index
    %c0_225 = arith.constant 0 : index
    %c224_226 = arith.constant 224 : index
    %309 = vector.load %arg11[%c3_224, %c0_225, %c224_226] : memref<14x8x448xbf16, #tpu.memory_space<vmem>>, vector<1x8x96xbf16>
    %310 = vector.shape_cast %309 : vector<1x8x96xbf16> to vector<8x96xbf16>
    %311 = tpu.concatenate %306, %308, %310 in 1 : vector<8x96xbf16>, vector<8x96xbf16>, vector<8x96xbf16> -> vector<8x288xbf16>
    %cst_227 = arith.constant dense<0.000000e+00> : vector<8x32xf32>
    %312 = tpu.matmul %311, %156, %cst_227 {dimension_numbers = #tpu.dot_dimension_numbers<[1], [0], [0], [1], [0, 0, 1, 1], [], []>} : vector<8x288xbf16>, vector<288x32xbf16>, vector<8x32xf32> -> vector<8x32xf32>
    %313 = vector.broadcast %157 : vector<1x32xf32> to vector<8x32xf32>
    %314 = arith.addf %312, %313 : vector<8x32xf32>
    %cst_228 = arith.constant 0.000000e+00 : f32
    %315 = vector.broadcast %cst_228 : f32 to vector<8x32xf32>
    %316 = arith.maximumf %314, %315 : vector<8x32xf32>
    %317 = arith.truncf %316 : vector<8x32xf32> to vector<8x32xbf16>
    %c0_229 = arith.constant 0 : index
    %c352_230 = arith.constant 352 : index
    %318 = vector.load %arg12[%c0_229, %c352_230] : memref<8x1568xbf16, #tpu.memory_space<vmem>>, vector<8x32xbf16>
    tpu.vector_store %arg12[%c0_229, %c352_230], %317 {strides = array<i32>} : memref<8x1568xbf16, #tpu.memory_space<vmem>>, vector<8x32xbf16>,
    %c1_231 = arith.constant 1 : index
    %c0_232 = arith.constant 0 : index
    %c288_233 = arith.constant 288 : index
    %319 = vector.load %arg11[%c1_231, %c0_232, %c288_233] : memref<14x8x448xbf16, #tpu.memory_space<vmem>>, vector<1x8x96xbf16>
    %320 = vector.shape_cast %319 : vector<1x8x96xbf16> to vector<8x96xbf16>
    %c2_234 = arith.constant 2 : index
    %c0_235 = arith.constant 0 : index
    %c288_236 = arith.constant 288 : index
    %321 = vector.load %arg11[%c2_234, %c0_235, %c288_236] : memref<14x8x448xbf16, #tpu.memory_space<vmem>>, vector<1x8x96xbf16>
    %322 = vector.shape_cast %321 : vector<1x8x96xbf16> to vector<8x96xbf16>
    %c3_237 = arith.constant 3 : index
    %c0_238 = arith.constant 0 : index
    %c288_239 = arith.constant 288 : index
    %323 = vector.load %arg11[%c3_237, %c0_238, %c288_239] : memref<14x8x448xbf16, #tpu.memory_space<vmem>>, vector<1x8x96xbf16>
    %324 = vector.shape_cast %323 : vector<1x8x96xbf16> to vector<8x96xbf16>
    %325 = tpu.concatenate %320, %322, %324 in 1 : vector<8x96xbf16>, vector<8x96xbf16>, vector<8x96xbf16> -> vector<8x288xbf16>
    %cst_240 = arith.constant dense<0.000000e+00> : vector<8x32xf32>
    %326 = tpu.matmul %325, %156, %cst_240 {dimension_numbers = #tpu.dot_dimension_numbers<[1], [0], [0], [1], [0, 0, 1, 1], [], []>} : vector<8x288xbf16>, vector<288x32xbf16>, vector<8x32xf32> -> vector<8x32xf32>
    %327 = vector.broadcast %157 : vector<1x32xf32> to vector<8x32xf32>
    %328 = arith.addf %326, %327 : vector<8x32xf32>
    %cst_241 = arith.constant 0.000000e+00 : f32
    %329 = vector.broadcast %cst_241 : f32 to vector<8x32xf32>
    %330 = arith.maximumf %328, %329 : vector<8x32xf32>
    %331 = arith.truncf %330 : vector<8x32xf32> to vector<8x32xbf16>
    %c0_242 = arith.constant 0 : index
    %c384 = arith.constant 384 : index
    %332 = vector.load %arg12[%c0_242, %c384] : memref<8x1568xbf16, #tpu.memory_space<vmem>>, vector<8x32xbf16>
    tpu.vector_store %arg12[%c0_242, %c384], %331 {strides = array<i32>} : memref<8x1568xbf16, #tpu.memory_space<vmem>>, vector<8x32xbf16>,
    %c1_243 = arith.constant 1 : index
    %c0_244 = arith.constant 0 : index
    %c352_245 = arith.constant 352 : index
    %333 = vector.load %arg11[%c1_243, %c0_244, %c352_245] : memref<14x8x448xbf16, #tpu.memory_space<vmem>>, vector<1x8x96xbf16>
    %334 = vector.shape_cast %333 : vector<1x8x96xbf16> to vector<8x96xbf16>
    %c2_246 = arith.constant 2 : index
    %c0_247 = arith.constant 0 : index
    %c352_248 = arith.constant 352 : index
    %335 = vector.load %arg11[%c2_246, %c0_247, %c352_248] : memref<14x8x448xbf16, #tpu.memory_space<vmem>>, vector<1x8x96xbf16>
    %336 = vector.shape_cast %335 : vector<1x8x96xbf16> to vector<8x96xbf16>
    %c3_249 = arith.constant 3 : index
    %c0_250 = arith.constant 0 : index
    %c352_251 = arith.constant 352 : index
    %337 = vector.load %arg11[%c3_249, %c0_250, %c352_251] : memref<14x8x448xbf16, #tpu.memory_space<vmem>>, vector<1x8x96xbf16>
    %338 = vector.shape_cast %337 : vector<1x8x96xbf16> to vector<8x96xbf16>
    %339 = tpu.concatenate %334, %336, %338 in 1 : vector<8x96xbf16>, vector<8x96xbf16>, vector<8x96xbf16> -> vector<8x288xbf16>
    %cst_252 = arith.constant dense<0.000000e+00> : vector<8x32xf32>
    %340 = tpu.matmul %339, %156, %cst_252 {dimension_numbers = #tpu.dot_dimension_numbers<[1], [0], [0], [1], [0, 0, 1, 1], [], []>} : vector<8x288xbf16>, vector<288x32xbf16>, vector<8x32xf32> -> vector<8x32xf32>
    %341 = vector.broadcast %157 : vector<1x32xf32> to vector<8x32xf32>
    %342 = arith.addf %340, %341 : vector<8x32xf32>
    %cst_253 = arith.constant 0.000000e+00 : f32
    %343 = vector.broadcast %cst_253 : f32 to vector<8x32xf32>
    %344 = arith.maximumf %342, %343 : vector<8x32xf32>
    %345 = arith.truncf %344 : vector<8x32xf32> to vector<8x32xbf16>
    %c0_254 = arith.constant 0 : index
    %c416 = arith.constant 416 : index
    %346 = vector.load %arg12[%c0_254, %c416] : memref<8x1568xbf16, #tpu.memory_space<vmem>>, vector<8x32xbf16>
    tpu.vector_store %arg12[%c0_254, %c416], %345 {strides = array<i32>} : memref<8x1568xbf16, #tpu.memory_space<vmem>>, vector<8x32xbf16>,
    %c3_255 = arith.constant 3 : index
    %c0_256 = arith.constant 0 : index
    %c0_257 = arith.constant 0 : index
    %347 = vector.load %arg11[%c3_255, %c0_256, %c0_257] : memref<14x8x448xbf16, #tpu.memory_space<vmem>>, vector<1x8x64xbf16>
    %348 = vector.shape_cast %347 : vector<1x8x64xbf16> to vector<8x64xbf16>
    %349 = tpu.concatenate %159, %348 in 1 : vector<8x32xbf16>, vector<8x64xbf16> -> vector<8x96xbf16>
    %c4_258 = arith.constant 4 : index
    %c0_259 = arith.constant 0 : index
    %c0_260 = arith.constant 0 : index
    %350 = vector.load %arg11[%c4_258, %c0_259, %c0_260] : memref<14x8x448xbf16, #tpu.memory_space<vmem>>, vector<1x8x64xbf16>
    %351 = vector.shape_cast %350 : vector<1x8x64xbf16> to vector<8x64xbf16>
    %352 = tpu.concatenate %159, %351 in 1 : vector<8x32xbf16>, vector<8x64xbf16> -> vector<8x96xbf16>
    %c5_261 = arith.constant 5 : index
    %c0_262 = arith.constant 0 : index
    %c0_263 = arith.constant 0 : index
    %353 = vector.load %arg11[%c5_261, %c0_262, %c0_263] : memref<14x8x448xbf16, #tpu.memory_space<vmem>>, vector<1x8x64xbf16>
    %354 = vector.shape_cast %353 : vector<1x8x64xbf16> to vector<8x64xbf16>
    %355 = tpu.concatenate %159, %354 in 1 : vector<8x32xbf16>, vector<8x64xbf16> -> vector<8x96xbf16>
    %356 = tpu.concatenate %349, %352, %355 in 1 : vector<8x96xbf16>, vector<8x96xbf16>, vector<8x96xbf16> -> vector<8x288xbf16>
    %cst_264 = arith.constant dense<0.000000e+00> : vector<8x32xf32>
    %357 = tpu.matmul %356, %156, %cst_264 {dimension_numbers = #tpu.dot_dimension_numbers<[1], [0], [0], [1], [0, 0, 1, 1], [], []>} : vector<8x288xbf16>, vector<288x32xbf16>, vector<8x32xf32> -> vector<8x32xf32>
    %358 = vector.broadcast %157 : vector<1x32xf32> to vector<8x32xf32>
    %359 = arith.addf %357, %358 : vector<8x32xf32>
    %cst_265 = arith.constant 0.000000e+00 : f32
    %360 = vector.broadcast %cst_265 : f32 to vector<8x32xf32>
    %361 = arith.maximumf %359, %360 : vector<8x32xf32>
    %362 = arith.truncf %361 : vector<8x32xf32> to vector<8x32xbf16>
    %c0_266 = arith.constant 0 : index
    %c448 = arith.constant 448 : index
    %363 = vector.load %arg12[%c0_266, %c448] : memref<8x1568xbf16, #tpu.memory_space<vmem>>, vector<8x32xbf16>
    tpu.vector_store %arg12[%c0_266, %c448], %362 {strides = array<i32>} : memref<8x1568xbf16, #tpu.memory_space<vmem>>, vector<8x32xbf16>,
    %c3_267 = arith.constant 3 : index
    %c0_268 = arith.constant 0 : index
    %c32_269 = arith.constant 32 : index
    %364 = vector.load %arg11[%c3_267, %c0_268, %c32_269] : memref<14x8x448xbf16, #tpu.memory_space<vmem>>, vector<1x8x96xbf16>
    %365 = vector.shape_cast %364 : vector<1x8x96xbf16> to vector<8x96xbf16>
    %c4_270 = arith.constant 4 : index
    %c0_271 = arith.constant 0 : index
    %c32_272 = arith.constant 32 : index
    %366 = vector.load %arg11[%c4_270, %c0_271, %c32_272] : memref<14x8x448xbf16, #tpu.memory_space<vmem>>, vector<1x8x96xbf16>
    %367 = vector.shape_cast %366 : vector<1x8x96xbf16> to vector<8x96xbf16>
    %c5_273 = arith.constant 5 : index
    %c0_274 = arith.constant 0 : index
    %c32_275 = arith.constant 32 : index
    %368 = vector.load %arg11[%c5_273, %c0_274, %c32_275] : memref<14x8x448xbf16, #tpu.memory_space<vmem>>, vector<1x8x96xbf16>
    %369 = vector.shape_cast %368 : vector<1x8x96xbf16> to vector<8x96xbf16>
    %370 = tpu.concatenate %365, %367, %369 in 1 : vector<8x96xbf16>, vector<8x96xbf16>, vector<8x96xbf16> -> vector<8x288xbf16>
    %cst_276 = arith.constant dense<0.000000e+00> : vector<8x32xf32>
    %371 = tpu.matmul %370, %156, %cst_276 {dimension_numbers = #tpu.dot_dimension_numbers<[1], [0], [0], [1], [0, 0, 1, 1], [], []>} : vector<8x288xbf16>, vector<288x32xbf16>, vector<8x32xf32> -> vector<8x32xf32>
    %372 = vector.broadcast %157 : vector<1x32xf32> to vector<8x32xf32>
    %373 = arith.addf %371, %372 : vector<8x32xf32>
    %cst_277 = arith.constant 0.000000e+00 : f32
    %374 = vector.broadcast %cst_277 : f32 to vector<8x32xf32>
    %375 = arith.maximumf %373, %374 : vector<8x32xf32>
    %376 = arith.truncf %375 : vector<8x32xf32> to vector<8x32xbf16>
    %c0_278 = arith.constant 0 : index
    %c480 = arith.constant 480 : index
    %377 = vector.load %arg12[%c0_278, %c480] : memref<8x1568xbf16, #tpu.memory_space<vmem>>, vector<8x32xbf16>
    tpu.vector_store %arg12[%c0_278, %c480], %376 {strides = array<i32>} : memref<8x1568xbf16, #tpu.memory_space<vmem>>, vector<8x32xbf16>,
    %c3_279 = arith.constant 3 : index
    %c0_280 = arith.constant 0 : index
    %c96_281 = arith.constant 96 : index
    %378 = vector.load %arg11[%c3_279, %c0_280, %c96_281] : memref<14x8x448xbf16, #tpu.memory_space<vmem>>, vector<1x8x96xbf16>
    %379 = vector.shape_cast %378 : vector<1x8x96xbf16> to vector<8x96xbf16>
    %c4_282 = arith.constant 4 : index
    %c0_283 = arith.constant 0 : index
    %c96_284 = arith.constant 96 : index
    %380 = vector.load %arg11[%c4_282, %c0_283, %c96_284] : memref<14x8x448xbf16, #tpu.memory_space<vmem>>, vector<1x8x96xbf16>
    %381 = vector.shape_cast %380 : vector<1x8x96xbf16> to vector<8x96xbf16>
    %c5_285 = arith.constant 5 : index
    %c0_286 = arith.constant 0 : index
    %c96_287 = arith.constant 96 : index
    %382 = vector.load %arg11[%c5_285, %c0_286, %c96_287] : memref<14x8x448xbf16, #tpu.memory_space<vmem>>, vector<1x8x96xbf16>
    %383 = vector.shape_cast %382 : vector<1x8x96xbf16> to vector<8x96xbf16>
    %384 = tpu.concatenate %379, %381, %383 in 1 : vector<8x96xbf16>, vector<8x96xbf16>, vector<8x96xbf16> -> vector<8x288xbf16>
    %cst_288 = arith.constant dense<0.000000e+00> : vector<8x32xf32>
    %385 = tpu.matmul %384, %156, %cst_288 {dimension_numbers = #tpu.dot_dimension_numbers<[1], [0], [0], [1], [0, 0, 1, 1], [], []>} : vector<8x288xbf16>, vector<288x32xbf16>, vector<8x32xf32> -> vector<8x32xf32>
    %386 = vector.broadcast %157 : vector<1x32xf32> to vector<8x32xf32>
    %387 = arith.addf %385, %386 : vector<8x32xf32>
    %cst_289 = arith.constant 0.000000e+00 : f32
    %388 = vector.broadcast %cst_289 : f32 to vector<8x32xf32>
    %389 = arith.maximumf %387, %388 : vector<8x32xf32>
    %390 = arith.truncf %389 : vector<8x32xf32> to vector<8x32xbf16>
    %c0_290 = arith.constant 0 : index
    %c512 = arith.constant 512 : index
    %391 = vector.load %arg12[%c0_290, %c512] : memref<8x1568xbf16, #tpu.memory_space<vmem>>, vector<8x32xbf16>
    tpu.vector_store %arg12[%c0_290, %c512], %390 {strides = array<i32>} : memref<8x1568xbf16, #tpu.memory_space<vmem>>, vector<8x32xbf16>,
    %c3_291 = arith.constant 3 : index
    %c0_292 = arith.constant 0 : index
    %c160_293 = arith.constant 160 : index
    %392 = vector.load %arg11[%c3_291, %c0_292, %c160_293] : memref<14x8x448xbf16, #tpu.memory_space<vmem>>, vector<1x8x96xbf16>
    %393 = vector.shape_cast %392 : vector<1x8x96xbf16> to vector<8x96xbf16>
    %c4_294 = arith.constant 4 : index
    %c0_295 = arith.constant 0 : index
    %c160_296 = arith.constant 160 : index
    %394 = vector.load %arg11[%c4_294, %c0_295, %c160_296] : memref<14x8x448xbf16, #tpu.memory_space<vmem>>, vector<1x8x96xbf16>
    %395 = vector.shape_cast %394 : vector<1x8x96xbf16> to vector<8x96xbf16>
    %c5_297 = arith.constant 5 : index
    %c0_298 = arith.constant 0 : index
    %c160_299 = arith.constant 160 : index
    %396 = vector.load %arg11[%c5_297, %c0_298, %c160_299] : memref<14x8x448xbf16, #tpu.memory_space<vmem>>, vector<1x8x96xbf16>
    %397 = vector.shape_cast %396 : vector<1x8x96xbf16> to vector<8x96xbf16>
    %398 = tpu.concatenate %393, %395, %397 in 1 : vector<8x96xbf16>, vector<8x96xbf16>, vector<8x96xbf16> -> vector<8x288xbf16>
    %cst_300 = arith.constant dense<0.000000e+00> : vector<8x32xf32>
    %399 = tpu.matmul %398, %156, %cst_300 {dimension_numbers = #tpu.dot_dimension_numbers<[1], [0], [0], [1], [0, 0, 1, 1], [], []>} : vector<8x288xbf16>, vector<288x32xbf16>, vector<8x32xf32> -> vector<8x32xf32>
    %400 = vector.broadcast %157 : vector<1x32xf32> to vector<8x32xf32>
    %401 = arith.addf %399, %400 : vector<8x32xf32>
    %cst_301 = arith.constant 0.000000e+00 : f32
    %402 = vector.broadcast %cst_301 : f32 to vector<8x32xf32>
    %403 = arith.maximumf %401, %402 : vector<8x32xf32>
    %404 = arith.truncf %403 : vector<8x32xf32> to vector<8x32xbf16>
    %c0_302 = arith.constant 0 : index
    %c544 = arith.constant 544 : index
    %405 = vector.load %arg12[%c0_302, %c544] : memref<8x1568xbf16, #tpu.memory_space<vmem>>, vector<8x32xbf16>
    tpu.vector_store %arg12[%c0_302, %c544], %404 {strides = array<i32>} : memref<8x1568xbf16, #tpu.memory_space<vmem>>, vector<8x32xbf16>,
    %c3_303 = arith.constant 3 : index
    %c0_304 = arith.constant 0 : index
    %c224_305 = arith.constant 224 : index
    %406 = vector.load %arg11[%c3_303, %c0_304, %c224_305] : memref<14x8x448xbf16, #tpu.memory_space<vmem>>, vector<1x8x96xbf16>
    %407 = vector.shape_cast %406 : vector<1x8x96xbf16> to vector<8x96xbf16>
    %c4_306 = arith.constant 4 : index
    %c0_307 = arith.constant 0 : index
    %c224_308 = arith.constant 224 : index
    %408 = vector.load %arg11[%c4_306, %c0_307, %c224_308] : memref<14x8x448xbf16, #tpu.memory_space<vmem>>, vector<1x8x96xbf16>
    %409 = vector.shape_cast %408 : vector<1x8x96xbf16> to vector<8x96xbf16>
    %c5_309 = arith.constant 5 : index
    %c0_310 = arith.constant 0 : index
    %c224_311 = arith.constant 224 : index
    %410 = vector.load %arg11[%c5_309, %c0_310, %c224_311] : memref<14x8x448xbf16, #tpu.memory_space<vmem>>, vector<1x8x96xbf16>
    %411 = vector.shape_cast %410 : vector<1x8x96xbf16> to vector<8x96xbf16>
    %412 = tpu.concatenate %407, %409, %411 in 1 : vector<8x96xbf16>, vector<8x96xbf16>, vector<8x96xbf16> -> vector<8x288xbf16>
    %cst_312 = arith.constant dense<0.000000e+00> : vector<8x32xf32>
    %413 = tpu.matmul %412, %156, %cst_312 {dimension_numbers = #tpu.dot_dimension_numbers<[1], [0], [0], [1], [0, 0, 1, 1], [], []>} : vector<8x288xbf16>, vector<288x32xbf16>, vector<8x32xf32> -> vector<8x32xf32>
    %414 = vector.broadcast %157 : vector<1x32xf32> to vector<8x32xf32>
    %415 = arith.addf %413, %414 : vector<8x32xf32>
    %cst_313 = arith.constant 0.000000e+00 : f32
    %416 = vector.broadcast %cst_313 : f32 to vector<8x32xf32>
    %417 = arith.maximumf %415, %416 : vector<8x32xf32>
    %418 = arith.truncf %417 : vector<8x32xf32> to vector<8x32xbf16>
    %c0_314 = arith.constant 0 : index
    %c576 = arith.constant 576 : index
    %419 = vector.load %arg12[%c0_314, %c576] : memref<8x1568xbf16, #tpu.memory_space<vmem>>, vector<8x32xbf16>
    tpu.vector_store %arg12[%c0_314, %c576], %418 {strides = array<i32>} : memref<8x1568xbf16, #tpu.memory_space<vmem>>, vector<8x32xbf16>,
    %c3_315 = arith.constant 3 : index
    %c0_316 = arith.constant 0 : index
    %c288_317 = arith.constant 288 : index
    %420 = vector.load %arg11[%c3_315, %c0_316, %c288_317] : memref<14x8x448xbf16, #tpu.memory_space<vmem>>, vector<1x8x96xbf16>
    %421 = vector.shape_cast %420 : vector<1x8x96xbf16> to vector<8x96xbf16>
    %c4_318 = arith.constant 4 : index
    %c0_319 = arith.constant 0 : index
    %c288_320 = arith.constant 288 : index
    %422 = vector.load %arg11[%c4_318, %c0_319, %c288_320] : memref<14x8x448xbf16, #tpu.memory_space<vmem>>, vector<1x8x96xbf16>
    %423 = vector.shape_cast %422 : vector<1x8x96xbf16> to vector<8x96xbf16>
    %c5_321 = arith.constant 5 : index
    %c0_322 = arith.constant 0 : index
    %c288_323 = arith.constant 288 : index
    %424 = vector.load %arg11[%c5_321, %c0_322, %c288_323] : memref<14x8x448xbf16, #tpu.memory_space<vmem>>, vector<1x8x96xbf16>
    %425 = vector.shape_cast %424 : vector<1x8x96xbf16> to vector<8x96xbf16>
    %426 = tpu.concatenate %421, %423, %425 in 1 : vector<8x96xbf16>, vector<8x96xbf16>, vector<8x96xbf16> -> vector<8x288xbf16>
    %cst_324 = arith.constant dense<0.000000e+00> : vector<8x32xf32>
    %427 = tpu.matmul %426, %156, %cst_324 {dimension_numbers = #tpu.dot_dimension_numbers<[1], [0], [0], [1], [0, 0, 1, 1], [], []>} : vector<8x288xbf16>, vector<288x32xbf16>, vector<8x32xf32> -> vector<8x32xf32>
    %428 = vector.broadcast %157 : vector<1x32xf32> to vector<8x32xf32>
    %429 = arith.addf %427, %428 : vector<8x32xf32>
    %cst_325 = arith.constant 0.000000e+00 : f32
    %430 = vector.broadcast %cst_325 : f32 to vector<8x32xf32>
    %431 = arith.maximumf %429, %430 : vector<8x32xf32>
    %432 = arith.truncf %431 : vector<8x32xf32> to vector<8x32xbf16>
    %c0_326 = arith.constant 0 : index
    %c608 = arith.constant 608 : index
    %433 = vector.load %arg12[%c0_326, %c608] : memref<8x1568xbf16, #tpu.memory_space<vmem>>, vector<8x32xbf16>
    tpu.vector_store %arg12[%c0_326, %c608], %432 {strides = array<i32>} : memref<8x1568xbf16, #tpu.memory_space<vmem>>, vector<8x32xbf16>,
    %c3_327 = arith.constant 3 : index
    %c0_328 = arith.constant 0 : index
    %c352_329 = arith.constant 352 : index
    %434 = vector.load %arg11[%c3_327, %c0_328, %c352_329] : memref<14x8x448xbf16, #tpu.memory_space<vmem>>, vector<1x8x96xbf16>
    %435 = vector.shape_cast %434 : vector<1x8x96xbf16> to vector<8x96xbf16>
    %c4_330 = arith.constant 4 : index
    %c0_331 = arith.constant 0 : index
    %c352_332 = arith.constant 352 : index
    %436 = vector.load %arg11[%c4_330, %c0_331, %c352_332] : memref<14x8x448xbf16, #tpu.memory_space<vmem>>, vector<1x8x96xbf16>
    %437 = vector.shape_cast %436 : vector<1x8x96xbf16> to vector<8x96xbf16>
    %c5_333 = arith.constant 5 : index
    %c0_334 = arith.constant 0 : index
    %c352_335 = arith.constant 352 : index
    %438 = vector.load %arg11[%c5_333, %c0_334, %c352_335] : memref<14x8x448xbf16, #tpu.memory_space<vmem>>, vector<1x8x96xbf16>
    %439 = vector.shape_cast %438 : vector<1x8x96xbf16> to vector<8x96xbf16>
    %440 = tpu.concatenate %435, %437, %439 in 1 : vector<8x96xbf16>, vector<8x96xbf16>, vector<8x96xbf16> -> vector<8x288xbf16>
    %cst_336 = arith.constant dense<0.000000e+00> : vector<8x32xf32>
    %441 = tpu.matmul %440, %156, %cst_336 {dimension_numbers = #tpu.dot_dimension_numbers<[1], [0], [0], [1], [0, 0, 1, 1], [], []>} : vector<8x288xbf16>, vector<288x32xbf16>, vector<8x32xf32> -> vector<8x32xf32>
    %442 = vector.broadcast %157 : vector<1x32xf32> to vector<8x32xf32>
    %443 = arith.addf %441, %442 : vector<8x32xf32>
    %cst_337 = arith.constant 0.000000e+00 : f32
    %444 = vector.broadcast %cst_337 : f32 to vector<8x32xf32>
    %445 = arith.maximumf %443, %444 : vector<8x32xf32>
    %446 = arith.truncf %445 : vector<8x32xf32> to vector<8x32xbf16>
    %c0_338 = arith.constant 0 : index
    %c640 = arith.constant 640 : index
    %447 = vector.load %arg12[%c0_338, %c640] : memref<8x1568xbf16, #tpu.memory_space<vmem>>, vector<8x32xbf16>
    tpu.vector_store %arg12[%c0_338, %c640], %446 {strides = array<i32>} : memref<8x1568xbf16, #tpu.memory_space<vmem>>, vector<8x32xbf16>,
    %c5_339 = arith.constant 5 : index
    %c0_340 = arith.constant 0 : index
    %c0_341 = arith.constant 0 : index
    %448 = vector.load %arg11[%c5_339, %c0_340, %c0_341] : memref<14x8x448xbf16, #tpu.memory_space<vmem>>, vector<1x8x64xbf16>
    %449 = vector.shape_cast %448 : vector<1x8x64xbf16> to vector<8x64xbf16>
    %450 = tpu.concatenate %159, %449 in 1 : vector<8x32xbf16>, vector<8x64xbf16> -> vector<8x96xbf16>
    %c6_342 = arith.constant 6 : index
    %c0_343 = arith.constant 0 : index
    %c0_344 = arith.constant 0 : index
    %451 = vector.load %arg11[%c6_342, %c0_343, %c0_344] : memref<14x8x448xbf16, #tpu.memory_space<vmem>>, vector<1x8x64xbf16>
    %452 = vector.shape_cast %451 : vector<1x8x64xbf16> to vector<8x64xbf16>
    %453 = tpu.concatenate %159, %452 in 1 : vector<8x32xbf16>, vector<8x64xbf16> -> vector<8x96xbf16>
    %c7_345 = arith.constant 7 : index
    %c0_346 = arith.constant 0 : index
    %c0_347 = arith.constant 0 : index
    %454 = vector.load %arg11[%c7_345, %c0_346, %c0_347] : memref<14x8x448xbf16, #tpu.memory_space<vmem>>, vector<1x8x64xbf16>
    %455 = vector.shape_cast %454 : vector<1x8x64xbf16> to vector<8x64xbf16>
    %456 = tpu.concatenate %159, %455 in 1 : vector<8x32xbf16>, vector<8x64xbf16> -> vector<8x96xbf16>
    %457 = tpu.concatenate %450, %453, %456 in 1 : vector<8x96xbf16>, vector<8x96xbf16>, vector<8x96xbf16> -> vector<8x288xbf16>
    %cst_348 = arith.constant dense<0.000000e+00> : vector<8x32xf32>
    %458 = tpu.matmul %457, %156, %cst_348 {dimension_numbers = #tpu.dot_dimension_numbers<[1], [0], [0], [1], [0, 0, 1, 1], [], []>} : vector<8x288xbf16>, vector<288x32xbf16>, vector<8x32xf32> -> vector<8x32xf32>
    %459 = vector.broadcast %157 : vector<1x32xf32> to vector<8x32xf32>
    %460 = arith.addf %458, %459 : vector<8x32xf32>
    %cst_349 = arith.constant 0.000000e+00 : f32
    %461 = vector.broadcast %cst_349 : f32 to vector<8x32xf32>
    %462 = arith.maximumf %460, %461 : vector<8x32xf32>
    %463 = arith.truncf %462 : vector<8x32xf32> to vector<8x32xbf16>
    %c0_350 = arith.constant 0 : index
    %c672 = arith.constant 672 : index
    %464 = vector.load %arg12[%c0_350, %c672] : memref<8x1568xbf16, #tpu.memory_space<vmem>>, vector<8x32xbf16>
    tpu.vector_store %arg12[%c0_350, %c672], %463 {strides = array<i32>} : memref<8x1568xbf16, #tpu.memory_space<vmem>>, vector<8x32xbf16>,
    %c5_351 = arith.constant 5 : index
    %c0_352 = arith.constant 0 : index
    %c32_353 = arith.constant 32 : index
    %465 = vector.load %arg11[%c5_351, %c0_352, %c32_353] : memref<14x8x448xbf16, #tpu.memory_space<vmem>>, vector<1x8x96xbf16>
    %466 = vector.shape_cast %465 : vector<1x8x96xbf16> to vector<8x96xbf16>
    %c6_354 = arith.constant 6 : index
    %c0_355 = arith.constant 0 : index
    %c32_356 = arith.constant 32 : index
    %467 = vector.load %arg11[%c6_354, %c0_355, %c32_356] : memref<14x8x448xbf16, #tpu.memory_space<vmem>>, vector<1x8x96xbf16>
    %468 = vector.shape_cast %467 : vector<1x8x96xbf16> to vector<8x96xbf16>
    %c7_357 = arith.constant 7 : index
    %c0_358 = arith.constant 0 : index
    %c32_359 = arith.constant 32 : index
    %469 = vector.load %arg11[%c7_357, %c0_358, %c32_359] : memref<14x8x448xbf16, #tpu.memory_space<vmem>>, vector<1x8x96xbf16>
    %470 = vector.shape_cast %469 : vector<1x8x96xbf16> to vector<8x96xbf16>
    %471 = tpu.concatenate %466, %468, %470 in 1 : vector<8x96xbf16>, vector<8x96xbf16>, vector<8x96xbf16> -> vector<8x288xbf16>
    %cst_360 = arith.constant dense<0.000000e+00> : vector<8x32xf32>
    %472 = tpu.matmul %471, %156, %cst_360 {dimension_numbers = #tpu.dot_dimension_numbers<[1], [0], [0], [1], [0, 0, 1, 1], [], []>} : vector<8x288xbf16>, vector<288x32xbf16>, vector<8x32xf32> -> vector<8x32xf32>
    %473 = vector.broadcast %157 : vector<1x32xf32> to vector<8x32xf32>
    %474 = arith.addf %472, %473 : vector<8x32xf32>
    %cst_361 = arith.constant 0.000000e+00 : f32
    %475 = vector.broadcast %cst_361 : f32 to vector<8x32xf32>
    %476 = arith.maximumf %474, %475 : vector<8x32xf32>
    %477 = arith.truncf %476 : vector<8x32xf32> to vector<8x32xbf16>
    %c0_362 = arith.constant 0 : index
    %c704 = arith.constant 704 : index
    %478 = vector.load %arg12[%c0_362, %c704] : memref<8x1568xbf16, #tpu.memory_space<vmem>>, vector<8x32xbf16>
    tpu.vector_store %arg12[%c0_362, %c704], %477 {strides = array<i32>} : memref<8x1568xbf16, #tpu.memory_space<vmem>>, vector<8x32xbf16>,
    %c5_363 = arith.constant 5 : index
    %c0_364 = arith.constant 0 : index
    %c96_365 = arith.constant 96 : index
    %479 = vector.load %arg11[%c5_363, %c0_364, %c96_365] : memref<14x8x448xbf16, #tpu.memory_space<vmem>>, vector<1x8x96xbf16>
    %480 = vector.shape_cast %479 : vector<1x8x96xbf16> to vector<8x96xbf16>
    %c6_366 = arith.constant 6 : index
    %c0_367 = arith.constant 0 : index
    %c96_368 = arith.constant 96 : index
    %481 = vector.load %arg11[%c6_366, %c0_367, %c96_368] : memref<14x8x448xbf16, #tpu.memory_space<vmem>>, vector<1x8x96xbf16>
    %482 = vector.shape_cast %481 : vector<1x8x96xbf16> to vector<8x96xbf16>
    %c7_369 = arith.constant 7 : index
    %c0_370 = arith.constant 0 : index
    %c96_371 = arith.constant 96 : index
    %483 = vector.load %arg11[%c7_369, %c0_370, %c96_371] : memref<14x8x448xbf16, #tpu.memory_space<vmem>>, vector<1x8x96xbf16>
    %484 = vector.shape_cast %483 : vector<1x8x96xbf16> to vector<8x96xbf16>
    %485 = tpu.concatenate %480, %482, %484 in 1 : vector<8x96xbf16>, vector<8x96xbf16>, vector<8x96xbf16> -> vector<8x288xbf16>
    %cst_372 = arith.constant dense<0.000000e+00> : vector<8x32xf32>
    %486 = tpu.matmul %485, %156, %cst_372 {dimension_numbers = #tpu.dot_dimension_numbers<[1], [0], [0], [1], [0, 0, 1, 1], [], []>} : vector<8x288xbf16>, vector<288x32xbf16>, vector<8x32xf32> -> vector<8x32xf32>
    %487 = vector.broadcast %157 : vector<1x32xf32> to vector<8x32xf32>
    %488 = arith.addf %486, %487 : vector<8x32xf32>
    %cst_373 = arith.constant 0.000000e+00 : f32
    %489 = vector.broadcast %cst_373 : f32 to vector<8x32xf32>
    %490 = arith.maximumf %488, %489 : vector<8x32xf32>
    %491 = arith.truncf %490 : vector<8x32xf32> to vector<8x32xbf16>
    %c0_374 = arith.constant 0 : index
    %c736 = arith.constant 736 : index
    %492 = vector.load %arg12[%c0_374, %c736] : memref<8x1568xbf16, #tpu.memory_space<vmem>>, vector<8x32xbf16>
    tpu.vector_store %arg12[%c0_374, %c736], %491 {strides = array<i32>} : memref<8x1568xbf16, #tpu.memory_space<vmem>>, vector<8x32xbf16>,
    %c5_375 = arith.constant 5 : index
    %c0_376 = arith.constant 0 : index
    %c160_377 = arith.constant 160 : index
    %493 = vector.load %arg11[%c5_375, %c0_376, %c160_377] : memref<14x8x448xbf16, #tpu.memory_space<vmem>>, vector<1x8x96xbf16>
    %494 = vector.shape_cast %493 : vector<1x8x96xbf16> to vector<8x96xbf16>
    %c6_378 = arith.constant 6 : index
    %c0_379 = arith.constant 0 : index
    %c160_380 = arith.constant 160 : index
    %495 = vector.load %arg11[%c6_378, %c0_379, %c160_380] : memref<14x8x448xbf16, #tpu.memory_space<vmem>>, vector<1x8x96xbf16>
    %496 = vector.shape_cast %495 : vector<1x8x96xbf16> to vector<8x96xbf16>
    %c7_381 = arith.constant 7 : index
    %c0_382 = arith.constant 0 : index
    %c160_383 = arith.constant 160 : index
    %497 = vector.load %arg11[%c7_381, %c0_382, %c160_383] : memref<14x8x448xbf16, #tpu.memory_space<vmem>>, vector<1x8x96xbf16>
    %498 = vector.shape_cast %497 : vector<1x8x96xbf16> to vector<8x96xbf16>
    %499 = tpu.concatenate %494, %496, %498 in 1 : vector<8x96xbf16>, vector<8x96xbf16>, vector<8x96xbf16> -> vector<8x288xbf16>
    %cst_384 = arith.constant dense<0.000000e+00> : vector<8x32xf32>
    %500 = tpu.matmul %499, %156, %cst_384 {dimension_numbers = #tpu.dot_dimension_numbers<[1], [0], [0], [1], [0, 0, 1, 1], [], []>} : vector<8x288xbf16>, vector<288x32xbf16>, vector<8x32xf32> -> vector<8x32xf32>
    %501 = vector.broadcast %157 : vector<1x32xf32> to vector<8x32xf32>
    %502 = arith.addf %500, %501 : vector<8x32xf32>
    %cst_385 = arith.constant 0.000000e+00 : f32
    %503 = vector.broadcast %cst_385 : f32 to vector<8x32xf32>
    %504 = arith.maximumf %502, %503 : vector<8x32xf32>
    %505 = arith.truncf %504 : vector<8x32xf32> to vector<8x32xbf16>
    %c0_386 = arith.constant 0 : index
    %c768 = arith.constant 768 : index
    %506 = vector.load %arg12[%c0_386, %c768] : memref<8x1568xbf16, #tpu.memory_space<vmem>>, vector<8x32xbf16>
    tpu.vector_store %arg12[%c0_386, %c768], %505 {strides = array<i32>} : memref<8x1568xbf16, #tpu.memory_space<vmem>>, vector<8x32xbf16>,
    %c5_387 = arith.constant 5 : index
    %c0_388 = arith.constant 0 : index
    %c224_389 = arith.constant 224 : index
    %507 = vector.load %arg11[%c5_387, %c0_388, %c224_389] : memref<14x8x448xbf16, #tpu.memory_space<vmem>>, vector<1x8x96xbf16>
    %508 = vector.shape_cast %507 : vector<1x8x96xbf16> to vector<8x96xbf16>
    %c6_390 = arith.constant 6 : index
    %c0_391 = arith.constant 0 : index
    %c224_392 = arith.constant 224 : index
    %509 = vector.load %arg11[%c6_390, %c0_391, %c224_392] : memref<14x8x448xbf16, #tpu.memory_space<vmem>>, vector<1x8x96xbf16>
    %510 = vector.shape_cast %509 : vector<1x8x96xbf16> to vector<8x96xbf16>
    %c7_393 = arith.constant 7 : index
    %c0_394 = arith.constant 0 : index
    %c224_395 = arith.constant 224 : index
    %511 = vector.load %arg11[%c7_393, %c0_394, %c224_395] : memref<14x8x448xbf16, #tpu.memory_space<vmem>>, vector<1x8x96xbf16>
    %512 = vector.shape_cast %511 : vector<1x8x96xbf16> to vector<8x96xbf16>
    %513 = tpu.concatenate %508, %510, %512 in 1 : vector<8x96xbf16>, vector<8x96xbf16>, vector<8x96xbf16> -> vector<8x288xbf16>
    %cst_396 = arith.constant dense<0.000000e+00> : vector<8x32xf32>
    %514 = tpu.matmul %513, %156, %cst_396 {dimension_numbers = #tpu.dot_dimension_numbers<[1], [0], [0], [1], [0, 0, 1, 1], [], []>} : vector<8x288xbf16>, vector<288x32xbf16>, vector<8x32xf32> -> vector<8x32xf32>
    %515 = vector.broadcast %157 : vector<1x32xf32> to vector<8x32xf32>
    %516 = arith.addf %514, %515 : vector<8x32xf32>
    %cst_397 = arith.constant 0.000000e+00 : f32
    %517 = vector.broadcast %cst_397 : f32 to vector<8x32xf32>
    %518 = arith.maximumf %516, %517 : vector<8x32xf32>
    %519 = arith.truncf %518 : vector<8x32xf32> to vector<8x32xbf16>
    %c0_398 = arith.constant 0 : index
    %c800 = arith.constant 800 : index
    %520 = vector.load %arg12[%c0_398, %c800] : memref<8x1568xbf16, #tpu.memory_space<vmem>>, vector<8x32xbf16>
    tpu.vector_store %arg12[%c0_398, %c800], %519 {strides = array<i32>} : memref<8x1568xbf16, #tpu.memory_space<vmem>>, vector<8x32xbf16>,
    %c5_399 = arith.constant 5 : index
    %c0_400 = arith.constant 0 : index
    %c288_401 = arith.constant 288 : index
    %521 = vector.load %arg11[%c5_399, %c0_400, %c288_401] : memref<14x8x448xbf16, #tpu.memory_space<vmem>>, vector<1x8x96xbf16>
    %522 = vector.shape_cast %521 : vector<1x8x96xbf16> to vector<8x96xbf16>
    %c6_402 = arith.constant 6 : index
    %c0_403 = arith.constant 0 : index
    %c288_404 = arith.constant 288 : index
    %523 = vector.load %arg11[%c6_402, %c0_403, %c288_404] : memref<14x8x448xbf16, #tpu.memory_space<vmem>>, vector<1x8x96xbf16>
    %524 = vector.shape_cast %523 : vector<1x8x96xbf16> to vector<8x96xbf16>
    %c7_405 = arith.constant 7 : index
    %c0_406 = arith.constant 0 : index
    %c288_407 = arith.constant 288 : index
    %525 = vector.load %arg11[%c7_405, %c0_406, %c288_407] : memref<14x8x448xbf16, #tpu.memory_space<vmem>>, vector<1x8x96xbf16>
    %526 = vector.shape_cast %525 : vector<1x8x96xbf16> to vector<8x96xbf16>
    %527 = tpu.concatenate %522, %524, %526 in 1 : vector<8x96xbf16>, vector<8x96xbf16>, vector<8x96xbf16> -> vector<8x288xbf16>
    %cst_408 = arith.constant dense<0.000000e+00> : vector<8x32xf32>
    %528 = tpu.matmul %527, %156, %cst_408 {dimension_numbers = #tpu.dot_dimension_numbers<[1], [0], [0], [1], [0, 0, 1, 1], [], []>} : vector<8x288xbf16>, vector<288x32xbf16>, vector<8x32xf32> -> vector<8x32xf32>
    %529 = vector.broadcast %157 : vector<1x32xf32> to vector<8x32xf32>
    %530 = arith.addf %528, %529 : vector<8x32xf32>
    %cst_409 = arith.constant 0.000000e+00 : f32
    %531 = vector.broadcast %cst_409 : f32 to vector<8x32xf32>
    %532 = arith.maximumf %530, %531 : vector<8x32xf32>
    %533 = arith.truncf %532 : vector<8x32xf32> to vector<8x32xbf16>
    %c0_410 = arith.constant 0 : index
    %c832 = arith.constant 832 : index
    %534 = vector.load %arg12[%c0_410, %c832] : memref<8x1568xbf16, #tpu.memory_space<vmem>>, vector<8x32xbf16>
    tpu.vector_store %arg12[%c0_410, %c832], %533 {strides = array<i32>} : memref<8x1568xbf16, #tpu.memory_space<vmem>>, vector<8x32xbf16>,
    %c5_411 = arith.constant 5 : index
    %c0_412 = arith.constant 0 : index
    %c352_413 = arith.constant 352 : index
    %535 = vector.load %arg11[%c5_411, %c0_412, %c352_413] : memref<14x8x448xbf16, #tpu.memory_space<vmem>>, vector<1x8x96xbf16>
    %536 = vector.shape_cast %535 : vector<1x8x96xbf16> to vector<8x96xbf16>
    %c6_414 = arith.constant 6 : index
    %c0_415 = arith.constant 0 : index
    %c352_416 = arith.constant 352 : index
    %537 = vector.load %arg11[%c6_414, %c0_415, %c352_416] : memref<14x8x448xbf16, #tpu.memory_space<vmem>>, vector<1x8x96xbf16>
    %538 = vector.shape_cast %537 : vector<1x8x96xbf16> to vector<8x96xbf16>
    %c7_417 = arith.constant 7 : index
    %c0_418 = arith.constant 0 : index
    %c352_419 = arith.constant 352 : index
    %539 = vector.load %arg11[%c7_417, %c0_418, %c352_419] : memref<14x8x448xbf16, #tpu.memory_space<vmem>>, vector<1x8x96xbf16>
    %540 = vector.shape_cast %539 : vector<1x8x96xbf16> to vector<8x96xbf16>
    %541 = tpu.concatenate %536, %538, %540 in 1 : vector<8x96xbf16>, vector<8x96xbf16>, vector<8x96xbf16> -> vector<8x288xbf16>
    %cst_420 = arith.constant dense<0.000000e+00> : vector<8x32xf32>
    %542 = tpu.matmul %541, %156, %cst_420 {dimension_numbers = #tpu.dot_dimension_numbers<[1], [0], [0], [1], [0, 0, 1, 1], [], []>} : vector<8x288xbf16>, vector<288x32xbf16>, vector<8x32xf32> -> vector<8x32xf32>
    %543 = vector.broadcast %157 : vector<1x32xf32> to vector<8x32xf32>
    %544 = arith.addf %542, %543 : vector<8x32xf32>
    %cst_421 = arith.constant 0.000000e+00 : f32
    %545 = vector.broadcast %cst_421 : f32 to vector<8x32xf32>
    %546 = arith.maximumf %544, %545 : vector<8x32xf32>
    %547 = arith.truncf %546 : vector<8x32xf32> to vector<8x32xbf16>
    %c0_422 = arith.constant 0 : index
    %c864 = arith.constant 864 : index
    %548 = vector.load %arg12[%c0_422, %c864] : memref<8x1568xbf16, #tpu.memory_space<vmem>>, vector<8x32xbf16>
    tpu.vector_store %arg12[%c0_422, %c864], %547 {strides = array<i32>} : memref<8x1568xbf16, #tpu.memory_space<vmem>>, vector<8x32xbf16>,
    %c7_423 = arith.constant 7 : index
    %c0_424 = arith.constant 0 : index
    %c0_425 = arith.constant 0 : index
    %549 = vector.load %arg11[%c7_423, %c0_424, %c0_425] : memref<14x8x448xbf16, #tpu.memory_space<vmem>>, vector<1x8x64xbf16>
    %550 = vector.shape_cast %549 : vector<1x8x64xbf16> to vector<8x64xbf16>
    %551 = tpu.concatenate %159, %550 in 1 : vector<8x32xbf16>, vector<8x64xbf16> -> vector<8x96xbf16>
    %c8_426 = arith.constant 8 : index
    %c0_427 = arith.constant 0 : index
    %c0_428 = arith.constant 0 : index
    %552 = vector.load %arg11[%c8_426, %c0_427, %c0_428] : memref<14x8x448xbf16, #tpu.memory_space<vmem>>, vector<1x8x64xbf16>
    %553 = vector.shape_cast %552 : vector<1x8x64xbf16> to vector<8x64xbf16>
    %554 = tpu.concatenate %159, %553 in 1 : vector<8x32xbf16>, vector<8x64xbf16> -> vector<8x96xbf16>
    %c9_429 = arith.constant 9 : index
    %c0_430 = arith.constant 0 : index
    %c0_431 = arith.constant 0 : index
    %555 = vector.load %arg11[%c9_429, %c0_430, %c0_431] : memref<14x8x448xbf16, #tpu.memory_space<vmem>>, vector<1x8x64xbf16>
    %556 = vector.shape_cast %555 : vector<1x8x64xbf16> to vector<8x64xbf16>
    %557 = tpu.concatenate %159, %556 in 1 : vector<8x32xbf16>, vector<8x64xbf16> -> vector<8x96xbf16>
    %558 = tpu.concatenate %551, %554, %557 in 1 : vector<8x96xbf16>, vector<8x96xbf16>, vector<8x96xbf16> -> vector<8x288xbf16>
    %cst_432 = arith.constant dense<0.000000e+00> : vector<8x32xf32>
    %559 = tpu.matmul %558, %156, %cst_432 {dimension_numbers = #tpu.dot_dimension_numbers<[1], [0], [0], [1], [0, 0, 1, 1], [], []>} : vector<8x288xbf16>, vector<288x32xbf16>, vector<8x32xf32> -> vector<8x32xf32>
    %560 = vector.broadcast %157 : vector<1x32xf32> to vector<8x32xf32>
    %561 = arith.addf %559, %560 : vector<8x32xf32>
    %cst_433 = arith.constant 0.000000e+00 : f32
    %562 = vector.broadcast %cst_433 : f32 to vector<8x32xf32>
    %563 = arith.maximumf %561, %562 : vector<8x32xf32>
    %564 = arith.truncf %563 : vector<8x32xf32> to vector<8x32xbf16>
    %c0_434 = arith.constant 0 : index
    %c896 = arith.constant 896 : index
    %565 = vector.load %arg12[%c0_434, %c896] : memref<8x1568xbf16, #tpu.memory_space<vmem>>, vector<8x32xbf16>
    tpu.vector_store %arg12[%c0_434, %c896], %564 {strides = array<i32>} : memref<8x1568xbf16, #tpu.memory_space<vmem>>, vector<8x32xbf16>,
    %c7_435 = arith.constant 7 : index
    %c0_436 = arith.constant 0 : index
    %c32_437 = arith.constant 32 : index
    %566 = vector.load %arg11[%c7_435, %c0_436, %c32_437] : memref<14x8x448xbf16, #tpu.memory_space<vmem>>, vector<1x8x96xbf16>
    %567 = vector.shape_cast %566 : vector<1x8x96xbf16> to vector<8x96xbf16>
    %c8_438 = arith.constant 8 : index
    %c0_439 = arith.constant 0 : index
    %c32_440 = arith.constant 32 : index
    %568 = vector.load %arg11[%c8_438, %c0_439, %c32_440] : memref<14x8x448xbf16, #tpu.memory_space<vmem>>, vector<1x8x96xbf16>
    %569 = vector.shape_cast %568 : vector<1x8x96xbf16> to vector<8x96xbf16>
    %c9_441 = arith.constant 9 : index
    %c0_442 = arith.constant 0 : index
    %c32_443 = arith.constant 32 : index
    %570 = vector.load %arg11[%c9_441, %c0_442, %c32_443] : memref<14x8x448xbf16, #tpu.memory_space<vmem>>, vector<1x8x96xbf16>
    %571 = vector.shape_cast %570 : vector<1x8x96xbf16> to vector<8x96xbf16>
    %572 = tpu.concatenate %567, %569, %571 in 1 : vector<8x96xbf16>, vector<8x96xbf16>, vector<8x96xbf16> -> vector<8x288xbf16>
    %cst_444 = arith.constant dense<0.000000e+00> : vector<8x32xf32>
    %573 = tpu.matmul %572, %156, %cst_444 {dimension_numbers = #tpu.dot_dimension_numbers<[1], [0], [0], [1], [0, 0, 1, 1], [], []>} : vector<8x288xbf16>, vector<288x32xbf16>, vector<8x32xf32> -> vector<8x32xf32>
    %574 = vector.broadcast %157 : vector<1x32xf32> to vector<8x32xf32>
    %575 = arith.addf %573, %574 : vector<8x32xf32>
    %cst_445 = arith.constant 0.000000e+00 : f32
    %576 = vector.broadcast %cst_445 : f32 to vector<8x32xf32>
    %577 = arith.maximumf %575, %576 : vector<8x32xf32>
    %578 = arith.truncf %577 : vector<8x32xf32> to vector<8x32xbf16>
    %c0_446 = arith.constant 0 : index
    %c928 = arith.constant 928 : index
    %579 = vector.load %arg12[%c0_446, %c928] : memref<8x1568xbf16, #tpu.memory_space<vmem>>, vector<8x32xbf16>
    tpu.vector_store %arg12[%c0_446, %c928], %578 {strides = array<i32>} : memref<8x1568xbf16, #tpu.memory_space<vmem>>, vector<8x32xbf16>,
    %c7_447 = arith.constant 7 : index
    %c0_448 = arith.constant 0 : index
    %c96_449 = arith.constant 96 : index
    %580 = vector.load %arg11[%c7_447, %c0_448, %c96_449] : memref<14x8x448xbf16, #tpu.memory_space<vmem>>, vector<1x8x96xbf16>
    %581 = vector.shape_cast %580 : vector<1x8x96xbf16> to vector<8x96xbf16>
    %c8_450 = arith.constant 8 : index
    %c0_451 = arith.constant 0 : index
    %c96_452 = arith.constant 96 : index
    %582 = vector.load %arg11[%c8_450, %c0_451, %c96_452] : memref<14x8x448xbf16, #tpu.memory_space<vmem>>, vector<1x8x96xbf16>
    %583 = vector.shape_cast %582 : vector<1x8x96xbf16> to vector<8x96xbf16>
    %c9_453 = arith.constant 9 : index
    %c0_454 = arith.constant 0 : index
    %c96_455 = arith.constant 96 : index
    %584 = vector.load %arg11[%c9_453, %c0_454, %c96_455] : memref<14x8x448xbf16, #tpu.memory_space<vmem>>, vector<1x8x96xbf16>
    %585 = vector.shape_cast %584 : vector<1x8x96xbf16> to vector<8x96xbf16>
    %586 = tpu.concatenate %581, %583, %585 in 1 : vector<8x96xbf16>, vector<8x96xbf16>, vector<8x96xbf16> -> vector<8x288xbf16>
    %cst_456 = arith.constant dense<0.000000e+00> : vector<8x32xf32>
    %587 = tpu.matmul %586, %156, %cst_456 {dimension_numbers = #tpu.dot_dimension_numbers<[1], [0], [0], [1], [0, 0, 1, 1], [], []>} : vector<8x288xbf16>, vector<288x32xbf16>, vector<8x32xf32> -> vector<8x32xf32>
    %588 = vector.broadcast %157 : vector<1x32xf32> to vector<8x32xf32>
    %589 = arith.addf %587, %588 : vector<8x32xf32>
    %cst_457 = arith.constant 0.000000e+00 : f32
    %590 = vector.broadcast %cst_457 : f32 to vector<8x32xf32>
    %591 = arith.maximumf %589, %590 : vector<8x32xf32>
    %592 = arith.truncf %591 : vector<8x32xf32> to vector<8x32xbf16>
    %c0_458 = arith.constant 0 : index
    %c960 = arith.constant 960 : index
    %593 = vector.load %arg12[%c0_458, %c960] : memref<8x1568xbf16, #tpu.memory_space<vmem>>, vector<8x32xbf16>
    tpu.vector_store %arg12[%c0_458, %c960], %592 {strides = array<i32>} : memref<8x1568xbf16, #tpu.memory_space<vmem>>, vector<8x32xbf16>,
    %c7_459 = arith.constant 7 : index
    %c0_460 = arith.constant 0 : index
    %c160_461 = arith.constant 160 : index
    %594 = vector.load %arg11[%c7_459, %c0_460, %c160_461] : memref<14x8x448xbf16, #tpu.memory_space<vmem>>, vector<1x8x96xbf16>
    %595 = vector.shape_cast %594 : vector<1x8x96xbf16> to vector<8x96xbf16>
    %c8_462 = arith.constant 8 : index
    %c0_463 = arith.constant 0 : index
    %c160_464 = arith.constant 160 : index
    %596 = vector.load %arg11[%c8_462, %c0_463, %c160_464] : memref<14x8x448xbf16, #tpu.memory_space<vmem>>, vector<1x8x96xbf16>
    %597 = vector.shape_cast %596 : vector<1x8x96xbf16> to vector<8x96xbf16>
    %c9_465 = arith.constant 9 : index
    %c0_466 = arith.constant 0 : index
    %c160_467 = arith.constant 160 : index
    %598 = vector.load %arg11[%c9_465, %c0_466, %c160_467] : memref<14x8x448xbf16, #tpu.memory_space<vmem>>, vector<1x8x96xbf16>
    %599 = vector.shape_cast %598 : vector<1x8x96xbf16> to vector<8x96xbf16>
    %600 = tpu.concatenate %595, %597, %599 in 1 : vector<8x96xbf16>, vector<8x96xbf16>, vector<8x96xbf16> -> vector<8x288xbf16>
    %cst_468 = arith.constant dense<0.000000e+00> : vector<8x32xf32>
    %601 = tpu.matmul %600, %156, %cst_468 {dimension_numbers = #tpu.dot_dimension_numbers<[1], [0], [0], [1], [0, 0, 1, 1], [], []>} : vector<8x288xbf16>, vector<288x32xbf16>, vector<8x32xf32> -> vector<8x32xf32>
    %602 = vector.broadcast %157 : vector<1x32xf32> to vector<8x32xf32>
    %603 = arith.addf %601, %602 : vector<8x32xf32>
    %cst_469 = arith.constant 0.000000e+00 : f32
    %604 = vector.broadcast %cst_469 : f32 to vector<8x32xf32>
    %605 = arith.maximumf %603, %604 : vector<8x32xf32>
    %606 = arith.truncf %605 : vector<8x32xf32> to vector<8x32xbf16>
    %c0_470 = arith.constant 0 : index
    %c992 = arith.constant 992 : index
    %607 = vector.load %arg12[%c0_470, %c992] : memref<8x1568xbf16, #tpu.memory_space<vmem>>, vector<8x32xbf16>
    tpu.vector_store %arg12[%c0_470, %c992], %606 {strides = array<i32>} : memref<8x1568xbf16, #tpu.memory_space<vmem>>, vector<8x32xbf16>,
    %c7_471 = arith.constant 7 : index
    %c0_472 = arith.constant 0 : index
    %c224_473 = arith.constant 224 : index
    %608 = vector.load %arg11[%c7_471, %c0_472, %c224_473] : memref<14x8x448xbf16, #tpu.memory_space<vmem>>, vector<1x8x96xbf16>
    %609 = vector.shape_cast %608 : vector<1x8x96xbf16> to vector<8x96xbf16>
    %c8_474 = arith.constant 8 : index
    %c0_475 = arith.constant 0 : index
    %c224_476 = arith.constant 224 : index
    %610 = vector.load %arg11[%c8_474, %c0_475, %c224_476] : memref<14x8x448xbf16, #tpu.memory_space<vmem>>, vector<1x8x96xbf16>
    %611 = vector.shape_cast %610 : vector<1x8x96xbf16> to vector<8x96xbf16>
    %c9_477 = arith.constant 9 : index
    %c0_478 = arith.constant 0 : index
    %c224_479 = arith.constant 224 : index
    %612 = vector.load %arg11[%c9_477, %c0_478, %c224_479] : memref<14x8x448xbf16, #tpu.memory_space<vmem>>, vector<1x8x96xbf16>
    %613 = vector.shape_cast %612 : vector<1x8x96xbf16> to vector<8x96xbf16>
    %614 = tpu.concatenate %609, %611, %613 in 1 : vector<8x96xbf16>, vector<8x96xbf16>, vector<8x96xbf16> -> vector<8x288xbf16>
    %cst_480 = arith.constant dense<0.000000e+00> : vector<8x32xf32>
    %615 = tpu.matmul %614, %156, %cst_480 {dimension_numbers = #tpu.dot_dimension_numbers<[1], [0], [0], [1], [0, 0, 1, 1], [], []>} : vector<8x288xbf16>, vector<288x32xbf16>, vector<8x32xf32> -> vector<8x32xf32>
    %616 = vector.broadcast %157 : vector<1x32xf32> to vector<8x32xf32>
    %617 = arith.addf %615, %616 : vector<8x32xf32>
    %cst_481 = arith.constant 0.000000e+00 : f32
    %618 = vector.broadcast %cst_481 : f32 to vector<8x32xf32>
    %619 = arith.maximumf %617, %618 : vector<8x32xf32>
    %620 = arith.truncf %619 : vector<8x32xf32> to vector<8x32xbf16>
    %c0_482 = arith.constant 0 : index
    %c1024 = arith.constant 1024 : index
    %621 = vector.load %arg12[%c0_482, %c1024] : memref<8x1568xbf16, #tpu.memory_space<vmem>>, vector<8x32xbf16>
    tpu.vector_store %arg12[%c0_482, %c1024], %620 {strides = array<i32>} : memref<8x1568xbf16, #tpu.memory_space<vmem>>, vector<8x32xbf16>,
    %c7_483 = arith.constant 7 : index
    %c0_484 = arith.constant 0 : index
    %c288_485 = arith.constant 288 : index
    %622 = vector.load %arg11[%c7_483, %c0_484, %c288_485] : memref<14x8x448xbf16, #tpu.memory_space<vmem>>, vector<1x8x96xbf16>
    %623 = vector.shape_cast %622 : vector<1x8x96xbf16> to vector<8x96xbf16>
    %c8_486 = arith.constant 8 : index
    %c0_487 = arith.constant 0 : index
    %c288_488 = arith.constant 288 : index
    %624 = vector.load %arg11[%c8_486, %c0_487, %c288_488] : memref<14x8x448xbf16, #tpu.memory_space<vmem>>, vector<1x8x96xbf16>
    %625 = vector.shape_cast %624 : vector<1x8x96xbf16> to vector<8x96xbf16>
    %c9_489 = arith.constant 9 : index
    %c0_490 = arith.constant 0 : index
    %c288_491 = arith.constant 288 : index
    %626 = vector.load %arg11[%c9_489, %c0_490, %c288_491] : memref<14x8x448xbf16, #tpu.memory_space<vmem>>, vector<1x8x96xbf16>
    %627 = vector.shape_cast %626 : vector<1x8x96xbf16> to vector<8x96xbf16>
    %628 = tpu.concatenate %623, %625, %627 in 1 : vector<8x96xbf16>, vector<8x96xbf16>, vector<8x96xbf16> -> vector<8x288xbf16>
    %cst_492 = arith.constant dense<0.000000e+00> : vector<8x32xf32>
    %629 = tpu.matmul %628, %156, %cst_492 {dimension_numbers = #tpu.dot_dimension_numbers<[1], [0], [0], [1], [0, 0, 1, 1], [], []>} : vector<8x288xbf16>, vector<288x32xbf16>, vector<8x32xf32> -> vector<8x32xf32>
    %630 = vector.broadcast %157 : vector<1x32xf32> to vector<8x32xf32>
    %631 = arith.addf %629, %630 : vector<8x32xf32>
    %cst_493 = arith.constant 0.000000e+00 : f32
    %632 = vector.broadcast %cst_493 : f32 to vector<8x32xf32>
    %633 = arith.maximumf %631, %632 : vector<8x32xf32>
    %634 = arith.truncf %633 : vector<8x32xf32> to vector<8x32xbf16>
    %c0_494 = arith.constant 0 : index
    %c1056 = arith.constant 1056 : index
    %635 = vector.load %arg12[%c0_494, %c1056] : memref<8x1568xbf16, #tpu.memory_space<vmem>>, vector<8x32xbf16>
    tpu.vector_store %arg12[%c0_494, %c1056], %634 {strides = array<i32>} : memref<8x1568xbf16, #tpu.memory_space<vmem>>, vector<8x32xbf16>,
    %c7_495 = arith.constant 7 : index
    %c0_496 = arith.constant 0 : index
    %c352_497 = arith.constant 352 : index
    %636 = vector.load %arg11[%c7_495, %c0_496, %c352_497] : memref<14x8x448xbf16, #tpu.memory_space<vmem>>, vector<1x8x96xbf16>
    %637 = vector.shape_cast %636 : vector<1x8x96xbf16> to vector<8x96xbf16>
    %c8_498 = arith.constant 8 : index
    %c0_499 = arith.constant 0 : index
    %c352_500 = arith.constant 352 : index
    %638 = vector.load %arg11[%c8_498, %c0_499, %c352_500] : memref<14x8x448xbf16, #tpu.memory_space<vmem>>, vector<1x8x96xbf16>
    %639 = vector.shape_cast %638 : vector<1x8x96xbf16> to vector<8x96xbf16>
    %c9_501 = arith.constant 9 : index
    %c0_502 = arith.constant 0 : index
    %c352_503 = arith.constant 352 : index
    %640 = vector.load %arg11[%c9_501, %c0_502, %c352_503] : memref<14x8x448xbf16, #tpu.memory_space<vmem>>, vector<1x8x96xbf16>
    %641 = vector.shape_cast %640 : vector<1x8x96xbf16> to vector<8x96xbf16>
    %642 = tpu.concatenate %637, %639, %641 in 1 : vector<8x96xbf16>, vector<8x96xbf16>, vector<8x96xbf16> -> vector<8x288xbf16>
    %cst_504 = arith.constant dense<0.000000e+00> : vector<8x32xf32>
    %643 = tpu.matmul %642, %156, %cst_504 {dimension_numbers = #tpu.dot_dimension_numbers<[1], [0], [0], [1], [0, 0, 1, 1], [], []>} : vector<8x288xbf16>, vector<288x32xbf16>, vector<8x32xf32> -> vector<8x32xf32>
    %644 = vector.broadcast %157 : vector<1x32xf32> to vector<8x32xf32>
    %645 = arith.addf %643, %644 : vector<8x32xf32>
    %cst_505 = arith.constant 0.000000e+00 : f32
    %646 = vector.broadcast %cst_505 : f32 to vector<8x32xf32>
    %647 = arith.maximumf %645, %646 : vector<8x32xf32>
    %648 = arith.truncf %647 : vector<8x32xf32> to vector<8x32xbf16>
    %c0_506 = arith.constant 0 : index
    %c1088 = arith.constant 1088 : index
    %649 = vector.load %arg12[%c0_506, %c1088] : memref<8x1568xbf16, #tpu.memory_space<vmem>>, vector<8x32xbf16>
    tpu.vector_store %arg12[%c0_506, %c1088], %648 {strides = array<i32>} : memref<8x1568xbf16, #tpu.memory_space<vmem>>, vector<8x32xbf16>,
    %c9_507 = arith.constant 9 : index
    %c0_508 = arith.constant 0 : index
    %c0_509 = arith.constant 0 : index
    %650 = vector.load %arg11[%c9_507, %c0_508, %c0_509] : memref<14x8x448xbf16, #tpu.memory_space<vmem>>, vector<1x8x64xbf16>
    %651 = vector.shape_cast %650 : vector<1x8x64xbf16> to vector<8x64xbf16>
    %652 = tpu.concatenate %159, %651 in 1 : vector<8x32xbf16>, vector<8x64xbf16> -> vector<8x96xbf16>
    %c10_510 = arith.constant 10 : index
    %c0_511 = arith.constant 0 : index
    %c0_512 = arith.constant 0 : index
    %653 = vector.load %arg11[%c10_510, %c0_511, %c0_512] : memref<14x8x448xbf16, #tpu.memory_space<vmem>>, vector<1x8x64xbf16>
    %654 = vector.shape_cast %653 : vector<1x8x64xbf16> to vector<8x64xbf16>
    %655 = tpu.concatenate %159, %654 in 1 : vector<8x32xbf16>, vector<8x64xbf16> -> vector<8x96xbf16>
    %c11_513 = arith.constant 11 : index
    %c0_514 = arith.constant 0 : index
    %c0_515 = arith.constant 0 : index
    %656 = vector.load %arg11[%c11_513, %c0_514, %c0_515] : memref<14x8x448xbf16, #tpu.memory_space<vmem>>, vector<1x8x64xbf16>
    %657 = vector.shape_cast %656 : vector<1x8x64xbf16> to vector<8x64xbf16>
    %658 = tpu.concatenate %159, %657 in 1 : vector<8x32xbf16>, vector<8x64xbf16> -> vector<8x96xbf16>
    %659 = tpu.concatenate %652, %655, %658 in 1 : vector<8x96xbf16>, vector<8x96xbf16>, vector<8x96xbf16> -> vector<8x288xbf16>
    %cst_516 = arith.constant dense<0.000000e+00> : vector<8x32xf32>
    %660 = tpu.matmul %659, %156, %cst_516 {dimension_numbers = #tpu.dot_dimension_numbers<[1], [0], [0], [1], [0, 0, 1, 1], [], []>} : vector<8x288xbf16>, vector<288x32xbf16>, vector<8x32xf32> -> vector<8x32xf32>
    %661 = vector.broadcast %157 : vector<1x32xf32> to vector<8x32xf32>
    %662 = arith.addf %660, %661 : vector<8x32xf32>
    %cst_517 = arith.constant 0.000000e+00 : f32
    %663 = vector.broadcast %cst_517 : f32 to vector<8x32xf32>
    %664 = arith.maximumf %662, %663 : vector<8x32xf32>
    %665 = arith.truncf %664 : vector<8x32xf32> to vector<8x32xbf16>
    %c0_518 = arith.constant 0 : index
    %c1120 = arith.constant 1120 : index
    %666 = vector.load %arg12[%c0_518, %c1120] : memref<8x1568xbf16, #tpu.memory_space<vmem>>, vector<8x32xbf16>
    tpu.vector_store %arg12[%c0_518, %c1120], %665 {strides = array<i32>} : memref<8x1568xbf16, #tpu.memory_space<vmem>>, vector<8x32xbf16>,
    %c9_519 = arith.constant 9 : index
    %c0_520 = arith.constant 0 : index
    %c32_521 = arith.constant 32 : index
    %667 = vector.load %arg11[%c9_519, %c0_520, %c32_521] : memref<14x8x448xbf16, #tpu.memory_space<vmem>>, vector<1x8x96xbf16>
    %668 = vector.shape_cast %667 : vector<1x8x96xbf16> to vector<8x96xbf16>
    %c10_522 = arith.constant 10 : index
    %c0_523 = arith.constant 0 : index
    %c32_524 = arith.constant 32 : index
    %669 = vector.load %arg11[%c10_522, %c0_523, %c32_524] : memref<14x8x448xbf16, #tpu.memory_space<vmem>>, vector<1x8x96xbf16>
    %670 = vector.shape_cast %669 : vector<1x8x96xbf16> to vector<8x96xbf16>
    %c11_525 = arith.constant 11 : index
    %c0_526 = arith.constant 0 : index
    %c32_527 = arith.constant 32 : index
    %671 = vector.load %arg11[%c11_525, %c0_526, %c32_527] : memref<14x8x448xbf16, #tpu.memory_space<vmem>>, vector<1x8x96xbf16>
    %672 = vector.shape_cast %671 : vector<1x8x96xbf16> to vector<8x96xbf16>
    %673 = tpu.concatenate %668, %670, %672 in 1 : vector<8x96xbf16>, vector<8x96xbf16>, vector<8x96xbf16> -> vector<8x288xbf16>
    %cst_528 = arith.constant dense<0.000000e+00> : vector<8x32xf32>
    %674 = tpu.matmul %673, %156, %cst_528 {dimension_numbers = #tpu.dot_dimension_numbers<[1], [0], [0], [1], [0, 0, 1, 1], [], []>} : vector<8x288xbf16>, vector<288x32xbf16>, vector<8x32xf32> -> vector<8x32xf32>
    %675 = vector.broadcast %157 : vector<1x32xf32> to vector<8x32xf32>
    %676 = arith.addf %674, %675 : vector<8x32xf32>
    %cst_529 = arith.constant 0.000000e+00 : f32
    %677 = vector.broadcast %cst_529 : f32 to vector<8x32xf32>
    %678 = arith.maximumf %676, %677 : vector<8x32xf32>
    %679 = arith.truncf %678 : vector<8x32xf32> to vector<8x32xbf16>
    %c0_530 = arith.constant 0 : index
    %c1152 = arith.constant 1152 : index
    %680 = vector.load %arg12[%c0_530, %c1152] : memref<8x1568xbf16, #tpu.memory_space<vmem>>, vector<8x32xbf16>
    tpu.vector_store %arg12[%c0_530, %c1152], %679 {strides = array<i32>} : memref<8x1568xbf16, #tpu.memory_space<vmem>>, vector<8x32xbf16>,
    %c9_531 = arith.constant 9 : index
    %c0_532 = arith.constant 0 : index
    %c96_533 = arith.constant 96 : index
    %681 = vector.load %arg11[%c9_531, %c0_532, %c96_533] : memref<14x8x448xbf16, #tpu.memory_space<vmem>>, vector<1x8x96xbf16>
    %682 = vector.shape_cast %681 : vector<1x8x96xbf16> to vector<8x96xbf16>
    %c10_534 = arith.constant 10 : index
    %c0_535 = arith.constant 0 : index
    %c96_536 = arith.constant 96 : index
    %683 = vector.load %arg11[%c10_534, %c0_535, %c96_536] : memref<14x8x448xbf16, #tpu.memory_space<vmem>>, vector<1x8x96xbf16>
    %684 = vector.shape_cast %683 : vector<1x8x96xbf16> to vector<8x96xbf16>
    %c11_537 = arith.constant 11 : index
    %c0_538 = arith.constant 0 : index
    %c96_539 = arith.constant 96 : index
    %685 = vector.load %arg11[%c11_537, %c0_538, %c96_539] : memref<14x8x448xbf16, #tpu.memory_space<vmem>>, vector<1x8x96xbf16>
    %686 = vector.shape_cast %685 : vector<1x8x96xbf16> to vector<8x96xbf16>
    %687 = tpu.concatenate %682, %684, %686 in 1 : vector<8x96xbf16>, vector<8x96xbf16>, vector<8x96xbf16> -> vector<8x288xbf16>
    %cst_540 = arith.constant dense<0.000000e+00> : vector<8x32xf32>
    %688 = tpu.matmul %687, %156, %cst_540 {dimension_numbers = #tpu.dot_dimension_numbers<[1], [0], [0], [1], [0, 0, 1, 1], [], []>} : vector<8x288xbf16>, vector<288x32xbf16>, vector<8x32xf32> -> vector<8x32xf32>
    %689 = vector.broadcast %157 : vector<1x32xf32> to vector<8x32xf32>
    %690 = arith.addf %688, %689 : vector<8x32xf32>
    %cst_541 = arith.constant 0.000000e+00 : f32
    %691 = vector.broadcast %cst_541 : f32 to vector<8x32xf32>
    %692 = arith.maximumf %690, %691 : vector<8x32xf32>
    %693 = arith.truncf %692 : vector<8x32xf32> to vector<8x32xbf16>
    %c0_542 = arith.constant 0 : index
    %c1184 = arith.constant 1184 : index
    %694 = vector.load %arg12[%c0_542, %c1184] : memref<8x1568xbf16, #tpu.memory_space<vmem>>, vector<8x32xbf16>
    tpu.vector_store %arg12[%c0_542, %c1184], %693 {strides = array<i32>} : memref<8x1568xbf16, #tpu.memory_space<vmem>>, vector<8x32xbf16>,
    %c9_543 = arith.constant 9 : index
    %c0_544 = arith.constant 0 : index
    %c160_545 = arith.constant 160 : index
    %695 = vector.load %arg11[%c9_543, %c0_544, %c160_545] : memref<14x8x448xbf16, #tpu.memory_space<vmem>>, vector<1x8x96xbf16>
    %696 = vector.shape_cast %695 : vector<1x8x96xbf16> to vector<8x96xbf16>
    %c10_546 = arith.constant 10 : index
    %c0_547 = arith.constant 0 : index
    %c160_548 = arith.constant 160 : index
    %697 = vector.load %arg11[%c10_546, %c0_547, %c160_548] : memref<14x8x448xbf16, #tpu.memory_space<vmem>>, vector<1x8x96xbf16>
    %698 = vector.shape_cast %697 : vector<1x8x96xbf16> to vector<8x96xbf16>
    %c11_549 = arith.constant 11 : index
    %c0_550 = arith.constant 0 : index
    %c160_551 = arith.constant 160 : index
    %699 = vector.load %arg11[%c11_549, %c0_550, %c160_551] : memref<14x8x448xbf16, #tpu.memory_space<vmem>>, vector<1x8x96xbf16>
    %700 = vector.shape_cast %699 : vector<1x8x96xbf16> to vector<8x96xbf16>
    %701 = tpu.concatenate %696, %698, %700 in 1 : vector<8x96xbf16>, vector<8x96xbf16>, vector<8x96xbf16> -> vector<8x288xbf16>
    %cst_552 = arith.constant dense<0.000000e+00> : vector<8x32xf32>
    %702 = tpu.matmul %701, %156, %cst_552 {dimension_numbers = #tpu.dot_dimension_numbers<[1], [0], [0], [1], [0, 0, 1, 1], [], []>} : vector<8x288xbf16>, vector<288x32xbf16>, vector<8x32xf32> -> vector<8x32xf32>
    %703 = vector.broadcast %157 : vector<1x32xf32> to vector<8x32xf32>
    %704 = arith.addf %702, %703 : vector<8x32xf32>
    %cst_553 = arith.constant 0.000000e+00 : f32
    %705 = vector.broadcast %cst_553 : f32 to vector<8x32xf32>
    %706 = arith.maximumf %704, %705 : vector<8x32xf32>
    %707 = arith.truncf %706 : vector<8x32xf32> to vector<8x32xbf16>
    %c0_554 = arith.constant 0 : index
    %c1216 = arith.constant 1216 : index
    %708 = vector.load %arg12[%c0_554, %c1216] : memref<8x1568xbf16, #tpu.memory_space<vmem>>, vector<8x32xbf16>
    tpu.vector_store %arg12[%c0_554, %c1216], %707 {strides = array<i32>} : memref<8x1568xbf16, #tpu.memory_space<vmem>>, vector<8x32xbf16>,
    %c9_555 = arith.constant 9 : index
    %c0_556 = arith.constant 0 : index
    %c224_557 = arith.constant 224 : index
    %709 = vector.load %arg11[%c9_555, %c0_556, %c224_557] : memref<14x8x448xbf16, #tpu.memory_space<vmem>>, vector<1x8x96xbf16>
    %710 = vector.shape_cast %709 : vector<1x8x96xbf16> to vector<8x96xbf16>
    %c10_558 = arith.constant 10 : index
    %c0_559 = arith.constant 0 : index
    %c224_560 = arith.constant 224 : index
    %711 = vector.load %arg11[%c10_558, %c0_559, %c224_560] : memref<14x8x448xbf16, #tpu.memory_space<vmem>>, vector<1x8x96xbf16>
    %712 = vector.shape_cast %711 : vector<1x8x96xbf16> to vector<8x96xbf16>
    %c11_561 = arith.constant 11 : index
    %c0_562 = arith.constant 0 : index
    %c224_563 = arith.constant 224 : index
    %713 = vector.load %arg11[%c11_561, %c0_562, %c224_563] : memref<14x8x448xbf16, #tpu.memory_space<vmem>>, vector<1x8x96xbf16>
    %714 = vector.shape_cast %713 : vector<1x8x96xbf16> to vector<8x96xbf16>
    %715 = tpu.concatenate %710, %712, %714 in 1 : vector<8x96xbf16>, vector<8x96xbf16>, vector<8x96xbf16> -> vector<8x288xbf16>
    %cst_564 = arith.constant dense<0.000000e+00> : vector<8x32xf32>
    %716 = tpu.matmul %715, %156, %cst_564 {dimension_numbers = #tpu.dot_dimension_numbers<[1], [0], [0], [1], [0, 0, 1, 1], [], []>} : vector<8x288xbf16>, vector<288x32xbf16>, vector<8x32xf32> -> vector<8x32xf32>
    %717 = vector.broadcast %157 : vector<1x32xf32> to vector<8x32xf32>
    %718 = arith.addf %716, %717 : vector<8x32xf32>
    %cst_565 = arith.constant 0.000000e+00 : f32
    %719 = vector.broadcast %cst_565 : f32 to vector<8x32xf32>
    %720 = arith.maximumf %718, %719 : vector<8x32xf32>
    %721 = arith.truncf %720 : vector<8x32xf32> to vector<8x32xbf16>
    %c0_566 = arith.constant 0 : index
    %c1248 = arith.constant 1248 : index
    %722 = vector.load %arg12[%c0_566, %c1248] : memref<8x1568xbf16, #tpu.memory_space<vmem>>, vector<8x32xbf16>
    tpu.vector_store %arg12[%c0_566, %c1248], %721 {strides = array<i32>} : memref<8x1568xbf16, #tpu.memory_space<vmem>>, vector<8x32xbf16>,
    %c9_567 = arith.constant 9 : index
    %c0_568 = arith.constant 0 : index
    %c288_569 = arith.constant 288 : index
    %723 = vector.load %arg11[%c9_567, %c0_568, %c288_569] : memref<14x8x448xbf16, #tpu.memory_space<vmem>>, vector<1x8x96xbf16>
    %724 = vector.shape_cast %723 : vector<1x8x96xbf16> to vector<8x96xbf16>
    %c10_570 = arith.constant 10 : index
    %c0_571 = arith.constant 0 : index
    %c288_572 = arith.constant 288 : index
    %725 = vector.load %arg11[%c10_570, %c0_571, %c288_572] : memref<14x8x448xbf16, #tpu.memory_space<vmem>>, vector<1x8x96xbf16>
    %726 = vector.shape_cast %725 : vector<1x8x96xbf16> to vector<8x96xbf16>
    %c11_573 = arith.constant 11 : index
    %c0_574 = arith.constant 0 : index
    %c288_575 = arith.constant 288 : index
    %727 = vector.load %arg11[%c11_573, %c0_574, %c288_575] : memref<14x8x448xbf16, #tpu.memory_space<vmem>>, vector<1x8x96xbf16>
    %728 = vector.shape_cast %727 : vector<1x8x96xbf16> to vector<8x96xbf16>
    %729 = tpu.concatenate %724, %726, %728 in 1 : vector<8x96xbf16>, vector<8x96xbf16>, vector<8x96xbf16> -> vector<8x288xbf16>
    %cst_576 = arith.constant dense<0.000000e+00> : vector<8x32xf32>
    %730 = tpu.matmul %729, %156, %cst_576 {dimension_numbers = #tpu.dot_dimension_numbers<[1], [0], [0], [1], [0, 0, 1, 1], [], []>} : vector<8x288xbf16>, vector<288x32xbf16>, vector<8x32xf32> -> vector<8x32xf32>
    %731 = vector.broadcast %157 : vector<1x32xf32> to vector<8x32xf32>
    %732 = arith.addf %730, %731 : vector<8x32xf32>
    %cst_577 = arith.constant 0.000000e+00 : f32
    %733 = vector.broadcast %cst_577 : f32 to vector<8x32xf32>
    %734 = arith.maximumf %732, %733 : vector<8x32xf32>
    %735 = arith.truncf %734 : vector<8x32xf32> to vector<8x32xbf16>
    %c0_578 = arith.constant 0 : index
    %c1280 = arith.constant 1280 : index
    %736 = vector.load %arg12[%c0_578, %c1280] : memref<8x1568xbf16, #tpu.memory_space<vmem>>, vector<8x32xbf16>
    tpu.vector_store %arg12[%c0_578, %c1280], %735 {strides = array<i32>} : memref<8x1568xbf16, #tpu.memory_space<vmem>>, vector<8x32xbf16>,
    %c9_579 = arith.constant 9 : index
    %c0_580 = arith.constant 0 : index
    %c352_581 = arith.constant 352 : index
    %737 = vector.load %arg11[%c9_579, %c0_580, %c352_581] : memref<14x8x448xbf16, #tpu.memory_space<vmem>>, vector<1x8x96xbf16>
    %738 = vector.shape_cast %737 : vector<1x8x96xbf16> to vector<8x96xbf16>
    %c10_582 = arith.constant 10 : index
    %c0_583 = arith.constant 0 : index
    %c352_584 = arith.constant 352 : index
    %739 = vector.load %arg11[%c10_582, %c0_583, %c352_584] : memref<14x8x448xbf16, #tpu.memory_space<vmem>>, vector<1x8x96xbf16>
    %740 = vector.shape_cast %739 : vector<1x8x96xbf16> to vector<8x96xbf16>
    %c11_585 = arith.constant 11 : index
    %c0_586 = arith.constant 0 : index
    %c352_587 = arith.constant 352 : index
    %741 = vector.load %arg11[%c11_585, %c0_586, %c352_587] : memref<14x8x448xbf16, #tpu.memory_space<vmem>>, vector<1x8x96xbf16>
    %742 = vector.shape_cast %741 : vector<1x8x96xbf16> to vector<8x96xbf16>
    %743 = tpu.concatenate %738, %740, %742 in 1 : vector<8x96xbf16>, vector<8x96xbf16>, vector<8x96xbf16> -> vector<8x288xbf16>
    %cst_588 = arith.constant dense<0.000000e+00> : vector<8x32xf32>
    %744 = tpu.matmul %743, %156, %cst_588 {dimension_numbers = #tpu.dot_dimension_numbers<[1], [0], [0], [1], [0, 0, 1, 1], [], []>} : vector<8x288xbf16>, vector<288x32xbf16>, vector<8x32xf32> -> vector<8x32xf32>
    %745 = vector.broadcast %157 : vector<1x32xf32> to vector<8x32xf32>
    %746 = arith.addf %744, %745 : vector<8x32xf32>
    %cst_589 = arith.constant 0.000000e+00 : f32
    %747 = vector.broadcast %cst_589 : f32 to vector<8x32xf32>
    %748 = arith.maximumf %746, %747 : vector<8x32xf32>
    %749 = arith.truncf %748 : vector<8x32xf32> to vector<8x32xbf16>
    %c0_590 = arith.constant 0 : index
    %c1312 = arith.constant 1312 : index
    %750 = vector.load %arg12[%c0_590, %c1312] : memref<8x1568xbf16, #tpu.memory_space<vmem>>, vector<8x32xbf16>
    tpu.vector_store %arg12[%c0_590, %c1312], %749 {strides = array<i32>} : memref<8x1568xbf16, #tpu.memory_space<vmem>>, vector<8x32xbf16>,
    %c11_591 = arith.constant 11 : index
    %c0_592 = arith.constant 0 : index
    %c0_593 = arith.constant 0 : index
    %751 = vector.load %arg11[%c11_591, %c0_592, %c0_593] : memref<14x8x448xbf16, #tpu.memory_space<vmem>>, vector<1x8x64xbf16>
    %752 = vector.shape_cast %751 : vector<1x8x64xbf16> to vector<8x64xbf16>
    %753 = tpu.concatenate %159, %752 in 1 : vector<8x32xbf16>, vector<8x64xbf16> -> vector<8x96xbf16>
    %c12_594 = arith.constant 12 : index
    %c0_595 = arith.constant 0 : index
    %c0_596 = arith.constant 0 : index
    %754 = vector.load %arg11[%c12_594, %c0_595, %c0_596] : memref<14x8x448xbf16, #tpu.memory_space<vmem>>, vector<1x8x64xbf16>
    %755 = vector.shape_cast %754 : vector<1x8x64xbf16> to vector<8x64xbf16>
    %756 = tpu.concatenate %159, %755 in 1 : vector<8x32xbf16>, vector<8x64xbf16> -> vector<8x96xbf16>
    %c13_597 = arith.constant 13 : index
    %c0_598 = arith.constant 0 : index
    %c0_599 = arith.constant 0 : index
    %757 = vector.load %arg11[%c13_597, %c0_598, %c0_599] : memref<14x8x448xbf16, #tpu.memory_space<vmem>>, vector<1x8x64xbf16>
    %758 = vector.shape_cast %757 : vector<1x8x64xbf16> to vector<8x64xbf16>
    %759 = tpu.concatenate %159, %758 in 1 : vector<8x32xbf16>, vector<8x64xbf16> -> vector<8x96xbf16>
    %760 = tpu.concatenate %753, %756, %759 in 1 : vector<8x96xbf16>, vector<8x96xbf16>, vector<8x96xbf16> -> vector<8x288xbf16>
    %cst_600 = arith.constant dense<0.000000e+00> : vector<8x32xf32>
    %761 = tpu.matmul %760, %156, %cst_600 {dimension_numbers = #tpu.dot_dimension_numbers<[1], [0], [0], [1], [0, 0, 1, 1], [], []>} : vector<8x288xbf16>, vector<288x32xbf16>, vector<8x32xf32> -> vector<8x32xf32>
    %762 = vector.broadcast %157 : vector<1x32xf32> to vector<8x32xf32>
    %763 = arith.addf %761, %762 : vector<8x32xf32>
    %cst_601 = arith.constant 0.000000e+00 : f32
    %764 = vector.broadcast %cst_601 : f32 to vector<8x32xf32>
    %765 = arith.maximumf %763, %764 : vector<8x32xf32>
    %766 = arith.truncf %765 : vector<8x32xf32> to vector<8x32xbf16>
    %c0_602 = arith.constant 0 : index
    %c1344 = arith.constant 1344 : index
    %767 = vector.load %arg12[%c0_602, %c1344] : memref<8x1568xbf16, #tpu.memory_space<vmem>>, vector<8x32xbf16>
    tpu.vector_store %arg12[%c0_602, %c1344], %766 {strides = array<i32>} : memref<8x1568xbf16, #tpu.memory_space<vmem>>, vector<8x32xbf16>,
    %c11_603 = arith.constant 11 : index
    %c0_604 = arith.constant 0 : index
    %c32_605 = arith.constant 32 : index
    %768 = vector.load %arg11[%c11_603, %c0_604, %c32_605] : memref<14x8x448xbf16, #tpu.memory_space<vmem>>, vector<1x8x96xbf16>
    %769 = vector.shape_cast %768 : vector<1x8x96xbf16> to vector<8x96xbf16>
    %c12_606 = arith.constant 12 : index
    %c0_607 = arith.constant 0 : index
    %c32_608 = arith.constant 32 : index
    %770 = vector.load %arg11[%c12_606, %c0_607, %c32_608] : memref<14x8x448xbf16, #tpu.memory_space<vmem>>, vector<1x8x96xbf16>
    %771 = vector.shape_cast %770 : vector<1x8x96xbf16> to vector<8x96xbf16>
    %c13_609 = arith.constant 13 : index
    %c0_610 = arith.constant 0 : index
    %c32_611 = arith.constant 32 : index
    %772 = vector.load %arg11[%c13_609, %c0_610, %c32_611] : memref<14x8x448xbf16, #tpu.memory_space<vmem>>, vector<1x8x96xbf16>
    %773 = vector.shape_cast %772 : vector<1x8x96xbf16> to vector<8x96xbf16>
    %774 = tpu.concatenate %769, %771, %773 in 1 : vector<8x96xbf16>, vector<8x96xbf16>, vector<8x96xbf16> -> vector<8x288xbf16>
    %cst_612 = arith.constant dense<0.000000e+00> : vector<8x32xf32>
    %775 = tpu.matmul %774, %156, %cst_612 {dimension_numbers = #tpu.dot_dimension_numbers<[1], [0], [0], [1], [0, 0, 1, 1], [], []>} : vector<8x288xbf16>, vector<288x32xbf16>, vector<8x32xf32> -> vector<8x32xf32>
    %776 = vector.broadcast %157 : vector<1x32xf32> to vector<8x32xf32>
    %777 = arith.addf %775, %776 : vector<8x32xf32>
    %cst_613 = arith.constant 0.000000e+00 : f32
    %778 = vector.broadcast %cst_613 : f32 to vector<8x32xf32>
    %779 = arith.maximumf %777, %778 : vector<8x32xf32>
    %780 = arith.truncf %779 : vector<8x32xf32> to vector<8x32xbf16>
    %c0_614 = arith.constant 0 : index
    %c1376 = arith.constant 1376 : index
    %781 = vector.load %arg12[%c0_614, %c1376] : memref<8x1568xbf16, #tpu.memory_space<vmem>>, vector<8x32xbf16>
    tpu.vector_store %arg12[%c0_614, %c1376], %780 {strides = array<i32>} : memref<8x1568xbf16, #tpu.memory_space<vmem>>, vector<8x32xbf16>,
    %c11_615 = arith.constant 11 : index
    %c0_616 = arith.constant 0 : index
    %c96_617 = arith.constant 96 : index
    %782 = vector.load %arg11[%c11_615, %c0_616, %c96_617] : memref<14x8x448xbf16, #tpu.memory_space<vmem>>, vector<1x8x96xbf16>
    %783 = vector.shape_cast %782 : vector<1x8x96xbf16> to vector<8x96xbf16>
    %c12_618 = arith.constant 12 : index
    %c0_619 = arith.constant 0 : index
    %c96_620 = arith.constant 96 : index
    %784 = vector.load %arg11[%c12_618, %c0_619, %c96_620] : memref<14x8x448xbf16, #tpu.memory_space<vmem>>, vector<1x8x96xbf16>
    %785 = vector.shape_cast %784 : vector<1x8x96xbf16> to vector<8x96xbf16>
    %c13_621 = arith.constant 13 : index
    %c0_622 = arith.constant 0 : index
    %c96_623 = arith.constant 96 : index
    %786 = vector.load %arg11[%c13_621, %c0_622, %c96_623] : memref<14x8x448xbf16, #tpu.memory_space<vmem>>, vector<1x8x96xbf16>
    %787 = vector.shape_cast %786 : vector<1x8x96xbf16> to vector<8x96xbf16>
    %788 = tpu.concatenate %783, %785, %787 in 1 : vector<8x96xbf16>, vector<8x96xbf16>, vector<8x96xbf16> -> vector<8x288xbf16>
    %cst_624 = arith.constant dense<0.000000e+00> : vector<8x32xf32>
    %789 = tpu.matmul %788, %156, %cst_624 {dimension_numbers = #tpu.dot_dimension_numbers<[1], [0], [0], [1], [0, 0, 1, 1], [], []>} : vector<8x288xbf16>, vector<288x32xbf16>, vector<8x32xf32> -> vector<8x32xf32>
    %790 = vector.broadcast %157 : vector<1x32xf32> to vector<8x32xf32>
    %791 = arith.addf %789, %790 : vector<8x32xf32>
    %cst_625 = arith.constant 0.000000e+00 : f32
    %792 = vector.broadcast %cst_625 : f32 to vector<8x32xf32>
    %793 = arith.maximumf %791, %792 : vector<8x32xf32>
    %794 = arith.truncf %793 : vector<8x32xf32> to vector<8x32xbf16>
    %c0_626 = arith.constant 0 : index
    %c1408 = arith.constant 1408 : index
    %795 = vector.load %arg12[%c0_626, %c1408] : memref<8x1568xbf16, #tpu.memory_space<vmem>>, vector<8x32xbf16>
    tpu.vector_store %arg12[%c0_626, %c1408], %794 {strides = array<i32>} : memref<8x1568xbf16, #tpu.memory_space<vmem>>, vector<8x32xbf16>,
    %c11_627 = arith.constant 11 : index
    %c0_628 = arith.constant 0 : index
    %c160_629 = arith.constant 160 : index
    %796 = vector.load %arg11[%c11_627, %c0_628, %c160_629] : memref<14x8x448xbf16, #tpu.memory_space<vmem>>, vector<1x8x96xbf16>
    %797 = vector.shape_cast %796 : vector<1x8x96xbf16> to vector<8x96xbf16>
    %c12_630 = arith.constant 12 : index
    %c0_631 = arith.constant 0 : index
    %c160_632 = arith.constant 160 : index
    %798 = vector.load %arg11[%c12_630, %c0_631, %c160_632] : memref<14x8x448xbf16, #tpu.memory_space<vmem>>, vector<1x8x96xbf16>
    %799 = vector.shape_cast %798 : vector<1x8x96xbf16> to vector<8x96xbf16>
    %c13_633 = arith.constant 13 : index
    %c0_634 = arith.constant 0 : index
    %c160_635 = arith.constant 160 : index
    %800 = vector.load %arg11[%c13_633, %c0_634, %c160_635] : memref<14x8x448xbf16, #tpu.memory_space<vmem>>, vector<1x8x96xbf16>
    %801 = vector.shape_cast %800 : vector<1x8x96xbf16> to vector<8x96xbf16>
    %802 = tpu.concatenate %797, %799, %801 in 1 : vector<8x96xbf16>, vector<8x96xbf16>, vector<8x96xbf16> -> vector<8x288xbf16>
    %cst_636 = arith.constant dense<0.000000e+00> : vector<8x32xf32>
    %803 = tpu.matmul %802, %156, %cst_636 {dimension_numbers = #tpu.dot_dimension_numbers<[1], [0], [0], [1], [0, 0, 1, 1], [], []>} : vector<8x288xbf16>, vector<288x32xbf16>, vector<8x32xf32> -> vector<8x32xf32>
    %804 = vector.broadcast %157 : vector<1x32xf32> to vector<8x32xf32>
    %805 = arith.addf %803, %804 : vector<8x32xf32>
    %cst_637 = arith.constant 0.000000e+00 : f32
    %806 = vector.broadcast %cst_637 : f32 to vector<8x32xf32>
    %807 = arith.maximumf %805, %806 : vector<8x32xf32>
    %808 = arith.truncf %807 : vector<8x32xf32> to vector<8x32xbf16>
    %c0_638 = arith.constant 0 : index
    %c1440 = arith.constant 1440 : index
    %809 = vector.load %arg12[%c0_638, %c1440] : memref<8x1568xbf16, #tpu.memory_space<vmem>>, vector<8x32xbf16>
    tpu.vector_store %arg12[%c0_638, %c1440], %808 {strides = array<i32>} : memref<8x1568xbf16, #tpu.memory_space<vmem>>, vector<8x32xbf16>,
    %c11_639 = arith.constant 11 : index
    %c0_640 = arith.constant 0 : index
    %c224_641 = arith.constant 224 : index
    %810 = vector.load %arg11[%c11_639, %c0_640, %c224_641] : memref<14x8x448xbf16, #tpu.memory_space<vmem>>, vector<1x8x96xbf16>
    %811 = vector.shape_cast %810 : vector<1x8x96xbf16> to vector<8x96xbf16>
    %c12_642 = arith.constant 12 : index
    %c0_643 = arith.constant 0 : index
    %c224_644 = arith.constant 224 : index
    %812 = vector.load %arg11[%c12_642, %c0_643, %c224_644] : memref<14x8x448xbf16, #tpu.memory_space<vmem>>, vector<1x8x96xbf16>
    %813 = vector.shape_cast %812 : vector<1x8x96xbf16> to vector<8x96xbf16>
    %c13_645 = arith.constant 13 : index
    %c0_646 = arith.constant 0 : index
    %c224_647 = arith.constant 224 : index
    %814 = vector.load %arg11[%c13_645, %c0_646, %c224_647] : memref<14x8x448xbf16, #tpu.memory_space<vmem>>, vector<1x8x96xbf16>
    %815 = vector.shape_cast %814 : vector<1x8x96xbf16> to vector<8x96xbf16>
    %816 = tpu.concatenate %811, %813, %815 in 1 : vector<8x96xbf16>, vector<8x96xbf16>, vector<8x96xbf16> -> vector<8x288xbf16>
    %cst_648 = arith.constant dense<0.000000e+00> : vector<8x32xf32>
    %817 = tpu.matmul %816, %156, %cst_648 {dimension_numbers = #tpu.dot_dimension_numbers<[1], [0], [0], [1], [0, 0, 1, 1], [], []>} : vector<8x288xbf16>, vector<288x32xbf16>, vector<8x32xf32> -> vector<8x32xf32>
    %818 = vector.broadcast %157 : vector<1x32xf32> to vector<8x32xf32>
    %819 = arith.addf %817, %818 : vector<8x32xf32>
    %cst_649 = arith.constant 0.000000e+00 : f32
    %820 = vector.broadcast %cst_649 : f32 to vector<8x32xf32>
    %821 = arith.maximumf %819, %820 : vector<8x32xf32>
    %822 = arith.truncf %821 : vector<8x32xf32> to vector<8x32xbf16>
    %c0_650 = arith.constant 0 : index
    %c1472 = arith.constant 1472 : index
    %823 = vector.load %arg12[%c0_650, %c1472] : memref<8x1568xbf16, #tpu.memory_space<vmem>>, vector<8x32xbf16>
    tpu.vector_store %arg12[%c0_650, %c1472], %822 {strides = array<i32>} : memref<8x1568xbf16, #tpu.memory_space<vmem>>, vector<8x32xbf16>,
    %c11_651 = arith.constant 11 : index
    %c0_652 = arith.constant 0 : index
    %c288_653 = arith.constant 288 : index
    %824 = vector.load %arg11[%c11_651, %c0_652, %c288_653] : memref<14x8x448xbf16, #tpu.memory_space<vmem>>, vector<1x8x96xbf16>
    %825 = vector.shape_cast %824 : vector<1x8x96xbf16> to vector<8x96xbf16>
    %c12_654 = arith.constant 12 : index
    %c0_655 = arith.constant 0 : index
    %c288_656 = arith.constant 288 : index
    %826 = vector.load %arg11[%c12_654, %c0_655, %c288_656] : memref<14x8x448xbf16, #tpu.memory_space<vmem>>, vector<1x8x96xbf16>
    %827 = vector.shape_cast %826 : vector<1x8x96xbf16> to vector<8x96xbf16>
    %c13_657 = arith.constant 13 : index
    %c0_658 = arith.constant 0 : index
    %c288_659 = arith.constant 288 : index
    %828 = vector.load %arg11[%c13_657, %c0_658, %c288_659] : memref<14x8x448xbf16, #tpu.memory_space<vmem>>, vector<1x8x96xbf16>
    %829 = vector.shape_cast %828 : vector<1x8x96xbf16> to vector<8x96xbf16>
    %830 = tpu.concatenate %825, %827, %829 in 1 : vector<8x96xbf16>, vector<8x96xbf16>, vector<8x96xbf16> -> vector<8x288xbf16>
    %cst_660 = arith.constant dense<0.000000e+00> : vector<8x32xf32>
    %831 = tpu.matmul %830, %156, %cst_660 {dimension_numbers = #tpu.dot_dimension_numbers<[1], [0], [0], [1], [0, 0, 1, 1], [], []>} : vector<8x288xbf16>, vector<288x32xbf16>, vector<8x32xf32> -> vector<8x32xf32>
    %832 = vector.broadcast %157 : vector<1x32xf32> to vector<8x32xf32>
    %833 = arith.addf %831, %832 : vector<8x32xf32>
    %cst_661 = arith.constant 0.000000e+00 : f32
    %834 = vector.broadcast %cst_661 : f32 to vector<8x32xf32>
    %835 = arith.maximumf %833, %834 : vector<8x32xf32>
    %836 = arith.truncf %835 : vector<8x32xf32> to vector<8x32xbf16>
    %c0_662 = arith.constant 0 : index
    %c1504 = arith.constant 1504 : index
    %837 = vector.load %arg12[%c0_662, %c1504] : memref<8x1568xbf16, #tpu.memory_space<vmem>>, vector<8x32xbf16>
    tpu.vector_store %arg12[%c0_662, %c1504], %836 {strides = array<i32>} : memref<8x1568xbf16, #tpu.memory_space<vmem>>, vector<8x32xbf16>,
    %c11_663 = arith.constant 11 : index
    %c0_664 = arith.constant 0 : index
    %c352_665 = arith.constant 352 : index
    %838 = vector.load %arg11[%c11_663, %c0_664, %c352_665] : memref<14x8x448xbf16, #tpu.memory_space<vmem>>, vector<1x8x96xbf16>
    %839 = vector.shape_cast %838 : vector<1x8x96xbf16> to vector<8x96xbf16>
    %c12_666 = arith.constant 12 : index
    %c0_667 = arith.constant 0 : index
    %c352_668 = arith.constant 352 : index
    %840 = vector.load %arg11[%c12_666, %c0_667, %c352_668] : memref<14x8x448xbf16, #tpu.memory_space<vmem>>, vector<1x8x96xbf16>
    %841 = vector.shape_cast %840 : vector<1x8x96xbf16> to vector<8x96xbf16>
    %c13_669 = arith.constant 13 : index
    %c0_670 = arith.constant 0 : index
    %c352_671 = arith.constant 352 : index
    %842 = vector.load %arg11[%c13_669, %c0_670, %c352_671] : memref<14x8x448xbf16, #tpu.memory_space<vmem>>, vector<1x8x96xbf16>
    %843 = vector.shape_cast %842 : vector<1x8x96xbf16> to vector<8x96xbf16>
    %844 = tpu.concatenate %839, %841, %843 in 1 : vector<8x96xbf16>, vector<8x96xbf16>, vector<8x96xbf16> -> vector<8x288xbf16>
    %cst_672 = arith.constant dense<0.000000e+00> : vector<8x32xf32>
    %845 = tpu.matmul %844, %156, %cst_672 {dimension_numbers = #tpu.dot_dimension_numbers<[1], [0], [0], [1], [0, 0, 1, 1], [], []>} : vector<8x288xbf16>, vector<288x32xbf16>, vector<8x32xf32> -> vector<8x32xf32>
    %846 = vector.broadcast %157 : vector<1x32xf32> to vector<8x32xf32>
    %847 = arith.addf %845, %846 : vector<8x32xf32>
    %cst_673 = arith.constant 0.000000e+00 : f32
    %848 = vector.broadcast %cst_673 : f32 to vector<8x32xf32>
    %849 = arith.maximumf %847, %848 : vector<8x32xf32>
    %850 = arith.truncf %849 : vector<8x32xf32> to vector<8x32xbf16>
    %c0_674 = arith.constant 0 : index
    %c1536 = arith.constant 1536 : index
    %851 = vector.load %arg12[%c0_674, %c1536] : memref<8x1568xbf16, #tpu.memory_space<vmem>>, vector<8x32xbf16>
    tpu.vector_store %arg12[%c0_674, %c1536], %850 {strides = array<i32>} : memref<8x1568xbf16, #tpu.memory_space<vmem>>, vector<8x32xbf16>,
    %c0_675 = arith.constant 0 : index
    %c0_676 = arith.constant 0 : index
    %852 = vector.load %arg12[%c0_675, %c0_676] : memref<8x1568xbf16, #tpu.memory_space<vmem>>, vector<8x1568xbf16>
    %c0_677 = arith.constant 0 : index
    %c0_678 = arith.constant 0 : index
    %853 = vector.load %arg6[%c0_677, %c0_678] : memref<1568x128xbf16, #tpu.memory_space<vmem>>, vector<1568x128xbf16>
    %cst_679 = arith.constant dense<0.000000e+00> : vector<8x128xf32>
    %854 = tpu.matmul %852, %853, %cst_679 {dimension_numbers = #tpu.dot_dimension_numbers<[1], [0], [0], [1], [0, 0, 1, 1], [], []>} : vector<8x1568xbf16>, vector<1568x128xbf16>, vector<8x128xf32> -> vector<8x128xf32>
    %c0_680 = arith.constant 0 : index
    %c0_681 = arith.constant 0 : index
    %855 = vector.load %arg7[%c0_680, %c0_681] : memref<1x128xf32, #tpu.memory_space<vmem>>, vector<1x128xf32>
    %856 = vector.broadcast %855 : vector<1x128xf32> to vector<8x128xf32>
    %857 = arith.addf %854, %856 : vector<8x128xf32>
    %cst_682 = arith.constant 0.000000e+00 : f32
    %858 = vector.broadcast %cst_682 : f32 to vector<8x128xf32>
    %859 = arith.maximumf %857, %858 : vector<8x128xf32>
    %860 = arith.truncf %859 : vector<8x128xf32> to vector<8x128xbf16>
    %c0_683 = arith.constant 0 : index
    %c0_684 = arith.constant 0 : index
    %861 = vector.load %arg8[%c0_683, %c0_684] : memref<128x10xbf16, #tpu.memory_space<vmem>>, vector<128x10xbf16>
    %cst_685 = arith.constant dense<0.000000e+00> : vector<8x10xf32>
    %862 = tpu.matmul %860, %861, %cst_685 {dimension_numbers = #tpu.dot_dimension_numbers<[1], [0], [0], [1], [0, 0, 1, 1], [], []>} : vector<8x128xbf16>, vector<128x10xbf16>, vector<8x10xf32> -> vector<8x10xf32>
    %c0_686 = arith.constant 0 : index
    %c0_687 = arith.constant 0 : index
    %863 = vector.load %arg9[%c0_686, %c0_687] : memref<1x10xf32, #tpu.memory_space<vmem>>, vector<1x10xf32>
    %864 = vector.broadcast %863 : vector<1x10xf32> to vector<8x10xf32>
    %865 = arith.addf %862, %864 : vector<8x10xf32>
    %cst_688 = arith.constant 0.000000e+00 : f32
    %866 = vector.broadcast %cst_688 : f32 to vector<8x10xf32>
    %867 = arith.maximumf %865, %866 : vector<8x10xf32>
    %c0_689 = arith.constant 0 : index
    %c0_690 = arith.constant 0 : index
    %868 = vector.load %arg10[%c0_689, %c0_690] : memref<8x10xf32, #tpu.memory_space<vmem>>, vector<8x10xf32>
    tpu.vector_store %arg10[%c0_689, %c0_690], %867 {strides = array<i32>} : memref<8x10xf32, #tpu.memory_space<vmem>>, vector<8x10xf32>,
    return
  }
  func.func @transform_0(%arg0: i32) -> (i32, i32, i32) {
    %c0_i32 = arith.constant 0 : i32
    %c0_i32_0 = arith.constant 0 : i32
    %c0_i32_1 = arith.constant 0 : i32
    return %arg0, %c0_i32, %c0_i32_0 : i32, i32, i32
  }
  func.func @transform_1(%arg0: i32) -> (i32, i32) {
    %c0_i32 = arith.constant 0 : i32
    %c0_i32_0 = arith.constant 0 : i32
    %c0_i32_1 = arith.constant 0 : i32
    return %c0_i32, %c0_i32_0 : i32, i32
  }
  func.func @transform_2(%arg0: i32) -> (i32, i32) {
    %c0_i32 = arith.constant 0 : i32
    %c0_i32_0 = arith.constant 0 : i32
    %c0_i32_1 = arith.constant 0 : i32
    return %c0_i32, %c0_i32_0 : i32, i32
  }
  func.func @transform_3(%arg0: i32) -> (i32, i32) {
    %c0_i32 = arith.constant 0 : i32
    %c0_i32_0 = arith.constant 0 : i32
    %c0_i32_1 = arith.constant 0 : i32
    return %c0_i32, %c0_i32_0 : i32, i32
  }
  func.func @transform_4(%arg0: i32) -> (i32, i32) {
    %c0_i32 = arith.constant 0 : i32
    %c0_i32_0 = arith.constant 0 : i32
    %c0_i32_1 = arith.constant 0 : i32
    return %c0_i32, %c0_i32_0 : i32, i32
  }
  func.func @transform_5(%arg0: i32) -> (i32, i32) {
    %c0_i32 = arith.constant 0 : i32
    %c0_i32_0 = arith.constant 0 : i32
    %c0_i32_1 = arith.constant 0 : i32
    return %c0_i32, %c0_i32_0 : i32, i32
  }
  func.func @transform_6(%arg0: i32) -> (i32, i32) {
    %c0_i32 = arith.constant 0 : i32
    %c0_i32_0 = arith.constant 0 : i32
    %c0_i32_1 = arith.constant 0 : i32
    return %c0_i32, %c0_i32_0 : i32, i32
  }
  func.func @transform_7(%arg0: i32) -> (i32, i32) {
    %c0_i32 = arith.constant 0 : i32
    %c0_i32_0 = arith.constant 0 : i32
    %c0_i32_1 = arith.constant 0 : i32
    return %c0_i32, %c0_i32_0 : i32, i32
  }
  func.func @transform_8(%arg0: i32) -> (i32, i32) {
    %c0_i32 = arith.constant 0 : i32
    %c0_i32_0 = arith.constant 0 : i32
    %c0_i32_1 = arith.constant 0 : i32
    return %c0_i32, %c0_i32_0 : i32, i32
  }
  func.func @transform_9(%arg0: i32) -> (i32, i32) {
    %c0_i32 = arith.constant 0 : i32
    %c0_i32_0 = arith.constant 0 : i32
    return %arg0, %c0_i32 : i32, i32
  }
}

</mosaic_0001>

<llo_original>
// kernel: cnn_forward.1
$region0: #{cnn_forward.1}
  #allocation0 [shape = 'u32[]', space=smem, size = 0x4, offset = 0x4, fixed_abs, tag = 'smem constant byte address 0x4 - core index']
  #allocation1 [shape = 'u32[144,128]{1,0:T(1,128)}', space=vmem, size = 0x12000, scoped, tag = 'internal scratch']
  #allocation2 [shape = 'bf16[14,8,448]{2,1,0:T(8,128)(2,1)}', space=vmem, size = 0x1c000, scoped, tag = 'scratch operand']
  #allocation3 [shape = 'bf16[8,1568]{1,0:T(8,128)(2,1)}', space=vmem, size = 0x6800, scoped, tag = 'scratch operand']
  %s0 = inlined_call_operand.vmem [shape: bf16[8,14,224], index: 0, kind: input, shape index: {}]
  %s1 = inlined_call_operand.vmem [shape: bf16[224,448], index: 1, kind: input, shape index: {}]
  %s2 = inlined_call_operand.vmem [shape: f32[1,448], index: 2, kind: input, shape index: {}]
  %s3 = inlined_call_operand.vmem [shape: bf16[288,32], index: 3, kind: input, shape index: {}]
  %s4 = inlined_call_operand.vmem [shape: f32[1,32], index: 4, kind: input, shape index: {}]
  %s5 = inlined_call_operand.vmem [shape: bf16[1568,128], index: 5, kind: input, shape index: {}]
  %s6 = inlined_call_operand.vmem [shape: f32[1,128], index: 6, kind: input, shape index: {}]
  %s7 = inlined_call_operand.vmem [shape: bf16[128,10], index: 7, kind: input, shape index: {}]
  %s8 = inlined_call_operand.vmem [shape: f32[1,10], index: 8, kind: input, shape index: {}]
  %s9 = inlined_call_operand.vmem [shape: f32[8,10], index: 9, kind: output, shape index: {}]
  %s10 = sld [smem:[#allocation0]]
  $region46: #{cnn_forward.1} parent=0
    _
  %s12 = ssub.s32 1, %s10
  %s13 = scalar_select 0, %s12, %s10
  // Predicated region
  $region2: #{cnn_forward.1} parent=0 // pred_check
    _
  $region3: #{cnn_forward.1} parent=0 // pred_check_branch
    %15 = sbr.rel (0) target = $region5
  $region4: #{cnn_forward.1} parent=0 // pred_region
    _
  $region5: #{cnn_forward.1} parent=0 // pred_fallthru
    _
  // Predicated region
  $region6: #{cnn_forward.1} parent=0 // pred_check
    _
  $region7: #{cnn_forward.1} parent=0 // pred_check_branch
    %17 = sbr.rel (0) target = $region9
  $region8: #{cnn_forward.1} parent=0 // pred_region
    _
  $region9: #{cnn_forward.1} parent=0 // pred_fallthru
    _
  // Predicated region
  $region10: #{cnn_forward.1} parent=0 // pred_check
    _
  $region11: #{cnn_forward.1} parent=0 // pred_check_branch
    %19 = sbr.rel (0) target = $region13
  $region12: #{cnn_forward.1} parent=0 // pred_region
    _
  $region13: #{cnn_forward.1} parent=0 // pred_fallthru
    _
  // Predicated region
  $region14: #{cnn_forward.1} parent=0 // pred_check
    _
  $region15: #{cnn_forward.1} parent=0 // pred_check_branch
    %21 = sbr.rel (0) target = $region17
  $region16: #{cnn_forward.1} parent=0 // pred_region
    _
  $region17: #{cnn_forward.1} parent=0 // pred_fallthru
    _
  // Predicated region
  $region18: #{cnn_forward.1} parent=0 // pred_check
    _
  $region19: #{cnn_forward.1} parent=0 // pred_check_branch
    %23 = sbr.rel (0) target = $region21
  $region20: #{cnn_forward.1} parent=0 // pred_region
    _
  $region21: #{cnn_forward.1} parent=0 // pred_fallthru
    _
  // Predicated region
  $region22: #{cnn_forward.1} parent=0 // pred_check
    _
  $region23: #{cnn_forward.1} parent=0 // pred_check_branch
    %25 = sbr.rel (0) target = $region25
  $region24: #{cnn_forward.1} parent=0 // pred_region
    _
  $region25: #{cnn_forward.1} parent=0 // pred_fallthru
    _
  // Predicated region
  $region26: #{cnn_forward.1} parent=0 // pred_check
    _
  $region27: #{cnn_forward.1} parent=0 // pred_check_branch
    %27 = sbr.rel (0) target = $region29
  $region28: #{cnn_forward.1} parent=0 // pred_region
    _
  $region29: #{cnn_forward.1} parent=0 // pred_fallthru
    _
  // Predicated region
  $region30: #{cnn_forward.1} parent=0 // pred_check
    _
  $region31: #{cnn_forward.1} parent=0 // pred_check_branch
    %29 = sbr.rel (0) target = $region33
  $region32: #{cnn_forward.1} parent=0 // pred_region
    _
  $region33: #{cnn_forward.1} parent=0 // pred_fallthru
    _
  // Predicated region
  $region34: #{cnn_forward.1} parent=0 // pred_check
    _
  $region35: #{cnn_forward.1} parent=0 // pred_check_branch
    %31 = sbr.rel (0) target = $region37
  $region36: #{cnn_forward.1} parent=0 // pred_region
    _
  $region37: #{cnn_forward.1} parent=0 // pred_fallthru
    _
  %v33 = vld [vmem:[%s1] sm:$0xff]
  %v34 = vld [vmem:[%s1 + $0x8] sm:$0xff]
  %v35 = vld [vmem:[%s1 + $0x10] sm:$0xff]
  %v36 = vld [vmem:[%s1 + $0x18] sm:$0xff]
  %v37 = vld [vmem:[%s1 + $0x20] sm:$0xff]
  %v38 = vld [vmem:[%s1 + $0x28] sm:$0xff]
  %v39 = vld [vmem:[%s1 + $0x30] sm:$0xff]
  %v40 = vld [vmem:[%s1 + $0x38] sm:$0xff]
  %v41 = vld [vmem:[%s1 + $0x40] sm:$0xff]
  %v42 = vld [vmem:[%s1 + $0x48] sm:$0xff]
  %v43 = vld [vmem:[%s1 + $0x50] sm:$0xff]
  %v44 = vld [vmem:[%s1 + $0x58] sm:$0xff]
  %v45 = vld [vmem:[%s1 + $0x60] sm:$0xff]
  %v46 = vld [vmem:[%s1 + $0x68] sm:$0xff]
  %v47 = vld [vmem:[%s1 + $0x70] sm:$0xff]
  %v48 = vld [vmem:[%s1 + $0x78] sm:$0xff]
  %v49 = vld [vmem:[%s1 + $0x80] sm:$0xff]
  %v50 = vld [vmem:[%s1 + $0x88] sm:$0xff]
  %v51 = vld [vmem:[%s1 + $0x90] sm:$0xff]
  %v52 = vld [vmem:[%s1 + $0x98] sm:$0xff]
  %v53 = vld [vmem:[%s1 + $0xa0] sm:$0xff]
  %v54 = vld [vmem:[%s1 + $0xa8] sm:$0xff]
  %v55 = vld [vmem:[%s1 + $0xb0] sm:$0xff]
  %v56 = vld [vmem:[%s1 + $0xb8] sm:$0xff]
  %v57 = vld [vmem:[%s1 + $0xc0] sm:$0xff]
  %v58 = vld [vmem:[%s1 + $0xc8] sm:$0xff]
  %v59 = vld [vmem:[%s1 + $0xd0] sm:$0xff]
  %v60 = vld [vmem:[%s1 + $0xd8] sm:$0xff]
  %v61 = vld [vmem:[%s1 + $0xe0] sm:$0xff]
  %v62 = vld [vmem:[%s1 + $0xe8] sm:$0xff]
  %v63 = vld [vmem:[%s1 + $0xf0] sm:$0xff]
  %v64 = vld [vmem:[%s1 + $0xf8] sm:$0xff]
  %v65 = vld [vmem:[%s1 + $0x100] sm:$0xff]
  %v66 = vld [vmem:[%s1 + $0x108] sm:$0xff]
  %v67 = vld [vmem:[%s1 + $0x110] sm:$0xff]
  %v68 = vld [vmem:[%s1 + $0x118] sm:$0xff]
  %v69 = vld [vmem:[%s1 + $0x120] sm:$0xff]
  %v70 = vld [vmem:[%s1 + $0x128] sm:$0xff]
  %v71 = vld [vmem:[%s1 + $0x130] sm:$0xff]
  %v72 = vld [vmem:[%s1 + $0x138] sm:$0xff]
  %v73 = vld [vmem:[%s1 + $0x140] sm:$0xff]
  %v74 = vld [vmem:[%s1 + $0x148] sm:$0xff]
  %v75 = vld [vmem:[%s1 + $0x150] sm:$0xff]
  %v76 = vld [vmem:[%s1 + $0x158] sm:$0xff]
  %v77 = vld [vmem:[%s1 + $0x160] sm:$0xff]
  %v78 = vld [vmem:[%s1 + $0x168] sm:$0xff]
  %v79 = vld [vmem:[%s1 + $0x170] sm:$0xff]
  %v80 = vld [vmem:[%s1 + $0x178] sm:$0xff]
  %v81 = vld [vmem:[%s1 + $0x180] sm:$0xff]
  %v82 = vld [vmem:[%s1 + $0x188] sm:$0xff]
  %v83 = vld [vmem:[%s1 + $0x190] sm:$0xff]
  %v84 = vld [vmem:[%s1 + $0x198] sm:$0xff]
  %v85 = vld [vmem:[%s1 + $0x1a0] sm:$0xff]
  %v86 = vld [vmem:[%s1 + $0x1a8] sm:$0xff]
  %v87 = vld [vmem:[%s1 + $0x1b0] sm:$0xff]
  %v88 = vld [vmem:[%s1 + $0x1b8] sm:$0xff]
  %v89 = vld [vmem:[%s2] sm:$0xf]
  %v90 = vld [vmem:[%s0] sm:$0x11]
  %v91 = vld [vmem:[%s0 + $0x10] sm:$0x11]
  %v92 = vld [vmem:[%s0 + $0x20] sm:$0x11]
  %v93 = vld [vmem:[%s0 + $0x30] sm:$0x11]
  %v94 = vld [vmem:[%s0 + $0x40] sm:$0x11]
  %v95 = vld [vmem:[%s0 + $0x50] sm:$0x11]
  %v96 = vld [vmem:[%s0 + $0x60] sm:$0x11]
  %v97 = vld [vmem:[%s0 + $0x70] sm:$0x11]
  %v99 = vlaneseq
  %v100 = vshrl.u32 %v99, 7
  %v101 = vsub.s32 0, %v100
  %v102 = vrot.slane %v89, %v101
  %v103 = vlaneseq
  %v104 = vshrl.u32 %v103, 7
  %v105 = vsub.s32 1, %v104
  %v106 = vrot.slane %v89, %v105
  %v107 = vlaneseq
  %v108 = vshrl.u32 %v107, 7
  %v109 = vsub.s32 2, %v108
  %v110 = vrot.slane %v89, %v109
  %v111 = vlaneseq
  %v112 = vshrl.u32 %v111, 7
  %v113 = vsub.s32 3, %v112
  %v114 = vrot.slane %v89, %v113
  %v127 = vunpack.c.l.b16 %v90
  %v128 = vunpack.c.h.b16 %v90
  %v129 = vunpack.c.l.b16 %v91
  %v130 = vunpack.c.h.b16 %v91
  %v131 = vunpack.c.l.b16 %v92
  %v132 = vunpack.c.h.b16 %v92
  %v133 = vunpack.c.l.b16 %v93
  %v134 = vunpack.c.h.b16 %v93
  %v135 = vunpack.c.l.b16 %v94
  %v136 = vunpack.c.h.b16 %v94
  %v137 = vunpack.c.l.b16 %v95
  %v138 = vunpack.c.h.b16 %v95
  %v139 = vunpack.c.l.b16 %v96
  %v140 = vunpack.c.h.b16 %v96
  %v141 = vunpack.c.l.b16 %v97
  %v142 = vunpack.c.h.b16 %v97
  %v143 = vpack.c.b16 %v127, %v127
  %v144 = vpack.c.b16 %v128, %v128
  %v145 = vpack.c.b16 %v129, %v129
  %v146 = vpack.c.b16 %v130, %v130
  %v147 = vpack.c.b16 %v131, %v131
  %v148 = vpack.c.b16 %v132, %v132
  %v149 = vpack.c.b16 %v133, %v133
  %v150 = vpack.c.b16 %v134, %v134
  %v151 = vpack.c.b16 %v135, %v135
  %v152 = vpack.c.b16 %v136, %v136
  %v153 = vpack.c.b16 %v137, %v137
  %v154 = vpack.c.b16 %v138, %v138
  %v155 = vpack.c.b16 %v139, %v139
  %v156 = vpack.c.b16 %v140, %v140
  %v157 = vpack.c.b16 %v141, %v141
  %v158 = vpack.c.b16 %v142, %v142
  %v159 = vunpack.c.l.b16 %v143
  %v160 = vunpack.c.l.b16 %v144
  %v161 = vunpack.c.l.b16 %v145
  %v162 = vunpack.c.l.b16 %v146
  %v163 = vunpack.c.l.b16 %v147
  %v164 = vunpack.c.l.b16 %v148
  %v165 = vunpack.c.l.b16 %v149
  %v166 = vunpack.c.l.b16 %v150
  %v167 = vunpack.c.l.b16 %v151
  %v168 = vunpack.c.l.b16 %v152
  %v169 = vunpack.c.l.b16 %v153
  %v170 = vunpack.c.l.b16 %v154
  %v171 = vunpack.c.l.b16 %v155
  %v172 = vunpack.c.l.b16 %v156
  %v173 = vunpack.c.l.b16 %v157
  %v174 = vunpack.c.l.b16 %v158
  %v175 = vrot.slane %v161, 7
  %vm176 = vcmask 1041409
  %v177 = vsel %vm176, %v175, %v159
  %v178 = vrot.slane %v163, 6
  %vm179 = vcmask 1042434
  %v180 = vsel %vm179, %v178, %v177
  %v181 = vrot.slane %v165, 5
  %vm182 = vcmask 1043459
  %v183 = vsel %vm182, %v181, %v180
  %v184 = vrot.slane %v167, 4
  %vm185 = vcmask 1044484
  %v186 = vsel %vm185, %v184, %v183
  %v187 = vrot.slane %v169, 3
  %vm188 = vcmask 1045509
  %v189 = vsel %vm188, %v187, %v186
  %v190 = vrot.slane %v171, 2
  %vm191 = vcmask 1046534
  %v192 = vsel %vm191, %v190, %v189
  %v193 = vrot.slane %v173, 1
  %vm194 = vcmask 1047559
  %v195 = vsel %vm194, %v193, %v192
  %v196 = vrot.slane %v162, 7
  %v197 = vsel %vm176, %v196, %v160
  %v198 = vrot.slane %v164, 6
  %v199 = vsel %vm179, %v198, %v197
  %v200 = vrot.slane %v166, 5
  %v201 = vsel %vm182, %v200, %v199
  %v202 = vrot.slane %v168, 4
  %v203 = vsel %vm185, %v202, %v201
  %v204 = vrot.slane %v170, 3
  %v205 = vsel %vm188, %v204, %v203
  %v206 = vrot.slane %v172, 2
  %v207 = vsel %vm191, %v206, %v205
  %v208 = vrot.slane %v174, 1
  %v209 = vsel %vm194, %v208, %v207
  %v210 = vpack.c.b16 %v195, %v195
  %v211 = vpack.c.b16 %v209, %v209
  %v269 = vunpack.c.l.b16 %v33
  %v270 = vunpack.c.h.b16 %v33
  %v271 = vunpack.c.l.b16 %v34
  %v272 = vunpack.c.h.b16 %v34
  %v273 = vunpack.c.l.b16 %v35
  %v274 = vunpack.c.h.b16 %v35
  %v275 = vunpack.c.l.b16 %v36
  %v276 = vunpack.c.h.b16 %v36
  %v277 = vunpack.c.l.b16 %v37
  %v278 = vunpack.c.h.b16 %v37
  %v279 = vunpack.c.l.b16 %v38
  %v280 = vunpack.c.h.b16 %v38
  %v281 = vunpack.c.l.b16 %v39
  %v282 = vunpack.c.h.b16 %v39
  %v283 = vunpack.c.l.b16 %v40
  %v284 = vunpack.c.h.b16 %v40
  %v285 = vunpack.c.l.b16 %v41
  %v286 = vunpack.c.h.b16 %v41
  %v287 = vunpack.c.l.b16 %v42
  %v288 = vunpack.c.h.b16 %v42
  %v289 = vunpack.c.l.b16 %v43
  %v290 = vunpack.c.h.b16 %v43
  %v291 = vunpack.c.l.b16 %v44
  %v292 = vunpack.c.h.b16 %v44
  %v293 = vunpack.c.l.b16 %v45
  %v294 = vunpack.c.h.b16 %v45
  %v295 = vunpack.c.l.b16 %v46
  %v296 = vunpack.c.h.b16 %v46
  %v297 = vunpack.c.l.b16 %v47
  %v298 = vunpack.c.h.b16 %v47
  %v299 = vunpack.c.l.b16 %v48
  %v300 = vunpack.c.h.b16 %v48
  %v301 = vunpack.c.l.b16 %v49
  %v302 = vunpack.c.h.b16 %v49
  %v303 = vunpack.c.l.b16 %v50
  %v304 = vunpack.c.h.b16 %v50
  %v305 = vunpack.c.l.b16 %v51
  %v306 = vunpack.c.h.b16 %v51
  %v307 = vunpack.c.l.b16 %v52
  %v308 = vunpack.c.h.b16 %v52
  %v309 = vunpack.c.l.b16 %v53
  %v310 = vunpack.c.h.b16 %v53
  %v311 = vunpack.c.l.b16 %v54
  %v312 = vunpack.c.h.b16 %v54
  %v313 = vunpack.c.l.b16 %v55
  %v314 = vunpack.c.h.b16 %v55
  %v315 = vunpack.c.l.b16 %v56
  %v316 = vunpack.c.h.b16 %v56
  %v317 = vunpack.c.l.b16 %v57
  %v318 = vunpack.c.h.b16 %v57
  %v319 = vunpack.c.l.b16 %v58
  %v320 = vunpack.c.h.b16 %v58
  %v321 = vunpack.c.l.b16 %v59
  %v322 = vunpack.c.h.b16 %v59
  %v323 = vunpack.c.l.b16 %v60
  %v324 = vunpack.c.h.b16 %v60
  %v325 = vunpack.c.l.b16 %v61
  %v326 = vunpack.c.h.b16 %v61
  %v327 = vunpack.c.l.b16 %v62
  %v328 = vunpack.c.h.b16 %v62
  %v329 = vunpack.c.l.b16 %v63
  %v330 = vunpack.c.h.b16 %v63
  %v331 = vunpack.c.l.b16 %v64
  %v332 = vunpack.c.h.b16 %v64
  %v333 = vunpack.c.l.b16 %v65
  %v334 = vunpack.c.h.b16 %v65
  %v335 = vunpack.c.l.b16 %v66
  %v336 = vunpack.c.h.b16 %v66
  %v337 = vunpack.c.l.b16 %v67
  %v338 = vunpack.c.h.b16 %v67
  %v339 = vunpack.c.l.b16 %v68
  %v340 = vunpack.c.h.b16 %v68
  %v341 = vunpack.c.l.b16 %v69
  %v342 = vunpack.c.h.b16 %v69
  %v343 = vunpack.c.l.b16 %v70
  %v344 = vunpack.c.h.b16 %v70
  %v345 = vunpack.c.l.b16 %v71
  %v346 = vunpack.c.h.b16 %v71
  %v347 = vunpack.c.l.b16 %v72
  %v348 = vunpack.c.h.b16 %v72
  %v349 = vunpack.c.l.b16 %v73
  %v350 = vunpack.c.h.b16 %v73
  %v351 = vunpack.c.l.b16 %v74
  %v352 = vunpack.c.h.b16 %v74
  %v353 = vunpack.c.l.b16 %v75
  %v354 = vunpack.c.h.b16 %v75
  %v355 = vunpack.c.l.b16 %v76
  %v356 = vunpack.c.h.b16 %v76
  %v357 = vunpack.c.l.b16 %v77
  %v358 = vunpack.c.h.b16 %v77
  %v359 = vunpack.c.l.b16 %v78
  %v360 = vunpack.c.h.b16 %v78
  %v361 = vunpack.c.l.b16 %v79
  %v362 = vunpack.c.h.b16 %v79
  %v363 = vunpack.c.l.b16 %v80
  %v364 = vunpack.c.h.b16 %v80
  %v365 = vunpack.c.l.b16 %v81
  %v366 = vunpack.c.h.b16 %v81
  %v367 = vunpack.c.l.b16 %v82
  %v368 = vunpack.c.h.b16 %v82
  %v369 = vunpack.c.l.b16 %v83
  %v370 = vunpack.c.h.b16 %v83
  %v371 = vunpack.c.l.b16 %v84
  %v372 = vunpack.c.h.b16 %v84
  %v373 = vunpack.c.l.b16 %v85
  %v374 = vunpack.c.h.b16 %v85
  %v375 = vunpack.c.l.b16 %v86
  %v376 = vunpack.c.h.b16 %v86
  %v377 = vunpack.c.l.b16 %v87
  %v378 = vunpack.c.h.b16 %v87
  %v379 = vunpack.c.l.b16 %v88
  %v380 = vunpack.c.h.b16 %v88
  %v381 = vpack.c.b16 %v273, %v269
  %v382 = vpack.c.b16 %v274, %v270
  %v383 = vpack.c.b16 %v275, %v271
  %v384 = vpack.c.b16 %v276, %v272
  %v385 = vpack.c.b16 %v281, %v277
  %v386 = vpack.c.b16 %v282, %v278
  %v387 = vpack.c.b16 %v283, %v279
  %v388 = vpack.c.b16 %v284, %v280
  %v389 = vpack.c.b16 %v289, %v285
  %v390 = vpack.c.b16 %v290, %v286
  %v391 = vpack.c.b16 %v291, %v287
  %v392 = vpack.c.b16 %v292, %v288
  %v393 = vpack.c.b16 %v297, %v293
  %v394 = vpack.c.b16 %v298, %v294
  %v395 = vpack.c.b16 %v299, %v295
  %v396 = vpack.c.b16 %v300, %v296
  %v397 = vpack.c.b16 %v305, %v301
  %v398 = vpack.c.b16 %v306, %v302
  %v399 = vpack.c.b16 %v307, %v303
  %v400 = vpack.c.b16 %v308, %v304
  %v401 = vpack.c.b16 %v313, %v309
  %v402 = vpack.c.b16 %v314, %v310
  %v403 = vpack.c.b16 %v315, %v311
  %v404 = vpack.c.b16 %v316, %v312
  %v405 = vpack.c.b16 %v321, %v317
  %v406 = vpack.c.b16 %v322, %v318
  %v407 = vpack.c.b16 %v323, %v319
  %v408 = vpack.c.b16 %v324, %v320
  %v409 = vpack.c.b16 %v329, %v325
  %v410 = vpack.c.b16 %v330, %v326
  %v411 = vpack.c.b16 %v331, %v327
  %v412 = vpack.c.b16 %v332, %v328
  %v413 = vpack.c.b16 %v337, %v333
  %v414 = vpack.c.b16 %v338, %v334
  %v415 = vpack.c.b16 %v339, %v335
  %v416 = vpack.c.b16 %v340, %v336
  %v417 = vpack.c.b16 %v345, %v341
  %v418 = vpack.c.b16 %v346, %v342
  %v419 = vpack.c.b16 %v347, %v343
  %v420 = vpack.c.b16 %v348, %v344
  %v421 = vpack.c.b16 %v353, %v349
  %v422 = vpack.c.b16 %v354, %v350
  %v423 = vpack.c.b16 %v355, %v351
  %v424 = vpack.c.b16 %v356, %v352
  %v425 = vpack.c.b16 %v361, %v357
  %v426 = vpack.c.b16 %v362, %v358
  %v427 = vpack.c.b16 %v363, %v359
  %v428 = vpack.c.b16 %v364, %v360
  %v429 = vpack.c.b16 %v369, %v365
  %v430 = vpack.c.b16 %v370, %v366
  %v431 = vpack.c.b16 %v371, %v367
  %v432 = vpack.c.b16 %v372, %v368
  %v433 = vpack.c.b16 %v377, %v373
  %v434 = vpack.c.b16 %v378, %v374
  %v435 = vpack.c.b16 %v379, %v375
  %v436 = vpack.c.b16 %v380, %v376
  %vm493 = vcmask 785408
  %v495 = vsel %vm493, %v211, 0
  %497 = vmatprep.subr.bf16.mxu0 %v382
  %498 = vmatpush1.bf16.msra.mxu0 %v381
  %499 = vmatprep.subr.bf16.mxu0 %v386
  %500 = vmatpush1.bf16.msra.mxu0 %v385
  %501 = vmatprep.subr.bf16.mxu0 %v390
  %502 = vmatpush1.bf16.msra.mxu0 %v389
  %503 = vmatprep.subr.bf16.mxu0 %v394
  %504 = vmatpush1.bf16.msra.mxu0 %v393
  %505 = vmatprep.subr.bf16.mxu0 %v398
  %506 = vmatpush1.bf16.msra.mxu0 %v397
  %507 = vmatprep.subr.bf16.mxu0 %v402
  %508 = vmatpush1.bf16.msra.mxu0 %v401
  %509 = vmatprep.subr.bf16.mxu0 %v406
  %510 = vmatpush1.bf16.msra.mxu0 %v405
  %511 = vmatprep.subr.bf16.mxu0 %v410
  %512 = vmatpush1.bf16.msra.mxu0 %v409
  %513 = vmatprep.subr.bf16.mxu0 %v414
  %514 = vmatpush1.bf16.msra.mxu0 %v413
  %515 = vmatprep.subr.bf16.mxu0 %v418
  %516 = vmatpush1.bf16.msra.mxu0 %v417
  %517 = vmatprep.subr.bf16.mxu0 %v422
  %518 = vmatpush1.bf16.msra.mxu0 %v421
  %519 = vmatprep.subr.bf16.mxu0 %v426
  %520 = vmatpush1.bf16.msra.mxu0 %v425
  %521 = vmatprep.subr.bf16.mxu0 %v430
  %522 = vmatpush1.bf16.msra.mxu0 %v429
  %523 = vmatprep.subr.bf16.mxu0 %v434
  %524 = vmatpush1.bf16.msra.mxu0 %v433
  %525 = vmatprep.subr.bf16.mxu0 0
  %526 = vmatpush1.bf16.msra.mxu0 0
  %527 = vmatprep.subr.bf16.mxu0 0
  %528 = vmatpush1.bf16.msra.mxu0 0
  %529 = vmatprep.mubr.bf16.mxu0 %v495
  %530 = vmatmul.mubr.bf16.gmra.mrb[0].mxu0 %v210
  %v531 = vpop.f32.mrb[0].mxu0
  %v532 = vadd.f32 %v102, %v531
  %v533 = vpop.f32.mrb[0].mxu0
  %v534 = vadd.f32 %v106, %v533
  %v535 = vpop.f32.mrb[0].mxu0
  %v536 = vpop.f32.mrb[0].mxu0
  %537 = vdwg.mxu0
  %538 = vmatprep.subr.bf16.mxu0 %v384
  %539 = vmatpush1.bf16.msra.mxu0 %v383
  %540 = vmatprep.subr.bf16.mxu0 %v388
  %541 = vmatpush1.bf16.msra.mxu0 %v387
  %542 = vmatprep.subr.bf16.mxu0 %v392
  %543 = vmatpush1.bf16.msra.mxu0 %v391
  %544 = vmatprep.subr.bf16.mxu0 %v396
  %545 = vmatpush1.bf16.msra.mxu0 %v395
  %546 = vmatprep.subr.bf16.mxu0 %v400
  %547 = vmatpush1.bf16.msra.mxu0 %v399
  %548 = vmatprep.subr.bf16.mxu0 %v404
  %549 = vmatpush1.bf16.msra.mxu0 %v403
  %550 = vmatprep.subr.bf16.mxu0 %v408
  %551 = vmatpush1.bf16.msra.mxu0 %v407
  %552 = vmatprep.subr.bf16.mxu0 %v412
  %553 = vmatpush1.bf16.msra.mxu0 %v411
  %554 = vmatprep.subr.bf16.mxu0 %v416
  %555 = vmatpush1.bf16.msra.mxu0 %v415
  %556 = vmatprep.subr.bf16.mxu0 %v420
  %557 = vmatpush1.bf16.msra.mxu0 %v419
  %558 = vmatprep.subr.bf16.mxu0 %v424
  %559 = vmatpush1.bf16.msra.mxu0 %v423
  %560 = vmatprep.subr.bf16.mxu0 %v428
  %561 = vmatpush1.bf16.msra.mxu0 %v427
  %562 = vmatprep.subr.bf16.mxu0 %v432
  %563 = vmatpush1.bf16.msra.mxu0 %v431
  %564 = vmatprep.subr.bf16.mxu0 %v436
  %565 = vmatpush1.bf16.msra.mxu0 %v435
  %566 = vmatprep.subr.bf16.mxu0 0
  %567 = vmatpush1.bf16.msra.mxu0 0
  %568 = vmatprep.subr.bf16.mxu0 0
  %569 = vmatpush1.bf16.msra.mxu0 0
  %570 = vmatprep.mubr.bf16.mxu0 %v495
  %571 = vmatmul.mubr.bf16.gmra.mrb[0].mxu0 %v210
  %v572 = vpop.f32.mrb[0].mxu0
  %v573 = vadd.f32 %v110, %v572
  %v574 = vpop.f32.mrb[0].mxu0
  %v575 = vadd.f32 %v114, %v574
  %v576 = vpop.f32.mrb[0].mxu0
  %v577 = vpop.f32.mrb[0].mxu0
  %578 = vdwg.mxu0
  %v579 = vmax.f32 %v532, 0.0
  %v580 = vmax.f32 %v534, 0.0
  %v581 = vmax.f32 %v573, 0.0
  %v582 = vmax.f32 %v575, 0.0
  %v583 = vpack.c.bf16 %v579, %v579
  %v584 = vpack.c.bf16 %v580, %v580
  %v585 = vpack.c.bf16 %v581, %v581
  %v586 = vpack.c.bf16 %v582, %v582
  %v591 = vunpack.c.l.b16 %v583
  %v592 = vunpack.c.l.b16 %v584
  %v593 = vunpack.c.l.b16 %v585
  %v594 = vunpack.c.l.b16 %v586
  %v595 = vpack.c.b16 %v592, %v591
  %v596 = vpack.c.b16 %v594, %v593
  %599 = vst [vmem:[#allocation2] sm:$0xff] %v595
  %vm600 = vcmask 1043456
  %vm601 = vcmask 523268
  %vm602 = vmor %vm601, %vm600
  %603 = vst.msk [vmem:[#allocation2 + $0x8] sm:$0xff] %vm602, %v596
  %v604 = vld [vmem:[%s0] sm:$0x11]
  %v605 = vld [vmem:[%s0 + $0x10] sm:$0x11]
  %v606 = vld [vmem:[%s0 + $0x20] sm:$0x11]
  %v607 = vld [vmem:[%s0 + $0x30] sm:$0x11]
  %v608 = vld [vmem:[%s0 + $0x40] sm:$0x11]
  %v609 = vld [vmem:[%s0 + $0x50] sm:$0x11]
  %v610 = vld [vmem:[%s0 + $0x60] sm:$0x11]
  %v611 = vld [vmem:[%s0 + $0x70] sm:$0x11]
  %v620 = vunpack.c.l.b16 %v604
  %v621 = vunpack.c.h.b16 %v604
  %v622 = vunpack.c.l.b16 %v605
  %v623 = vunpack.c.h.b16 %v605
  %v624 = vunpack.c.l.b16 %v606
  %v625 = vunpack.c.h.b16 %v606
  %v626 = vunpack.c.l.b16 %v607
  %v627 = vunpack.c.h.b16 %v607
  %v628 = vunpack.c.l.b16 %v608
  %v629 = vunpack.c.h.b16 %v608
  %v630 = vunpack.c.l.b16 %v609
  %v631 = vunpack.c.h.b16 %v609
  %v632 = vunpack.c.l.b16 %v610
  %v633 = vunpack.c.h.b16 %v610
  %v634 = vunpack.c.l.b16 %v611
  %v635 = vunpack.c.h.b16 %v611
  %v636 = vpack.c.b16 %v620, %v620
  %v637 = vpack.c.b16 %v621, %v621
  %v638 = vpack.c.b16 %v622, %v622
  %v639 = vpack.c.b16 %v623, %v623
  %v640 = vpack.c.b16 %v624, %v624
  %v641 = vpack.c.b16 %v625, %v625
  %v642 = vpack.c.b16 %v626, %v626
  %v643 = vpack.c.b16 %v627, %v627
  %v644 = vpack.c.b16 %v628, %v628
  %v645 = vpack.c.b16 %v629, %v629
  %v646 = vpack.c.b16 %v630, %v630
  %v647 = vpack.c.b16 %v631, %v631
  %v648 = vpack.c.b16 %v632, %v632
  %v649 = vpack.c.b16 %v633, %v633
  %v650 = vpack.c.b16 %v634, %v634
  %v651 = vpack.c.b16 %v635, %v635
  %v652 = vunpack.c.l.b16 %v636
  %v653 = vunpack.c.l.b16 %v637
  %v654 = vunpack.c.l.b16 %v638
  %v655 = vunpack.c.l.b16 %v639
  %v656 = vunpack.c.l.b16 %v640
  %v657 = vunpack.c.l.b16 %v641
  %v658 = vunpack.c.l.b16 %v642
  %v659 = vunpack.c.l.b16 %v643
  %v660 = vunpack.c.l.b16 %v644
  %v661 = vunpack.c.l.b16 %v645
  %v662 = vunpack.c.l.b16 %v646
  %v663 = vunpack.c.l.b16 %v647
  %v664 = vunpack.c.l.b16 %v648
  %v665 = vunpack.c.l.b16 %v649
  %v666 = vunpack.c.l.b16 %v650
  %v667 = vunpack.c.l.b16 %v651
  %v668 = vrot.slane %v652, 1
  %v669 = vsel %vm176, %v654, %v668
  %v670 = vrot.slane %v656, 7
  %v671 = vsel %vm179, %v670, %v669
  %v672 = vrot.slane %v658, 6
  %v673 = vsel %vm182, %v672, %v671
  %v674 = vrot.slane %v660, 5
  %v675 = vsel %vm185, %v674, %v673
  %v676 = vrot.slane %v662, 4
  %v677 = vsel %vm188, %v676, %v675
  %v678 = vrot.slane %v664, 3
  %v679 = vsel %vm191, %v678, %v677
  %v680 = vrot.slane %v666, 2
  %v681 = vsel %vm194, %v680, %v679
  %v682 = vrot.slane %v653, 1
  %v683 = vsel %vm176, %v655, %v682
  %v684 = vrot.slane %v657, 7
  %v685 = vsel %vm179, %v684, %v683
  %v686 = vrot.slane %v659, 6
  %v687 = vsel %vm182, %v686, %v685
  %v688 = vrot.slane %v661, 5
  %v689 = vsel %vm185, %v688, %v687
  %v690 = vrot.slane %v663, 4
  %v691 = vsel %vm188, %v690, %v689
  %v692 = vrot.slane %v665, 3
  %v693 = vsel %vm191, %v692, %v691
  %v694 = vrot.slane %v667, 2
  %v695 = vsel %vm194, %v694, %v693
  %v696 = vpack.c.b16 %v681, %v681
  %v697 = vpack.c.b16 %v695, %v695
  %v700 = vsel %vm493, %v697, 0
  %702 = vmatprep.subr.bf16.mxu0 %v382
  %703 = vmatpush1.bf16.msra.mxu0 %v381
  %704 = vmatprep.subr.bf16.mxu0 %v386
  %705 = vmatpush1.bf16.msra.mxu0 %v385
  %706 = vmatprep.subr.bf16.mxu0 %v390
  %707 = vmatpush1.bf16.msra.mxu0 %v389
  %708 = vmatprep.subr.bf16.mxu0 %v394
  %709 = vmatpush1.bf16.msra.mxu0 %v393
  %710 = vmatprep.subr.bf16.mxu0 %v398
  %711 = vmatpush1.bf16.msra.mxu0 %v397
  %712 = vmatprep.subr.bf16.mxu0 %v402
  %713 = vmatpush1.bf16.msra.mxu0 %v401
  %714 = vmatprep.subr.bf16.mxu0 %v406
  %715 = vmatpush1.bf16.msra.mxu0 %v405
  %716 = vmatprep.subr.bf16.mxu0 %v410
  %717 = vmatpush1.bf16.msra.mxu0 %v409
  %718 = vmatprep.subr.bf16.mxu0 %v414
  %719 = vmatpush1.bf16.msra.mxu0 %v413
  %720 = vmatprep.subr.bf16.mxu0 %v418
  %721 = vmatpush1.bf16.msra.mxu0 %v417
  %722 = vmatprep.subr.bf16.mxu0 %v422
  %723 = vmatpush1.bf16.msra.mxu0 %v421
  %724 = vmatprep.subr.bf16.mxu0 %v426
  %725 = vmatpush1.bf16.msra.mxu0 %v425
  %726 = vmatprep.subr.bf16.mxu0 %v430
  %727 = vmatpush1.bf16.msra.mxu0 %v429
  %728 = vmatprep.subr.bf16.mxu0 %v434
  %729 = vmatpush1.bf16.msra.mxu0 %v433
  %730 = vmatprep.subr.bf16.mxu0 0
  %731 = vmatpush1.bf16.msra.mxu0 0
  %732 = vmatprep.subr.bf16.mxu0 0
  %733 = vmatpush1.bf16.msra.mxu0 0
  %734 = vmatprep.mubr.bf16.mxu0 %v700
  %735 = vmatmul.mubr.bf16.gmra.mrb[0].mxu0 %v696
  %v736 = vpop.f32.mrb[0].mxu0
  %v737 = vadd.f32 %v102, %v736
  %v738 = vpop.f32.mrb[0].mxu0
  %v739 = vadd.f32 %v106, %v738
  %v740 = vpop.f32.mrb[0].mxu0
  %v741 = vpop.f32.mrb[0].mxu0
  %742 = vdwg.mxu0
  %743 = vmatprep.subr.bf16.mxu0 %v384
  %744 = vmatpush1.bf16.msra.mxu0 %v383
  %745 = vmatprep.subr.bf16.mxu0 %v388
  %746 = vmatpush1.bf16.msra.mxu0 %v387
  %747 = vmatprep.subr.bf16.mxu0 %v392
  %748 = vmatpush1.bf16.msra.mxu0 %v391
  %749 = vmatprep.subr.bf16.mxu0 %v396
  %750 = vmatpush1.bf16.msra.mxu0 %v395
  %751 = vmatprep.subr.bf16.mxu0 %v400
  %752 = vmatpush1.bf16.msra.mxu0 %v399
  %753 = vmatprep.subr.bf16.mxu0 %v404
  %754 = vmatpush1.bf16.msra.mxu0 %v403
  %755 = vmatprep.subr.bf16.mxu0 %v408
  %756 = vmatpush1.bf16.msra.mxu0 %v407
  %757 = vmatprep.subr.bf16.mxu0 %v412
  %758 = vmatpush1.bf16.msra.mxu0 %v411
  %759 = vmatprep.subr.bf16.mxu0 %v416
  %760 = vmatpush1.bf16.msra.mxu0 %v415
  %761 = vmatprep.subr.bf16.mxu0 %v420
  %762 = vmatpush1.bf16.msra.mxu0 %v419
  %763 = vmatprep.subr.bf16.mxu0 %v424
  %764 = vmatpush1.bf16.msra.mxu0 %v423
  %765 = vmatprep.subr.bf16.mxu0 %v428
  %766 = vmatpush1.bf16.msra.mxu0 %v427
  %767 = vmatprep.subr.bf16.mxu0 %v432
  %768 = vmatpush1.bf16.msra.mxu0 %v431
  %769 = vmatprep.subr.bf16.mxu0 %v436
  %770 = vmatpush1.bf16.msra.mxu0 %v435
  %771 = vmatprep.subr.bf16.mxu0 0
  %772 = vmatpush1.bf16.msra.mxu0 0
  %773 = vmatprep.subr.bf16.mxu0 0
  %774 = vmatpush1.bf16.msra.mxu0 0
  %775 = vmatprep.mubr.bf16.mxu0 %v700
  %776 = vmatmul.mubr.bf16.gmra.mrb[0].mxu0 %v696
  %v777 = vpop.f32.mrb[0].mxu0
  %v778 = vadd.f32 %v110, %v777
  %v779 = vpop.f32.mrb[0].mxu0
  %v780 = vadd.f32 %v114, %v779
  %v781 = vpop.f32.mrb[0].mxu0
  %v782 = vpop.f32.mrb[0].mxu0
  %783 = vdwg.mxu0
  %v784 = vmax.f32 %v737, 0.0
  %v785 = vmax.f32 %v739, 0.0
  %v786 = vmax.f32 %v778, 0.0
  %v787 = vmax.f32 %v780, 0.0
  %v788 = vpack.c.bf16 %v784, %v784
  %v789 = vpack.c.bf16 %v785, %v785
  %v790 = vpack.c.bf16 %v786, %v786
  %v791 = vpack.c.bf16 %v787, %v787
  %v796 = vunpack.c.l.b16 %v788
  %v797 = vunpack.c.l.b16 %v789
  %v798 = vunpack.c.l.b16 %v790
  %v799 = vunpack.c.l.b16 %v791
  %v800 = vpack.c.b16 %v797, %v796
  %v801 = vpack.c.b16 %v799, %v798
  %s804 = scalar_lea.vmem [#allocation2], 16
  %805 = vst [vmem:[%s804] sm:$0xff] %v800
  %806 = vst.msk [vmem:[%s804 + $0x8] sm:$0xff] %vm602, %v801
  %v807 = vld [vmem:[%s0] sm:$0x22]
  %v808 = vld [vmem:[%s0 + $0x10] sm:$0x22]
  %v809 = vld [vmem:[%s0 + $0x20] sm:$0x22]
  %v810 = vld [vmem:[%s0 + $0x30] sm:$0x22]
  %v811 = vld [vmem:[%s0 + $0x40] sm:$0x22]
  %v812 = vld [vmem:[%s0 + $0x50] sm:$0x22]
  %v813 = vld [vmem:[%s0 + $0x60] sm:$0x22]
  %v814 = vld [vmem:[%s0 + $0x70] sm:$0x22]
  %v823 = vunpack.c.l.b16 %v807
  %v824 = vunpack.c.h.b16 %v807
  %v825 = vunpack.c.l.b16 %v808
  %v826 = vunpack.c.h.b16 %v808
  %v827 = vunpack.c.l.b16 %v809
  %v828 = vunpack.c.h.b16 %v809
  %v829 = vunpack.c.l.b16 %v810
  %v830 = vunpack.c.h.b16 %v810
  %v831 = vunpack.c.l.b16 %v811
  %v832 = vunpack.c.h.b16 %v811
  %v833 = vunpack.c.l.b16 %v812
  %v834 = vunpack.c.h.b16 %v812
  %v835 = vunpack.c.l.b16 %v813
  %v836 = vunpack.c.h.b16 %v813
  %v837 = vunpack.c.l.b16 %v814
  %v838 = vunpack.c.h.b16 %v814
  %v839 = vpack.c.b16 %v823, %v823
  %v840 = vpack.c.b16 %v824, %v824
  %v841 = vpack.c.b16 %v825, %v825
  %v842 = vpack.c.b16 %v826, %v826
  %v843 = vpack.c.b16 %v827, %v827
  %v844 = vpack.c.b16 %v828, %v828
  %v845 = vpack.c.b16 %v829, %v829
  %v846 = vpack.c.b16 %v830, %v830
  %v847 = vpack.c.b16 %v831, %v831
  %v848 = vpack.c.b16 %v832, %v832
  %v849 = vpack.c.b16 %v833, %v833
  %v850 = vpack.c.b16 %v834, %v834
  %v851 = vpack.c.b16 %v835, %v835
  %v852 = vpack.c.b16 %v836, %v836
  %v853 = vpack.c.b16 %v837, %v837
  %v854 = vpack.c.b16 %v838, %v838
  %v855 = vunpack.c.l.b16 %v839
  %v856 = vunpack.c.l.b16 %v840
  %v857 = vunpack.c.l.b16 %v841
  %v858 = vunpack.c.l.b16 %v842
  %v859 = vunpack.c.l.b16 %v843
  %v860 = vunpack.c.l.b16 %v844
  %v861 = vunpack.c.l.b16 %v845
  %v862 = vunpack.c.l.b16 %v846
  %v863 = vunpack.c.l.b16 %v847
  %v864 = vunpack.c.l.b16 %v848
  %v865 = vunpack.c.l.b16 %v849
  %v866 = vunpack.c.l.b16 %v850
  %v867 = vunpack.c.l.b16 %v851
  %v868 = vunpack.c.l.b16 %v852
  %v869 = vunpack.c.l.b16 %v853
  %v870 = vunpack.c.l.b16 %v854
  %v871 = vrot.slane %v855, 2
  %v872 = vrot.slane %v857, 1
  %v873 = vsel %vm176, %v872, %v871
  %v874 = vsel %vm179, %v859, %v873
  %v875 = vrot.slane %v861, 7
  %v876 = vsel %vm182, %v875, %v874
  %v877 = vrot.slane %v863, 6
  %v878 = vsel %vm185, %v877, %v876
  %v879 = vrot.slane %v865, 5
  %v880 = vsel %vm188, %v879, %v878
  %v881 = vrot.slane %v867, 4
  %v882 = vsel %vm191, %v881, %v880
  %v883 = vrot.slane %v869, 3
  %v884 = vsel %vm194, %v883, %v882
  %v885 = vrot.slane %v856, 2
  %v886 = vrot.slane %v858, 1
  %v887 = vsel %vm176, %v886, %v885
  %v888 = vsel %vm179, %v860, %v887
  %v889 = vrot.slane %v862, 7
  %v890 = vsel %vm182, %v889, %v888
  %v891 = vrot.slane %v864, 6
  %v892 = vsel %vm185, %v891, %v890
  %v893 = vrot.slane %v866, 5
  %v894 = vsel %vm188, %v893, %v892
  %v895 = vrot.slane %v868, 4
  %v896 = vsel %vm191, %v895, %v894
  %v897 = vrot.slane %v870, 3
  %v898 = vsel %vm194, %v897, %v896
  %v899 = vpack.c.b16 %v884, %v884
  %v900 = vpack.c.b16 %v898, %v898
  %v903 = vsel %vm493, %v900, 0
  %905 = vmatprep.subr.bf16.mxu0 %v382
  %906 = vmatpush1.bf16.msra.mxu0 %v381
  %907 = vmatprep.subr.bf16.mxu0 %v386
  %908 = vmatpush1.bf16.msra.mxu0 %v385
  %909 = vmatprep.subr.bf16.mxu0 %v390
  %910 = vmatpush1.bf16.msra.mxu0 %v389
  %911 = vmatprep.subr.bf16.mxu0 %v394
  %912 = vmatpush1.bf16.msra.mxu0 %v393
  %913 = vmatprep.subr.bf16.mxu0 %v398
  %914 = vmatpush1.bf16.msra.mxu0 %v397
  %915 = vmatprep.subr.bf16.mxu0 %v402
  %916 = vmatpush1.bf16.msra.mxu0 %v401
  %917 = vmatprep.subr.bf16.mxu0 %v406
  %918 = vmatpush1.bf16.msra.mxu0 %v405
  %919 = vmatprep.subr.bf16.mxu0 %v410
  %920 = vmatpush1.bf16.msra.mxu0 %v409
  %921 = vmatprep.subr.bf16.mxu0 %v414
  %922 = vmatpush1.bf16.msra.mxu0 %v413
  %923 = vmatprep.subr.bf16.mxu0 %v418
  %924 = vmatpush1.bf16.msra.mxu0 %v417
  %925 = vmatprep.subr.bf16.mxu0 %v422
  %926 = vmatpush1.bf16.msra.mxu0 %v421
  %927 = vmatprep.subr.bf16.mxu0 %v426
  %928 = vmatpush1.bf16.msra.mxu0 %v425
  %929 = vmatprep.subr.bf16.mxu0 %v430
  %930 = vmatpush1.bf16.msra.mxu0 %v429
  %931 = vmatprep.subr.bf16.mxu0 %v434
  %932 = vmatpush1.bf16.msra.mxu0 %v433
  %933 = vmatprep.subr.bf16.mxu0 0
  %934 = vmatpush1.bf16.msra.mxu0 0
  %935 = vmatprep.subr.bf16.mxu0 0
  %936 = vmatpush1.bf16.msra.mxu0 0
  %937 = vmatprep.mubr.bf16.mxu0 %v903
  %938 = vmatmul.mubr.bf16.gmra.mrb[0].mxu0 %v899
  %v939 = vpop.f32.mrb[0].mxu0
  %v940 = vadd.f32 %v102, %v939
  %v941 = vpop.f32.mrb[0].mxu0
  %v942 = vadd.f32 %v106, %v941
  %v943 = vpop.f32.mrb[0].mxu0
  %v944 = vpop.f32.mrb[0].mxu0
  %945 = vdwg.mxu0
  %946 = vmatprep.subr.bf16.mxu0 %v384
  %947 = vmatpush1.bf16.msra.mxu0 %v383
  %948 = vmatprep.subr.bf16.mxu0 %v388
  %949 = vmatpush1.bf16.msra.mxu0 %v387
  %950 = vmatprep.subr.bf16.mxu0 %v392
  %951 = vmatpush1.bf16.msra.mxu0 %v391
  %952 = vmatprep.subr.bf16.mxu0 %v396
  %953 = vmatpush1.bf16.msra.mxu0 %v395
  %954 = vmatprep.subr.bf16.mxu0 %v400
  %955 = vmatpush1.bf16.msra.mxu0 %v399
  %956 = vmatprep.subr.bf16.mxu0 %v404
  %957 = vmatpush1.bf16.msra.mxu0 %v403
  %958 = vmatprep.subr.bf16.mxu0 %v408
  %959 = vmatpush1.bf16.msra.mxu0 %v407
  %960 = vmatprep.subr.bf16.mxu0 %v412
  %961 = vmatpush1.bf16.msra.mxu0 %v411
  %962 = vmatprep.subr.bf16.mxu0 %v416
  %963 = vmatpush1.bf16.msra.mxu0 %v415
  %964 = vmatprep.subr.bf16.mxu0 %v420
  %965 = vmatpush1.bf16.msra.mxu0 %v419
  %966 = vmatprep.subr.bf16.mxu0 %v424
  %967 = vmatpush1.bf16.msra.mxu0 %v423
  %968 = vmatprep.subr.bf16.mxu0 %v428
  %969 = vmatpush1.bf16.msra.mxu0 %v427
  %970 = vmatprep.subr.bf16.mxu0 %v432
  %971 = vmatpush1.bf16.msra.mxu0 %v431
  %972 = vmatprep.subr.bf16.mxu0 %v436
  %973 = vmatpush1.bf16.msra.mxu0 %v435
  %974 = vmatprep.subr.bf16.mxu0 0
  %975 = vmatpush1.bf16.msra.mxu0 0
  %976 = vmatprep.subr.bf16.mxu0 0
  %977 = vmatpush1.bf16.msra.mxu0 0
  %978 = vmatprep.mubr.bf16.mxu0 %v903
  %979 = vmatmul.mubr.bf16.gmra.mrb[0].mxu0 %v899
  %v980 = vpop.f32.mrb[0].mxu0
  %v981 = vadd.f32 %v110, %v980
  %v982 = vpop.f32.mrb[0].mxu0
  %v983 = vadd.f32 %v114, %v982
  %v984 = vpop.f32.mrb[0].mxu0
  %v985 = vpop.f32.mrb[0].mxu0
  %986 = vdwg.mxu0
  %v987 = vmax.f32 %v940, 0.0
  %v988 = vmax.f32 %v942, 0.0
  %v989 = vmax.f32 %v981, 0.0
  %v990 = vmax.f32 %v983, 0.0
  %v991 = vpack.c.bf16 %v987, %v987
  %v992 = vpack.c.bf16 %v988, %v988
  %v993 = vpack.c.bf16 %v989, %v989
  %v994 = vpack.c.bf16 %v990, %v990
  %v999 = vunpack.c.l.b16 %v991
  %v1000 = vunpack.c.l.b16 %v992
  %v1001 = vunpack.c.l.b16 %v993
  %v1002 = vunpack.c.l.b16 %v994
  %v1003 = vpack.c.b16 %v1000, %v999
  %v1004 = vpack.c.b16 %v1002, %v1001
  %s1007 = scalar_lea.vmem [#allocation2], 32
  %1008 = vst [vmem:[%s1007] sm:$0xff] %v1003
  %1009 = vst.msk [vmem:[%s1007 + $0x8] sm:$0xff] %vm602, %v1004
  %v1010 = vld [vmem:[%s0] sm:$0x22]
  %v1011 = vld [vmem:[%s0 + $0x10] sm:$0x22]
  %v1012 = vld [vmem:[%s0 + $0x20] sm:$0x22]
  %v1013 = vld [vmem:[%s0 + $0x30] sm:$0x22]
  %v1014 = vld [vmem:[%s0 + $0x40] sm:$0x22]
  %v1015 = vld [vmem:[%s0 + $0x50] sm:$0x22]
  %v1016 = vld [vmem:[%s0 + $0x60] sm:$0x22]
  %v1017 = vld [vmem:[%s0 + $0x70] sm:$0x22]
  %v1026 = vunpack.c.l.b16 %v1010
  %v1027 = vunpack.c.h.b16 %v1010
  %v1028 = vunpack.c.l.b16 %v1011
  %v1029 = vunpack.c.h.b16 %v1011
  %v1030 = vunpack.c.l.b16 %v1012
  %v1031 = vunpack.c.h.b16 %v1012
  %v1032 = vunpack.c.l.b16 %v1013
  %v1033 = vunpack.c.h.b16 %v1013
  %v1034 = vunpack.c.l.b16 %v1014
  %v1035 = vunpack.c.h.b16 %v1014
  %v1036 = vunpack.c.l.b16 %v1015
  %v1037 = vunpack.c.h.b16 %v1015
  %v1038 = vunpack.c.l.b16 %v1016
  %v1039 = vunpack.c.h.b16 %v1016
  %v1040 = vunpack.c.l.b16 %v1017
  %v1041 = vunpack.c.h.b16 %v1017
  %v1042 = vpack.c.b16 %v1026, %v1026
  %v1043 = vpack.c.b16 %v1027, %v1027
  %v1044 = vpack.c.b16 %v1028, %v1028
  %v1045 = vpack.c.b16 %v1029, %v1029
  %v1046 = vpack.c.b16 %v1030, %v1030
  %v1047 = vpack.c.b16 %v1031, %v1031
  %v1048 = vpack.c.b16 %v1032, %v1032
  %v1049 = vpack.c.b16 %v1033, %v1033
  %v1050 = vpack.c.b16 %v1034, %v1034
  %v1051 = vpack.c.b16 %v1035, %v1035
  %v1052 = vpack.c.b16 %v1036, %v1036
  %v1053 = vpack.c.b16 %v1037, %v1037
  %v1054 = vpack.c.b16 %v1038, %v1038
  %v1055 = vpack.c.b16 %v1039, %v1039
  %v1056 = vpack.c.b16 %v1040, %v1040
  %v1057 = vpack.c.b16 %v1041, %v1041
  %v1058 = vunpack.c.l.b16 %v1042
  %v1059 = vunpack.c.l.b16 %v1043
  %v1060 = vunpack.c.l.b16 %v1044
  %v1061 = vunpack.c.l.b16 %v1045
  %v1062 = vunpack.c.l.b16 %v1046
  %v1063 = vunpack.c.l.b16 %v1047
  %v1064 = vunpack.c.l.b16 %v1048
  %v1065 = vunpack.c.l.b16 %v1049
  %v1066 = vunpack.c.l.b16 %v1050
  %v1067 = vunpack.c.l.b16 %v1051
  %v1068 = vunpack.c.l.b16 %v1052
  %v1069 = vunpack.c.l.b16 %v1053
  %v1070 = vunpack.c.l.b16 %v1054
  %v1071 = vunpack.c.l.b16 %v1055
  %v1072 = vunpack.c.l.b16 %v1056
  %v1073 = vunpack.c.l.b16 %v1057
  %v1074 = vrot.slane %v1058, 3
  %v1075 = vrot.slane %v1060, 2
  %v1076 = vsel %vm176, %v1075, %v1074
  %v1077 = vrot.slane %v1062, 1
  %v1078 = vsel %vm179, %v1077, %v1076
  %v1079 = vsel %vm182, %v1064, %v1078
  %v1080 = vrot.slane %v1066, 7
  %v1081 = vsel %vm185, %v1080, %v1079
  %v1082 = vrot.slane %v1068, 6
  %v1083 = vsel %vm188, %v1082, %v1081
  %v1084 = vrot.slane %v1070, 5
  %v1085 = vsel %vm191, %v1084, %v1083
  %v1086 = vrot.slane %v1072, 4
  %v1087 = vsel %vm194, %v1086, %v1085
  %v1088 = vrot.slane %v1059, 3
  %v1089 = vrot.slane %v1061, 2
  %v1090 = vsel %vm176, %v1089, %v1088
  %v1091 = vrot.slane %v1063, 1
  %v1092 = vsel %vm179, %v1091, %v1090
  %v1093 = vsel %vm182, %v1065, %v1092
  %v1094 = vrot.slane %v1067, 7
  %v1095 = vsel %vm185, %v1094, %v1093
  %v1096 = vrot.slane %v1069, 6
  %v1097 = vsel %vm188, %v1096, %v1095
  %v1098 = vrot.slane %v1071, 5
  %v1099 = vsel %vm191, %v1098, %v1097
  %v1100 = vrot.slane %v1073, 4
  %v1101 = vsel %vm194, %v1100, %v1099
  %v1102 = vpack.c.b16 %v1087, %v1087
  %v1103 = vpack.c.b16 %v1101, %v1101
  %v1106 = vsel %vm493, %v1103, 0
  %1108 = vmatprep.subr.bf16.mxu0 %v382
  %1109 = vmatpush1.bf16.msra.mxu0 %v381
  %1110 = vmatprep.subr.bf16.mxu0 %v386
  %1111 = vmatpush1.bf16.msra.mxu0 %v385
  %1112 = vmatprep.subr.bf16.mxu0 %v390
  %1113 = vmatpush1.bf16.msra.mxu0 %v389
  %1114 = vmatprep.subr.bf16.mxu0 %v394
  %1115 = vmatpush1.bf16.msra.mxu0 %v393
  %1116 = vmatprep.subr.bf16.mxu0 %v398
  %1117 = vmatpush1.bf16.msra.mxu0 %v397
  %1118 = vmatprep.subr.bf16.mxu0 %v402
  %1119 = vmatpush1.bf16.msra.mxu0 %v401
  %1120 = vmatprep.subr.bf16.mxu0 %v406
  %1121 = vmatpush1.bf16.msra.mxu0 %v405
  %1122 = vmatprep.subr.bf16.mxu0 %v410
  %1123 = vmatpush1.bf16.msra.mxu0 %v409
  %1124 = vmatprep.subr.bf16.mxu0 %v414
  %1125 = vmatpush1.bf16.msra.mxu0 %v413
  %1126 = vmatprep.subr.bf16.mxu0 %v418
  %1127 = vmatpush1.bf16.msra.mxu0 %v417
  %1128 = vmatprep.subr.bf16.mxu0 %v422
  %1129 = vmatpush1.bf16.msra.mxu0 %v421
  %1130 = vmatprep.subr.bf16.mxu0 %v426
  %1131 = vmatpush1.bf16.msra.mxu0 %v425
  %1132 = vmatprep.subr.bf16.mxu0 %v430
  %1133 = vmatpush1.bf16.msra.mxu0 %v429
  %1134 = vmatprep.subr.bf16.mxu0 %v434
  %1135 = vmatpush1.bf16.msra.mxu0 %v433
  %1136 = vmatprep.subr.bf16.mxu0 0
  %1137 = vmatpush1.bf16.msra.mxu0 0
  %1138 = vmatprep.subr.bf16.mxu0 0
  %1139 = vmatpush1.bf16.msra.mxu0 0
  %1140 = vmatprep.mubr.bf16.mxu0 %v1106
  %1141 = vmatmul.mubr.bf16.gmra.mrb[0].mxu0 %v1102
  %v1142 = vpop.f32.mrb[0].mxu0
  %v1143 = vadd.f32 %v102, %v1142
  %v1144 = vpop.f32.mrb[0].mxu0
  %v1145 = vadd.f32 %v106, %v1144
  %v1146 = vpop.f32.mrb[0].mxu0
  %v1147 = vpop.f32.mrb[0].mxu0
  %1148 = vdwg.mxu0
  %1149 = vmatprep.subr.bf16.mxu0 %v384
  %1150 = vmatpush1.bf16.msra.mxu0 %v383
  %1151 = vmatprep.subr.bf16.mxu0 %v388
  %1152 = vmatpush1.bf16.msra.mxu0 %v387
  %1153 = vmatprep.subr.bf16.mxu0 %v392
  %1154 = vmatpush1.bf16.msra.mxu0 %v391
  %1155 = vmatprep.subr.bf16.mxu0 %v396
  %1156 = vmatpush1.bf16.msra.mxu0 %v395
  %1157 = vmatprep.subr.bf16.mxu0 %v400
  %1158 = vmatpush1.bf16.msra.mxu0 %v399
  %1159 = vmatprep.subr.bf16.mxu0 %v404
  %1160 = vmatpush1.bf16.msra.mxu0 %v403
  %1161 = vmatprep.subr.bf16.mxu0 %v408
  %1162 = vmatpush1.bf16.msra.mxu0 %v407
  %1163 = vmatprep.subr.bf16.mxu0 %v412
  %1164 = vmatpush1.bf16.msra.mxu0 %v411
  %1165 = vmatprep.subr.bf16.mxu0 %v416
  %1166 = vmatpush1.bf16.msra.mxu0 %v415
  %1167 = vmatprep.subr.bf16.mxu0 %v420
  %1168 = vmatpush1.bf16.msra.mxu0 %v419
  %1169 = vmatprep.subr.bf16.mxu0 %v424
  %1170 = vmatpush1.bf16.msra.mxu0 %v423
  %1171 = vmatprep.subr.bf16.mxu0 %v428
  %1172 = vmatpush1.bf16.msra.mxu0 %v427
  %1173 = vmatprep.subr.bf16.mxu0 %v432
  %1174 = vmatpush1.bf16.msra.mxu0 %v431
  %1175 = vmatprep.subr.bf16.mxu0 %v436
  %1176 = vmatpush1.bf16.msra.mxu0 %v435
  %1177 = vmatprep.subr.bf16.mxu0 0
  %1178 = vmatpush1.bf16.msra.mxu0 0
  %1179 = vmatprep.subr.bf16.mxu0 0
  %1180 = vmatpush1.bf16.msra.mxu0 0
  %1181 = vmatprep.mubr.bf16.mxu0 %v1106
  %1182 = vmatmul.mubr.bf16.gmra.mrb[0].mxu0 %v1102
  %v1183 = vpop.f32.mrb[0].mxu0
  %v1184 = vadd.f32 %v110, %v1183
  %v1185 = vpop.f32.mrb[0].mxu0
  %v1186 = vadd.f32 %v114, %v1185
  %v1187 = vpop.f32.mrb[0].mxu0
  %v1188 = vpop.f32.mrb[0].mxu0
  %1189 = vdwg.mxu0
  %v1190 = vmax.f32 %v1143, 0.0
  %v1191 = vmax.f32 %v1145, 0.0
  %v1192 = vmax.f32 %v1184, 0.0
  %v1193 = vmax.f32 %v1186, 0.0
  %v1194 = vpack.c.bf16 %v1190, %v1190
  %v1195 = vpack.c.bf16 %v1191, %v1191
  %v1196 = vpack.c.bf16 %v1192, %v1192
  %v1197 = vpack.c.bf16 %v1193, %v1193
  %v1202 = vunpack.c.l.b16 %v1194
  %v1203 = vunpack.c.l.b16 %v1195
  %v1204 = vunpack.c.l.b16 %v1196
  %v1205 = vunpack.c.l.b16 %v1197
  %v1206 = vpack.c.b16 %v1203, %v1202
  %v1207 = vpack.c.b16 %v1205, %v1204
  %s1210 = scalar_lea.vmem [#allocation2], 48
  %1211 = vst [vmem:[%s1210] sm:$0xff] %v1206
  %1212 = vst.msk [vmem:[%s1210 + $0x8] sm:$0xff] %vm602, %v1207
  %v1213 = vld [vmem:[%s0] sm:$0x44]
  %v1214 = vld [vmem:[%s0 + $0x10] sm:$0x44]
  %v1215 = vld [vmem:[%s0 + $0x20] sm:$0x44]
  %v1216 = vld [vmem:[%s0 + $0x30] sm:$0x44]
  %v1217 = vld [vmem:[%s0 + $0x40] sm:$0x44]
  %v1218 = vld [vmem:[%s0 + $0x50] sm:$0x44]
  %v1219 = vld [vmem:[%s0 + $0x60] sm:$0x44]
  %v1220 = vld [vmem:[%s0 + $0x70] sm:$0x44]
  %v1229 = vunpack.c.l.b16 %v1213
  %v1230 = vunpack.c.h.b16 %v1213
  %v1231 = vunpack.c.l.b16 %v1214
  %v1232 = vunpack.c.h.b16 %v1214
  %v1233 = vunpack.c.l.b16 %v1215
  %v1234 = vunpack.c.h.b16 %v1215
  %v1235 = vunpack.c.l.b16 %v1216
  %v1236 = vunpack.c.h.b16 %v1216
  %v1237 = vunpack.c.l.b16 %v1217
  %v1238 = vunpack.c.h.b16 %v1217
  %v1239 = vunpack.c.l.b16 %v1218
  %v1240 = vunpack.c.h.b16 %v1218
  %v1241 = vunpack.c.l.b16 %v1219
  %v1242 = vunpack.c.h.b16 %v1219
  %v1243 = vunpack.c.l.b16 %v1220
  %v1244 = vunpack.c.h.b16 %v1220
  %v1245 = vpack.c.b16 %v1229, %v1229
  %v1246 = vpack.c.b16 %v1230, %v1230
  %v1247 = vpack.c.b16 %v1231, %v1231
  %v1248 = vpack.c.b16 %v1232, %v1232
  %v1249 = vpack.c.b16 %v1233, %v1233
  %v1250 = vpack.c.b16 %v1234, %v1234
  %v1251 = vpack.c.b16 %v1235, %v1235
  %v1252 = vpack.c.b16 %v1236, %v1236
  %v1253 = vpack.c.b16 %v1237, %v1237
  %v1254 = vpack.c.b16 %v1238, %v1238
  %v1255 = vpack.c.b16 %v1239, %v1239
  %v1256 = vpack.c.b16 %v1240, %v1240
  %v1257 = vpack.c.b16 %v1241, %v1241
  %v1258 = vpack.c.b16 %v1242, %v1242
  %v1259 = vpack.c.b16 %v1243, %v1243
  %v1260 = vpack.c.b16 %v1244, %v1244
  %v1261 = vunpack.c.l.b16 %v1245
  %v1262 = vunpack.c.l.b16 %v1246
  %v1263 = vunpack.c.l.b16 %v1247
  %v1264 = vunpack.c.l.b16 %v1248
  %v1265 = vunpack.c.l.b16 %v1249
  %v1266 = vunpack.c.l.b16 %v1250
  %v1267 = vunpack.c.l.b16 %v1251
  %v1268 = vunpack.c.l.b16 %v1252
  %v1269 = vunpack.c.l.b16 %v1253
  %v1270 = vunpack.c.l.b16 %v1254
  %v1271 = vunpack.c.l.b16 %v1255
  %v1272 = vunpack.c.l.b16 %v1256
  %v1273 = vunpack.c.l.b16 %v1257
  %v1274 = vunpack.c.l.b16 %v1258
  %v1275 = vunpack.c.l.b16 %v1259
  %v1276 = vunpack.c.l.b16 %v1260
  %v1277 = vrot.slane %v1261, 4
  %v1278 = vrot.slane %v1263, 3
  %v1279 = vsel %vm176, %v1278, %v1277
  %v1280 = vrot.slane %v1265, 2
  %v1281 = vsel %vm179, %v1280, %v1279
  %v1282 = vrot.slane %v1267, 1
  %v1283 = vsel %vm182, %v1282, %v1281
  %v1284 = vsel %vm185, %v1269, %v1283
  %v1285 = vrot.slane %v1271, 7
  %v1286 = vsel %vm188, %v1285, %v1284
  %v1287 = vrot.slane %v1273, 6
  %v1288 = vsel %vm191, %v1287, %v1286
  %v1289 = vrot.slane %v1275, 5
  %v1290 = vsel %vm194, %v1289, %v1288
  %v1291 = vrot.slane %v1262, 4
  %v1292 = vrot.slane %v1264, 3
  %v1293 = vsel %vm176, %v1292, %v1291
  %v1294 = vrot.slane %v1266, 2
  %v1295 = vsel %vm179, %v1294, %v1293
  %v1296 = vrot.slane %v1268, 1
  %v1297 = vsel %vm182, %v1296, %v1295
  %v1298 = vsel %vm185, %v1270, %v1297
  %v1299 = vrot.slane %v1272, 7
  %v1300 = vsel %vm188, %v1299, %v1298
  %v1301 = vrot.slane %v1274, 6
  %v1302 = vsel %vm191, %v1301, %v1300
  %v1303 = vrot.slane %v1276, 5
  %v1304 = vsel %vm194, %v1303, %v1302
  %v1305 = vpack.c.b16 %v1290, %v1290
  %v1306 = vpack.c.b16 %v1304, %v1304
  %v1309 = vsel %vm493, %v1306, 0
  %1311 = vmatprep.subr.bf16.mxu0 %v382
  %1312 = vmatpush1.bf16.msra.mxu0 %v381
  %1313 = vmatprep.subr.bf16.mxu0 %v386
  %1314 = vmatpush1.bf16.msra.mxu0 %v385
  %1315 = vmatprep.subr.bf16.mxu0 %v390
  %1316 = vmatpush1.bf16.msra.mxu0 %v389
  %1317 = vmatprep.subr.bf16.mxu0 %v394
  %1318 = vmatpush1.bf16.msra.mxu0 %v393
  %1319 = vmatprep.subr.bf16.mxu0 %v398
  %1320 = vmatpush1.bf16.msra.mxu0 %v397
  %1321 = vmatprep.subr.bf16.mxu0 %v402
  %1322 = vmatpush1.bf16.msra.mxu0 %v401
  %1323 = vmatprep.subr.bf16.mxu0 %v406
  %1324 = vmatpush1.bf16.msra.mxu0 %v405
  %1325 = vmatprep.subr.bf16.mxu0 %v410
  %1326 = vmatpush1.bf16.msra.mxu0 %v409
  %1327 = vmatprep.subr.bf16.mxu0 %v414
  %1328 = vmatpush1.bf16.msra.mxu0 %v413
  %1329 = vmatprep.subr.bf16.mxu0 %v418
  %1330 = vmatpush1.bf16.msra.mxu0 %v417
  %1331 = vmatprep.subr.bf16.mxu0 %v422
  %1332 = vmatpush1.bf16.msra.mxu0 %v421
  %1333 = vmatprep.subr.bf16.mxu0 %v426
  %1334 = vmatpush1.bf16.msra.mxu0 %v425
  %1335 = vmatprep.subr.bf16.mxu0 %v430
  %1336 = vmatpush1.bf16.msra.mxu0 %v429
  %1337 = vmatprep.subr.bf16.mxu0 %v434
  %1338 = vmatpush1.bf16.msra.mxu0 %v433
  %1339 = vmatprep.subr.bf16.mxu0 0
  %1340 = vmatpush1.bf16.msra.mxu0 0
  %1341 = vmatprep.subr.bf16.mxu0 0
  %1342 = vmatpush1.bf16.msra.mxu0 0
  %1343 = vmatprep.mubr.bf16.mxu0 %v1309
  %1344 = vmatmul.mubr.bf16.gmra.mrb[0].mxu0 %v1305
  %v1345 = vpop.f32.mrb[0].mxu0
  %v1346 = vadd.f32 %v102, %v1345
  %v1347 = vpop.f32.mrb[0].mxu0
  %v1348 = vadd.f32 %v106, %v1347
  %v1349 = vpop.f32.mrb[0].mxu0
  %v1350 = vpop.f32.mrb[0].mxu0
  %1351 = vdwg.mxu0
  %1352 = vmatprep.subr.bf16.mxu0 %v384
  %1353 = vmatpush1.bf16.msra.mxu0 %v383
  %1354 = vmatprep.subr.bf16.mxu0 %v388
  %1355 = vmatpush1.bf16.msra.mxu0 %v387
  %1356 = vmatprep.subr.bf16.mxu0 %v392
  %1357 = vmatpush1.bf16.msra.mxu0 %v391
  %1358 = vmatprep.subr.bf16.mxu0 %v396
  %1359 = vmatpush1.bf16.msra.mxu0 %v395
  %1360 = vmatprep.subr.bf16.mxu0 %v400
  %1361 = vmatpush1.bf16.msra.mxu0 %v399
  %1362 = vmatprep.subr.bf16.mxu0 %v404
  %1363 = vmatpush1.bf16.msra.mxu0 %v403
  %1364 = vmatprep.subr.bf16.mxu0 %v408
  %1365 = vmatpush1.bf16.msra.mxu0 %v407
  %1366 = vmatprep.subr.bf16.mxu0 %v412
  %1367 = vmatpush1.bf16.msra.mxu0 %v411
  %1368 = vmatprep.subr.bf16.mxu0 %v416
  %1369 = vmatpush1.bf16.msra.mxu0 %v415
  %1370 = vmatprep.subr.bf16.mxu0 %v420
  %1371 = vmatpush1.bf16.msra.mxu0 %v419
  %1372 = vmatprep.subr.bf16.mxu0 %v424
  %1373 = vmatpush1.bf16.msra.mxu0 %v423
  %1374 = vmatprep.subr.bf16.mxu0 %v428
  %1375 = vmatpush1.bf16.msra.mxu0 %v427
  %1376 = vmatprep.subr.bf16.mxu0 %v432
  %1377 = vmatpush1.bf16.msra.mxu0 %v431
  %1378 = vmatprep.subr.bf16.mxu0 %v436
  %1379 = vmatpush1.bf16.msra.mxu0 %v435
  %1380 = vmatprep.subr.bf16.mxu0 0
  %1381 = vmatpush1.bf16.msra.mxu0 0
  %1382 = vmatprep.subr.bf16.mxu0 0
  %1383 = vmatpush1.bf16.msra.mxu0 0
  %1384 = vmatprep.mubr.bf16.mxu0 %v1309
  %1385 = vmatmul.mubr.bf16.gmra.mrb[0].mxu0 %v1305
  %v1386 = vpop.f32.mrb[0].mxu0
  %v1387 = vadd.f32 %v110, %v1386
  %v1388 = vpop.f32.mrb[0].mxu0
  %v1389 = vadd.f32 %v114, %v1388
  %v1390 = vpop.f32.mrb[0].mxu0
  %v1391 = vpop.f32.mrb[0].mxu0
  %1392 = vdwg.mxu0
  %v1393 = vmax.f32 %v1346, 0.0
  %v1394 = vmax.f32 %v1348, 0.0
  %v1395 = vmax.f32 %v1387, 0.0
  %v1396 = vmax.f32 %v1389, 0.0
  %v1397 = vpack.c.bf16 %v1393, %v1393
  %v1398 = vpack.c.bf16 %v1394, %v1394
  %v1399 = vpack.c.bf16 %v1395, %v1395
  %v1400 = vpack.c.bf16 %v1396, %v1396
  %v1405 = vunpack.c.l.b16 %v1397
  %v1406 = vunpack.c.l.b16 %v1398
  %v1407 = vunpack.c.l.b16 %v1399
  %v1408 = vunpack.c.l.b16 %v1400
  %v1409 = vpack.c.b16 %v1406, %v1405
  %v1410 = vpack.c.b16 %v1408, %v1407
  %s1413 = scalar_lea.vmem [#allocation2], 64
  %1414 = vst [vmem:[%s1413] sm:$0xff] %v1409
  %1415 = vst.msk [vmem:[%s1413 + $0x8] sm:$0xff] %vm602, %v1410
  %v1416 = vld [vmem:[%s0] sm:$0x44]
  %v1417 = vld [vmem:[%s0 + $0x10] sm:$0x44]
  %v1418 = vld [vmem:[%s0 + $0x20] sm:$0x44]
  %v1419 = vld [vmem:[%s0 + $0x30] sm:$0x44]
  %v1420 = vld [vmem:[%s0 + $0x40] sm:$0x44]
  %v1421 = vld [vmem:[%s0 + $0x50] sm:$0x44]
  %v1422 = vld [vmem:[%s0 + $0x60] sm:$0x44]
  %v1423 = vld [vmem:[%s0 + $0x70] sm:$0x44]
  %v1432 = vunpack.c.l.b16 %v1416
  %v1433 = vunpack.c.h.b16 %v1416
  %v1434 = vunpack.c.l.b16 %v1417
  %v1435 = vunpack.c.h.b16 %v1417
  %v1436 = vunpack.c.l.b16 %v1418
  %v1437 = vunpack.c.h.b16 %v1418
  %v1438 = vunpack.c.l.b16 %v1419
  %v1439 = vunpack.c.h.b16 %v1419
  %v1440 = vunpack.c.l.b16 %v1420
  %v1441 = vunpack.c.h.b16 %v1420
  %v1442 = vunpack.c.l.b16 %v1421
  %v1443 = vunpack.c.h.b16 %v1421
  %v1444 = vunpack.c.l.b16 %v1422
  %v1445 = vunpack.c.h.b16 %v1422
  %v1446 = vunpack.c.l.b16 %v1423
  %v1447 = vunpack.c.h.b16 %v1423
  %v1448 = vpack.c.b16 %v1432, %v1432
  %v1449 = vpack.c.b16 %v1433, %v1433
  %v1450 = vpack.c.b16 %v1434, %v1434
  %v1451 = vpack.c.b16 %v1435, %v1435
  %v1452 = vpack.c.b16 %v1436, %v1436
  %v1453 = vpack.c.b16 %v1437, %v1437
  %v1454 = vpack.c.b16 %v1438, %v1438
  %v1455 = vpack.c.b16 %v1439, %v1439
  %v1456 = vpack.c.b16 %v1440, %v1440
  %v1457 = vpack.c.b16 %v1441, %v1441
  %v1458 = vpack.c.b16 %v1442, %v1442
  %v1459 = vpack.c.b16 %v1443, %v1443
  %v1460 = vpack.c.b16 %v1444, %v1444
  %v1461 = vpack.c.b16 %v1445, %v1445
  %v1462 = vpack.c.b16 %v1446, %v1446
  %v1463 = vpack.c.b16 %v1447, %v1447
  %v1464 = vunpack.c.l.b16 %v1448
  %v1465 = vunpack.c.l.b16 %v1449
  %v1466 = vunpack.c.l.b16 %v1450
  %v1467 = vunpack.c.l.b16 %v1451
  %v1468 = vunpack.c.l.b16 %v1452
  %v1469 = vunpack.c.l.b16 %v1453
  %v1470 = vunpack.c.l.b16 %v1454
  %v1471 = vunpack.c.l.b16 %v1455
  %v1472 = vunpack.c.l.b16 %v1456
  %v1473 = vunpack.c.l.b16 %v1457
  %v1474 = vunpack.c.l.b16 %v1458
  %v1475 = vunpack.c.l.b16 %v1459
  %v1476 = vunpack.c.l.b16 %v1460
  %v1477 = vunpack.c.l.b16 %v1461
  %v1478 = vunpack.c.l.b16 %v1462
  %v1479 = vunpack.c.l.b16 %v1463
  %v1480 = vrot.slane %v1464, 5
  %v1481 = vrot.slane %v1466, 4
  %v1482 = vsel %vm176, %v1481, %v1480
  %v1483 = vrot.slane %v1468, 3
  %v1484 = vsel %vm179, %v1483, %v1482
  %v1485 = vrot.slane %v1470, 2
  %v1486 = vsel %vm182, %v1485, %v1484
  %v1487 = vrot.slane %v1472, 1
  %v1488 = vsel %vm185, %v1487, %v1486
  %v1489 = vsel %vm188, %v1474, %v1488
  %v1490 = vrot.slane %v1476, 7
  %v1491 = vsel %vm191, %v1490, %v1489
  %v1492 = vrot.slane %v1478, 6
  %v1493 = vsel %vm194, %v1492, %v1491
  %v1494 = vrot.slane %v1465, 5
  %v1495 = vrot.slane %v1467, 4
  %v1496 = vsel %vm176, %v1495, %v1494
  %v1497 = vrot.slane %v1469, 3
  %v1498 = vsel %vm179, %v1497, %v1496
  %v1499 = vrot.slane %v1471, 2
  %v1500 = vsel %vm182, %v1499, %v1498
  %v1501 = vrot.slane %v1473, 1
  %v1502 = vsel %vm185, %v1501, %v1500
  %v1503 = vsel %vm188, %v1475, %v1502
  %v1504 = vrot.slane %v1477, 7
  %v1505 = vsel %vm191, %v1504, %v1503
  %v1506 = vrot.slane %v1479, 6
  %v1507 = vsel %vm194, %v1506, %v1505
  %v1508 = vpack.c.b16 %v1493, %v1493
  %v1509 = vpack.c.b16 %v1507, %v1507
  %v1512 = vsel %vm493, %v1509, 0
  %1514 = vmatprep.subr.bf16.mxu0 %v382
  %1515 = vmatpush1.bf16.msra.mxu0 %v381
  %1516 = vmatprep.subr.bf16.mxu0 %v386
  %1517 = vmatpush1.bf16.msra.mxu0 %v385
  %1518 = vmatprep.subr.bf16.mxu0 %v390
  %1519 = vmatpush1.bf16.msra.mxu0 %v389
  %1520 = vmatprep.subr.bf16.mxu0 %v394
  %1521 = vmatpush1.bf16.msra.mxu0 %v393
  %1522 = vmatprep.subr.bf16.mxu0 %v398
  %1523 = vmatpush1.bf16.msra.mxu0 %v397
  %1524 = vmatprep.subr.bf16.mxu0 %v402
  %1525 = vmatpush1.bf16.msra.mxu0 %v401
  %1526 = vmatprep.subr.bf16.mxu0 %v406
  %1527 = vmatpush1.bf16.msra.mxu0 %v405
  %1528 = vmatprep.subr.bf16.mxu0 %v410
  %1529 = vmatpush1.bf16.msra.mxu0 %v409
  %1530 = vmatprep.subr.bf16.mxu0 %v414
  %1531 = vmatpush1.bf16.msra.mxu0 %v413
  %1532 = vmatprep.subr.bf16.mxu0 %v418
  %1533 = vmatpush1.bf16.msra.mxu0 %v417
  %1534 = vmatprep.subr.bf16.mxu0 %v422
  %1535 = vmatpush1.bf16.msra.mxu0 %v421
  %1536 = vmatprep.subr.bf16.mxu0 %v426
  %1537 = vmatpush1.bf16.msra.mxu0 %v425
  %1538 = vmatprep.subr.bf16.mxu0 %v430
  %1539 = vmatpush1.bf16.msra.mxu0 %v429
  %1540 = vmatprep.subr.bf16.mxu0 %v434
  %1541 = vmatpush1.bf16.msra.mxu0 %v433
  %1542 = vmatprep.subr.bf16.mxu0 0
  %1543 = vmatpush1.bf16.msra.mxu0 0
  %1544 = vmatprep.subr.bf16.mxu0 0
  %1545 = vmatpush1.bf16.msra.mxu0 0
  %1546 = vmatprep.mubr.bf16.mxu0 %v1512
  %1547 = vmatmul.mubr.bf16.gmra.mrb[0].mxu0 %v1508
  %v1548 = vpop.f32.mrb[0].mxu0
  %v1549 = vadd.f32 %v102, %v1548
  %v1550 = vpop.f32.mrb[0].mxu0
  %v1551 = vadd.f32 %v106, %v1550
  %v1552 = vpop.f32.mrb[0].mxu0
  %v1553 = vpop.f32.mrb[0].mxu0
  %1554 = vdwg.mxu0
  %1555 = vmatprep.subr.bf16.mxu0 %v384
  %1556 = vmatpush1.bf16.msra.mxu0 %v383
  %1557 = vmatprep.subr.bf16.mxu0 %v388
  %1558 = vmatpush1.bf16.msra.mxu0 %v387
  %1559 = vmatprep.subr.bf16.mxu0 %v392
  %1560 = vmatpush1.bf16.msra.mxu0 %v391
  %1561 = vmatprep.subr.bf16.mxu0 %v396
  %1562 = vmatpush1.bf16.msra.mxu0 %v395
  %1563 = vmatprep.subr.bf16.mxu0 %v400
  %1564 = vmatpush1.bf16.msra.mxu0 %v399
  %1565 = vmatprep.subr.bf16.mxu0 %v404
  %1566 = vmatpush1.bf16.msra.mxu0 %v403
  %1567 = vmatprep.subr.bf16.mxu0 %v408
  %1568 = vmatpush1.bf16.msra.mxu0 %v407
  %1569 = vmatprep.subr.bf16.mxu0 %v412
  %1570 = vmatpush1.bf16.msra.mxu0 %v411
  %1571 = vmatprep.subr.bf16.mxu0 %v416
  %1572 = vmatpush1.bf16.msra.mxu0 %v415
  %1573 = vmatprep.subr.bf16.mxu0 %v420
  %1574 = vmatpush1.bf16.msra.mxu0 %v419
  %1575 = vmatprep.subr.bf16.mxu0 %v424
  %1576 = vmatpush1.bf16.msra.mxu0 %v423
  %1577 = vmatprep.subr.bf16.mxu0 %v428
  %1578 = vmatpush1.bf16.msra.mxu0 %v427
  %1579 = vmatprep.subr.bf16.mxu0 %v432
  %1580 = vmatpush1.bf16.msra.mxu0 %v431
  %1581 = vmatprep.subr.bf16.mxu0 %v436
  %1582 = vmatpush1.bf16.msra.mxu0 %v435
  %1583 = vmatprep.subr.bf16.mxu0 0
  %1584 = vmatpush1.bf16.msra.mxu0 0
  %1585 = vmatprep.subr.bf16.mxu0 0
  %1586 = vmatpush1.bf16.msra.mxu0 0
  %1587 = vmatprep.mubr.bf16.mxu0 %v1512
  %1588 = vmatmul.mubr.bf16.gmra.mrb[0].mxu0 %v1508
  %v1589 = vpop.f32.mrb[0].mxu0
  %v1590 = vadd.f32 %v110, %v1589
  %v1591 = vpop.f32.mrb[0].mxu0
  %v1592 = vadd.f32 %v114, %v1591
  %v1593 = vpop.f32.mrb[0].mxu0
  %v1594 = vpop.f32.mrb[0].mxu0
  %1595 = vdwg.mxu0
  %v1596 = vmax.f32 %v1549, 0.0
  %v1597 = vmax.f32 %v1551, 0.0
  %v1598 = vmax.f32 %v1590, 0.0
  %v1599 = vmax.f32 %v1592, 0.0
  %v1600 = vpack.c.bf16 %v1596, %v1596
  %v1601 = vpack.c.bf16 %v1597, %v1597
  %v1602 = vpack.c.bf16 %v1598, %v1598
  %v1603 = vpack.c.bf16 %v1599, %v1599
  %v1608 = vunpack.c.l.b16 %v1600
  %v1609 = vunpack.c.l.b16 %v1601
  %v1610 = vunpack.c.l.b16 %v1602
  %v1611 = vunpack.c.l.b16 %v1603
  %v1612 = vpack.c.b16 %v1609, %v1608
  %v1613 = vpack.c.b16 %v1611, %v1610
  %s1616 = scalar_lea.vmem [#allocation2], 80
  %1617 = vst [vmem:[%s1616] sm:$0xff] %v1612
  %1618 = vst.msk [vmem:[%s1616 + $0x8] sm:$0xff] %vm602, %v1613
  %v1619 = vld [vmem:[%s0] sm:$0x88]
  %v1620 = vld [vmem:[%s0 + $0x10] sm:$0x88]
  %v1621 = vld [vmem:[%s0 + $0x20] sm:$0x88]
  %v1622 = vld [vmem:[%s0 + $0x30] sm:$0x88]
  %v1623 = vld [vmem:[%s0 + $0x40] sm:$0x88]
  %v1624 = vld [vmem:[%s0 + $0x50] sm:$0x88]
  %v1625 = vld [vmem:[%s0 + $0x60] sm:$0x88]
  %v1626 = vld [vmem:[%s0 + $0x70] sm:$0x88]
  %v1635 = vunpack.c.l.b16 %v1619
  %v1636 = vunpack.c.h.b16 %v1619
  %v1637 = vunpack.c.l.b16 %v1620
  %v1638 = vunpack.c.h.b16 %v1620
  %v1639 = vunpack.c.l.b16 %v1621
  %v1640 = vunpack.c.h.b16 %v1621
  %v1641 = vunpack.c.l.b16 %v1622
  %v1642 = vunpack.c.h.b16 %v1622
  %v1643 = vunpack.c.l.b16 %v1623
  %v1644 = vunpack.c.h.b16 %v1623
  %v1645 = vunpack.c.l.b16 %v1624
  %v1646 = vunpack.c.h.b16 %v1624
  %v1647 = vunpack.c.l.b16 %v1625
  %v1648 = vunpack.c.h.b16 %v1625
  %v1649 = vunpack.c.l.b16 %v1626
  %v1650 = vunpack.c.h.b16 %v1626
  %v1651 = vpack.c.b16 %v1635, %v1635
  %v1652 = vpack.c.b16 %v1636, %v1636
  %v1653 = vpack.c.b16 %v1637, %v1637
  %v1654 = vpack.c.b16 %v1638, %v1638
  %v1655 = vpack.c.b16 %v1639, %v1639
  %v1656 = vpack.c.b16 %v1640, %v1640
  %v1657 = vpack.c.b16 %v1641, %v1641
  %v1658 = vpack.c.b16 %v1642, %v1642
  %v1659 = vpack.c.b16 %v1643, %v1643
  %v1660 = vpack.c.b16 %v1644, %v1644
  %v1661 = vpack.c.b16 %v1645, %v1645
  %v1662 = vpack.c.b16 %v1646, %v1646
  %v1663 = vpack.c.b16 %v1647, %v1647
  %v1664 = vpack.c.b16 %v1648, %v1648
  %v1665 = vpack.c.b16 %v1649, %v1649
  %v1666 = vpack.c.b16 %v1650, %v1650
  %v1667 = vunpack.c.l.b16 %v1651
  %v1668 = vunpack.c.l.b16 %v1652
  %v1669 = vunpack.c.l.b16 %v1653
  %v1670 = vunpack.c.l.b16 %v1654
  %v1671 = vunpack.c.l.b16 %v1655
  %v1672 = vunpack.c.l.b16 %v1656
  %v1673 = vunpack.c.l.b16 %v1657
  %v1674 = vunpack.c.l.b16 %v1658
  %v1675 = vunpack.c.l.b16 %v1659
  %v1676 = vunpack.c.l.b16 %v1660
  %v1677 = vunpack.c.l.b16 %v1661
  %v1678 = vunpack.c.l.b16 %v1662
  %v1679 = vunpack.c.l.b16 %v1663
  %v1680 = vunpack.c.l.b16 %v1664
  %v1681 = vunpack.c.l.b16 %v1665
  %v1682 = vunpack.c.l.b16 %v1666
  %v1683 = vrot.slane %v1667, 6
  %v1684 = vrot.slane %v1669, 5
  %v1685 = vsel %vm176, %v1684, %v1683
  %v1686 = vrot.slane %v1671, 4
  %v1687 = vsel %vm179, %v1686, %v1685
  %v1688 = vrot.slane %v1673, 3
  %v1689 = vsel %vm182, %v1688, %v1687
  %v1690 = vrot.slane %v1675, 2
  %v1691 = vsel %vm185, %v1690, %v1689
  %v1692 = vrot.slane %v1677, 1
  %v1693 = vsel %vm188, %v1692, %v1691
  %v1694 = vsel %vm191, %v1679, %v1693
  %v1695 = vrot.slane %v1681, 7
  %v1696 = vsel %vm194, %v1695, %v1694
  %v1697 = vrot.slane %v1668, 6
  %v1698 = vrot.slane %v1670, 5
  %v1699 = vsel %vm176, %v1698, %v1697
  %v1700 = vrot.slane %v1672, 4
  %v1701 = vsel %vm179, %v1700, %v1699
  %v1702 = vrot.slane %v1674, 3
  %v1703 = vsel %vm182, %v1702, %v1701
  %v1704 = vrot.slane %v1676, 2
  %v1705 = vsel %vm185, %v1704, %v1703
  %v1706 = vrot.slane %v1678, 1
  %v1707 = vsel %vm188, %v1706, %v1705
  %v1708 = vsel %vm191, %v1680, %v1707
  %v1709 = vrot.slane %v1682, 7
  %v1710 = vsel %vm194, %v1709, %v1708
  %v1711 = vpack.c.b16 %v1696, %v1696
  %v1712 = vpack.c.b16 %v1710, %v1710
  %v1715 = vsel %vm493, %v1712, 0
  %1717 = vmatprep.subr.bf16.mxu0 %v382
  %1718 = vmatpush1.bf16.msra.mxu0 %v381
  %1719 = vmatprep.subr.bf16.mxu0 %v386
  %1720 = vmatpush1.bf16.msra.mxu0 %v385
  %1721 = vmatprep.subr.bf16.mxu0 %v390
  %1722 = vmatpush1.bf16.msra.mxu0 %v389
  %1723 = vmatprep.subr.bf16.mxu0 %v394
  %1724 = vmatpush1.bf16.msra.mxu0 %v393
  %1725 = vmatprep.subr.bf16.mxu0 %v398
  %1726 = vmatpush1.bf16.msra.mxu0 %v397
  %1727 = vmatprep.subr.bf16.mxu0 %v402
  %1728 = vmatpush1.bf16.msra.mxu0 %v401
  %1729 = vmatprep.subr.bf16.mxu0 %v406
  %1730 = vmatpush1.bf16.msra.mxu0 %v405
  %1731 = vmatprep.subr.bf16.mxu0 %v410
  %1732 = vmatpush1.bf16.msra.mxu0 %v409
  %1733 = vmatprep.subr.bf16.mxu0 %v414
  %1734 = vmatpush1.bf16.msra.mxu0 %v413
  %1735 = vmatprep.subr.bf16.mxu0 %v418
  %1736 = vmatpush1.bf16.msra.mxu0 %v417
  %1737 = vmatprep.subr.bf16.mxu0 %v422
  %1738 = vmatpush1.bf16.msra.mxu0 %v421
  %1739 = vmatprep.subr.bf16.mxu0 %v426
  %1740 = vmatpush1.bf16.msra.mxu0 %v425
  %1741 = vmatprep.subr.bf16.mxu0 %v430
  %1742 = vmatpush1.bf16.msra.mxu0 %v429
  %1743 = vmatprep.subr.bf16.mxu0 %v434
  %1744 = vmatpush1.bf16.msra.mxu0 %v433
  %1745 = vmatprep.subr.bf16.mxu0 0
  %1746 = vmatpush1.bf16.msra.mxu0 0
  %1747 = vmatprep.subr.bf16.mxu0 0
  %1748 = vmatpush1.bf16.msra.mxu0 0
  %1749 = vmatprep.mubr.bf16.mxu0 %v1715
  %1750 = vmatmul.mubr.bf16.gmra.mrb[0].mxu0 %v1711
  %v1751 = vpop.f32.mrb[0].mxu0
  %v1752 = vadd.f32 %v102, %v1751
  %v1753 = vpop.f32.mrb[0].mxu0
  %v1754 = vadd.f32 %v106, %v1753
  %v1755 = vpop.f32.mrb[0].mxu0
  %v1756 = vpop.f32.mrb[0].mxu0
  %1757 = vdwg.mxu0
  %1758 = vmatprep.subr.bf16.mxu0 %v384
  %1759 = vmatpush1.bf16.msra.mxu0 %v383
  %1760 = vmatprep.subr.bf16.mxu0 %v388
  %1761 = vmatpush1.bf16.msra.mxu0 %v387
  %1762 = vmatprep.subr.bf16.mxu0 %v392
  %1763 = vmatpush1.bf16.msra.mxu0 %v391
  %1764 = vmatprep.subr.bf16.mxu0 %v396
  %1765 = vmatpush1.bf16.msra.mxu0 %v395
  %1766 = vmatprep.subr.bf16.mxu0 %v400
  %1767 = vmatpush1.bf16.msra.mxu0 %v399
  %1768 = vmatprep.subr.bf16.mxu0 %v404
  %1769 = vmatpush1.bf16.msra.mxu0 %v403
  %1770 = vmatprep.subr.bf16.mxu0 %v408
  %1771 = vmatpush1.bf16.msra.mxu0 %v407
  %1772 = vmatprep.subr.bf16.mxu0 %v412
  %1773 = vmatpush1.bf16.msra.mxu0 %v411
  %1774 = vmatprep.subr.bf16.mxu0 %v416
  %1775 = vmatpush1.bf16.msra.mxu0 %v415
  %1776 = vmatprep.subr.bf16.mxu0 %v420
  %1777 = vmatpush1.bf16.msra.mxu0 %v419
  %1778 = vmatprep.subr.bf16.mxu0 %v424
  %1779 = vmatpush1.bf16.msra.mxu0 %v423
  %1780 = vmatprep.subr.bf16.mxu0 %v428
  %1781 = vmatpush1.bf16.msra.mxu0 %v427
  %1782 = vmatprep.subr.bf16.mxu0 %v432
  %1783 = vmatpush1.bf16.msra.mxu0 %v431
  %1784 = vmatprep.subr.bf16.mxu0 %v436
  %1785 = vmatpush1.bf16.msra.mxu0 %v435
  %1786 = vmatprep.subr.bf16.mxu0 0
  %1787 = vmatpush1.bf16.msra.mxu0 0
  %1788 = vmatprep.subr.bf16.mxu0 0
  %1789 = vmatpush1.bf16.msra.mxu0 0
  %1790 = vmatprep.mubr.bf16.mxu0 %v1715
  %1791 = vmatmul.mubr.bf16.gmra.mrb[0].mxu0 %v1711
  %v1792 = vpop.f32.mrb[0].mxu0
  %v1793 = vadd.f32 %v110, %v1792
  %v1794 = vpop.f32.mrb[0].mxu0
  %v1795 = vadd.f32 %v114, %v1794
  %v1796 = vpop.f32.mrb[0].mxu0
  %v1797 = vpop.f32.mrb[0].mxu0
  %1798 = vdwg.mxu0
  %v1799 = vmax.f32 %v1752, 0.0
  %v1800 = vmax.f32 %v1754, 0.0
  %v1801 = vmax.f32 %v1793, 0.0
  %v1802 = vmax.f32 %v1795, 0.0
  %v1803 = vpack.c.bf16 %v1799, %v1799
  %v1804 = vpack.c.bf16 %v1800, %v1800
  %v1805 = vpack.c.bf16 %v1801, %v1801
  %v1806 = vpack.c.bf16 %v1802, %v1802
  %v1811 = vunpack.c.l.b16 %v1803
  %v1812 = vunpack.c.l.b16 %v1804
  %v1813 = vunpack.c.l.b16 %v1805
  %v1814 = vunpack.c.l.b16 %v1806
  %v1815 = vpack.c.b16 %v1812, %v1811
  %v1816 = vpack.c.b16 %v1814, %v1813
  %s1819 = scalar_lea.vmem [#allocation2], 96
  %1820 = vst [vmem:[%s1819] sm:$0xff] %v1815
  %1821 = vst.msk [vmem:[%s1819 + $0x8] sm:$0xff] %vm602, %v1816
  %v1822 = vld [vmem:[%s0] sm:$0x88]
  %v1823 = vld [vmem:[%s0 + $0x10] sm:$0x88]
  %v1824 = vld [vmem:[%s0 + $0x20] sm:$0x88]
  %v1825 = vld [vmem:[%s0 + $0x30] sm:$0x88]
  %v1826 = vld [vmem:[%s0 + $0x40] sm:$0x88]
  %v1827 = vld [vmem:[%s0 + $0x50] sm:$0x88]
  %v1828 = vld [vmem:[%s0 + $0x60] sm:$0x88]
  %v1829 = vld [vmem:[%s0 + $0x70] sm:$0x88]
  %v1838 = vunpack.c.l.b16 %v1822
  %v1839 = vunpack.c.h.b16 %v1822
  %v1840 = vunpack.c.l.b16 %v1823
  %v1841 = vunpack.c.h.b16 %v1823
  %v1842 = vunpack.c.l.b16 %v1824
  %v1843 = vunpack.c.h.b16 %v1824
  %v1844 = vunpack.c.l.b16 %v1825
  %v1845 = vunpack.c.h.b16 %v1825
  %v1846 = vunpack.c.l.b16 %v1826
  %v1847 = vunpack.c.h.b16 %v1826
  %v1848 = vunpack.c.l.b16 %v1827
  %v1849 = vunpack.c.h.b16 %v1827
  %v1850 = vunpack.c.l.b16 %v1828
  %v1851 = vunpack.c.h.b16 %v1828
  %v1852 = vunpack.c.l.b16 %v1829
  %v1853 = vunpack.c.h.b16 %v1829
  %v1854 = vpack.c.b16 %v1838, %v1838
  %v1855 = vpack.c.b16 %v1839, %v1839
  %v1856 = vpack.c.b16 %v1840, %v1840
  %v1857 = vpack.c.b16 %v1841, %v1841
  %v1858 = vpack.c.b16 %v1842, %v1842
  %v1859 = vpack.c.b16 %v1843, %v1843
  %v1860 = vpack.c.b16 %v1844, %v1844
  %v1861 = vpack.c.b16 %v1845, %v1845
  %v1862 = vpack.c.b16 %v1846, %v1846
  %v1863 = vpack.c.b16 %v1847, %v1847
  %v1864 = vpack.c.b16 %v1848, %v1848
  %v1865 = vpack.c.b16 %v1849, %v1849
  %v1866 = vpack.c.b16 %v1850, %v1850
  %v1867 = vpack.c.b16 %v1851, %v1851
  %v1868 = vpack.c.b16 %v1852, %v1852
  %v1869 = vpack.c.b16 %v1853, %v1853
  %v1870 = vunpack.c.l.b16 %v1854
  %v1871 = vunpack.c.l.b16 %v1855
  %v1872 = vunpack.c.l.b16 %v1856
  %v1873 = vunpack.c.l.b16 %v1857
  %v1874 = vunpack.c.l.b16 %v1858
  %v1875 = vunpack.c.l.b16 %v1859
  %v1876 = vunpack.c.l.b16 %v1860
  %v1877 = vunpack.c.l.b16 %v1861
  %v1878 = vunpack.c.l.b16 %v1862
  %v1879 = vunpack.c.l.b16 %v1863
  %v1880 = vunpack.c.l.b16 %v1864
  %v1881 = vunpack.c.l.b16 %v1865
  %v1882 = vunpack.c.l.b16 %v1866
  %v1883 = vunpack.c.l.b16 %v1867
  %v1884 = vunpack.c.l.b16 %v1868
  %v1885 = vunpack.c.l.b16 %v1869
  %v1886 = vrot.slane %v1870, 7
  %v1887 = vrot.slane %v1872, 6
  %v1888 = vsel %vm176, %v1887, %v1886
  %v1889 = vrot.slane %v1874, 5
  %v1890 = vsel %vm179, %v1889, %v1888
  %v1891 = vrot.slane %v1876, 4
  %v1892 = vsel %vm182, %v1891, %v1890
  %v1893 = vrot.slane %v1878, 3
  %v1894 = vsel %vm185, %v1893, %v1892
  %v1895 = vrot.slane %v1880, 2
  %v1896 = vsel %vm188, %v1895, %v1894
  %v1897 = vrot.slane %v1882, 1
  %v1898 = vsel %vm191, %v1897, %v1896
  %v1899 = vsel %vm194, %v1884, %v1898
  %v1900 = vrot.slane %v1871, 7
  %v1901 = vrot.slane %v1873, 6
  %v1902 = vsel %vm176, %v1901, %v1900
  %v1903 = vrot.slane %v1875, 5
  %v1904 = vsel %vm179, %v1903, %v1902
  %v1905 = vrot.slane %v1877, 4
  %v1906 = vsel %vm182, %v1905, %v1904
  %v1907 = vrot.slane %v1879, 3
  %v1908 = vsel %vm185, %v1907, %v1906
  %v1909 = vrot.slane %v1881, 2
  %v1910 = vsel %vm188, %v1909, %v1908
  %v1911 = vrot.slane %v1883, 1
  %v1912 = vsel %vm191, %v1911, %v1910
  %v1913 = vsel %vm194, %v1885, %v1912
  %v1914 = vpack.c.b16 %v1899, %v1899
  %v1915 = vpack.c.b16 %v1913, %v1913
  %v1918 = vsel %vm493, %v1915, 0
  %1920 = vmatprep.subr.bf16.mxu0 %v382
  %1921 = vmatpush1.bf16.msra.mxu0 %v381
  %1922 = vmatprep.subr.bf16.mxu0 %v386
  %1923 = vmatpush1.bf16.msra.mxu0 %v385
  %1924 = vmatprep.subr.bf16.mxu0 %v390
  %1925 = vmatpush1.bf16.msra.mxu0 %v389
  %1926 = vmatprep.subr.bf16.mxu0 %v394
  %1927 = vmatpush1.bf16.msra.mxu0 %v393
  %1928 = vmatprep.subr.bf16.mxu0 %v398
  %1929 = vmatpush1.bf16.msra.mxu0 %v397
  %1930 = vmatprep.subr.bf16.mxu0 %v402
  %1931 = vmatpush1.bf16.msra.mxu0 %v401
  %1932 = vmatprep.subr.bf16.mxu0 %v406
  %1933 = vmatpush1.bf16.msra.mxu0 %v405
  %1934 = vmatprep.subr.bf16.mxu0 %v410
  %1935 = vmatpush1.bf16.msra.mxu0 %v409
  %1936 = vmatprep.subr.bf16.mxu0 %v414
  %1937 = vmatpush1.bf16.msra.mxu0 %v413
  %1938 = vmatprep.subr.bf16.mxu0 %v418
  %1939 = vmatpush1.bf16.msra.mxu0 %v417
  %1940 = vmatprep.subr.bf16.mxu0 %v422
  %1941 = vmatpush1.bf16.msra.mxu0 %v421
  %1942 = vmatprep.subr.bf16.mxu0 %v426
  %1943 = vmatpush1.bf16.msra.mxu0 %v425
  %1944 = vmatprep.subr.bf16.mxu0 %v430
  %1945 = vmatpush1.bf16.msra.mxu0 %v429
  %1946 = vmatprep.subr.bf16.mxu0 %v434
  %1947 = vmatpush1.bf16.msra.mxu0 %v433
  %1948 = vmatprep.subr.bf16.mxu0 0
  %1949 = vmatpush1.bf16.msra.mxu0 0
  %1950 = vmatprep.subr.bf16.mxu0 0
  %1951 = vmatpush1.bf16.msra.mxu0 0
  %1952 = vmatprep.mubr.bf16.mxu0 %v1918
  %1953 = vmatmul.mubr.bf16.gmra.mrb[0].mxu0 %v1914
  %v1954 = vpop.f32.mrb[0].mxu0
  %v1955 = vadd.f32 %v102, %v1954
  %v1956 = vpop.f32.mrb[0].mxu0
  %v1957 = vadd.f32 %v106, %v1956
  %v1958 = vpop.f32.mrb[0].mxu0
  %v1959 = vpop.f32.mrb[0].mxu0
  %1960 = vdwg.mxu0
  %1961 = vmatprep.subr.bf16.mxu0 %v384
  %1962 = vmatpush1.bf16.msra.mxu0 %v383
  %1963 = vmatprep.subr.bf16.mxu0 %v388
  %1964 = vmatpush1.bf16.msra.mxu0 %v387
  %1965 = vmatprep.subr.bf16.mxu0 %v392
  %1966 = vmatpush1.bf16.msra.mxu0 %v391
  %1967 = vmatprep.subr.bf16.mxu0 %v396
  %1968 = vmatpush1.bf16.msra.mxu0 %v395
  %1969 = vmatprep.subr.bf16.mxu0 %v400
  %1970 = vmatpush1.bf16.msra.mxu0 %v399
  %1971 = vmatprep.subr.bf16.mxu0 %v404
  %1972 = vmatpush1.bf16.msra.mxu0 %v403
  %1973 = vmatprep.subr.bf16.mxu0 %v408
  %1974 = vmatpush1.bf16.msra.mxu0 %v407
  %1975 = vmatprep.subr.bf16.mxu0 %v412
  %1976 = vmatpush1.bf16.msra.mxu0 %v411
  %1977 = vmatprep.subr.bf16.mxu0 %v416
  %1978 = vmatpush1.bf16.msra.mxu0 %v415
  %1979 = vmatprep.subr.bf16.mxu0 %v420
  %1980 = vmatpush1.bf16.msra.mxu0 %v419
  %1981 = vmatprep.subr.bf16.mxu0 %v424
  %1982 = vmatpush1.bf16.msra.mxu0 %v423
  %1983 = vmatprep.subr.bf16.mxu0 %v428
  %1984 = vmatpush1.bf16.msra.mxu0 %v427
  %1985 = vmatprep.subr.bf16.mxu0 %v432
  %1986 = vmatpush1.bf16.msra.mxu0 %v431
  %1987 = vmatprep.subr.bf16.mxu0 %v436
  %1988 = vmatpush1.bf16.msra.mxu0 %v435
  %1989 = vmatprep.subr.bf16.mxu0 0
  %1990 = vmatpush1.bf16.msra.mxu0 0
  %1991 = vmatprep.subr.bf16.mxu0 0
  %1992 = vmatpush1.bf16.msra.mxu0 0
  %1993 = vmatprep.mubr.bf16.mxu0 %v1918
  %1994 = vmatmul.mubr.bf16.gmra.mrb[0].mxu0 %v1914
  %v1995 = vpop.f32.mrb[0].mxu0
  %v1996 = vadd.f32 %v110, %v1995
  %v1997 = vpop.f32.mrb[0].mxu0
  %v1998 = vadd.f32 %v114, %v1997
  %v1999 = vpop.f32.mrb[0].mxu0
  %v2000 = vpop.f32.mrb[0].mxu0
  %2001 = vdwg.mxu0
  %v2002 = vmax.f32 %v1955, 0.0
  %v2003 = vmax.f32 %v1957, 0.0
  %v2004 = vmax.f32 %v1996, 0.0
  %v2005 = vmax.f32 %v1998, 0.0
  %v2006 = vpack.c.bf16 %v2002, %v2002
  %v2007 = vpack.c.bf16 %v2003, %v2003
  %v2008 = vpack.c.bf16 %v2004, %v2004
  %v2009 = vpack.c.bf16 %v2005, %v2005
  %v2014 = vunpack.c.l.b16 %v2006
  %v2015 = vunpack.c.l.b16 %v2007
  %v2016 = vunpack.c.l.b16 %v2008
  %v2017 = vunpack.c.l.b16 %v2009
  %v2018 = vpack.c.b16 %v2015, %v2014
  %v2019 = vpack.c.b16 %v2017, %v2016
  %s2022 = scalar_lea.vmem [#allocation2], 112
  %2023 = vst [vmem:[%s2022] sm:$0xff] %v2018
  %2024 = vst.msk [vmem:[%s2022 + $0x8] sm:$0xff] %vm602, %v2019
  %v2025 = vld [vmem:[%s0 + $0x8] sm:$0x11]
  %v2026 = vld [vmem:[%s0 + $0x18] sm:$0x11]
  %v2027 = vld [vmem:[%s0 + $0x28] sm:$0x11]
  %v2028 = vld [vmem:[%s0 + $0x38] sm:$0x11]
  %v2029 = vld [vmem:[%s0 + $0x48] sm:$0x11]
  %v2030 = vld [vmem:[%s0 + $0x58] sm:$0x11]
  %v2031 = vld [vmem:[%s0 + $0x68] sm:$0x11]
  %v2032 = vld [vmem:[%s0 + $0x78] sm:$0x11]
  %v2041 = vunpack.c.l.b16 %v2025
  %v2042 = vunpack.c.h.b16 %v2025
  %v2043 = vunpack.c.l.b16 %v2026
  %v2044 = vunpack.c.h.b16 %v2026
  %v2045 = vunpack.c.l.b16 %v2027
  %v2046 = vunpack.c.h.b16 %v2027
  %v2047 = vunpack.c.l.b16 %v2028
  %v2048 = vunpack.c.h.b16 %v2028
  %v2049 = vunpack.c.l.b16 %v2029
  %v2050 = vunpack.c.h.b16 %v2029
  %v2051 = vunpack.c.l.b16 %v2030
  %v2052 = vunpack.c.h.b16 %v2030
  %v2053 = vunpack.c.l.b16 %v2031
  %v2054 = vunpack.c.h.b16 %v2031
  %v2055 = vunpack.c.l.b16 %v2032
  %v2056 = vunpack.c.h.b16 %v2032
  %v2057 = vpack.c.b16 %v2041, %v2041
  %v2058 = vpack.c.b16 %v2042, %v2042
  %v2059 = vpack.c.b16 %v2043, %v2043
  %v2060 = vpack.c.b16 %v2044, %v2044
  %v2061 = vpack.c.b16 %v2045, %v2045
  %v2062 = vpack.c.b16 %v2046, %v2046
  %v2063 = vpack.c.b16 %v2047, %v2047
  %v2064 = vpack.c.b16 %v2048, %v2048
  %v2065 = vpack.c.b16 %v2049, %v2049
  %v2066 = vpack.c.b16 %v2050, %v2050
  %v2067 = vpack.c.b16 %v2051, %v2051
  %v2068 = vpack.c.b16 %v2052, %v2052
  %v2069 = vpack.c.b16 %v2053, %v2053
  %v2070 = vpack.c.b16 %v2054, %v2054
  %v2071 = vpack.c.b16 %v2055, %v2055
  %v2072 = vpack.c.b16 %v2056, %v2056
  %v2073 = vunpack.c.l.b16 %v2057
  %v2074 = vunpack.c.l.b16 %v2058
  %v2075 = vunpack.c.l.b16 %v2059
  %v2076 = vunpack.c.l.b16 %v2060
  %v2077 = vunpack.c.l.b16 %v2061
  %v2078 = vunpack.c.l.b16 %v2062
  %v2079 = vunpack.c.l.b16 %v2063
  %v2080 = vunpack.c.l.b16 %v2064
  %v2081 = vunpack.c.l.b16 %v2065
  %v2082 = vunpack.c.l.b16 %v2066
  %v2083 = vunpack.c.l.b16 %v2067
  %v2084 = vunpack.c.l.b16 %v2068
  %v2085 = vunpack.c.l.b16 %v2069
  %v2086 = vunpack.c.l.b16 %v2070
  %v2087 = vunpack.c.l.b16 %v2071
  %v2088 = vunpack.c.l.b16 %v2072
  %v2089 = vrot.slane %v2075, 7
  %v2090 = vsel %vm176, %v2089, %v2073
  %v2091 = vrot.slane %v2077, 6
  %v2092 = vsel %vm179, %v2091, %v2090
  %v2093 = vrot.slane %v2079, 5
  %v2094 = vsel %vm182, %v2093, %v2092
  %v2095 = vrot.slane %v2081, 4
  %v2096 = vsel %vm185, %v2095, %v2094
  %v2097 = vrot.slane %v2083, 3
  %v2098 = vsel %vm188, %v2097, %v2096
  %v2099 = vrot.slane %v2085, 2
  %v2100 = vsel %vm191, %v2099, %v2098
  %v2101 = vrot.slane %v2087, 1
  %v2102 = vsel %vm194, %v2101, %v2100
  %v2103 = vrot.slane %v2076, 7
  %v2104 = vsel %vm176, %v2103, %v2074
  %v2105 = vrot.slane %v2078, 6
  %v2106 = vsel %vm179, %v2105, %v2104
  %v2107 = vrot.slane %v2080, 5
  %v2108 = vsel %vm182, %v2107, %v2106
  %v2109 = vrot.slane %v2082, 4
  %v2110 = vsel %vm185, %v2109, %v2108
  %v2111 = vrot.slane %v2084, 3
  %v2112 = vsel %vm188, %v2111, %v2110
  %v2113 = vrot.slane %v2086, 2
  %v2114 = vsel %vm191, %v2113, %v2112
  %v2115 = vrot.slane %v2088, 1
  %v2116 = vsel %vm194, %v2115, %v2114
  %v2117 = vpack.c.b16 %v2102, %v2102
  %v2118 = vpack.c.b16 %v2116, %v2116
  %v2121 = vsel %vm493, %v2118, 0
  %2123 = vmatprep.subr.bf16.mxu0 %v382
  %2124 = vmatpush1.bf16.msra.mxu0 %v381
  %2125 = vmatprep.subr.bf16.mxu0 %v386
  %2126 = vmatpush1.bf16.msra.mxu0 %v385
  %2127 = vmatprep.subr.bf16.mxu0 %v390
  %2128 = vmatpush1.bf16.msra.mxu0 %v389
  %2129 = vmatprep.subr.bf16.mxu0 %v394
  %2130 = vmatpush1.bf16.msra.mxu0 %v393
  %2131 = vmatprep.subr.bf16.mxu0 %v398
  %2132 = vmatpush1.bf16.msra.mxu0 %v397
  %2133 = vmatprep.subr.bf16.mxu0 %v402
  %2134 = vmatpush1.bf16.msra.mxu0 %v401
  %2135 = vmatprep.subr.bf16.mxu0 %v406
  %2136 = vmatpush1.bf16.msra.mxu0 %v405
  %2137 = vmatprep.subr.bf16.mxu0 %v410
  %2138 = vmatpush1.bf16.msra.mxu0 %v409
  %2139 = vmatprep.subr.bf16.mxu0 %v414
  %2140 = vmatpush1.bf16.msra.mxu0 %v413
  %2141 = vmatprep.subr.bf16.mxu0 %v418
  %2142 = vmatpush1.bf16.msra.mxu0 %v417
  %2143 = vmatprep.subr.bf16.mxu0 %v422
  %2144 = vmatpush1.bf16.msra.mxu0 %v421
  %2145 = vmatprep.subr.bf16.mxu0 %v426
  %2146 = vmatpush1.bf16.msra.mxu0 %v425
  %2147 = vmatprep.subr.bf16.mxu0 %v430
  %2148 = vmatpush1.bf16.msra.mxu0 %v429
  %2149 = vmatprep.subr.bf16.mxu0 %v434
  %2150 = vmatpush1.bf16.msra.mxu0 %v433
  %2151 = vmatprep.subr.bf16.mxu0 0
  %2152 = vmatpush1.bf16.msra.mxu0 0
  %2153 = vmatprep.subr.bf16.mxu0 0
  %2154 = vmatpush1.bf16.msra.mxu0 0
  %2155 = vmatprep.mubr.bf16.mxu0 %v2121
  %2156 = vmatmul.mubr.bf16.gmra.mrb[0].mxu0 %v2117
  %v2157 = vpop.f32.mrb[0].mxu0
  %v2158 = vadd.f32 %v102, %v2157
  %v2159 = vpop.f32.mrb[0].mxu0
  %v2160 = vadd.f32 %v106, %v2159
  %v2161 = vpop.f32.mrb[0].mxu0
  %v2162 = vpop.f32.mrb[0].mxu0
  %2163 = vdwg.mxu0
  %2164 = vmatprep.subr.bf16.mxu0 %v384
  %2165 = vmatpush1.bf16.msra.mxu0 %v383
  %2166 = vmatprep.subr.bf16.mxu0 %v388
  %2167 = vmatpush1.bf16.msra.mxu0 %v387
  %2168 = vmatprep.subr.bf16.mxu0 %v392
  %2169 = vmatpush1.bf16.msra.mxu0 %v391
  %2170 = vmatprep.subr.bf16.mxu0 %v396
  %2171 = vmatpush1.bf16.msra.mxu0 %v395
  %2172 = vmatprep.subr.bf16.mxu0 %v400
  %2173 = vmatpush1.bf16.msra.mxu0 %v399
  %2174 = vmatprep.subr.bf16.mxu0 %v404
  %2175 = vmatpush1.bf16.msra.mxu0 %v403
  %2176 = vmatprep.subr.bf16.mxu0 %v408
  %2177 = vmatpush1.bf16.msra.mxu0 %v407
  %2178 = vmatprep.subr.bf16.mxu0 %v412
  %2179 = vmatpush1.bf16.msra.mxu0 %v411
  %2180 = vmatprep.subr.bf16.mxu0 %v416
  %2181 = vmatpush1.bf16.msra.mxu0 %v415
  %2182 = vmatprep.subr.bf16.mxu0 %v420
  %2183 = vmatpush1.bf16.msra.mxu0 %v419
  %2184 = vmatprep.subr.bf16.mxu0 %v424
  %2185 = vmatpush1.bf16.msra.mxu0 %v423
  %2186 = vmatprep.subr.bf16.mxu0 %v428
  %2187 = vmatpush1.bf16.msra.mxu0 %v427
  %2188 = vmatprep.subr.bf16.mxu0 %v432
  %2189 = vmatpush1.bf16.msra.mxu0 %v431
  %2190 = vmatprep.subr.bf16.mxu0 %v436
  %2191 = vmatpush1.bf16.msra.mxu0 %v435
  %2192 = vmatprep.subr.bf16.mxu0 0
  %2193 = vmatpush1.bf16.msra.mxu0 0
  %2194 = vmatprep.subr.bf16.mxu0 0
  %2195 = vmatpush1.bf16.msra.mxu0 0
  %2196 = vmatprep.mubr.bf16.mxu0 %v2121
  %2197 = vmatmul.mubr.bf16.gmra.mrb[0].mxu0 %v2117
  %v2198 = vpop.f32.mrb[0].mxu0
  %v2199 = vadd.f32 %v110, %v2198
  %v2200 = vpop.f32.mrb[0].mxu0
  %v2201 = vadd.f32 %v114, %v2200
  %v2202 = vpop.f32.mrb[0].mxu0
  %v2203 = vpop.f32.mrb[0].mxu0
  %2204 = vdwg.mxu0
  %v2205 = vmax.f32 %v2158, 0.0
  %v2206 = vmax.f32 %v2160, 0.0
  %v2207 = vmax.f32 %v2199, 0.0
  %v2208 = vmax.f32 %v2201, 0.0
  %v2209 = vpack.c.bf16 %v2205, %v2205
  %v2210 = vpack.c.bf16 %v2206, %v2206
  %v2211 = vpack.c.bf16 %v2207, %v2207
  %v2212 = vpack.c.bf16 %v2208, %v2208
  %v2217 = vunpack.c.l.b16 %v2209
  %v2218 = vunpack.c.l.b16 %v2210
  %v2219 = vunpack.c.l.b16 %v2211
  %v2220 = vunpack.c.l.b16 %v2212
  %v2221 = vpack.c.b16 %v2218, %v2217
  %v2222 = vpack.c.b16 %v2220, %v2219
  %s2225 = scalar_lea.vmem [#allocation2], 128
  %2226 = vst [vmem:[%s2225] sm:$0xff] %v2221
  %2227 = vst.msk [vmem:[%s2225 + $0x8] sm:$0xff] %vm602, %v2222
  %v2228 = vld [vmem:[%s0 + $0x8] sm:$0x11]
  %v2229 = vld [vmem:[%s0 + $0x18] sm:$0x11]
  %v2230 = vld [vmem:[%s0 + $0x28] sm:$0x11]
  %v2231 = vld [vmem:[%s0 + $0x38] sm:$0x11]
  %v2232 = vld [vmem:[%s0 + $0x48] sm:$0x11]
  %v2233 = vld [vmem:[%s0 + $0x58] sm:$0x11]
  %v2234 = vld [vmem:[%s0 + $0x68] sm:$0x11]
  %v2235 = vld [vmem:[%s0 + $0x78] sm:$0x11]
  %v2244 = vunpack.c.l.b16 %v2228
  %v2245 = vunpack.c.h.b16 %v2228
  %v2246 = vunpack.c.l.b16 %v2229
  %v2247 = vunpack.c.h.b16 %v2229
  %v2248 = vunpack.c.l.b16 %v2230
  %v2249 = vunpack.c.h.b16 %v2230
  %v2250 = vunpack.c.l.b16 %v2231
  %v2251 = vunpack.c.h.b16 %v2231
  %v2252 = vunpack.c.l.b16 %v2232
  %v2253 = vunpack.c.h.b16 %v2232
  %v2254 = vunpack.c.l.b16 %v2233
  %v2255 = vunpack.c.h.b16 %v2233
  %v2256 = vunpack.c.l.b16 %v2234
  %v2257 = vunpack.c.h.b16 %v2234
  %v2258 = vunpack.c.l.b16 %v2235
  %v2259 = vunpack.c.h.b16 %v2235
  %v2260 = vpack.c.b16 %v2244, %v2244
  %v2261 = vpack.c.b16 %v2245, %v2245
  %v2262 = vpack.c.b16 %v2246, %v2246
  %v2263 = vpack.c.b16 %v2247, %v2247
  %v2264 = vpack.c.b16 %v2248, %v2248
  %v2265 = vpack.c.b16 %v2249, %v2249
  %v2266 = vpack.c.b16 %v2250, %v2250
  %v2267 = vpack.c.b16 %v2251, %v2251
  %v2268 = vpack.c.b16 %v2252, %v2252
  %v2269 = vpack.c.b16 %v2253, %v2253
  %v2270 = vpack.c.b16 %v2254, %v2254
  %v2271 = vpack.c.b16 %v2255, %v2255
  %v2272 = vpack.c.b16 %v2256, %v2256
  %v2273 = vpack.c.b16 %v2257, %v2257
  %v2274 = vpack.c.b16 %v2258, %v2258
  %v2275 = vpack.c.b16 %v2259, %v2259
  %v2276 = vunpack.c.l.b16 %v2260
  %v2277 = vunpack.c.l.b16 %v2261
  %v2278 = vunpack.c.l.b16 %v2262
  %v2279 = vunpack.c.l.b16 %v2263
  %v2280 = vunpack.c.l.b16 %v2264
  %v2281 = vunpack.c.l.b16 %v2265
  %v2282 = vunpack.c.l.b16 %v2266
  %v2283 = vunpack.c.l.b16 %v2267
  %v2284 = vunpack.c.l.b16 %v2268
  %v2285 = vunpack.c.l.b16 %v2269
  %v2286 = vunpack.c.l.b16 %v2270
  %v2287 = vunpack.c.l.b16 %v2271
  %v2288 = vunpack.c.l.b16 %v2272
  %v2289 = vunpack.c.l.b16 %v2273
  %v2290 = vunpack.c.l.b16 %v2274
  %v2291 = vunpack.c.l.b16 %v2275
  %v2292 = vrot.slane %v2276, 1
  %v2293 = vsel %vm176, %v2278, %v2292
  %v2294 = vrot.slane %v2280, 7
  %v2295 = vsel %vm179, %v2294, %v2293
  %v2296 = vrot.slane %v2282, 6
  %v2297 = vsel %vm182, %v2296, %v2295
  %v2298 = vrot.slane %v2284, 5
  %v2299 = vsel %vm185, %v2298, %v2297
  %v2300 = vrot.slane %v2286, 4
  %v2301 = vsel %vm188, %v2300, %v2299
  %v2302 = vrot.slane %v2288, 3
  %v2303 = vsel %vm191, %v2302, %v2301
  %v2304 = vrot.slane %v2290, 2
  %v2305 = vsel %vm194, %v2304, %v2303
  %v2306 = vrot.slane %v2277, 1
  %v2307 = vsel %vm176, %v2279, %v2306
  %v2308 = vrot.slane %v2281, 7
  %v2309 = vsel %vm179, %v2308, %v2307
  %v2310 = vrot.slane %v2283, 6
  %v2311 = vsel %vm182, %v2310, %v2309
  %v2312 = vrot.slane %v2285, 5
  %v2313 = vsel %vm185, %v2312, %v2311
  %v2314 = vrot.slane %v2287, 4
  %v2315 = vsel %vm188, %v2314, %v2313
  %v2316 = vrot.slane %v2289, 3
  %v2317 = vsel %vm191, %v2316, %v2315
  %v2318 = vrot.slane %v2291, 2
  %v2319 = vsel %vm194, %v2318, %v2317
  %v2320 = vpack.c.b16 %v2305, %v2305
  %v2321 = vpack.c.b16 %v2319, %v2319
  %v2324 = vsel %vm493, %v2321, 0
  %2326 = vmatprep.subr.bf16.mxu0 %v382
  %2327 = vmatpush1.bf16.msra.mxu0 %v381
  %2328 = vmatprep.subr.bf16.mxu0 %v386
  %2329 = vmatpush1.bf16.msra.mxu0 %v385
  %2330 = vmatprep.subr.bf16.mxu0 %v390
  %2331 = vmatpush1.bf16.msra.mxu0 %v389
  %2332 = vmatprep.subr.bf16.mxu0 %v394
  %2333 = vmatpush1.bf16.msra.mxu0 %v393
  %2334 = vmatprep.subr.bf16.mxu0 %v398
  %2335 = vmatpush1.bf16.msra.mxu0 %v397
  %2336 = vmatprep.subr.bf16.mxu0 %v402
  %2337 = vmatpush1.bf16.msra.mxu0 %v401
  %2338 = vmatprep.subr.bf16.mxu0 %v406
  %2339 = vmatpush1.bf16.msra.mxu0 %v405
  %2340 = vmatprep.subr.bf16.mxu0 %v410
  %2341 = vmatpush1.bf16.msra.mxu0 %v409
  %2342 = vmatprep.subr.bf16.mxu0 %v414
  %2343 = vmatpush1.bf16.msra.mxu0 %v413
  %2344 = vmatprep.subr.bf16.mxu0 %v418
  %2345 = vmatpush1.bf16.msra.mxu0 %v417
  %2346 = vmatprep.subr.bf16.mxu0 %v422
  %2347 = vmatpush1.bf16.msra.mxu0 %v421
  %2348 = vmatprep.subr.bf16.mxu0 %v426
  %2349 = vmatpush1.bf16.msra.mxu0 %v425
  %2350 = vmatprep.subr.bf16.mxu0 %v430
  %2351 = vmatpush1.bf16.msra.mxu0 %v429
  %2352 = vmatprep.subr.bf16.mxu0 %v434
  %2353 = vmatpush1.bf16.msra.mxu0 %v433
  %2354 = vmatprep.subr.bf16.mxu0 0
  %2355 = vmatpush1.bf16.msra.mxu0 0
  %2356 = vmatprep.subr.bf16.mxu0 0
  %2357 = vmatpush1.bf16.msra.mxu0 0
  %2358 = vmatprep.mubr.bf16.mxu0 %v2324
  %2359 = vmatmul.mubr.bf16.gmra.mrb[0].mxu0 %v2320
  %v2360 = vpop.f32.mrb[0].mxu0
  %v2361 = vadd.f32 %v102, %v2360
  %v2362 = vpop.f32.mrb[0].mxu0
  %v2363 = vadd.f32 %v106, %v2362
  %v2364 = vpop.f32.mrb[0].mxu0
  %v2365 = vpop.f32.mrb[0].mxu0
  %2366 = vdwg.mxu0
  %2367 = vmatprep.subr.bf16.mxu0 %v384
  %2368 = vmatpush1.bf16.msra.mxu0 %v383
  %2369 = vmatprep.subr.bf16.mxu0 %v388
  %2370 = vmatpush1.bf16.msra.mxu0 %v387
  %2371 = vmatprep.subr.bf16.mxu0 %v392
  %2372 = vmatpush1.bf16.msra.mxu0 %v391
  %2373 = vmatprep.subr.bf16.mxu0 %v396
  %2374 = vmatpush1.bf16.msra.mxu0 %v395
  %2375 = vmatprep.subr.bf16.mxu0 %v400
  %2376 = vmatpush1.bf16.msra.mxu0 %v399
  %2377 = vmatprep.subr.bf16.mxu0 %v404
  %2378 = vmatpush1.bf16.msra.mxu0 %v403
  %2379 = vmatprep.subr.bf16.mxu0 %v408
  %2380 = vmatpush1.bf16.msra.mxu0 %v407
  %2381 = vmatprep.subr.bf16.mxu0 %v412
  %2382 = vmatpush1.bf16.msra.mxu0 %v411
  %2383 = vmatprep.subr.bf16.mxu0 %v416
  %2384 = vmatpush1.bf16.msra.mxu0 %v415
  %2385 = vmatprep.subr.bf16.mxu0 %v420
  %2386 = vmatpush1.bf16.msra.mxu0 %v419
  %2387 = vmatprep.subr.bf16.mxu0 %v424
  %2388 = vmatpush1.bf16.msra.mxu0 %v423
  %2389 = vmatprep.subr.bf16.mxu0 %v428
  %2390 = vmatpush1.bf16.msra.mxu0 %v427
  %2391 = vmatprep.subr.bf16.mxu0 %v432
  %2392 = vmatpush1.bf16.msra.mxu0 %v431
  %2393 = vmatprep.subr.bf16.mxu0 %v436
  %2394 = vmatpush1.bf16.msra.mxu0 %v435
  %2395 = vmatprep.subr.bf16.mxu0 0
  %2396 = vmatpush1.bf16.msra.mxu0 0
  %2397 = vmatprep.subr.bf16.mxu0 0
  %2398 = vmatpush1.bf16.msra.mxu0 0
  %2399 = vmatprep.mubr.bf16.mxu0 %v2324
  %2400 = vmatmul.mubr.bf16.gmra.mrb[0].mxu0 %v2320
  %v2401 = vpop.f32.mrb[0].mxu0
  %v2402 = vadd.f32 %v110, %v2401
  %v2403 = vpop.f32.mrb[0].mxu0
  %v2404 = vadd.f32 %v114, %v2403
  %v2405 = vpop.f32.mrb[0].mxu0
  %v2406 = vpop.f32.mrb[0].mxu0
  %2407 = vdwg.mxu0
  %v2408 = vmax.f32 %v2361, 0.0
  %v2409 = vmax.f32 %v2363, 0.0
  %v2410 = vmax.f32 %v2402, 0.0
  %v2411 = vmax.f32 %v2404, 0.0
  %v2412 = vpack.c.bf16 %v2408, %v2408
  %v2413 = vpack.c.bf16 %v2409, %v2409
  %v2414 = vpack.c.bf16 %v2410, %v2410
  %v2415 = vpack.c.bf16 %v2411, %v2411
  %v2420 = vunpack.c.l.b16 %v2412
  %v2421 = vunpack.c.l.b16 %v2413
  %v2422 = vunpack.c.l.b16 %v2414
  %v2423 = vunpack.c.l.b16 %v2415
  %v2424 = vpack.c.b16 %v2421, %v2420
  %v2425 = vpack.c.b16 %v2423, %v2422
  %s2428 = scalar_lea.vmem [#allocation2], 144
  %2429 = vst [vmem:[%s2428] sm:$0xff] %v2424
  %2430 = vst.msk [vmem:[%s2428 + $0x8] sm:$0xff] %vm602, %v2425
  %v2431 = vld [vmem:[%s0 + $0x8] sm:$0x22]
  %v2432 = vld [vmem:[%s0 + $0x18] sm:$0x22]
  %v2433 = vld [vmem:[%s0 + $0x28] sm:$0x22]
  %v2434 = vld [vmem:[%s0 + $0x38] sm:$0x22]
  %v2435 = vld [vmem:[%s0 + $0x48] sm:$0x22]
  %v2436 = vld [vmem:[%s0 + $0x58] sm:$0x22]
  %v2437 = vld [vmem:[%s0 + $0x68] sm:$0x22]
  %v2438 = vld [vmem:[%s0 + $0x78] sm:$0x22]
  %v2447 = vunpack.c.l.b16 %v2431
  %v2448 = vunpack.c.h.b16 %v2431
  %v2449 = vunpack.c.l.b16 %v2432
  %v2450 = vunpack.c.h.b16 %v2432
  %v2451 = vunpack.c.l.b16 %v2433
  %v2452 = vunpack.c.h.b16 %v2433
  %v2453 = vunpack.c.l.b16 %v2434
  %v2454 = vunpack.c.h.b16 %v2434
  %v2455 = vunpack.c.l.b16 %v2435
  %v2456 = vunpack.c.h.b16 %v2435
  %v2457 = vunpack.c.l.b16 %v2436
  %v2458 = vunpack.c.h.b16 %v2436
  %v2459 = vunpack.c.l.b16 %v2437
  %v2460 = vunpack.c.h.b16 %v2437
  %v2461 = vunpack.c.l.b16 %v2438
  %v2462 = vunpack.c.h.b16 %v2438
  %v2463 = vpack.c.b16 %v2447, %v2447
  %v2464 = vpack.c.b16 %v2448, %v2448
  %v2465 = vpack.c.b16 %v2449, %v2449
  %v2466 = vpack.c.b16 %v2450, %v2450
  %v2467 = vpack.c.b16 %v2451, %v2451
  %v2468 = vpack.c.b16 %v2452, %v2452
  %v2469 = vpack.c.b16 %v2453, %v2453
  %v2470 = vpack.c.b16 %v2454, %v2454
  %v2471 = vpack.c.b16 %v2455, %v2455
  %v2472 = vpack.c.b16 %v2456, %v2456
  %v2473 = vpack.c.b16 %v2457, %v2457
  %v2474 = vpack.c.b16 %v2458, %v2458
  %v2475 = vpack.c.b16 %v2459, %v2459
  %v2476 = vpack.c.b16 %v2460, %v2460
  %v2477 = vpack.c.b16 %v2461, %v2461
  %v2478 = vpack.c.b16 %v2462, %v2462
  %v2479 = vunpack.c.l.b16 %v2463
  %v2480 = vunpack.c.l.b16 %v2464
  %v2481 = vunpack.c.l.b16 %v2465
  %v2482 = vunpack.c.l.b16 %v2466
  %v2483 = vunpack.c.l.b16 %v2467
  %v2484 = vunpack.c.l.b16 %v2468
  %v2485 = vunpack.c.l.b16 %v2469
  %v2486 = vunpack.c.l.b16 %v2470
  %v2487 = vunpack.c.l.b16 %v2471
  %v2488 = vunpack.c.l.b16 %v2472
  %v2489 = vunpack.c.l.b16 %v2473
  %v2490 = vunpack.c.l.b16 %v2474
  %v2491 = vunpack.c.l.b16 %v2475
  %v2492 = vunpack.c.l.b16 %v2476
  %v2493 = vunpack.c.l.b16 %v2477
  %v2494 = vunpack.c.l.b16 %v2478
  %v2495 = vrot.slane %v2479, 2
  %v2496 = vrot.slane %v2481, 1
  %v2497 = vsel %vm176, %v2496, %v2495
  %v2498 = vsel %vm179, %v2483, %v2497
  %v2499 = vrot.slane %v2485, 7
  %v2500 = vsel %vm182, %v2499, %v2498
  %v2501 = vrot.slane %v2487, 6
  %v2502 = vsel %vm185, %v2501, %v2500
  %v2503 = vrot.slane %v2489, 5
  %v2504 = vsel %vm188, %v2503, %v2502
  %v2505 = vrot.slane %v2491, 4
  %v2506 = vsel %vm191, %v2505, %v2504
  %v2507 = vrot.slane %v2493, 3
  %v2508 = vsel %vm194, %v2507, %v2506
  %v2509 = vrot.slane %v2480, 2
  %v2510 = vrot.slane %v2482, 1
  %v2511 = vsel %vm176, %v2510, %v2509
  %v2512 = vsel %vm179, %v2484, %v2511
  %v2513 = vrot.slane %v2486, 7
  %v2514 = vsel %vm182, %v2513, %v2512
  %v2515 = vrot.slane %v2488, 6
  %v2516 = vsel %vm185, %v2515, %v2514
  %v2517 = vrot.slane %v2490, 5
  %v2518 = vsel %vm188, %v2517, %v2516
  %v2519 = vrot.slane %v2492, 4
  %v2520 = vsel %vm191, %v2519, %v2518
  %v2521 = vrot.slane %v2494, 3
  %v2522 = vsel %vm194, %v2521, %v2520
  %v2523 = vpack.c.b16 %v2508, %v2508
  %v2524 = vpack.c.b16 %v2522, %v2522
  %v2527 = vsel %vm493, %v2524, 0
  %2529 = vmatprep.subr.bf16.mxu0 %v382
  %2530 = vmatpush1.bf16.msra.mxu0 %v381
  %2531 = vmatprep.subr.bf16.mxu0 %v386
  %2532 = vmatpush1.bf16.msra.mxu0 %v385
  %2533 = vmatprep.subr.bf16.mxu0 %v390
  %2534 = vmatpush1.bf16.msra.mxu0 %v389
  %2535 = vmatprep.subr.bf16.mxu0 %v394
  %2536 = vmatpush1.bf16.msra.mxu0 %v393
  %2537 = vmatprep.subr.bf16.mxu0 %v398
  %2538 = vmatpush1.bf16.msra.mxu0 %v397
  %2539 = vmatprep.subr.bf16.mxu0 %v402
  %2540 = vmatpush1.bf16.msra.mxu0 %v401
  %2541 = vmatprep.subr.bf16.mxu0 %v406
  %2542 = vmatpush1.bf16.msra.mxu0 %v405
  %2543 = vmatprep.subr.bf16.mxu0 %v410
  %2544 = vmatpush1.bf16.msra.mxu0 %v409
  %2545 = vmatprep.subr.bf16.mxu0 %v414
  %2546 = vmatpush1.bf16.msra.mxu0 %v413
  %2547 = vmatprep.subr.bf16.mxu0 %v418
  %2548 = vmatpush1.bf16.msra.mxu0 %v417
  %2549 = vmatprep.subr.bf16.mxu0 %v422
  %2550 = vmatpush1.bf16.msra.mxu0 %v421
  %2551 = vmatprep.subr.bf16.mxu0 %v426
  %2552 = vmatpush1.bf16.msra.mxu0 %v425
  %2553 = vmatprep.subr.bf16.mxu0 %v430
  %2554 = vmatpush1.bf16.msra.mxu0 %v429
  %2555 = vmatprep.subr.bf16.mxu0 %v434
  %2556 = vmatpush1.bf16.msra.mxu0 %v433
  %2557 = vmatprep.subr.bf16.mxu0 0
  %2558 = vmatpush1.bf16.msra.mxu0 0
  %2559 = vmatprep.subr.bf16.mxu0 0
  %2560 = vmatpush1.bf16.msra.mxu0 0
  %2561 = vmatprep.mubr.bf16.mxu0 %v2527
  %2562 = vmatmul.mubr.bf16.gmra.mrb[0].mxu0 %v2523
  %v2563 = vpop.f32.mrb[0].mxu0
  %v2564 = vadd.f32 %v102, %v2563
  %v2565 = vpop.f32.mrb[0].mxu0
  %v2566 = vadd.f32 %v106, %v2565
  %v2567 = vpop.f32.mrb[0].mxu0
  %v2568 = vpop.f32.mrb[0].mxu0
  %2569 = vdwg.mxu0
  %2570 = vmatprep.subr.bf16.mxu0 %v384
  %2571 = vmatpush1.bf16.msra.mxu0 %v383
  %2572 = vmatprep.subr.bf16.mxu0 %v388
  %2573 = vmatpush1.bf16.msra.mxu0 %v387
  %2574 = vmatprep.subr.bf16.mxu0 %v392
  %2575 = vmatpush1.bf16.msra.mxu0 %v391
  %2576 = vmatprep.subr.bf16.mxu0 %v396
  %2577 = vmatpush1.bf16.msra.mxu0 %v395
  %2578 = vmatprep.subr.bf16.mxu0 %v400
  %2579 = vmatpush1.bf16.msra.mxu0 %v399
  %2580 = vmatprep.subr.bf16.mxu0 %v404
  %2581 = vmatpush1.bf16.msra.mxu0 %v403
  %2582 = vmatprep.subr.bf16.mxu0 %v408
  %2583 = vmatpush1.bf16.msra.mxu0 %v407
  %2584 = vmatprep.subr.bf16.mxu0 %v412
  %2585 = vmatpush1.bf16.msra.mxu0 %v411
  %2586 = vmatprep.subr.bf16.mxu0 %v416
  %2587 = vmatpush1.bf16.msra.mxu0 %v415
  %2588 = vmatprep.subr.bf16.mxu0 %v420
  %2589 = vmatpush1.bf16.msra.mxu0 %v419
  %2590 = vmatprep.subr.bf16.mxu0 %v424
  %2591 = vmatpush1.bf16.msra.mxu0 %v423
  %2592 = vmatprep.subr.bf16.mxu0 %v428
  %2593 = vmatpush1.bf16.msra.mxu0 %v427
  %2594 = vmatprep.subr.bf16.mxu0 %v432
  %2595 = vmatpush1.bf16.msra.mxu0 %v431
  %2596 = vmatprep.subr.bf16.mxu0 %v436
  %2597 = vmatpush1.bf16.msra.mxu0 %v435
  %2598 = vmatprep.subr.bf16.mxu0 0
  %2599 = vmatpush1.bf16.msra.mxu0 0
  %2600 = vmatprep.subr.bf16.mxu0 0
  %2601 = vmatpush1.bf16.msra.mxu0 0
  %2602 = vmatprep.mubr.bf16.mxu0 %v2527
  %2603 = vmatmul.mubr.bf16.gmra.mrb[0].mxu0 %v2523
  %v2604 = vpop.f32.mrb[0].mxu0
  %v2605 = vadd.f32 %v110, %v2604
  %v2606 = vpop.f32.mrb[0].mxu0
  %v2607 = vadd.f32 %v114, %v2606
  %v2608 = vpop.f32.mrb[0].mxu0
  %v2609 = vpop.f32.mrb[0].mxu0
  %2610 = vdwg.mxu0
  %v2611 = vmax.f32 %v2564, 0.0
  %v2612 = vmax.f32 %v2566, 0.0
  %v2613 = vmax.f32 %v2605, 0.0
  %v2614 = vmax.f32 %v2607, 0.0
  %v2615 = vpack.c.bf16 %v2611, %v2611
  %v2616 = vpack.c.bf16 %v2612, %v2612
  %v2617 = vpack.c.bf16 %v2613, %v2613
  %v2618 = vpack.c.bf16 %v2614, %v2614
  %v2623 = vunpack.c.l.b16 %v2615
  %v2624 = vunpack.c.l.b16 %v2616
  %v2625 = vunpack.c.l.b16 %v2617
  %v2626 = vunpack.c.l.b16 %v2618
  %v2627 = vpack.c.b16 %v2624, %v2623
  %v2628 = vpack.c.b16 %v2626, %v2625
  %s2631 = scalar_lea.vmem [#allocation2], 160
  %2632 = vst [vmem:[%s2631] sm:$0xff] %v2627
  %2633 = vst.msk [vmem:[%s2631 + $0x8] sm:$0xff] %vm602, %v2628
  %v2634 = vld [vmem:[%s0 + $0x8] sm:$0x22]
  %v2635 = vld [vmem:[%s0 + $0x18] sm:$0x22]
  %v2636 = vld [vmem:[%s0 + $0x28] sm:$0x22]
  %v2637 = vld [vmem:[%s0 + $0x38] sm:$0x22]
  %v2638 = vld [vmem:[%s0 + $0x48] sm:$0x22]
  %v2639 = vld [vmem:[%s0 + $0x58] sm:$0x22]
  %v2640 = vld [vmem:[%s0 + $0x68] sm:$0x22]
  %v2641 = vld [vmem:[%s0 + $0x78] sm:$0x22]
  %v2650 = vunpack.c.l.b16 %v2634
  %v2651 = vunpack.c.h.b16 %v2634
  %v2652 = vunpack.c.l.b16 %v2635
  %v2653 = vunpack.c.h.b16 %v2635
  %v2654 = vunpack.c.l.b16 %v2636
  %v2655 = vunpack.c.h.b16 %v2636
  %v2656 = vunpack.c.l.b16 %v2637
  %v2657 = vunpack.c.h.b16 %v2637
  %v2658 = vunpack.c.l.b16 %v2638
  %v2659 = vunpack.c.h.b16 %v2638
  %v2660 = vunpack.c.l.b16 %v2639
  %v2661 = vunpack.c.h.b16 %v2639
  %v2662 = vunpack.c.l.b16 %v2640
  %v2663 = vunpack.c.h.b16 %v2640
  %v2664 = vunpack.c.l.b16 %v2641
  %v2665 = vunpack.c.h.b16 %v2641
  %v2666 = vpack.c.b16 %v2650, %v2650
  %v2667 = vpack.c.b16 %v2651, %v2651
  %v2668 = vpack.c.b16 %v2652, %v2652
  %v2669 = vpack.c.b16 %v2653, %v2653
  %v2670 = vpack.c.b16 %v2654, %v2654
  %v2671 = vpack.c.b16 %v2655, %v2655
  %v2672 = vpack.c.b16 %v2656, %v2656
  %v2673 = vpack.c.b16 %v2657, %v2657
  %v2674 = vpack.c.b16 %v2658, %v2658
  %v2675 = vpack.c.b16 %v2659, %v2659
  %v2676 = vpack.c.b16 %v2660, %v2660
  %v2677 = vpack.c.b16 %v2661, %v2661
  %v2678 = vpack.c.b16 %v2662, %v2662
  %v2679 = vpack.c.b16 %v2663, %v2663
  %v2680 = vpack.c.b16 %v2664, %v2664
  %v2681 = vpack.c.b16 %v2665, %v2665
  %v2682 = vunpack.c.l.b16 %v2666
  %v2683 = vunpack.c.l.b16 %v2667
  %v2684 = vunpack.c.l.b16 %v2668
  %v2685 = vunpack.c.l.b16 %v2669
  %v2686 = vunpack.c.l.b16 %v2670
  %v2687 = vunpack.c.l.b16 %v2671
  %v2688 = vunpack.c.l.b16 %v2672
  %v2689 = vunpack.c.l.b16 %v2673
  %v2690 = vunpack.c.l.b16 %v2674
  %v2691 = vunpack.c.l.b16 %v2675
  %v2692 = vunpack.c.l.b16 %v2676
  %v2693 = vunpack.c.l.b16 %v2677
  %v2694 = vunpack.c.l.b16 %v2678
  %v2695 = vunpack.c.l.b16 %v2679
  %v2696 = vunpack.c.l.b16 %v2680
  %v2697 = vunpack.c.l.b16 %v2681
  %v2698 = vrot.slane %v2682, 3
  %v2699 = vrot.slane %v2684, 2
  %v2700 = vsel %vm176, %v2699, %v2698
  %v2701 = vrot.slane %v2686, 1
  %v2702 = vsel %vm179, %v2701, %v2700
  %v2703 = vsel %vm182, %v2688, %v2702
  %v2704 = vrot.slane %v2690, 7
  %v2705 = vsel %vm185, %v2704, %v2703
  %v2706 = vrot.slane %v2692, 6
  %v2707 = vsel %vm188, %v2706, %v2705
  %v2708 = vrot.slane %v2694, 5
  %v2709 = vsel %vm191, %v2708, %v2707
  %v2710 = vrot.slane %v2696, 4
  %v2711 = vsel %vm194, %v2710, %v2709
  %v2712 = vrot.slane %v2683, 3
  %v2713 = vrot.slane %v2685, 2
  %v2714 = vsel %vm176, %v2713, %v2712
  %v2715 = vrot.slane %v2687, 1
  %v2716 = vsel %vm179, %v2715, %v2714
  %v2717 = vsel %vm182, %v2689, %v2716
  %v2718 = vrot.slane %v2691, 7
  %v2719 = vsel %vm185, %v2718, %v2717
  %v2720 = vrot.slane %v2693, 6
  %v2721 = vsel %vm188, %v2720, %v2719
  %v2722 = vrot.slane %v2695, 5
  %v2723 = vsel %vm191, %v2722, %v2721
  %v2724 = vrot.slane %v2697, 4
  %v2725 = vsel %vm194, %v2724, %v2723
  %v2726 = vpack.c.b16 %v2711, %v2711
  %v2727 = vpack.c.b16 %v2725, %v2725
  %v2730 = vsel %vm493, %v2727, 0
  %2732 = vmatprep.subr.bf16.mxu0 %v382
  %2733 = vmatpush1.bf16.msra.mxu0 %v381
  %2734 = vmatprep.subr.bf16.mxu0 %v386
  %2735 = vmatpush1.bf16.msra.mxu0 %v385
  %2736 = vmatprep.subr.bf16.mxu0 %v390
  %2737 = vmatpush1.bf16.msra.mxu0 %v389
  %2738 = vmatprep.subr.bf16.mxu0 %v394
  %2739 = vmatpush1.bf16.msra.mxu0 %v393
  %2740 = vmatprep.subr.bf16.mxu0 %v398
  %2741 = vmatpush1.bf16.msra.mxu0 %v397
  %2742 = vmatprep.subr.bf16.mxu0 %v402
  %2743 = vmatpush1.bf16.msra.mxu0 %v401
  %2744 = vmatprep.subr.bf16.mxu0 %v406
  %2745 = vmatpush1.bf16.msra.mxu0 %v405
  %2746 = vmatprep.subr.bf16.mxu0 %v410
  %2747 = vmatpush1.bf16.msra.mxu0 %v409
  %2748 = vmatprep.subr.bf16.mxu0 %v414
  %2749 = vmatpush1.bf16.msra.mxu0 %v413
  %2750 = vmatprep.subr.bf16.mxu0 %v418
  %2751 = vmatpush1.bf16.msra.mxu0 %v417
  %2752 = vmatprep.subr.bf16.mxu0 %v422
  %2753 = vmatpush1.bf16.msra.mxu0 %v421
  %2754 = vmatprep.subr.bf16.mxu0 %v426
  %2755 = vmatpush1.bf16.msra.mxu0 %v425
  %2756 = vmatprep.subr.bf16.mxu0 %v430
  %2757 = vmatpush1.bf16.msra.mxu0 %v429
  %2758 = vmatprep.subr.bf16.mxu0 %v434
  %2759 = vmatpush1.bf16.msra.mxu0 %v433
  %2760 = vmatprep.subr.bf16.mxu0 0
  %2761 = vmatpush1.bf16.msra.mxu0 0
  %2762 = vmatprep.subr.bf16.mxu0 0
  %2763 = vmatpush1.bf16.msra.mxu0 0
  %2764 = vmatprep.mubr.bf16.mxu0 %v2730
  %2765 = vmatmul.mubr.bf16.gmra.mrb[0].mxu0 %v2726
  %v2766 = vpop.f32.mrb[0].mxu0
  %v2767 = vadd.f32 %v102, %v2766
  %v2768 = vpop.f32.mrb[0].mxu0
  %v2769 = vadd.f32 %v106, %v2768
  %v2770 = vpop.f32.mrb[0].mxu0
  %v2771 = vpop.f32.mrb[0].mxu0
  %2772 = vdwg.mxu0
  %2773 = vmatprep.subr.bf16.mxu0 %v384
  %2774 = vmatpush1.bf16.msra.mxu0 %v383
  %2775 = vmatprep.subr.bf16.mxu0 %v388
  %2776 = vmatpush1.bf16.msra.mxu0 %v387
  %2777 = vmatprep.subr.bf16.mxu0 %v392
  %2778 = vmatpush1.bf16.msra.mxu0 %v391
  %2779 = vmatprep.subr.bf16.mxu0 %v396
  %2780 = vmatpush1.bf16.msra.mxu0 %v395
  %2781 = vmatprep.subr.bf16.mxu0 %v400
  %2782 = vmatpush1.bf16.msra.mxu0 %v399
  %2783 = vmatprep.subr.bf16.mxu0 %v404
  %2784 = vmatpush1.bf16.msra.mxu0 %v403
  %2785 = vmatprep.subr.bf16.mxu0 %v408
  %2786 = vmatpush1.bf16.msra.mxu0 %v407
  %2787 = vmatprep.subr.bf16.mxu0 %v412
  %2788 = vmatpush1.bf16.msra.mxu0 %v411
  %2789 = vmatprep.subr.bf16.mxu0 %v416
  %2790 = vmatpush1.bf16.msra.mxu0 %v415
  %2791 = vmatprep.subr.bf16.mxu0 %v420
  %2792 = vmatpush1.bf16.msra.mxu0 %v419
  %2793 = vmatprep.subr.bf16.mxu0 %v424
  %2794 = vmatpush1.bf16.msra.mxu0 %v423
  %2795 = vmatprep.subr.bf16.mxu0 %v428
  %2796 = vmatpush1.bf16.msra.mxu0 %v427
  %2797 = vmatprep.subr.bf16.mxu0 %v432
  %2798 = vmatpush1.bf16.msra.mxu0 %v431
  %2799 = vmatprep.subr.bf16.mxu0 %v436
  %2800 = vmatpush1.bf16.msra.mxu0 %v435
  %2801 = vmatprep.subr.bf16.mxu0 0
  %2802 = vmatpush1.bf16.msra.mxu0 0
  %2803 = vmatprep.subr.bf16.mxu0 0
  %2804 = vmatpush1.bf16.msra.mxu0 0
  %2805 = vmatprep.mubr.bf16.mxu0 %v2730
  %2806 = vmatmul.mubr.bf16.gmra.mrb[0].mxu0 %v2726
  %v2807 = vpop.f32.mrb[0].mxu0
  %v2808 = vadd.f32 %v110, %v2807
  %v2809 = vpop.f32.mrb[0].mxu0
  %v2810 = vadd.f32 %v114, %v2809
  %v2811 = vpop.f32.mrb[0].mxu0
  %v2812 = vpop.f32.mrb[0].mxu0
  %2813 = vdwg.mxu0
  %v2814 = vmax.f32 %v2767, 0.0
  %v2815 = vmax.f32 %v2769, 0.0
  %v2816 = vmax.f32 %v2808, 0.0
  %v2817 = vmax.f32 %v2810, 0.0
  %v2818 = vpack.c.bf16 %v2814, %v2814
  %v2819 = vpack.c.bf16 %v2815, %v2815
  %v2820 = vpack.c.bf16 %v2816, %v2816
  %v2821 = vpack.c.bf16 %v2817, %v2817
  %v2826 = vunpack.c.l.b16 %v2818
  %v2827 = vunpack.c.l.b16 %v2819
  %v2828 = vunpack.c.l.b16 %v2820
  %v2829 = vunpack.c.l.b16 %v2821
  %v2830 = vpack.c.b16 %v2827, %v2826
  %v2831 = vpack.c.b16 %v2829, %v2828
  %s2834 = scalar_lea.vmem [#allocation2], 176
  %2835 = vst [vmem:[%s2834] sm:$0xff] %v2830
  %2836 = vst.msk [vmem:[%s2834 + $0x8] sm:$0xff] %vm602, %v2831
  %v2837 = vld [vmem:[%s0 + $0x8] sm:$0x44]
  %v2838 = vld [vmem:[%s0 + $0x18] sm:$0x44]
  %v2839 = vld [vmem:[%s0 + $0x28] sm:$0x44]
  %v2840 = vld [vmem:[%s0 + $0x38] sm:$0x44]
  %v2841 = vld [vmem:[%s0 + $0x48] sm:$0x44]
  %v2842 = vld [vmem:[%s0 + $0x58] sm:$0x44]
  %v2843 = vld [vmem:[%s0 + $0x68] sm:$0x44]
  %v2844 = vld [vmem:[%s0 + $0x78] sm:$0x44]
  %v2853 = vunpack.c.l.b16 %v2837
  %v2854 = vunpack.c.h.b16 %v2837
  %v2855 = vunpack.c.l.b16 %v2838
  %v2856 = vunpack.c.h.b16 %v2838
  %v2857 = vunpack.c.l.b16 %v2839
  %v2858 = vunpack.c.h.b16 %v2839
  %v2859 = vunpack.c.l.b16 %v2840
  %v2860 = vunpack.c.h.b16 %v2840
  %v2861 = vunpack.c.l.b16 %v2841
  %v2862 = vunpack.c.h.b16 %v2841
  %v2863 = vunpack.c.l.b16 %v2842
  %v2864 = vunpack.c.h.b16 %v2842
  %v2865 = vunpack.c.l.b16 %v2843
  %v2866 = vunpack.c.h.b16 %v2843
  %v2867 = vunpack.c.l.b16 %v2844
  %v2868 = vunpack.c.h.b16 %v2844
  %v2869 = vpack.c.b16 %v2853, %v2853
  %v2870 = vpack.c.b16 %v2854, %v2854
  %v2871 = vpack.c.b16 %v2855, %v2855
  %v2872 = vpack.c.b16 %v2856, %v2856
  %v2873 = vpack.c.b16 %v2857, %v2857
  %v2874 = vpack.c.b16 %v2858, %v2858
  %v2875 = vpack.c.b16 %v2859, %v2859
  %v2876 = vpack.c.b16 %v2860, %v2860
  %v2877 = vpack.c.b16 %v2861, %v2861
  %v2878 = vpack.c.b16 %v2862, %v2862
  %v2879 = vpack.c.b16 %v2863, %v2863
  %v2880 = vpack.c.b16 %v2864, %v2864
  %v2881 = vpack.c.b16 %v2865, %v2865
  %v2882 = vpack.c.b16 %v2866, %v2866
  %v2883 = vpack.c.b16 %v2867, %v2867
  %v2884 = vpack.c.b16 %v2868, %v2868
  %v2885 = vunpack.c.l.b16 %v2869
  %v2886 = vunpack.c.l.b16 %v2870
  %v2887 = vunpack.c.l.b16 %v2871
  %v2888 = vunpack.c.l.b16 %v2872
  %v2889 = vunpack.c.l.b16 %v2873
  %v2890 = vunpack.c.l.b16 %v2874
  %v2891 = vunpack.c.l.b16 %v2875
  %v2892 = vunpack.c.l.b16 %v2876
  %v2893 = vunpack.c.l.b16 %v2877
  %v2894 = vunpack.c.l.b16 %v2878
  %v2895 = vunpack.c.l.b16 %v2879
  %v2896 = vunpack.c.l.b16 %v2880
  %v2897 = vunpack.c.l.b16 %v2881
  %v2898 = vunpack.c.l.b16 %v2882
  %v2899 = vunpack.c.l.b16 %v2883
  %v2900 = vunpack.c.l.b16 %v2884
  %v2901 = vrot.slane %v2885, 4
  %v2902 = vrot.slane %v2887, 3
  %v2903 = vsel %vm176, %v2902, %v2901
  %v2904 = vrot.slane %v2889, 2
  %v2905 = vsel %vm179, %v2904, %v2903
  %v2906 = vrot.slane %v2891, 1
  %v2907 = vsel %vm182, %v2906, %v2905
  %v2908 = vsel %vm185, %v2893, %v2907
  %v2909 = vrot.slane %v2895, 7
  %v2910 = vsel %vm188, %v2909, %v2908
  %v2911 = vrot.slane %v2897, 6
  %v2912 = vsel %vm191, %v2911, %v2910
  %v2913 = vrot.slane %v2899, 5
  %v2914 = vsel %vm194, %v2913, %v2912
  %v2915 = vrot.slane %v2886, 4
  %v2916 = vrot.slane %v2888, 3
  %v2917 = vsel %vm176, %v2916, %v2915
  %v2918 = vrot.slane %v2890, 2
  %v2919 = vsel %vm179, %v2918, %v2917
  %v2920 = vrot.slane %v2892, 1
  %v2921 = vsel %vm182, %v2920, %v2919
  %v2922 = vsel %vm185, %v2894, %v2921
  %v2923 = vrot.slane %v2896, 7
  %v2924 = vsel %vm188, %v2923, %v2922
  %v2925 = vrot.slane %v2898, 6
  %v2926 = vsel %vm191, %v2925, %v2924
  %v2927 = vrot.slane %v2900, 5
  %v2928 = vsel %vm194, %v2927, %v2926
  %v2929 = vpack.c.b16 %v2914, %v2914
  %v2930 = vpack.c.b16 %v2928, %v2928
  %v2933 = vsel %vm493, %v2930, 0
  %2935 = vmatprep.subr.bf16.mxu0 %v382
  %2936 = vmatpush1.bf16.msra.mxu0 %v381
  %2937 = vmatprep.subr.bf16.mxu0 %v386
  %2938 = vmatpush1.bf16.msra.mxu0 %v385
  %2939 = vmatprep.subr.bf16.mxu0 %v390
  %2940 = vmatpush1.bf16.msra.mxu0 %v389
  %2941 = vmatprep.subr.bf16.mxu0 %v394
  %2942 = vmatpush1.bf16.msra.mxu0 %v393
  %2943 = vmatprep.subr.bf16.mxu0 %v398
  %2944 = vmatpush1.bf16.msra.mxu0 %v397
  %2945 = vmatprep.subr.bf16.mxu0 %v402
  %2946 = vmatpush1.bf16.msra.mxu0 %v401
  %2947 = vmatprep.subr.bf16.mxu0 %v406
  %2948 = vmatpush1.bf16.msra.mxu0 %v405
  %2949 = vmatprep.subr.bf16.mxu0 %v410
  %2950 = vmatpush1.bf16.msra.mxu0 %v409
  %2951 = vmatprep.subr.bf16.mxu0 %v414
  %2952 = vmatpush1.bf16.msra.mxu0 %v413
  %2953 = vmatprep.subr.bf16.mxu0 %v418
  %2954 = vmatpush1.bf16.msra.mxu0 %v417
  %2955 = vmatprep.subr.bf16.mxu0 %v422
  %2956 = vmatpush1.bf16.msra.mxu0 %v421
  %2957 = vmatprep.subr.bf16.mxu0 %v426
  %2958 = vmatpush1.bf16.msra.mxu0 %v425
  %2959 = vmatprep.subr.bf16.mxu0 %v430
  %2960 = vmatpush1.bf16.msra.mxu0 %v429
  %2961 = vmatprep.subr.bf16.mxu0 %v434
  %2962 = vmatpush1.bf16.msra.mxu0 %v433
  %2963 = vmatprep.subr.bf16.mxu0 0
  %2964 = vmatpush1.bf16.msra.mxu0 0
  %2965 = vmatprep.subr.bf16.mxu0 0
  %2966 = vmatpush1.bf16.msra.mxu0 0
  %2967 = vmatprep.mubr.bf16.mxu0 %v2933
  %2968 = vmatmul.mubr.bf16.gmra.mrb[0].mxu0 %v2929
  %v2969 = vpop.f32.mrb[0].mxu0
  %v2970 = vadd.f32 %v102, %v2969
  %v2971 = vpop.f32.mrb[0].mxu0
  %v2972 = vadd.f32 %v106, %v2971
  %v2973 = vpop.f32.mrb[0].mxu0
  %v2974 = vpop.f32.mrb[0].mxu0
  %2975 = vdwg.mxu0
  %2976 = vmatprep.subr.bf16.mxu0 %v384
  %2977 = vmatpush1.bf16.msra.mxu0 %v383
  %2978 = vmatprep.subr.bf16.mxu0 %v388
  %2979 = vmatpush1.bf16.msra.mxu0 %v387
  %2980 = vmatprep.subr.bf16.mxu0 %v392
  %2981 = vmatpush1.bf16.msra.mxu0 %v391
  %2982 = vmatprep.subr.bf16.mxu0 %v396
  %2983 = vmatpush1.bf16.msra.mxu0 %v395
  %2984 = vmatprep.subr.bf16.mxu0 %v400
  %2985 = vmatpush1.bf16.msra.mxu0 %v399
  %2986 = vmatprep.subr.bf16.mxu0 %v404
  %2987 = vmatpush1.bf16.msra.mxu0 %v403
  %2988 = vmatprep.subr.bf16.mxu0 %v408
  %2989 = vmatpush1.bf16.msra.mxu0 %v407
  %2990 = vmatprep.subr.bf16.mxu0 %v412
  %2991 = vmatpush1.bf16.msra.mxu0 %v411
  %2992 = vmatprep.subr.bf16.mxu0 %v416
  %2993 = vmatpush1.bf16.msra.mxu0 %v415
  %2994 = vmatprep.subr.bf16.mxu0 %v420
  %2995 = vmatpush1.bf16.msra.mxu0 %v419
  %2996 = vmatprep.subr.bf16.mxu0 %v424
  %2997 = vmatpush1.bf16.msra.mxu0 %v423
  %2998 = vmatprep.subr.bf16.mxu0 %v428
  %2999 = vmatpush1.bf16.msra.mxu0 %v427
  %3000 = vmatprep.subr.bf16.mxu0 %v432
  %3001 = vmatpush1.bf16.msra.mxu0 %v431
  %3002 = vmatprep.subr.bf16.mxu0 %v436
  %3003 = vmatpush1.bf16.msra.mxu0 %v435
  %3004 = vmatprep.subr.bf16.mxu0 0
  %3005 = vmatpush1.bf16.msra.mxu0 0
  %3006 = vmatprep.subr.bf16.mxu0 0
  %3007 = vmatpush1.bf16.msra.mxu0 0
  %3008 = vmatprep.mubr.bf16.mxu0 %v2933
  %3009 = vmatmul.mubr.bf16.gmra.mrb[0].mxu0 %v2929
  %v3010 = vpop.f32.mrb[0].mxu0
  %v3011 = vadd.f32 %v110, %v3010
  %v3012 = vpop.f32.mrb[0].mxu0
  %v3013 = vadd.f32 %v114, %v3012
  %v3014 = vpop.f32.mrb[0].mxu0
  %v3015 = vpop.f32.mrb[0].mxu0
  %3016 = vdwg.mxu0
  %v3017 = vmax.f32 %v2970, 0.0
  %v3018 = vmax.f32 %v2972, 0.0
  %v3019 = vmax.f32 %v3011, 0.0
  %v3020 = vmax.f32 %v3013, 0.0
  %v3021 = vpack.c.bf16 %v3017, %v3017
  %v3022 = vpack.c.bf16 %v3018, %v3018
  %v3023 = vpack.c.bf16 %v3019, %v3019
  %v3024 = vpack.c.bf16 %v3020, %v3020
  %v3029 = vunpack.c.l.b16 %v3021
  %v3030 = vunpack.c.l.b16 %v3022
  %v3031 = vunpack.c.l.b16 %v3023
  %v3032 = vunpack.c.l.b16 %v3024
  %v3033 = vpack.c.b16 %v3030, %v3029
  %v3034 = vpack.c.b16 %v3032, %v3031
  %s3037 = scalar_lea.vmem [#allocation2], 192
  %3038 = vst [vmem:[%s3037] sm:$0xff] %v3033
  %3039 = vst.msk [vmem:[%s3037 + $0x8] sm:$0xff] %vm602, %v3034
  %v3040 = vld [vmem:[%s0 + $0x8] sm:$0x44]
  %v3041 = vld [vmem:[%s0 + $0x18] sm:$0x44]
  %v3042 = vld [vmem:[%s0 + $0x28] sm:$0x44]
  %v3043 = vld [vmem:[%s0 + $0x38] sm:$0x44]
  %v3044 = vld [vmem:[%s0 + $0x48] sm:$0x44]
  %v3045 = vld [vmem:[%s0 + $0x58] sm:$0x44]
  %v3046 = vld [vmem:[%s0 + $0x68] sm:$0x44]
  %v3047 = vld [vmem:[%s0 + $0x78] sm:$0x44]
  %v3056 = vunpack.c.l.b16 %v3040
  %v3057 = vunpack.c.h.b16 %v3040
  %v3058 = vunpack.c.l.b16 %v3041
  %v3059 = vunpack.c.h.b16 %v3041
  %v3060 = vunpack.c.l.b16 %v3042
  %v3061 = vunpack.c.h.b16 %v3042
  %v3062 = vunpack.c.l.b16 %v3043
  %v3063 = vunpack.c.h.b16 %v3043
  %v3064 = vunpack.c.l.b16 %v3044
  %v3065 = vunpack.c.h.b16 %v3044
  %v3066 = vunpack.c.l.b16 %v3045
  %v3067 = vunpack.c.h.b16 %v3045
  %v3068 = vunpack.c.l.b16 %v3046
  %v3069 = vunpack.c.h.b16 %v3046
  %v3070 = vunpack.c.l.b16 %v3047
  %v3071 = vunpack.c.h.b16 %v3047
  %v3072 = vpack.c.b16 %v3056, %v3056
  %v3073 = vpack.c.b16 %v3057, %v3057
  %v3074 = vpack.c.b16 %v3058, %v3058
  %v3075 = vpack.c.b16 %v3059, %v3059
  %v3076 = vpack.c.b16 %v3060, %v3060
  %v3077 = vpack.c.b16 %v3061, %v3061
  %v3078 = vpack.c.b16 %v3062, %v3062
  %v3079 = vpack.c.b16 %v3063, %v3063
  %v3080 = vpack.c.b16 %v3064, %v3064
  %v3081 = vpack.c.b16 %v3065, %v3065
  %v3082 = vpack.c.b16 %v3066, %v3066
  %v3083 = vpack.c.b16 %v3067, %v3067
  %v3084 = vpack.c.b16 %v3068, %v3068
  %v3085 = vpack.c.b16 %v3069, %v3069
  %v3086 = vpack.c.b16 %v3070, %v3070
  %v3087 = vpack.c.b16 %v3071, %v3071
  %v3088 = vunpack.c.l.b16 %v3072
  %v3089 = vunpack.c.l.b16 %v3073
  %v3090 = vunpack.c.l.b16 %v3074
  %v3091 = vunpack.c.l.b16 %v3075
  %v3092 = vunpack.c.l.b16 %v3076
  %v3093 = vunpack.c.l.b16 %v3077
  %v3094 = vunpack.c.l.b16 %v3078
  %v3095 = vunpack.c.l.b16 %v3079
  %v3096 = vunpack.c.l.b16 %v3080
  %v3097 = vunpack.c.l.b16 %v3081
  %v3098 = vunpack.c.l.b16 %v3082
  %v3099 = vunpack.c.l.b16 %v3083
  %v3100 = vunpack.c.l.b16 %v3084
  %v3101 = vunpack.c.l.b16 %v3085
  %v3102 = vunpack.c.l.b16 %v3086
  %v3103 = vunpack.c.l.b16 %v3087
  %v3104 = vrot.slane %v3088, 5
  %v3105 = vrot.slane %v3090, 4
  %v3106 = vsel %vm176, %v3105, %v3104
  %v3107 = vrot.slane %v3092, 3
  %v3108 = vsel %vm179, %v3107, %v3106
  %v3109 = vrot.slane %v3094, 2
  %v3110 = vsel %vm182, %v3109, %v3108
  %v3111 = vrot.slane %v3096, 1
  %v3112 = vsel %vm185, %v3111, %v3110
  %v3113 = vsel %vm188, %v3098, %v3112
  %v3114 = vrot.slane %v3100, 7
  %v3115 = vsel %vm191, %v3114, %v3113
  %v3116 = vrot.slane %v3102, 6
  %v3117 = vsel %vm194, %v3116, %v3115
  %v3118 = vrot.slane %v3089, 5
  %v3119 = vrot.slane %v3091, 4
  %v3120 = vsel %vm176, %v3119, %v3118
  %v3121 = vrot.slane %v3093, 3
  %v3122 = vsel %vm179, %v3121, %v3120
  %v3123 = vrot.slane %v3095, 2
  %v3124 = vsel %vm182, %v3123, %v3122
  %v3125 = vrot.slane %v3097, 1
  %v3126 = vsel %vm185, %v3125, %v3124
  %v3127 = vsel %vm188, %v3099, %v3126
  %v3128 = vrot.slane %v3101, 7
  %v3129 = vsel %vm191, %v3128, %v3127
  %v3130 = vrot.slane %v3103, 6
  %v3131 = vsel %vm194, %v3130, %v3129
  %v3132 = vpack.c.b16 %v3117, %v3117
  %v3133 = vpack.c.b16 %v3131, %v3131
  %v3136 = vsel %vm493, %v3133, 0
  %3138 = vmatprep.subr.bf16.mxu0 %v382
  %3139 = vmatpush1.bf16.msra.mxu0 %v381
  %3140 = vmatprep.subr.bf16.mxu0 %v386
  %3141 = vmatpush1.bf16.msra.mxu0 %v385
  %3142 = vmatprep.subr.bf16.mxu0 %v390
  %3143 = vmatpush1.bf16.msra.mxu0 %v389
  %3144 = vmatprep.subr.bf16.mxu0 %v394
  %3145 = vmatpush1.bf16.msra.mxu0 %v393
  %3146 = vmatprep.subr.bf16.mxu0 %v398
  %3147 = vmatpush1.bf16.msra.mxu0 %v397
  %3148 = vmatprep.subr.bf16.mxu0 %v402
  %3149 = vmatpush1.bf16.msra.mxu0 %v401
  %3150 = vmatprep.subr.bf16.mxu0 %v406
  %3151 = vmatpush1.bf16.msra.mxu0 %v405
  %3152 = vmatprep.subr.bf16.mxu0 %v410
  %3153 = vmatpush1.bf16.msra.mxu0 %v409
  %3154 = vmatprep.subr.bf16.mxu0 %v414
  %3155 = vmatpush1.bf16.msra.mxu0 %v413
  %3156 = vmatprep.subr.bf16.mxu0 %v418
  %3157 = vmatpush1.bf16.msra.mxu0 %v417
  %3158 = vmatprep.subr.bf16.mxu0 %v422
  %3159 = vmatpush1.bf16.msra.mxu0 %v421
  %3160 = vmatprep.subr.bf16.mxu0 %v426
  %3161 = vmatpush1.bf16.msra.mxu0 %v425
  %3162 = vmatprep.subr.bf16.mxu0 %v430
  %3163 = vmatpush1.bf16.msra.mxu0 %v429
  %3164 = vmatprep.subr.bf16.mxu0 %v434
  %3165 = vmatpush1.bf16.msra.mxu0 %v433
  %3166 = vmatprep.subr.bf16.mxu0 0
  %3167 = vmatpush1.bf16.msra.mxu0 0
  %3168 = vmatprep.subr.bf16.mxu0 0
  %3169 = vmatpush1.bf16.msra.mxu0 0
  %3170 = vmatprep.mubr.bf16.mxu0 %v3136
  %3171 = vmatmul.mubr.bf16.gmra.mrb[0].mxu0 %v3132
  %v3172 = vpop.f32.mrb[0].mxu0
  %v3173 = vadd.f32 %v102, %v3172
  %v3174 = vpop.f32.mrb[0].mxu0
  %v3175 = vadd.f32 %v106, %v3174
  %v3176 = vpop.f32.mrb[0].mxu0
  %v3177 = vpop.f32.mrb[0].mxu0
  %3178 = vdwg.mxu0
  %3179 = vmatprep.subr.bf16.mxu0 %v384
  %3180 = vmatpush1.bf16.msra.mxu0 %v383
  %3181 = vmatprep.subr.bf16.mxu0 %v388
  %3182 = vmatpush1.bf16.msra.mxu0 %v387
  %3183 = vmatprep.subr.bf16.mxu0 %v392
  %3184 = vmatpush1.bf16.msra.mxu0 %v391
  %3185 = vmatprep.subr.bf16.mxu0 %v396
  %3186 = vmatpush1.bf16.msra.mxu0 %v395
  %3187 = vmatprep.subr.bf16.mxu0 %v400
  %3188 = vmatpush1.bf16.msra.mxu0 %v399
  %3189 = vmatprep.subr.bf16.mxu0 %v404
  %3190 = vmatpush1.bf16.msra.mxu0 %v403
  %3191 = vmatprep.subr.bf16.mxu0 %v408
  %3192 = vmatpush1.bf16.msra.mxu0 %v407
  %3193 = vmatprep.subr.bf16.mxu0 %v412
  %3194 = vmatpush1.bf16.msra.mxu0 %v411
  %3195 = vmatprep.subr.bf16.mxu0 %v416
  %3196 = vmatpush1.bf16.msra.mxu0 %v415
  %3197 = vmatprep.subr.bf16.mxu0 %v420
  %3198 = vmatpush1.bf16.msra.mxu0 %v419
  %3199 = vmatprep.subr.bf16.mxu0 %v424
  %3200 = vmatpush1.bf16.msra.mxu0 %v423
  %3201 = vmatprep.subr.bf16.mxu0 %v428
  %3202 = vmatpush1.bf16.msra.mxu0 %v427
  %3203 = vmatprep.subr.bf16.mxu0 %v432
  %3204 = vmatpush1.bf16.msra.mxu0 %v431
  %3205 = vmatprep.subr.bf16.mxu0 %v436
  %3206 = vmatpush1.bf16.msra.mxu0 %v435
  %3207 = vmatprep.subr.bf16.mxu0 0
  %3208 = vmatpush1.bf16.msra.mxu0 0
  %3209 = vmatprep.subr.bf16.mxu0 0
  %3210 = vmatpush1.bf16.msra.mxu0 0
  %3211 = vmatprep.mubr.bf16.mxu0 %v3136
  %3212 = vmatmul.mubr.bf16.gmra.mrb[0].mxu0 %v3132
  %v3213 = vpop.f32.mrb[0].mxu0
  %v3214 = vadd.f32 %v110, %v3213
  %v3215 = vpop.f32.mrb[0].mxu0
  %v3216 = vadd.f32 %v114, %v3215
  %v3217 = vpop.f32.mrb[0].mxu0
  %v3218 = vpop.f32.mrb[0].mxu0
  %3219 = vdwg.mxu0
  %v3220 = vmax.f32 %v3173, 0.0
  %v3221 = vmax.f32 %v3175, 0.0
  %v3222 = vmax.f32 %v3214, 0.0
  %v3223 = vmax.f32 %v3216, 0.0
  %v3224 = vpack.c.bf16 %v3220, %v3220
  %v3225 = vpack.c.bf16 %v3221, %v3221
  %v3226 = vpack.c.bf16 %v3222, %v3222
  %v3227 = vpack.c.bf16 %v3223, %v3223
  %v3232 = vunpack.c.l.b16 %v3224
  %v3233 = vunpack.c.l.b16 %v3225
  %v3234 = vunpack.c.l.b16 %v3226
  %v3235 = vunpack.c.l.b16 %v3227
  %v3236 = vpack.c.b16 %v3233, %v3232
  %v3237 = vpack.c.b16 %v3235, %v3234
  %s3240 = scalar_lea.vmem [#allocation2], 208
  %3241 = vst [vmem:[%s3240] sm:$0xff] %v3236
  %3242 = vst.msk [vmem:[%s3240 + $0x8] sm:$0xff] %vm602, %v3237
  %v3243 = vld [vmem:[%s3] sm:$0xf]
  %v3244 = vld [vmem:[%s3 + $0x4] sm:$0xf]
  %v3245 = vld [vmem:[%s3 + $0x8] sm:$0xf]
  %v3246 = vld [vmem:[%s3 + $0xc] sm:$0xf]
  %v3247 = vld [vmem:[%s3 + $0x10] sm:$0xf]
  %v3248 = vld [vmem:[%s3 + $0x14] sm:$0xf]
  %v3249 = vld [vmem:[%s3 + $0x18] sm:$0xf]
  %v3250 = vld [vmem:[%s3 + $0x1c] sm:$0xf]
  %v3251 = vld [vmem:[%s3 + $0x20] sm:$0xf]
  %v3252 = vld [vmem:[%s3 + $0x24] sm:$0xf]
  %v3253 = vld [vmem:[%s3 + $0x28] sm:$0xf]
  %v3254 = vld [vmem:[%s3 + $0x2c] sm:$0xf]
  %v3255 = vld [vmem:[%s3 + $0x30] sm:$0xf]
  %v3256 = vld [vmem:[%s3 + $0x34] sm:$0xf]
  %v3257 = vld [vmem:[%s3 + $0x38] sm:$0xf]
  %v3258 = vld [vmem:[%s3 + $0x3c] sm:$0xf]
  %v3259 = vld [vmem:[%s3 + $0x40] sm:$0xf]
  %v3260 = vld [vmem:[%s3 + $0x44] sm:$0xf]
  %v3261 = vld [vmem:[%s3 + $0x48] sm:$0xf]
  %v3262 = vld [vmem:[%s3 + $0x4c] sm:$0xf]
  %v3263 = vld [vmem:[%s3 + $0x50] sm:$0xf]
  %v3264 = vld [vmem:[%s3 + $0x54] sm:$0xf]
  %v3265 = vld [vmem:[%s3 + $0x58] sm:$0xf]
  %v3266 = vld [vmem:[%s3 + $0x5c] sm:$0xf]
  %v3267 = vld [vmem:[%s3 + $0x60] sm:$0xf]
  %v3268 = vld [vmem:[%s3 + $0x64] sm:$0xf]
  %v3269 = vld [vmem:[%s3 + $0x68] sm:$0xf]
  %v3270 = vld [vmem:[%s3 + $0x6c] sm:$0xf]
  %v3271 = vld [vmem:[%s3 + $0x70] sm:$0xf]
  %v3272 = vld [vmem:[%s3 + $0x74] sm:$0xf]
  %v3273 = vld [vmem:[%s3 + $0x78] sm:$0xf]
  %v3274 = vld [vmem:[%s3 + $0x7c] sm:$0xf]
  %v3275 = vld [vmem:[%s3 + $0x80] sm:$0xf]
  %v3276 = vld [vmem:[%s3 + $0x84] sm:$0xf]
  %v3277 = vld [vmem:[%s3 + $0x88] sm:$0xf]
  %v3278 = vld [vmem:[%s3 + $0x8c] sm:$0xf]
  %v3279 = vld [vmem:[%s4] sm:$0x1]
  %v3280 = vld [vmem:[#allocation2] sm:$0xf]
  %v3282 = vunpack.c.l.b16 %v3280
  %v3283 = vpack.c.b16 %v3282, %v3282
  %3284 = vrot.lane.b32.xlu0 %v3283, 32
  %v3285 = vpop.permute.xlu0 %3284
  %vm3286 = vcmask 261120
  %v3289 = vsel %vm3286, 0, %v3285
  %v3290 = vld [vmem:[%s804] sm:$0xf]
  %v3292 = vunpack.c.l.b16 %v3290
  %v3293 = vpack.c.b16 %v3292, %v3292
  %3294 = vrot.lane.b32.xlu0 %v3293, 32
  %v3295 = vpop.permute.xlu0 %3294
  %v3297 = vsel %vm3286, 0, %v3295
  %3299 = vrot.lane.b32.xlu0 %v3289, 96
  %v3300 = vpop.permute.xlu0 %3299
  %3302 = vrot.lane.b32.xlu0 %v3297, 64
  %v3303 = vpop.permute.xlu0 %3302
  %v3305 = vsel %vm493, 0, %v3300
  %vm3307 = vcmask 523264
  %v3309 = vsel %vm3307, %v3300, %v3303
  %v3312 = vlaneseq
  %v3313 = vshrl.u32 %v3312, 7
  %v3314 = vsub.s32 0, %v3313
  %v3315 = vrot.slane %v3279, %v3314
  %v3353 = vunpack.c.l.b16 %v3243
  %v3354 = vunpack.c.l.b16 %v3244
  %v3355 = vunpack.c.l.b16 %v3245
  %v3356 = vunpack.c.l.b16 %v3246
  %v3357 = vunpack.c.l.b16 %v3247
  %v3358 = vunpack.c.l.b16 %v3248
  %v3359 = vunpack.c.l.b16 %v3249
  %v3360 = vunpack.c.l.b16 %v3250
  %v3361 = vunpack.c.l.b16 %v3251
  %v3362 = vunpack.c.l.b16 %v3252
  %v3363 = vunpack.c.l.b16 %v3253
  %v3364 = vunpack.c.l.b16 %v3254
  %v3365 = vunpack.c.l.b16 %v3255
  %v3366 = vunpack.c.l.b16 %v3256
  %v3367 = vunpack.c.l.b16 %v3257
  %v3368 = vunpack.c.l.b16 %v3258
  %v3369 = vunpack.c.l.b16 %v3259
  %v3370 = vunpack.c.l.b16 %v3260
  %v3371 = vunpack.c.l.b16 %v3261
  %v3372 = vunpack.c.l.b16 %v3262
  %v3373 = vunpack.c.l.b16 %v3263
  %v3374 = vunpack.c.l.b16 %v3264
  %v3375 = vunpack.c.l.b16 %v3265
  %v3376 = vunpack.c.l.b16 %v3266
  %v3377 = vunpack.c.l.b16 %v3267
  %v3378 = vunpack.c.l.b16 %v3268
  %v3379 = vunpack.c.l.b16 %v3269
  %v3380 = vunpack.c.l.b16 %v3270
  %v3381 = vunpack.c.l.b16 %v3271
  %v3382 = vunpack.c.l.b16 %v3272
  %v3383 = vunpack.c.l.b16 %v3273
  %v3384 = vunpack.c.l.b16 %v3274
  %v3385 = vunpack.c.l.b16 %v3275
  %v3386 = vunpack.c.l.b16 %v3276
  %v3387 = vunpack.c.l.b16 %v3277
  %v3388 = vunpack.c.l.b16 %v3278
  %v3389 = vpack.c.b16 %v3354, %v3353
  %v3390 = vpack.c.b16 %v3356, %v3355
  %v3391 = vpack.c.b16 %v3358, %v3357
  %v3392 = vpack.c.b16 %v3360, %v3359
  %v3393 = vpack.c.b16 %v3362, %v3361
  %v3394 = vpack.c.b16 %v3364, %v3363
  %v3395 = vpack.c.b16 %v3366, %v3365
  %v3396 = vpack.c.b16 %v3368, %v3367
  %v3397 = vpack.c.b16 %v3370, %v3369
  %v3398 = vpack.c.b16 %v3372, %v3371
  %v3399 = vpack.c.b16 %v3374, %v3373
  %v3400 = vpack.c.b16 %v3376, %v3375
  %v3401 = vpack.c.b16 %v3378, %v3377
  %v3402 = vpack.c.b16 %v3380, %v3379
  %v3403 = vpack.c.b16 %v3382, %v3381
  %v3404 = vpack.c.b16 %v3384, %v3383
  %v3405 = vpack.c.b16 %v3386, %v3385
  %v3406 = vpack.c.b16 %v3388, %v3387
  %v3425 = vsel %vm3286, %v3303, 0
  %3427 = vmatprep.subr.bf16.mxu0 0
  %3428 = vmatpush1.bf16.msra.mxu0 %v3389
  %3429 = vmatprep.subr.bf16.mxu0 0
  %3430 = vmatpush1.bf16.msra.mxu0 %v3390
  %3431 = vmatprep.subr.bf16.mxu0 0
  %3432 = vmatpush1.bf16.msra.mxu0 %v3391
  %3433 = vmatprep.subr.bf16.mxu0 0
  %3434 = vmatpush1.bf16.msra.mxu0 %v3392
  %3435 = vmatprep.subr.bf16.mxu0 0
  %3436 = vmatpush1.bf16.msra.mxu0 %v3393
  %3437 = vmatprep.subr.bf16.mxu0 0
  %3438 = vmatpush1.bf16.msra.mxu0 %v3394
  %3439 = vmatprep.subr.bf16.mxu0 0
  %3440 = vmatpush1.bf16.msra.mxu0 %v3395
  %3441 = vmatprep.subr.bf16.mxu0 0
  %3442 = vmatpush1.bf16.msra.mxu0 %v3396
  %3443 = vmatprep.subr.bf16.mxu0 0
  %3444 = vmatpush1.bf16.msra.mxu0 %v3397
  %3445 = vmatprep.subr.bf16.mxu0 0
  %3446 = vmatpush1.bf16.msra.mxu0 %v3398
  %3447 = vmatprep.subr.bf16.mxu0 0
  %3448 = vmatpush1.bf16.msra.mxu0 %v3399
  %3449 = vmatprep.subr.bf16.mxu0 0
  %3450 = vmatpush1.bf16.msra.mxu0 %v3400
  %3451 = vmatprep.subr.bf16.mxu0 0
  %3452 = vmatpush1.bf16.msra.mxu0 %v3401
  %3453 = vmatprep.subr.bf16.mxu0 0
  %3454 = vmatpush1.bf16.msra.mxu0 %v3402
  %3455 = vmatprep.subr.bf16.mxu0 0
  %3456 = vmatpush1.bf16.msra.mxu0 %v3403
  %3457 = vmatprep.subr.bf16.mxu0 0
  %3458 = vmatpush1.bf16.msra.mxu0 %v3404
  %3459 = vmatprep.mubr.bf16.mxu0 %v3309
  %3460 = vmatmul.mubr.bf16.gmra.mrb[0].mxu0 %v3305
  %v3461 = vpop.f32.mrb[0].mxu0
  %v3462 = vadd.f32 %v3315, %v3461
  %v3463 = vpop.f32.mrb[0].mxu0
  %v3464 = vpop.f32.mrb[0].mxu0
  %v3465 = vpop.f32.mrb[0].mxu0
  %3466 = vdwg.mxu0
  %3467 = vmatprep.subr.bf16.mxu0 0
  %3468 = vmatpush1.bf16.msra.mxu0 %v3405
  %3469 = vmatprep.subr.bf16.mxu0 0
  %3470 = vmatpush1.bf16.msra.mxu0 %v3406
  %3471 = vmatprep.subr.bf16.mxu0 0
  %3472 = vmatpush1.bf16.msra.mxu0 0
  %3473 = vmatprep.subr.bf16.mxu0 0
  %3474 = vmatpush1.bf16.msra.mxu0 0
  %3475 = vmatprep.subr.bf16.mxu0 0
  %3476 = vmatpush1.bf16.msra.mxu0 0
  %3477 = vmatprep.subr.bf16.mxu0 0
  %3478 = vmatpush1.bf16.msra.mxu0 0
  %3479 = vmatprep.subr.bf16.mxu0 0
  %3480 = vmatpush1.bf16.msra.mxu0 0
  %3481 = vmatprep.subr.bf16.mxu0 0
  %3482 = vmatpush1.bf16.msra.mxu0 0
  %3483 = vmatprep.subr.bf16.mxu0 0
  %3484 = vmatpush1.bf16.msra.mxu0 0
  %3485 = vmatprep.subr.bf16.mxu0 0
  %3486 = vmatpush1.bf16.msra.mxu0 0
  %3487 = vmatprep.subr.bf16.mxu0 0
  %3488 = vmatpush1.bf16.msra.mxu0 0
  %3489 = vmatprep.subr.bf16.mxu0 0
  %3490 = vmatpush1.bf16.msra.mxu0 0
  %3491 = vmatprep.subr.bf16.mxu0 0
  %3492 = vmatpush1.bf16.msra.mxu0 0
  %3493 = vmatprep.subr.bf16.mxu0 0
  %3494 = vmatpush1.bf16.msra.mxu0 0
  %3495 = vmatprep.subr.bf16.mxu0 0
  %3496 = vmatpush1.bf16.msra.mxu0 0
  %3497 = vmatprep.subr.bf16.mxu0 0
  %3498 = vmatpush1.bf16.msra.mxu0 0
  %3499 = vmatprep.mubr.bf16.mxu0 0
  %3500 = vmatmul.mubr.bf16.gmra.mrb[0].mxu0 %v3425
  %v3501 = vpop.f32.mrb[0].mxu0
  %v3502 = vadd.f32 %v3462, %v3501
  %v3503 = vpop.f32.mrb[0].mxu0
  %v3504 = vpop.f32.mrb[0].mxu0
  %v3505 = vpop.f32.mrb[0].mxu0
  %3506 = vdwg.mxu0
  %v3507 = vmax.f32 %v3502, 0.0
  %v3508 = vpack.c.bf16 %v3507, %v3507
  %vm3509 = vcmask 257024
  %3510 = vst.msk [vmem:[#allocation3] sm:$0xf] %vm3509, %v3508
  %v3511 = vld [vmem:[#allocation2] sm:$0xf]
  %v3512 = vld [vmem:[%s804] sm:$0xf]
  %v3514 = vunpack.c.l.b16 %v3511
  %v3515 = vpack.c.b16 %v3514, %v3514
  %3516 = vrot.lane.b32.xlu0 %v3515, 64
  %v3517 = vpop.permute.xlu0 %3516
  %v3519 = vunpack.c.l.b16 %v3512
  %v3520 = vpack.c.b16 %v3519, %v3519
  %3521 = vrot.lane.b32.xlu0 %v3520, 32
  %v3522 = vpop.permute.xlu0 %3521
  %v3524 = vsel %vm493, 0, %v3517
  %v3527 = vsel %vm3307, %v3517, %v3522
  %v3529 = vsel %vm3286, %v3522, 0
  %3531 = vmatprep.subr.bf16.mxu0 0
  %3532 = vmatpush1.bf16.msra.mxu0 %v3389
  %3533 = vmatprep.subr.bf16.mxu0 0
  %3534 = vmatpush1.bf16.msra.mxu0 %v3390
  %3535 = vmatprep.subr.bf16.mxu0 0
  %3536 = vmatpush1.bf16.msra.mxu0 %v3391
  %3537 = vmatprep.subr.bf16.mxu0 0
  %3538 = vmatpush1.bf16.msra.mxu0 %v3392
  %3539 = vmatprep.subr.bf16.mxu0 0
  %3540 = vmatpush1.bf16.msra.mxu0 %v3393
  %3541 = vmatprep.subr.bf16.mxu0 0
  %3542 = vmatpush1.bf16.msra.mxu0 %v3394
  %3543 = vmatprep.subr.bf16.mxu0 0
  %3544 = vmatpush1.bf16.msra.mxu0 %v3395
  %3545 = vmatprep.subr.bf16.mxu0 0
  %3546 = vmatpush1.bf16.msra.mxu0 %v3396
  %3547 = vmatprep.subr.bf16.mxu0 0
  %3548 = vmatpush1.bf16.msra.mxu0 %v3397
  %3549 = vmatprep.subr.bf16.mxu0 0
  %3550 = vmatpush1.bf16.msra.mxu0 %v3398
  %3551 = vmatprep.subr.bf16.mxu0 0
  %3552 = vmatpush1.bf16.msra.mxu0 %v3399
  %3553 = vmatprep.subr.bf16.mxu0 0
  %3554 = vmatpush1.bf16.msra.mxu0 %v3400
  %3555 = vmatprep.subr.bf16.mxu0 0
  %3556 = vmatpush1.bf16.msra.mxu0 %v3401
  %3557 = vmatprep.subr.bf16.mxu0 0
  %3558 = vmatpush1.bf16.msra.mxu0 %v3402
  %3559 = vmatprep.subr.bf16.mxu0 0
  %3560 = vmatpush1.bf16.msra.mxu0 %v3403
  %3561 = vmatprep.subr.bf16.mxu0 0
  %3562 = vmatpush1.bf16.msra.mxu0 %v3404
  %3563 = vmatprep.mubr.bf16.mxu0 %v3527
  %3564 = vmatmul.mubr.bf16.gmra.mrb[0].mxu0 %v3524
  %v3565 = vpop.f32.mrb[0].mxu0
  %v3566 = vadd.f32 %v3315, %v3565
  %v3567 = vpop.f32.mrb[0].mxu0
  %v3568 = vpop.f32.mrb[0].mxu0
  %v3569 = vpop.f32.mrb[0].mxu0
  %3570 = vdwg.mxu0
  %3571 = vmatprep.subr.bf16.mxu0 0
  %3572 = vmatpush1.bf16.msra.mxu0 %v3405
  %3573 = vmatprep.subr.bf16.mxu0 0
  %3574 = vmatpush1.bf16.msra.mxu0 %v3406
  %3575 = vmatprep.subr.bf16.mxu0 0
  %3576 = vmatpush1.bf16.msra.mxu0 0
  %3577 = vmatprep.subr.bf16.mxu0 0
  %3578 = vmatpush1.bf16.msra.mxu0 0
  %3579 = vmatprep.subr.bf16.mxu0 0
  %3580 = vmatpush1.bf16.msra.mxu0 0
  %3581 = vmatprep.subr.bf16.mxu0 0
  %3582 = vmatpush1.bf16.msra.mxu0 0
  %3583 = vmatprep.subr.bf16.mxu0 0
  %3584 = vmatpush1.bf16.msra.mxu0 0
  %3585 = vmatprep.subr.bf16.mxu0 0
  %3586 = vmatpush1.bf16.msra.mxu0 0
  %3587 = vmatprep.subr.bf16.mxu0 0
  %3588 = vmatpush1.bf16.msra.mxu0 0
  %3589 = vmatprep.subr.bf16.mxu0 0
  %3590 = vmatpush1.bf16.msra.mxu0 0
  %3591 = vmatprep.subr.bf16.mxu0 0
  %3592 = vmatpush1.bf16.msra.mxu0 0
  %3593 = vmatprep.subr.bf16.mxu0 0
  %3594 = vmatpush1.bf16.msra.mxu0 0
  %3595 = vmatprep.subr.bf16.mxu0 0
  %3596 = vmatpush1.bf16.msra.mxu0 0
  %3597 = vmatprep.subr.bf16.mxu0 0
  %3598 = vmatpush1.bf16.msra.mxu0 0
  %3599 = vmatprep.subr.bf16.mxu0 0
  %3600 = vmatpush1.bf16.msra.mxu0 0
  %3601 = vmatprep.subr.bf16.mxu0 0
  %3602 = vmatpush1.bf16.msra.mxu0 0
  %3603 = vmatprep.mubr.bf16.mxu0 0
  %3604 = vmatmul.mubr.bf16.gmra.mrb[0].mxu0 %v3529
  %v3605 = vpop.f32.mrb[0].mxu0
  %v3606 = vadd.f32 %v3566, %v3605
  %v3607 = vpop.f32.mrb[0].mxu0
  %v3608 = vpop.f32.mrb[0].mxu0
  %v3609 = vpop.f32.mrb[0].mxu0
  %3610 = vdwg.mxu0
  %v3611 = vmax.f32 %v3606, 0.0
  %v3612 = vpack.c.bf16 %v3611, %v3611
  %v3614 = vunpack.c.l.b16 %v3612
  %v3615 = vpack.c.b16 %v3614, %v3614
  %3616 = vrot.lane.b32.xlu0 %v3615, 32
  %v3617 = vpop.permute.xlu0 %3616
  %vm3619 = vcmask 519424
  %3620 = vst.msk [vmem:[#allocation3] sm:$0xf] %vm3619, %v3617
  %v3621 = vld [vmem:[#allocation2] sm:$0xff]
  %v3622 = vld [vmem:[%s804] sm:$0xff]
  %v3624 = vunpack.c.l.b16 %v3621
  %v3625 = vunpack.c.h.b16 %v3621
  %v3626 = vpack.c.b16 %v3624, %v3624
  %v3627 = vpack.c.b16 %v3625, %v3625
  %v3629 = vunpack.c.l.b16 %v3622
  %v3630 = vunpack.c.h.b16 %v3622
  %v3631 = vpack.c.b16 %v3629, %v3629
  %v3632 = vpack.c.b16 %v3630, %v3630
  %3633 = vrot.lane.b32.xlu0 %v3631, 96
  %v3634 = vpop.permute.xlu0 %3633
  %3635 = vrot.lane.b32.xlu0 %v3632, 96
  %v3636 = vpop.permute.xlu0 %3635
  %vm3637 = vcmask 785408
  %v3638 = vsel %vm3637, %v3634, %v3636
  %v3640 = vsel %vm493, 0, %v3626
  %v3644 = vsel %vm3307, %v3627, %v3638
  %v3647 = vsel %vm3286, %v3636, 0
  %3649 = vmatprep.subr.bf16.mxu0 0
  %3650 = vmatpush1.bf16.msra.mxu0 %v3389
  %3651 = vmatprep.subr.bf16.mxu0 0
  %3652 = vmatpush1.bf16.msra.mxu0 %v3390
  %3653 = vmatprep.subr.bf16.mxu0 0
  %3654 = vmatpush1.bf16.msra.mxu0 %v3391
  %3655 = vmatprep.subr.bf16.mxu0 0
  %3656 = vmatpush1.bf16.msra.mxu0 %v3392
  %3657 = vmatprep.subr.bf16.mxu0 0
  %3658 = vmatpush1.bf16.msra.mxu0 %v3393
  %3659 = vmatprep.subr.bf16.mxu0 0
  %3660 = vmatpush1.bf16.msra.mxu0 %v3394
  %3661 = vmatprep.subr.bf16.mxu0 0
  %3662 = vmatpush1.bf16.msra.mxu0 %v3395
  %3663 = vmatprep.subr.bf16.mxu0 0
  %3664 = vmatpush1.bf16.msra.mxu0 %v3396
  %3665 = vmatprep.subr.bf16.mxu0 0
  %3666 = vmatpush1.bf16.msra.mxu0 %v3397
  %3667 = vmatprep.subr.bf16.mxu0 0
  %3668 = vmatpush1.bf16.msra.mxu0 %v3398
  %3669 = vmatprep.subr.bf16.mxu0 0
  %3670 = vmatpush1.bf16.msra.mxu0 %v3399
  %3671 = vmatprep.subr.bf16.mxu0 0
  %3672 = vmatpush1.bf16.msra.mxu0 %v3400
  %3673 = vmatprep.subr.bf16.mxu0 0
  %3674 = vmatpush1.bf16.msra.mxu0 %v3401
  %3675 = vmatprep.subr.bf16.mxu0 0
  %3676 = vmatpush1.bf16.msra.mxu0 %v3402
  %3677 = vmatprep.subr.bf16.mxu0 0
  %3678 = vmatpush1.bf16.msra.mxu0 %v3403
  %3679 = vmatprep.subr.bf16.mxu0 0
  %3680 = vmatpush1.bf16.msra.mxu0 %v3404
  %3681 = vmatprep.mubr.bf16.mxu0 %v3644
  %3682 = vmatmul.mubr.bf16.gmra.mrb[0].mxu0 %v3640
  %v3683 = vpop.f32.mrb[0].mxu0
  %v3684 = vadd.f32 %v3315, %v3683
  %v3685 = vpop.f32.mrb[0].mxu0
  %v3686 = vpop.f32.mrb[0].mxu0
  %v3687 = vpop.f32.mrb[0].mxu0
  %3688 = vdwg.mxu0
  %3689 = vmatprep.subr.bf16.mxu0 0
  %3690 = vmatpush1.bf16.msra.mxu0 %v3405
  %3691 = vmatprep.subr.bf16.mxu0 0
  %3692 = vmatpush1.bf16.msra.mxu0 %v3406
  %3693 = vmatprep.subr.bf16.mxu0 0
  %3694 = vmatpush1.bf16.msra.mxu0 0
  %3695 = vmatprep.subr.bf16.mxu0 0
  %3696 = vmatpush1.bf16.msra.mxu0 0
  %3697 = vmatprep.subr.bf16.mxu0 0
  %3698 = vmatpush1.bf16.msra.mxu0 0
  %3699 = vmatprep.subr.bf16.mxu0 0
  %3700 = vmatpush1.bf16.msra.mxu0 0
  %3701 = vmatprep.subr.bf16.mxu0 0
  %3702 = vmatpush1.bf16.msra.mxu0 0
  %3703 = vmatprep.subr.bf16.mxu0 0
  %3704 = vmatpush1.bf16.msra.mxu0 0
  %3705 = vmatprep.subr.bf16.mxu0 0
  %3706 = vmatpush1.bf16.msra.mxu0 0
  %3707 = vmatprep.subr.bf16.mxu0 0
  %3708 = vmatpush1.bf16.msra.mxu0 0
  %3709 = vmatprep.subr.bf16.mxu0 0
  %3710 = vmatpush1.bf16.msra.mxu0 0
  %3711 = vmatprep.subr.bf16.mxu0 0
  %3712 = vmatpush1.bf16.msra.mxu0 0
  %3713 = vmatprep.subr.bf16.mxu0 0
  %3714 = vmatpush1.bf16.msra.mxu0 0
  %3715 = vmatprep.subr.bf16.mxu0 0
  %3716 = vmatpush1.bf16.msra.mxu0 0
  %3717 = vmatprep.subr.bf16.mxu0 0
  %3718 = vmatpush1.bf16.msra.mxu0 0
  %3719 = vmatprep.subr.bf16.mxu0 0
  %3720 = vmatpush1.bf16.msra.mxu0 0
  %3721 = vmatprep.mubr.bf16.mxu0 0
  %3722 = vmatmul.mubr.bf16.gmra.mrb[0].mxu0 %v3647
  %v3723 = vpop.f32.mrb[0].mxu0
  %v3724 = vadd.f32 %v3684, %v3723
  %v3725 = vpop.f32.mrb[0].mxu0
  %v3726 = vpop.f32.mrb[0].mxu0
  %v3727 = vpop.f32.mrb[0].mxu0
  %3728 = vdwg.mxu0
  %v3729 = vmax.f32 %v3724, 0.0
  %v3730 = vpack.c.bf16 %v3729, %v3729
  %v3732 = vunpack.c.l.b16 %v3730
  %v3733 = vpack.c.b16 %v3732, %v3732
  %3734 = vrot.lane.b32.xlu0 %v3733, 64
  %v3735 = vpop.permute.xlu0 %3734
  %vm3737 = vcmask 781824
  %3738 = vst.msk [vmem:[#allocation3] sm:$0xf] %vm3737, %v3735
  %v3739 = vld [vmem:[#allocation2 + $0x4] sm:$0xf]
  %v3740 = vld [vmem:[%s804 + $0x4] sm:$0xf]
  %v3742 = vunpack.c.l.b16 %v3739
  %v3743 = vpack.c.b16 %v3742, %v3742
  %3744 = vrot.lane.b32.xlu0 %v3743, 64
  %v3745 = vpop.permute.xlu0 %3744
  %v3747 = vunpack.c.l.b16 %v3740
  %v3748 = vpack.c.b16 %v3747, %v3747
  %3749 = vrot.lane.b32.xlu0 %v3748, 32
  %v3750 = vpop.permute.xlu0 %3749
  %v3752 = vsel %vm493, 0, %v3745
  %v3755 = vsel %vm3307, %v3745, %v3750
  %v3757 = vsel %vm3286, %v3750, 0
  %3759 = vmatprep.subr.bf16.mxu0 0
  %3760 = vmatpush1.bf16.msra.mxu0 %v3389
  %3761 = vmatprep.subr.bf16.mxu0 0
  %3762 = vmatpush1.bf16.msra.mxu0 %v3390
  %3763 = vmatprep.subr.bf16.mxu0 0
  %3764 = vmatpush1.bf16.msra.mxu0 %v3391
  %3765 = vmatprep.subr.bf16.mxu0 0
  %3766 = vmatpush1.bf16.msra.mxu0 %v3392
  %3767 = vmatprep.subr.bf16.mxu0 0
  %3768 = vmatpush1.bf16.msra.mxu0 %v3393
  %3769 = vmatprep.subr.bf16.mxu0 0
  %3770 = vmatpush1.bf16.msra.mxu0 %v3394
  %3771 = vmatprep.subr.bf16.mxu0 0
  %3772 = vmatpush1.bf16.msra.mxu0 %v3395
  %3773 = vmatprep.subr.bf16.mxu0 0
  %3774 = vmatpush1.bf16.msra.mxu0 %v3396
  %3775 = vmatprep.subr.bf16.mxu0 0
  %3776 = vmatpush1.bf16.msra.mxu0 %v3397
  %3777 = vmatprep.subr.bf16.mxu0 0
  %3778 = vmatpush1.bf16.msra.mxu0 %v3398
  %3779 = vmatprep.subr.bf16.mxu0 0
  %3780 = vmatpush1.bf16.msra.mxu0 %v3399
  %3781 = vmatprep.subr.bf16.mxu0 0
  %3782 = vmatpush1.bf16.msra.mxu0 %v3400
  %3783 = vmatprep.subr.bf16.mxu0 0
  %3784 = vmatpush1.bf16.msra.mxu0 %v3401
  %3785 = vmatprep.subr.bf16.mxu0 0
  %3786 = vmatpush1.bf16.msra.mxu0 %v3402
  %3787 = vmatprep.subr.bf16.mxu0 0
  %3788 = vmatpush1.bf16.msra.mxu0 %v3403
  %3789 = vmatprep.subr.bf16.mxu0 0
  %3790 = vmatpush1.bf16.msra.mxu0 %v3404
  %3791 = vmatprep.mubr.bf16.mxu0 %v3755
  %3792 = vmatmul.mubr.bf16.gmra.mrb[0].mxu0 %v3752
  %v3793 = vpop.f32.mrb[0].mxu0
  %v3794 = vadd.f32 %v3315, %v3793
  %v3795 = vpop.f32.mrb[0].mxu0
  %v3796 = vpop.f32.mrb[0].mxu0
  %v3797 = vpop.f32.mrb[0].mxu0
  %3798 = vdwg.mxu0
  %3799 = vmatprep.subr.bf16.mxu0 0
  %3800 = vmatpush1.bf16.msra.mxu0 %v3405
  %3801 = vmatprep.subr.bf16.mxu0 0
  %3802 = vmatpush1.bf16.msra.mxu0 %v3406
  %3803 = vmatprep.subr.bf16.mxu0 0
  %3804 = vmatpush1.bf16.msra.mxu0 0
  %3805 = vmatprep.subr.bf16.mxu0 0
  %3806 = vmatpush1.bf16.msra.mxu0 0
  %3807 = vmatprep.subr.bf16.mxu0 0
  %3808 = vmatpush1.bf16.msra.mxu0 0
  %3809 = vmatprep.subr.bf16.mxu0 0
  %3810 = vmatpush1.bf16.msra.mxu0 0
  %3811 = vmatprep.subr.bf16.mxu0 0
  %3812 = vmatpush1.bf16.msra.mxu0 0
  %3813 = vmatprep.subr.bf16.mxu0 0
  %3814 = vmatpush1.bf16.msra.mxu0 0
  %3815 = vmatprep.subr.bf16.mxu0 0
  %3816 = vmatpush1.bf16.msra.mxu0 0
  %3817 = vmatprep.subr.bf16.mxu0 0
  %3818 = vmatpush1.bf16.msra.mxu0 0
  %3819 = vmatprep.subr.bf16.mxu0 0
  %3820 = vmatpush1.bf16.msra.mxu0 0
  %3821 = vmatprep.subr.bf16.mxu0 0
  %3822 = vmatpush1.bf16.msra.mxu0 0
  %3823 = vmatprep.subr.bf16.mxu0 0
  %3824 = vmatpush1.bf16.msra.mxu0 0
  %3825 = vmatprep.subr.bf16.mxu0 0
  %3826 = vmatpush1.bf16.msra.mxu0 0
  %3827 = vmatprep.subr.bf16.mxu0 0
  %3828 = vmatpush1.bf16.msra.mxu0 0
  %3829 = vmatprep.subr.bf16.mxu0 0
  %3830 = vmatpush1.bf16.msra.mxu0 0
  %3831 = vmatprep.mubr.bf16.mxu0 0
  %3832 = vmatmul.mubr.bf16.gmra.mrb[0].mxu0 %v3757
  %v3833 = vpop.f32.mrb[0].mxu0
  %v3834 = vadd.f32 %v3794, %v3833
  %v3835 = vpop.f32.mrb[0].mxu0
  %v3836 = vpop.f32.mrb[0].mxu0
  %v3837 = vpop.f32.mrb[0].mxu0
  %3838 = vdwg.mxu0
  %v3839 = vmax.f32 %v3834, 0.0
  %v3840 = vpack.c.bf16 %v3839, %v3839
  %v3842 = vunpack.c.l.b16 %v3840
  %v3843 = vpack.c.b16 %v3842, %v3842
  %3844 = vrot.lane.b32.xlu0 %v3843, 96
  %v3845 = vpop.permute.xlu0 %3844
  %vm3847 = vcmask 1044224
  %3848 = vst.msk [vmem:[#allocation3] sm:$0xf] %vm3847, %v3845
  %v3849 = vld [vmem:[#allocation2 + $0x4] sm:$0xff]
  %v3850 = vld [vmem:[%s804 + $0x4] sm:$0xff]
  %v3852 = vunpack.c.l.b16 %v3849
  %v3853 = vunpack.c.h.b16 %v3849
  %v3854 = vpack.c.b16 %v3852, %v3852
  %v3855 = vpack.c.b16 %v3853, %v3853
  %v3857 = vunpack.c.l.b16 %v3850
  %v3858 = vunpack.c.h.b16 %v3850
  %v3859 = vpack.c.b16 %v3857, %v3857
  %v3860 = vpack.c.b16 %v3858, %v3858
  %3861 = vrot.lane.b32.xlu0 %v3859, 96
  %v3862 = vpop.permute.xlu0 %3861
  %3863 = vrot.lane.b32.xlu0 %v3860, 96
  %v3864 = vpop.permute.xlu0 %3863
  %v3865 = vsel %vm3637, %v3862, %v3864
  %v3867 = vsel %vm493, 0, %v3854
  %v3871 = vsel %vm3307, %v3855, %v3865
  %v3874 = vsel %vm3286, %v3864, 0
  %3876 = vmatprep.subr.bf16.mxu0 0
  %3877 = vmatpush1.bf16.msra.mxu0 %v3389
  %3878 = vmatprep.subr.bf16.mxu0 0
  %3879 = vmatpush1.bf16.msra.mxu0 %v3390
  %3880 = vmatprep.subr.bf16.mxu0 0
  %3881 = vmatpush1.bf16.msra.mxu0 %v3391
  %3882 = vmatprep.subr.bf16.mxu0 0
  %3883 = vmatpush1.bf16.msra.mxu0 %v3392
  %3884 = vmatprep.subr.bf16.mxu0 0
  %3885 = vmatpush1.bf16.msra.mxu0 %v3393
  %3886 = vmatprep.subr.bf16.mxu0 0
  %3887 = vmatpush1.bf16.msra.mxu0 %v3394
  %3888 = vmatprep.subr.bf16.mxu0 0
  %3889 = vmatpush1.bf16.msra.mxu0 %v3395
  %3890 = vmatprep.subr.bf16.mxu0 0
  %3891 = vmatpush1.bf16.msra.mxu0 %v3396
  %3892 = vmatprep.subr.bf16.mxu0 0
  %3893 = vmatpush1.bf16.msra.mxu0 %v3397
  %3894 = vmatprep.subr.bf16.mxu0 0
  %3895 = vmatpush1.bf16.msra.mxu0 %v3398
  %3896 = vmatprep.subr.bf16.mxu0 0
  %3897 = vmatpush1.bf16.msra.mxu0 %v3399
  %3898 = vmatprep.subr.bf16.mxu0 0
  %3899 = vmatpush1.bf16.msra.mxu0 %v3400
  %3900 = vmatprep.subr.bf16.mxu0 0
  %3901 = vmatpush1.bf16.msra.mxu0 %v3401
  %3902 = vmatprep.subr.bf16.mxu0 0
  %3903 = vmatpush1.bf16.msra.mxu0 %v3402
  %3904 = vmatprep.subr.bf16.mxu0 0
  %3905 = vmatpush1.bf16.msra.mxu0 %v3403
  %3906 = vmatprep.subr.bf16.mxu0 0
  %3907 = vmatpush1.bf16.msra.mxu0 %v3404
  %3908 = vmatprep.mubr.bf16.mxu0 %v3871
  %3909 = vmatmul.mubr.bf16.gmra.mrb[0].mxu0 %v3867
  %v3910 = vpop.f32.mrb[0].mxu0
  %v3911 = vadd.f32 %v3315, %v3910
  %v3912 = vpop.f32.mrb[0].mxu0
  %v3913 = vpop.f32.mrb[0].mxu0
  %v3914 = vpop.f32.mrb[0].mxu0
  %3915 = vdwg.mxu0
  %3916 = vmatprep.subr.bf16.mxu0 0
  %3917 = vmatpush1.bf16.msra.mxu0 %v3405
  %3918 = vmatprep.subr.bf16.mxu0 0
  %3919 = vmatpush1.bf16.msra.mxu0 %v3406
  %3920 = vmatprep.subr.bf16.mxu0 0
  %3921 = vmatpush1.bf16.msra.mxu0 0
  %3922 = vmatprep.subr.bf16.mxu0 0
  %3923 = vmatpush1.bf16.msra.mxu0 0
  %3924 = vmatprep.subr.bf16.mxu0 0
  %3925 = vmatpush1.bf16.msra.mxu0 0
  %3926 = vmatprep.subr.bf16.mxu0 0
  %3927 = vmatpush1.bf16.msra.mxu0 0
  %3928 = vmatprep.subr.bf16.mxu0 0
  %3929 = vmatpush1.bf16.msra.mxu0 0
  %3930 = vmatprep.subr.bf16.mxu0 0
  %3931 = vmatpush1.bf16.msra.mxu0 0
  %3932 = vmatprep.subr.bf16.mxu0 0
  %3933 = vmatpush1.bf16.msra.mxu0 0
  %3934 = vmatprep.subr.bf16.mxu0 0
  %3935 = vmatpush1.bf16.msra.mxu0 0
  %3936 = vmatprep.subr.bf16.mxu0 0
  %3937 = vmatpush1.bf16.msra.mxu0 0
  %3938 = vmatprep.subr.bf16.mxu0 0
  %3939 = vmatpush1.bf16.msra.mxu0 0
  %3940 = vmatprep.subr.bf16.mxu0 0
  %3941 = vmatpush1.bf16.msra.mxu0 0
  %3942 = vmatprep.subr.bf16.mxu0 0
  %3943 = vmatpush1.bf16.msra.mxu0 0
  %3944 = vmatprep.subr.bf16.mxu0 0
  %3945 = vmatpush1.bf16.msra.mxu0 0
  %3946 = vmatprep.subr.bf16.mxu0 0
  %3947 = vmatpush1.bf16.msra.mxu0 0
  %3948 = vmatprep.mubr.bf16.mxu0 0
  %3949 = vmatmul.mubr.bf16.gmra.mrb[0].mxu0 %v3874
  %v3950 = vpop.f32.mrb[0].mxu0
  %v3951 = vadd.f32 %v3911, %v3950
  %v3952 = vpop.f32.mrb[0].mxu0
  %v3953 = vpop.f32.mrb[0].mxu0
  %v3954 = vpop.f32.mrb[0].mxu0
  %3955 = vdwg.mxu0
  %v3956 = vmax.f32 %v3951, 0.0
  %v3957 = vpack.c.bf16 %v3956, %v3956
  %3958 = vst.msk [vmem:[#allocation3 + $0x4] sm:$0xf] %vm3509, %v3957
  %v3959 = vld [vmem:[#allocation2 + $0x8] sm:$0xf]
  %v3960 = vld [vmem:[%s804 + $0x8] sm:$0xf]
  %v3962 = vunpack.c.l.b16 %v3959
  %v3963 = vpack.c.b16 %v3962, %v3962
  %3964 = vrot.lane.b32.xlu0 %v3963, 64
  %v3965 = vpop.permute.xlu0 %3964
  %v3967 = vunpack.c.l.b16 %v3960
  %v3968 = vpack.c.b16 %v3967, %v3967
  %3969 = vrot.lane.b32.xlu0 %v3968, 32
  %v3970 = vpop.permute.xlu0 %3969
  %v3972 = vsel %vm493, 0, %v3965
  %v3975 = vsel %vm3307, %v3965, %v3970
  %v3977 = vsel %vm3286, %v3970, 0
  %3979 = vmatprep.subr.bf16.mxu0 0
  %3980 = vmatpush1.bf16.msra.mxu0 %v3389
  %3981 = vmatprep.subr.bf16.mxu0 0
  %3982 = vmatpush1.bf16.msra.mxu0 %v3390
  %3983 = vmatprep.subr.bf16.mxu0 0
  %3984 = vmatpush1.bf16.msra.mxu0 %v3391
  %3985 = vmatprep.subr.bf16.mxu0 0
  %3986 = vmatpush1.bf16.msra.mxu0 %v3392
  %3987 = vmatprep.subr.bf16.mxu0 0
  %3988 = vmatpush1.bf16.msra.mxu0 %v3393
  %3989 = vmatprep.subr.bf16.mxu0 0
  %3990 = vmatpush1.bf16.msra.mxu0 %v3394
  %3991 = vmatprep.subr.bf16.mxu0 0
  %3992 = vmatpush1.bf16.msra.mxu0 %v3395
  %3993 = vmatprep.subr.bf16.mxu0 0
  %3994 = vmatpush1.bf16.msra.mxu0 %v3396
  %3995 = vmatprep.subr.bf16.mxu0 0
  %3996 = vmatpush1.bf16.msra.mxu0 %v3397
  %3997 = vmatprep.subr.bf16.mxu0 0
  %3998 = vmatpush1.bf16.msra.mxu0 %v3398
  %3999 = vmatprep.subr.bf16.mxu0 0
  %4000 = vmatpush1.bf16.msra.mxu0 %v3399
  %4001 = vmatprep.subr.bf16.mxu0 0
  %4002 = vmatpush1.bf16.msra.mxu0 %v3400
  %4003 = vmatprep.subr.bf16.mxu0 0
  %4004 = vmatpush1.bf16.msra.mxu0 %v3401
  %4005 = vmatprep.subr.bf16.mxu0 0
  %4006 = vmatpush1.bf16.msra.mxu0 %v3402
  %4007 = vmatprep.subr.bf16.mxu0 0
  %4008 = vmatpush1.bf16.msra.mxu0 %v3403
  %4009 = vmatprep.subr.bf16.mxu0 0
  %4010 = vmatpush1.bf16.msra.mxu0 %v3404
  %4011 = vmatprep.mubr.bf16.mxu0 %v3975
  %4012 = vmatmul.mubr.bf16.gmra.mrb[0].mxu0 %v3972
  %v4013 = vpop.f32.mrb[0].mxu0
  %v4014 = vadd.f32 %v3315, %v4013
  %v4015 = vpop.f32.mrb[0].mxu0
  %v4016 = vpop.f32.mrb[0].mxu0
  %v4017 = vpop.f32.mrb[0].mxu0
  %4018 = vdwg.mxu0
  %4019 = vmatprep.subr.bf16.mxu0 0
  %4020 = vmatpush1.bf16.msra.mxu0 %v3405
  %4021 = vmatprep.subr.bf16.mxu0 0
  %4022 = vmatpush1.bf16.msra.mxu0 %v3406
  %4023 = vmatprep.subr.bf16.mxu0 0
  %4024 = vmatpush1.bf16.msra.mxu0 0
  %4025 = vmatprep.subr.bf16.mxu0 0
  %4026 = vmatpush1.bf16.msra.mxu0 0
  %4027 = vmatprep.subr.bf16.mxu0 0
  %4028 = vmatpush1.bf16.msra.mxu0 0
  %4029 = vmatprep.subr.bf16.mxu0 0
  %4030 = vmatpush1.bf16.msra.mxu0 0
  %4031 = vmatprep.subr.bf16.mxu0 0
  %4032 = vmatpush1.bf16.msra.mxu0 0
  %4033 = vmatprep.subr.bf16.mxu0 0
  %4034 = vmatpush1.bf16.msra.mxu0 0
  %4035 = vmatprep.subr.bf16.mxu0 0
  %4036 = vmatpush1.bf16.msra.mxu0 0
  %4037 = vmatprep.subr.bf16.mxu0 0
  %4038 = vmatpush1.bf16.msra.mxu0 0
  %4039 = vmatprep.subr.bf16.mxu0 0
  %4040 = vmatpush1.bf16.msra.mxu0 0
  %4041 = vmatprep.subr.bf16.mxu0 0
  %4042 = vmatpush1.bf16.msra.mxu0 0
  %4043 = vmatprep.subr.bf16.mxu0 0
  %4044 = vmatpush1.bf16.msra.mxu0 0
  %4045 = vmatprep.subr.bf16.mxu0 0
  %4046 = vmatpush1.bf16.msra.mxu0 0
  %4047 = vmatprep.subr.bf16.mxu0 0
  %4048 = vmatpush1.bf16.msra.mxu0 0
  %4049 = vmatprep.subr.bf16.mxu0 0
  %4050 = vmatpush1.bf16.msra.mxu0 0
  %4051 = vmatprep.mubr.bf16.mxu0 0
  %4052 = vmatmul.mubr.bf16.gmra.mrb[0].mxu0 %v3977
  %v4053 = vpop.f32.mrb[0].mxu0
  %v4054 = vadd.f32 %v4014, %v4053
  %v4055 = vpop.f32.mrb[0].mxu0
  %v4056 = vpop.f32.mrb[0].mxu0
  %v4057 = vpop.f32.mrb[0].mxu0
  %4058 = vdwg.mxu0
  %v4059 = vmax.f32 %v4054, 0.0
  %v4060 = vpack.c.bf16 %v4059, %v4059
  %v4062 = vunpack.c.l.b16 %v4060
  %v4063 = vpack.c.b16 %v4062, %v4062
  %4064 = vrot.lane.b32.xlu0 %v4063, 32
  %v4065 = vpop.permute.xlu0 %4064
  %4067 = vst.msk [vmem:[#allocation3 + $0x4] sm:$0xf] %vm3619, %v4065
  %v4068 = vld [vmem:[#allocation2 + $0x8] sm:$0xff]
  %v4069 = vld [vmem:[%s804 + $0x8] sm:$0xff]
  %v4071 = vunpack.c.l.b16 %v4068
  %v4072 = vunpack.c.h.b16 %v4068
  %v4073 = vpack.c.b16 %v4071, %v4071
  %v4074 = vpack.c.b16 %v4072, %v4072
  %v4076 = vunpack.c.l.b16 %v4069
  %v4077 = vunpack.c.h.b16 %v4069
  %v4078 = vpack.c.b16 %v4076, %v4076
  %v4079 = vpack.c.b16 %v4077, %v4077
  %4080 = vrot.lane.b32.xlu0 %v4078, 96
  %v4081 = vpop.permute.xlu0 %4080
  %4082 = vrot.lane.b32.xlu0 %v4079, 96
  %v4083 = vpop.permute.xlu0 %4082
  %v4084 = vsel %vm3637, %v4081, %v4083
  %v4086 = vsel %vm493, 0, %v4073
  %v4090 = vsel %vm3307, %v4074, %v4084
  %v4093 = vsel %vm3286, %v4083, 0
  %4095 = vmatprep.subr.bf16.mxu0 0
  %4096 = vmatpush1.bf16.msra.mxu0 %v3389
  %4097 = vmatprep.subr.bf16.mxu0 0
  %4098 = vmatpush1.bf16.msra.mxu0 %v3390
  %4099 = vmatprep.subr.bf16.mxu0 0
  %4100 = vmatpush1.bf16.msra.mxu0 %v3391
  %4101 = vmatprep.subr.bf16.mxu0 0
  %4102 = vmatpush1.bf16.msra.mxu0 %v3392
  %4103 = vmatprep.subr.bf16.mxu0 0
  %4104 = vmatpush1.bf16.msra.mxu0 %v3393
  %4105 = vmatprep.subr.bf16.mxu0 0
  %4106 = vmatpush1.bf16.msra.mxu0 %v3394
  %4107 = vmatprep.subr.bf16.mxu0 0
  %4108 = vmatpush1.bf16.msra.mxu0 %v3395
  %4109 = vmatprep.subr.bf16.mxu0 0
  %4110 = vmatpush1.bf16.msra.mxu0 %v3396
  %4111 = vmatprep.subr.bf16.mxu0 0
  %4112 = vmatpush1.bf16.msra.mxu0 %v3397
  %4113 = vmatprep.subr.bf16.mxu0 0
  %4114 = vmatpush1.bf16.msra.mxu0 %v3398
  %4115 = vmatprep.subr.bf16.mxu0 0
  %4116 = vmatpush1.bf16.msra.mxu0 %v3399
  %4117 = vmatprep.subr.bf16.mxu0 0
  %4118 = vmatpush1.bf16.msra.mxu0 %v3400
  %4119 = vmatprep.subr.bf16.mxu0 0
  %4120 = vmatpush1.bf16.msra.mxu0 %v3401
  %4121 = vmatprep.subr.bf16.mxu0 0
  %4122 = vmatpush1.bf16.msra.mxu0 %v3402
  %4123 = vmatprep.subr.bf16.mxu0 0
  %4124 = vmatpush1.bf16.msra.mxu0 %v3403
  %4125 = vmatprep.subr.bf16.mxu0 0
  %4126 = vmatpush1.bf16.msra.mxu0 %v3404
  %4127 = vmatprep.mubr.bf16.mxu0 %v4090
  %4128 = vmatmul.mubr.bf16.gmra.mrb[0].mxu0 %v4086
  %v4129 = vpop.f32.mrb[0].mxu0
  %v4130 = vadd.f32 %v3315, %v4129
  %v4131 = vpop.f32.mrb[0].mxu0
  %v4132 = vpop.f32.mrb[0].mxu0
  %v4133 = vpop.f32.mrb[0].mxu0
  %4134 = vdwg.mxu0
  %4135 = vmatprep.subr.bf16.mxu0 0
  %4136 = vmatpush1.bf16.msra.mxu0 %v3405
  %4137 = vmatprep.subr.bf16.mxu0 0
  %4138 = vmatpush1.bf16.msra.mxu0 %v3406
  %4139 = vmatprep.subr.bf16.mxu0 0
  %4140 = vmatpush1.bf16.msra.mxu0 0
  %4141 = vmatprep.subr.bf16.mxu0 0
  %4142 = vmatpush1.bf16.msra.mxu0 0
  %4143 = vmatprep.subr.bf16.mxu0 0
  %4144 = vmatpush1.bf16.msra.mxu0 0
  %4145 = vmatprep.subr.bf16.mxu0 0
  %4146 = vmatpush1.bf16.msra.mxu0 0
  %4147 = vmatprep.subr.bf16.mxu0 0
  %4148 = vmatpush1.bf16.msra.mxu0 0
  %4149 = vmatprep.subr.bf16.mxu0 0
  %4150 = vmatpush1.bf16.msra.mxu0 0
  %4151 = vmatprep.subr.bf16.mxu0 0
  %4152 = vmatpush1.bf16.msra.mxu0 0
  %4153 = vmatprep.subr.bf16.mxu0 0
  %4154 = vmatpush1.bf16.msra.mxu0 0
  %4155 = vmatprep.subr.bf16.mxu0 0
  %4156 = vmatpush1.bf16.msra.mxu0 0
  %4157 = vmatprep.subr.bf16.mxu0 0
  %4158 = vmatpush1.bf16.msra.mxu0 0
  %4159 = vmatprep.subr.bf16.mxu0 0
  %4160 = vmatpush1.bf16.msra.mxu0 0
  %4161 = vmatprep.subr.bf16.mxu0 0
  %4162 = vmatpush1.bf16.msra.mxu0 0
  %4163 = vmatprep.subr.bf16.mxu0 0
  %4164 = vmatpush1.bf16.msra.mxu0 0
  %4165 = vmatprep.subr.bf16.mxu0 0
  %4166 = vmatpush1.bf16.msra.mxu0 0
  %4167 = vmatprep.mubr.bf16.mxu0 0
  %4168 = vmatmul.mubr.bf16.gmra.mrb[0].mxu0 %v4093
  %v4169 = vpop.f32.mrb[0].mxu0
  %v4170 = vadd.f32 %v4130, %v4169
  %v4171 = vpop.f32.mrb[0].mxu0
  %v4172 = vpop.f32.mrb[0].mxu0
  %v4173 = vpop.f32.mrb[0].mxu0
  %4174 = vdwg.mxu0
  %v4175 = vmax.f32 %v4170, 0.0
  %v4176 = vpack.c.bf16 %v4175, %v4175
  %v4178 = vunpack.c.l.b16 %v4176
  %v4179 = vpack.c.b16 %v4178, %v4178
  %4180 = vrot.lane.b32.xlu0 %v4179, 64
  %v4181 = vpop.permute.xlu0 %4180
  %4183 = vst.msk [vmem:[#allocation3 + $0x4] sm:$0xf] %vm3737, %v4181
  %v4184 = vld [vmem:[%s804] sm:$0xf]
  %v4186 = vunpack.c.l.b16 %v4184
  %v4187 = vpack.c.b16 %v4186, %v4186
  %4188 = vrot.lane.b32.xlu0 %v4187, 32
  %v4189 = vpop.permute.xlu0 %4188
  %v4191 = vsel %vm3286, 0, %v4189
  %v4192 = vld [vmem:[%s1007] sm:$0xf]
  %v4194 = vunpack.c.l.b16 %v4192
  %v4195 = vpack.c.b16 %v4194, %v4194
  %4196 = vrot.lane.b32.xlu0 %v4195, 32
  %v4197 = vpop.permute.xlu0 %4196
  %v4199 = vsel %vm3286, 0, %v4197
  %v4200 = vld [vmem:[%s1210] sm:$0xf]
  %v4202 = vunpack.c.l.b16 %v4200
  %v4203 = vpack.c.b16 %v4202, %v4202
  %4204 = vrot.lane.b32.xlu0 %v4203, 32
  %v4205 = vpop.permute.xlu0 %4204
  %v4207 = vsel %vm3286, 0, %v4205
  %4209 = vrot.lane.b32.xlu0 %v4199, 96
  %v4210 = vpop.permute.xlu0 %4209
  %4212 = vrot.lane.b32.xlu0 %v4207, 64
  %v4213 = vpop.permute.xlu0 %4212
  %v4215 = vsel %vm493, %v4191, %v4210
  %v4218 = vsel %vm3307, %v4210, %v4213
  %v4220 = vsel %vm3286, %v4213, 0
  %4222 = vmatprep.subr.bf16.mxu0 0
  %4223 = vmatpush1.bf16.msra.mxu0 %v3389
  %4224 = vmatprep.subr.bf16.mxu0 0
  %4225 = vmatpush1.bf16.msra.mxu0 %v3390
  %4226 = vmatprep.subr.bf16.mxu0 0
  %4227 = vmatpush1.bf16.msra.mxu0 %v3391
  %4228 = vmatprep.subr.bf16.mxu0 0
  %4229 = vmatpush1.bf16.msra.mxu0 %v3392
  %4230 = vmatprep.subr.bf16.mxu0 0
  %4231 = vmatpush1.bf16.msra.mxu0 %v3393
  %4232 = vmatprep.subr.bf16.mxu0 0
  %4233 = vmatpush1.bf16.msra.mxu0 %v3394
  %4234 = vmatprep.subr.bf16.mxu0 0
  %4235 = vmatpush1.bf16.msra.mxu0 %v3395
  %4236 = vmatprep.subr.bf16.mxu0 0
  %4237 = vmatpush1.bf16.msra.mxu0 %v3396
  %4238 = vmatprep.subr.bf16.mxu0 0
  %4239 = vmatpush1.bf16.msra.mxu0 %v3397
  %4240 = vmatprep.subr.bf16.mxu0 0
  %4241 = vmatpush1.bf16.msra.mxu0 %v3398
  %4242 = vmatprep.subr.bf16.mxu0 0
  %4243 = vmatpush1.bf16.msra.mxu0 %v3399
  %4244 = vmatprep.subr.bf16.mxu0 0
  %4245 = vmatpush1.bf16.msra.mxu0 %v3400
  %4246 = vmatprep.subr.bf16.mxu0 0
  %4247 = vmatpush1.bf16.msra.mxu0 %v3401
  %4248 = vmatprep.subr.bf16.mxu0 0
  %4249 = vmatpush1.bf16.msra.mxu0 %v3402
  %4250 = vmatprep.subr.bf16.mxu0 0
  %4251 = vmatpush1.bf16.msra.mxu0 %v3403
  %4252 = vmatprep.subr.bf16.mxu0 0
  %4253 = vmatpush1.bf16.msra.mxu0 %v3404
  %4254 = vmatprep.mubr.bf16.mxu0 %v4218
  %4255 = vmatmul.mubr.bf16.gmra.mrb[0].mxu0 %v4215
  %v4256 = vpop.f32.mrb[0].mxu0
  %v4257 = vadd.f32 %v3315, %v4256
  %v4258 = vpop.f32.mrb[0].mxu0
  %v4259 = vpop.f32.mrb[0].mxu0
  %v4260 = vpop.f32.mrb[0].mxu0
  %4261 = vdwg.mxu0
  %4262 = vmatprep.subr.bf16.mxu0 0
  %4263 = vmatpush1.bf16.msra.mxu0 %v3405
  %4264 = vmatprep.subr.bf16.mxu0 0
  %4265 = vmatpush1.bf16.msra.mxu0 %v3406
  %4266 = vmatprep.subr.bf16.mxu0 0
  %4267 = vmatpush1.bf16.msra.mxu0 0
  %4268 = vmatprep.subr.bf16.mxu0 0
  %4269 = vmatpush1.bf16.msra.mxu0 0
  %4270 = vmatprep.subr.bf16.mxu0 0
  %4271 = vmatpush1.bf16.msra.mxu0 0
  %4272 = vmatprep.subr.bf16.mxu0 0
  %4273 = vmatpush1.bf16.msra.mxu0 0
  %4274 = vmatprep.subr.bf16.mxu0 0
  %4275 = vmatpush1.bf16.msra.mxu0 0
  %4276 = vmatprep.subr.bf16.mxu0 0
  %4277 = vmatpush1.bf16.msra.mxu0 0
  %4278 = vmatprep.subr.bf16.mxu0 0
  %4279 = vmatpush1.bf16.msra.mxu0 0
  %4280 = vmatprep.subr.bf16.mxu0 0
  %4281 = vmatpush1.bf16.msra.mxu0 0
  %4282 = vmatprep.subr.bf16.mxu0 0
  %4283 = vmatpush1.bf16.msra.mxu0 0
  %4284 = vmatprep.subr.bf16.mxu0 0
  %4285 = vmatpush1.bf16.msra.mxu0 0
  %4286 = vmatprep.subr.bf16.mxu0 0
  %4287 = vmatpush1.bf16.msra.mxu0 0
  %4288 = vmatprep.subr.bf16.mxu0 0
  %4289 = vmatpush1.bf16.msra.mxu0 0
  %4290 = vmatprep.subr.bf16.mxu0 0
  %4291 = vmatpush1.bf16.msra.mxu0 0
  %4292 = vmatprep.subr.bf16.mxu0 0
  %4293 = vmatpush1.bf16.msra.mxu0 0
  %4294 = vmatprep.mubr.bf16.mxu0 0
  %4295 = vmatmul.mubr.bf16.gmra.mrb[0].mxu0 %v4220
  %v4296 = vpop.f32.mrb[0].mxu0
  %v4297 = vadd.f32 %v4257, %v4296
  %v4298 = vpop.f32.mrb[0].mxu0
  %v4299 = vpop.f32.mrb[0].mxu0
  %v4300 = vpop.f32.mrb[0].mxu0
  %4301 = vdwg.mxu0
  %v4302 = vmax.f32 %v4297, 0.0
  %v4303 = vpack.c.bf16 %v4302, %v4302
  %v4305 = vunpack.c.l.b16 %v4303
  %v4306 = vpack.c.b16 %v4305, %v4305
  %4307 = vrot.lane.b32.xlu0 %v4306, 96
  %v4308 = vpop.permute.xlu0 %4307
  %4310 = vst.msk [vmem:[#allocation3 + $0x4] sm:$0xf] %vm3847, %v4308
  %v4311 = vld [vmem:[%s804] sm:$0xf]
  %v4312 = vld [vmem:[%s1007] sm:$0xf]
  %v4313 = vld [vmem:[%s1210] sm:$0xf]
  %v4315 = vunpack.c.l.b16 %v4311
  %v4316 = vpack.c.b16 %v4315, %v4315
  %4317 = vrot.lane.b32.xlu0 %v4316, 96
  %v4318 = vpop.permute.xlu0 %4317
  %v4320 = vunpack.c.l.b16 %v4312
  %v4321 = vpack.c.b16 %v4320, %v4320
  %4322 = vrot.lane.b32.xlu0 %v4321, 64
  %v4323 = vpop.permute.xlu0 %4322
  %v4325 = vunpack.c.l.b16 %v4313
  %v4326 = vpack.c.b16 %v4325, %v4325
  %4327 = vrot.lane.b32.xlu0 %v4326, 32
  %v4328 = vpop.permute.xlu0 %4327
  %v4331 = vsel %vm493, %v4318, %v4323
  %v4334 = vsel %vm3307, %v4323, %v4328
  %v4336 = vsel %vm3286, %v4328, 0
  %4338 = vmatprep.subr.bf16.mxu0 0
  %4339 = vmatpush1.bf16.msra.mxu0 %v3389
  %4340 = vmatprep.subr.bf16.mxu0 0
  %4341 = vmatpush1.bf16.msra.mxu0 %v3390
  %4342 = vmatprep.subr.bf16.mxu0 0
  %4343 = vmatpush1.bf16.msra.mxu0 %v3391
  %4344 = vmatprep.subr.bf16.mxu0 0
  %4345 = vmatpush1.bf16.msra.mxu0 %v3392
  %4346 = vmatprep.subr.bf16.mxu0 0
  %4347 = vmatpush1.bf16.msra.mxu0 %v3393
  %4348 = vmatprep.subr.bf16.mxu0 0
  %4349 = vmatpush1.bf16.msra.mxu0 %v3394
  %4350 = vmatprep.subr.bf16.mxu0 0
  %4351 = vmatpush1.bf16.msra.mxu0 %v3395
  %4352 = vmatprep.subr.bf16.mxu0 0
  %4353 = vmatpush1.bf16.msra.mxu0 %v3396
  %4354 = vmatprep.subr.bf16.mxu0 0
  %4355 = vmatpush1.bf16.msra.mxu0 %v3397
  %4356 = vmatprep.subr.bf16.mxu0 0
  %4357 = vmatpush1.bf16.msra.mxu0 %v3398
  %4358 = vmatprep.subr.bf16.mxu0 0
  %4359 = vmatpush1.bf16.msra.mxu0 %v3399
  %4360 = vmatprep.subr.bf16.mxu0 0
  %4361 = vmatpush1.bf16.msra.mxu0 %v3400
  %4362 = vmatprep.subr.bf16.mxu0 0
  %4363 = vmatpush1.bf16.msra.mxu0 %v3401
  %4364 = vmatprep.subr.bf16.mxu0 0
  %4365 = vmatpush1.bf16.msra.mxu0 %v3402
  %4366 = vmatprep.subr.bf16.mxu0 0
  %4367 = vmatpush1.bf16.msra.mxu0 %v3403
  %4368 = vmatprep.subr.bf16.mxu0 0
  %4369 = vmatpush1.bf16.msra.mxu0 %v3404
  %4370 = vmatprep.mubr.bf16.mxu0 %v4334
  %4371 = vmatmul.mubr.bf16.gmra.mrb[0].mxu0 %v4331
  %v4372 = vpop.f32.mrb[0].mxu0
  %v4373 = vadd.f32 %v3315, %v4372
  %v4374 = vpop.f32.mrb[0].mxu0
  %v4375 = vpop.f32.mrb[0].mxu0
  %v4376 = vpop.f32.mrb[0].mxu0
  %4377 = vdwg.mxu0
  %4378 = vmatprep.subr.bf16.mxu0 0
  %4379 = vmatpush1.bf16.msra.mxu0 %v3405
  %4380 = vmatprep.subr.bf16.mxu0 0
  %4381 = vmatpush1.bf16.msra.mxu0 %v3406
  %4382 = vmatprep.subr.bf16.mxu0 0
  %4383 = vmatpush1.bf16.msra.mxu0 0
  %4384 = vmatprep.subr.bf16.mxu0 0
  %4385 = vmatpush1.bf16.msra.mxu0 0
  %4386 = vmatprep.subr.bf16.mxu0 0
  %4387 = vmatpush1.bf16.msra.mxu0 0
  %4388 = vmatprep.subr.bf16.mxu0 0
  %4389 = vmatpush1.bf16.msra.mxu0 0
  %4390 = vmatprep.subr.bf16.mxu0 0
  %4391 = vmatpush1.bf16.msra.mxu0 0
  %4392 = vmatprep.subr.bf16.mxu0 0
  %4393 = vmatpush1.bf16.msra.mxu0 0
  %4394 = vmatprep.subr.bf16.mxu0 0
  %4395 = vmatpush1.bf16.msra.mxu0 0
  %4396 = vmatprep.subr.bf16.mxu0 0
  %4397 = vmatpush1.bf16.msra.mxu0 0
  %4398 = vmatprep.subr.bf16.mxu0 0
  %4399 = vmatpush1.bf16.msra.mxu0 0
  %4400 = vmatprep.subr.bf16.mxu0 0
  %4401 = vmatpush1.bf16.msra.mxu0 0
  %4402 = vmatprep.subr.bf16.mxu0 0
  %4403 = vmatpush1.bf16.msra.mxu0 0
  %4404 = vmatprep.subr.bf16.mxu0 0
  %4405 = vmatpush1.bf16.msra.mxu0 0
  %4406 = vmatprep.subr.bf16.mxu0 0
  %4407 = vmatpush1.bf16.msra.mxu0 0
  %4408 = vmatprep.subr.bf16.mxu0 0
  %4409 = vmatpush1.bf16.msra.mxu0 0
  %4410 = vmatprep.mubr.bf16.mxu0 0
  %4411 = vmatmul.mubr.bf16.gmra.mrb[0].mxu0 %v4336
  %v4412 = vpop.f32.mrb[0].mxu0
  %v4413 = vadd.f32 %v4373, %v4412
  %v4414 = vpop.f32.mrb[0].mxu0
  %v4415 = vpop.f32.mrb[0].mxu0
  %v4416 = vpop.f32.mrb[0].mxu0
  %4417 = vdwg.mxu0
  %v4418 = vmax.f32 %v4413, 0.0
  %v4419 = vpack.c.bf16 %v4418, %v4418
  %4420 = vst.msk [vmem:[#allocation3 + $0x8] sm:$0xf] %vm3509, %v4419
  %v4421 = vld [vmem:[%s804] sm:$0xff]
  %v4422 = vld [vmem:[%s1007] sm:$0xff]
  %v4423 = vld [vmem:[%s1210] sm:$0xff]
  %v4425 = vunpack.c.l.b16 %v4421
  %v4426 = vunpack.c.h.b16 %v4421
  %v4427 = vpack.c.b16 %v4425, %v4425
  %v4428 = vpack.c.b16 %v4426, %v4426
  %4429 = vrot.lane.b32.xlu0 %v4427, 32
  %v4430 = vpop.permute.xlu0 %4429
  %4431 = vrot.lane.b32.xlu0 %v4428, 32
  %v4432 = vpop.permute.xlu0 %4431
  %vm4433 = vcmask 261120
  %v4434 = vsel %vm4433, %v4430, %v4432
  %v4436 = vunpack.c.l.b16 %v4422
  %v4437 = vunpack.c.h.b16 %v4422
  %v4438 = vpack.c.b16 %v4436, %v4436
  %v4439 = vpack.c.b16 %v4437, %v4437
  %v4441 = vunpack.c.l.b16 %v4423
  %v4442 = vunpack.c.h.b16 %v4423
  %v4443 = vpack.c.b16 %v4441, %v4441
  %v4444 = vpack.c.b16 %v4442, %v4442
  %4445 = vrot.lane.b32.xlu0 %v4443, 96
  %v4446 = vpop.permute.xlu0 %4445
  %4447 = vrot.lane.b32.xlu0 %v4444, 96
  %v4448 = vpop.permute.xlu0 %4447
  %v4449 = vsel %vm3637, %v4446, %v4448
  %v4452 = vsel %vm493, %v4434, %v4438
  %v4456 = vsel %vm3307, %v4439, %v4449
  %v4459 = vsel %vm3286, %v4448, 0
  %4461 = vmatprep.subr.bf16.mxu0 0
  %4462 = vmatpush1.bf16.msra.mxu0 %v3389
  %4463 = vmatprep.subr.bf16.mxu0 0
  %4464 = vmatpush1.bf16.msra.mxu0 %v3390
  %4465 = vmatprep.subr.bf16.mxu0 0
  %4466 = vmatpush1.bf16.msra.mxu0 %v3391
  %4467 = vmatprep.subr.bf16.mxu0 0
  %4468 = vmatpush1.bf16.msra.mxu0 %v3392
  %4469 = vmatprep.subr.bf16.mxu0 0
  %4470 = vmatpush1.bf16.msra.mxu0 %v3393
  %4471 = vmatprep.subr.bf16.mxu0 0
  %4472 = vmatpush1.bf16.msra.mxu0 %v3394
  %4473 = vmatprep.subr.bf16.mxu0 0
  %4474 = vmatpush1.bf16.msra.mxu0 %v3395
  %4475 = vmatprep.subr.bf16.mxu0 0
  %4476 = vmatpush1.bf16.msra.mxu0 %v3396
  %4477 = vmatprep.subr.bf16.mxu0 0
  %4478 = vmatpush1.bf16.msra.mxu0 %v3397
  %4479 = vmatprep.subr.bf16.mxu0 0
  %4480 = vmatpush1.bf16.msra.mxu0 %v3398
  %4481 = vmatprep.subr.bf16.mxu0 0
  %4482 = vmatpush1.bf16.msra.mxu0 %v3399
  %4483 = vmatprep.subr.bf16.mxu0 0
  %4484 = vmatpush1.bf16.msra.mxu0 %v3400
  %4485 = vmatprep.subr.bf16.mxu0 0
  %4486 = vmatpush1.bf16.msra.mxu0 %v3401
  %4487 = vmatprep.subr.bf16.mxu0 0
  %4488 = vmatpush1.bf16.msra.mxu0 %v3402
  %4489 = vmatprep.subr.bf16.mxu0 0
  %4490 = vmatpush1.bf16.msra.mxu0 %v3403
  %4491 = vmatprep.subr.bf16.mxu0 0
  %4492 = vmatpush1.bf16.msra.mxu0 %v3404
  %4493 = vmatprep.mubr.bf16.mxu0 %v4456
  %4494 = vmatmul.mubr.bf16.gmra.mrb[0].mxu0 %v4452
  %v4495 = vpop.f32.mrb[0].mxu0
  %v4496 = vadd.f32 %v3315, %v4495
  %v4497 = vpop.f32.mrb[0].mxu0
  %v4498 = vpop.f32.mrb[0].mxu0
  %v4499 = vpop.f32.mrb[0].mxu0
  %4500 = vdwg.mxu0
  %4501 = vmatprep.subr.bf16.mxu0 0
  %4502 = vmatpush1.bf16.msra.mxu0 %v3405
  %4503 = vmatprep.subr.bf16.mxu0 0
  %4504 = vmatpush1.bf16.msra.mxu0 %v3406
  %4505 = vmatprep.subr.bf16.mxu0 0
  %4506 = vmatpush1.bf16.msra.mxu0 0
  %4507 = vmatprep.subr.bf16.mxu0 0
  %4508 = vmatpush1.bf16.msra.mxu0 0
  %4509 = vmatprep.subr.bf16.mxu0 0
  %4510 = vmatpush1.bf16.msra.mxu0 0
  %4511 = vmatprep.subr.bf16.mxu0 0
  %4512 = vmatpush1.bf16.msra.mxu0 0
  %4513 = vmatprep.subr.bf16.mxu0 0
  %4514 = vmatpush1.bf16.msra.mxu0 0
  %4515 = vmatprep.subr.bf16.mxu0 0
  %4516 = vmatpush1.bf16.msra.mxu0 0
  %4517 = vmatprep.subr.bf16.mxu0 0
  %4518 = vmatpush1.bf16.msra.mxu0 0
  %4519 = vmatprep.subr.bf16.mxu0 0
  %4520 = vmatpush1.bf16.msra.mxu0 0
  %4521 = vmatprep.subr.bf16.mxu0 0
  %4522 = vmatpush1.bf16.msra.mxu0 0
  %4523 = vmatprep.subr.bf16.mxu0 0
  %4524 = vmatpush1.bf16.msra.mxu0 0
  %4525 = vmatprep.subr.bf16.mxu0 0
  %4526 = vmatpush1.bf16.msra.mxu0 0
  %4527 = vmatprep.subr.bf16.mxu0 0
  %4528 = vmatpush1.bf16.msra.mxu0 0
  %4529 = vmatprep.subr.bf16.mxu0 0
  %4530 = vmatpush1.bf16.msra.mxu0 0
  %4531 = vmatprep.subr.bf16.mxu0 0
  %4532 = vmatpush1.bf16.msra.mxu0 0
  %4533 = vmatprep.mubr.bf16.mxu0 0
  %4534 = vmatmul.mubr.bf16.gmra.mrb[0].mxu0 %v4459
  %v4535 = vpop.f32.mrb[0].mxu0
  %v4536 = vadd.f32 %v4496, %v4535
  %v4537 = vpop.f32.mrb[0].mxu0
  %v4538 = vpop.f32.mrb[0].mxu0
  %v4539 = vpop.f32.mrb[0].mxu0
  %4540 = vdwg.mxu0
  %v4541 = vmax.f32 %v4536, 0.0
  %v4542 = vpack.c.bf16 %v4541, %v4541
  %v4544 = vunpack.c.l.b16 %v4542
  %v4545 = vpack.c.b16 %v4544, %v4544
  %4546 = vrot.lane.b32.xlu0 %v4545, 32
  %v4547 = vpop.permute.xlu0 %4546
  %4549 = vst.msk [vmem:[#allocation3 + $0x8] sm:$0xf] %vm3619, %v4547
  %v4550 = vld [vmem:[%s804 + $0x4] sm:$0xf]
  %v4551 = vld [vmem:[%s1007 + $0x4] sm:$0xf]
  %v4552 = vld [vmem:[%s1210 + $0x4] sm:$0xf]
  %v4554 = vunpack.c.l.b16 %v4550
  %v4555 = vpack.c.b16 %v4554, %v4554
  %4556 = vrot.lane.b32.xlu0 %v4555, 96
  %v4557 = vpop.permute.xlu0 %4556
  %v4559 = vunpack.c.l.b16 %v4551
  %v4560 = vpack.c.b16 %v4559, %v4559
  %4561 = vrot.lane.b32.xlu0 %v4560, 64
  %v4562 = vpop.permute.xlu0 %4561
  %v4564 = vunpack.c.l.b16 %v4552
  %v4565 = vpack.c.b16 %v4564, %v4564
  %4566 = vrot.lane.b32.xlu0 %v4565, 32
  %v4567 = vpop.permute.xlu0 %4566
  %v4570 = vsel %vm493, %v4557, %v4562
  %v4573 = vsel %vm3307, %v4562, %v4567
  %v4575 = vsel %vm3286, %v4567, 0
  %4577 = vmatprep.subr.bf16.mxu0 0
  %4578 = vmatpush1.bf16.msra.mxu0 %v3389
  %4579 = vmatprep.subr.bf16.mxu0 0
  %4580 = vmatpush1.bf16.msra.mxu0 %v3390
  %4581 = vmatprep.subr.bf16.mxu0 0
  %4582 = vmatpush1.bf16.msra.mxu0 %v3391
  %4583 = vmatprep.subr.bf16.mxu0 0
  %4584 = vmatpush1.bf16.msra.mxu0 %v3392
  %4585 = vmatprep.subr.bf16.mxu0 0
  %4586 = vmatpush1.bf16.msra.mxu0 %v3393
  %4587 = vmatprep.subr.bf16.mxu0 0
  %4588 = vmatpush1.bf16.msra.mxu0 %v3394
  %4589 = vmatprep.subr.bf16.mxu0 0
  %4590 = vmatpush1.bf16.msra.mxu0 %v3395
  %4591 = vmatprep.subr.bf16.mxu0 0
  %4592 = vmatpush1.bf16.msra.mxu0 %v3396
  %4593 = vmatprep.subr.bf16.mxu0 0
  %4594 = vmatpush1.bf16.msra.mxu0 %v3397
  %4595 = vmatprep.subr.bf16.mxu0 0
  %4596 = vmatpush1.bf16.msra.mxu0 %v3398
  %4597 = vmatprep.subr.bf16.mxu0 0
  %4598 = vmatpush1.bf16.msra.mxu0 %v3399
  %4599 = vmatprep.subr.bf16.mxu0 0
  %4600 = vmatpush1.bf16.msra.mxu0 %v3400
  %4601 = vmatprep.subr.bf16.mxu0 0
  %4602 = vmatpush1.bf16.msra.mxu0 %v3401
  %4603 = vmatprep.subr.bf16.mxu0 0
  %4604 = vmatpush1.bf16.msra.mxu0 %v3402
  %4605 = vmatprep.subr.bf16.mxu0 0
  %4606 = vmatpush1.bf16.msra.mxu0 %v3403
  %4607 = vmatprep.subr.bf16.mxu0 0
  %4608 = vmatpush1.bf16.msra.mxu0 %v3404
  %4609 = vmatprep.mubr.bf16.mxu0 %v4573
  %4610 = vmatmul.mubr.bf16.gmra.mrb[0].mxu0 %v4570
  %v4611 = vpop.f32.mrb[0].mxu0
  %v4612 = vadd.f32 %v3315, %v4611
  %v4613 = vpop.f32.mrb[0].mxu0
  %v4614 = vpop.f32.mrb[0].mxu0
  %v4615 = vpop.f32.mrb[0].mxu0
  %4616 = vdwg.mxu0
  %4617 = vmatprep.subr.bf16.mxu0 0
  %4618 = vmatpush1.bf16.msra.mxu0 %v3405
  %4619 = vmatprep.subr.bf16.mxu0 0
  %4620 = vmatpush1.bf16.msra.mxu0 %v3406
  %4621 = vmatprep.subr.bf16.mxu0 0
  %4622 = vmatpush1.bf16.msra.mxu0 0
  %4623 = vmatprep.subr.bf16.mxu0 0
  %4624 = vmatpush1.bf16.msra.mxu0 0
  %4625 = vmatprep.subr.bf16.mxu0 0
  %4626 = vmatpush1.bf16.msra.mxu0 0
  %4627 = vmatprep.subr.bf16.mxu0 0
  %4628 = vmatpush1.bf16.msra.mxu0 0
  %4629 = vmatprep.subr.bf16.mxu0 0
  %4630 = vmatpush1.bf16.msra.mxu0 0
  %4631 = vmatprep.subr.bf16.mxu0 0
  %4632 = vmatpush1.bf16.msra.mxu0 0
  %4633 = vmatprep.subr.bf16.mxu0 0
  %4634 = vmatpush1.bf16.msra.mxu0 0
  %4635 = vmatprep.subr.bf16.mxu0 0
  %4636 = vmatpush1.bf16.msra.mxu0 0
  %4637 = vmatprep.subr.bf16.mxu0 0
  %4638 = vmatpush1.bf16.msra.mxu0 0
  %4639 = vmatprep.subr.bf16.mxu0 0
  %4640 = vmatpush1.bf16.msra.mxu0 0
  %4641 = vmatprep.subr.bf16.mxu0 0
  %4642 = vmatpush1.bf16.msra.mxu0 0
  %4643 = vmatprep.subr.bf16.mxu0 0
  %4644 = vmatpush1.bf16.msra.mxu0 0
  %4645 = vmatprep.subr.bf16.mxu0 0
  %4646 = vmatpush1.bf16.msra.mxu0 0
  %4647 = vmatprep.subr.bf16.mxu0 0
  %4648 = vmatpush1.bf16.msra.mxu0 0
  %4649 = vmatprep.mubr.bf16.mxu0 0
  %4650 = vmatmul.mubr.bf16.gmra.mrb[0].mxu0 %v4575
  %v4651 = vpop.f32.mrb[0].mxu0
  %v4652 = vadd.f32 %v4612, %v4651
  %v4653 = vpop.f32.mrb[0].mxu0
  %v4654 = vpop.f32.mrb[0].mxu0
  %v4655 = vpop.f32.mrb[0].mxu0
  %4656 = vdwg.mxu0
  %v4657 = vmax.f32 %v4652, 0.0
  %v4658 = vpack.c.bf16 %v4657, %v4657
  %v4660 = vunpack.c.l.b16 %v4658
  %v4661 = vpack.c.b16 %v4660, %v4660
  %4662 = vrot.lane.b32.xlu0 %v4661, 64
  %v4663 = vpop.permute.xlu0 %4662
  %4665 = vst.msk [vmem:[#allocation3 + $0x8] sm:$0xf] %vm3737, %v4663
  %v4666 = vld [vmem:[%s804 + $0x4] sm:$0xff]
  %v4667 = vld [vmem:[%s1007 + $0x4] sm:$0xff]
  %v4668 = vld [vmem:[%s1210 + $0x4] sm:$0xff]
  %v4670 = vunpack.c.l.b16 %v4666
  %v4671 = vunpack.c.h.b16 %v4666
  %v4672 = vpack.c.b16 %v4670, %v4670
  %v4673 = vpack.c.b16 %v4671, %v4671
  %4674 = vrot.lane.b32.xlu0 %v4672, 32
  %v4675 = vpop.permute.xlu0 %4674
  %4676 = vrot.lane.b32.xlu0 %v4673, 32
  %v4677 = vpop.permute.xlu0 %4676
  %v4678 = vsel %vm4433, %v4675, %v4677
  %v4680 = vunpack.c.l.b16 %v4667
  %v4681 = vunpack.c.h.b16 %v4667
  %v4682 = vpack.c.b16 %v4680, %v4680
  %v4683 = vpack.c.b16 %v4681, %v4681
  %v4685 = vunpack.c.l.b16 %v4668
  %v4686 = vunpack.c.h.b16 %v4668
  %v4687 = vpack.c.b16 %v4685, %v4685
  %v4688 = vpack.c.b16 %v4686, %v4686
  %4689 = vrot.lane.b32.xlu0 %v4687, 96
  %v4690 = vpop.permute.xlu0 %4689
  %4691 = vrot.lane.b32.xlu0 %v4688, 96
  %v4692 = vpop.permute.xlu0 %4691
  %v4693 = vsel %vm3637, %v4690, %v4692
  %v4696 = vsel %vm493, %v4678, %v4682
  %v4700 = vsel %vm3307, %v4683, %v4693
  %v4703 = vsel %vm3286, %v4692, 0
  %4705 = vmatprep.subr.bf16.mxu0 0
  %4706 = vmatpush1.bf16.msra.mxu0 %v3389
  %4707 = vmatprep.subr.bf16.mxu0 0
  %4708 = vmatpush1.bf16.msra.mxu0 %v3390
  %4709 = vmatprep.subr.bf16.mxu0 0
  %4710 = vmatpush1.bf16.msra.mxu0 %v3391
  %4711 = vmatprep.subr.bf16.mxu0 0
  %4712 = vmatpush1.bf16.msra.mxu0 %v3392
  %4713 = vmatprep.subr.bf16.mxu0 0
  %4714 = vmatpush1.bf16.msra.mxu0 %v3393
  %4715 = vmatprep.subr.bf16.mxu0 0
  %4716 = vmatpush1.bf16.msra.mxu0 %v3394
  %4717 = vmatprep.subr.bf16.mxu0 0
  %4718 = vmatpush1.bf16.msra.mxu0 %v3395
  %4719 = vmatprep.subr.bf16.mxu0 0
  %4720 = vmatpush1.bf16.msra.mxu0 %v3396
  %4721 = vmatprep.subr.bf16.mxu0 0
  %4722 = vmatpush1.bf16.msra.mxu0 %v3397
  %4723 = vmatprep.subr.bf16.mxu0 0
  %4724 = vmatpush1.bf16.msra.mxu0 %v3398
  %4725 = vmatprep.subr.bf16.mxu0 0
  %4726 = vmatpush1.bf16.msra.mxu0 %v3399
  %4727 = vmatprep.subr.bf16.mxu0 0
  %4728 = vmatpush1.bf16.msra.mxu0 %v3400
  %4729 = vmatprep.subr.bf16.mxu0 0
  %4730 = vmatpush1.bf16.msra.mxu0 %v3401
  %4731 = vmatprep.subr.bf16.mxu0 0
  %4732 = vmatpush1.bf16.msra.mxu0 %v3402
  %4733 = vmatprep.subr.bf16.mxu0 0
  %4734 = vmatpush1.bf16.msra.mxu0 %v3403
  %4735 = vmatprep.subr.bf16.mxu0 0
  %4736 = vmatpush1.bf16.msra.mxu0 %v3404
  %4737 = vmatprep.mubr.bf16.mxu0 %v4700
  %4738 = vmatmul.mubr.bf16.gmra.mrb[0].mxu0 %v4696
  %v4739 = vpop.f32.mrb[0].mxu0
  %v4740 = vadd.f32 %v3315, %v4739
  %v4741 = vpop.f32.mrb[0].mxu0
  %v4742 = vpop.f32.mrb[0].mxu0
  %v4743 = vpop.f32.mrb[0].mxu0
  %4744 = vdwg.mxu0
  %4745 = vmatprep.subr.bf16.mxu0 0
  %4746 = vmatpush1.bf16.msra.mxu0 %v3405
  %4747 = vmatprep.subr.bf16.mxu0 0
  %4748 = vmatpush1.bf16.msra.mxu0 %v3406
  %4749 = vmatprep.subr.bf16.mxu0 0
  %4750 = vmatpush1.bf16.msra.mxu0 0
  %4751 = vmatprep.subr.bf16.mxu0 0
  %4752 = vmatpush1.bf16.msra.mxu0 0
  %4753 = vmatprep.subr.bf16.mxu0 0
  %4754 = vmatpush1.bf16.msra.mxu0 0
  %4755 = vmatprep.subr.bf16.mxu0 0
  %4756 = vmatpush1.bf16.msra.mxu0 0
  %4757 = vmatprep.subr.bf16.mxu0 0
  %4758 = vmatpush1.bf16.msra.mxu0 0
  %4759 = vmatprep.subr.bf16.mxu0 0
  %4760 = vmatpush1.bf16.msra.mxu0 0
  %4761 = vmatprep.subr.bf16.mxu0 0
  %4762 = vmatpush1.bf16.msra.mxu0 0
  %4763 = vmatprep.subr.bf16.mxu0 0
  %4764 = vmatpush1.bf16.msra.mxu0 0
  %4765 = vmatprep.subr.bf16.mxu0 0
  %4766 = vmatpush1.bf16.msra.mxu0 0
  %4767 = vmatprep.subr.bf16.mxu0 0
  %4768 = vmatpush1.bf16.msra.mxu0 0
  %4769 = vmatprep.subr.bf16.mxu0 0
  %4770 = vmatpush1.bf16.msra.mxu0 0
  %4771 = vmatprep.subr.bf16.mxu0 0
  %4772 = vmatpush1.bf16.msra.mxu0 0
  %4773 = vmatprep.subr.bf16.mxu0 0
  %4774 = vmatpush1.bf16.msra.mxu0 0
  %4775 = vmatprep.subr.bf16.mxu0 0
  %4776 = vmatpush1.bf16.msra.mxu0 0
  %4777 = vmatprep.mubr.bf16.mxu0 0
  %4778 = vmatmul.mubr.bf16.gmra.mrb[0].mxu0 %v4703
  %v4779 = vpop.f32.mrb[0].mxu0
  %v4780 = vadd.f32 %v4740, %v4779
  %v4781 = vpop.f32.mrb[0].mxu0
  %v4782 = vpop.f32.mrb[0].mxu0
  %v4783 = vpop.f32.mrb[0].mxu0
  %4784 = vdwg.mxu0
  %v4785 = vmax.f32 %v4780, 0.0
  %v4786 = vpack.c.bf16 %v4785, %v4785
  %v4788 = vunpack.c.l.b16 %v4786
  %v4789 = vpack.c.b16 %v4788, %v4788
  %4790 = vrot.lane.b32.xlu0 %v4789, 96
  %v4791 = vpop.permute.xlu0 %4790
  %4793 = vst.msk [vmem:[#allocation3 + $0x8] sm:$0xf] %vm3847, %v4791
  %v4794 = vld [vmem:[%s804 + $0x8] sm:$0xf]
  %v4795 = vld [vmem:[%s1007 + $0x8] sm:$0xf]
  %v4796 = vld [vmem:[%s1210 + $0x8] sm:$0xf]
  %v4798 = vunpack.c.l.b16 %v4794
  %v4799 = vpack.c.b16 %v4798, %v4798
  %4800 = vrot.lane.b32.xlu0 %v4799, 96
  %v4801 = vpop.permute.xlu0 %4800
  %v4803 = vunpack.c.l.b16 %v4795
  %v4804 = vpack.c.b16 %v4803, %v4803
  %4805 = vrot.lane.b32.xlu0 %v4804, 64
  %v4806 = vpop.permute.xlu0 %4805
  %v4808 = vunpack.c.l.b16 %v4796
  %v4809 = vpack.c.b16 %v4808, %v4808
  %4810 = vrot.lane.b32.xlu0 %v4809, 32
  %v4811 = vpop.permute.xlu0 %4810
  %v4814 = vsel %vm493, %v4801, %v4806
  %v4817 = vsel %vm3307, %v4806, %v4811
  %v4819 = vsel %vm3286, %v4811, 0
  %4821 = vmatprep.subr.bf16.mxu0 0
  %4822 = vmatpush1.bf16.msra.mxu0 %v3389
  %4823 = vmatprep.subr.bf16.mxu0 0
  %4824 = vmatpush1.bf16.msra.mxu0 %v3390
  %4825 = vmatprep.subr.bf16.mxu0 0
  %4826 = vmatpush1.bf16.msra.mxu0 %v3391
  %4827 = vmatprep.subr.bf16.mxu0 0
  %4828 = vmatpush1.bf16.msra.mxu0 %v3392
  %4829 = vmatprep.subr.bf16.mxu0 0
  %4830 = vmatpush1.bf16.msra.mxu0 %v3393
  %4831 = vmatprep.subr.bf16.mxu0 0
  %4832 = vmatpush1.bf16.msra.mxu0 %v3394
  %4833 = vmatprep.subr.bf16.mxu0 0
  %4834 = vmatpush1.bf16.msra.mxu0 %v3395
  %4835 = vmatprep.subr.bf16.mxu0 0
  %4836 = vmatpush1.bf16.msra.mxu0 %v3396
  %4837 = vmatprep.subr.bf16.mxu0 0
  %4838 = vmatpush1.bf16.msra.mxu0 %v3397
  %4839 = vmatprep.subr.bf16.mxu0 0
  %4840 = vmatpush1.bf16.msra.mxu0 %v3398
  %4841 = vmatprep.subr.bf16.mxu0 0
  %4842 = vmatpush1.bf16.msra.mxu0 %v3399
  %4843 = vmatprep.subr.bf16.mxu0 0
  %4844 = vmatpush1.bf16.msra.mxu0 %v3400
  %4845 = vmatprep.subr.bf16.mxu0 0
  %4846 = vmatpush1.bf16.msra.mxu0 %v3401
  %4847 = vmatprep.subr.bf16.mxu0 0
  %4848 = vmatpush1.bf16.msra.mxu0 %v3402
  %4849 = vmatprep.subr.bf16.mxu0 0
  %4850 = vmatpush1.bf16.msra.mxu0 %v3403
  %4851 = vmatprep.subr.bf16.mxu0 0
  %4852 = vmatpush1.bf16.msra.mxu0 %v3404
  %4853 = vmatprep.mubr.bf16.mxu0 %v4817
  %4854 = vmatmul.mubr.bf16.gmra.mrb[0].mxu0 %v4814
  %v4855 = vpop.f32.mrb[0].mxu0
  %v4856 = vadd.f32 %v3315, %v4855
  %v4857 = vpop.f32.mrb[0].mxu0
  %v4858 = vpop.f32.mrb[0].mxu0
  %v4859 = vpop.f32.mrb[0].mxu0
  %4860 = vdwg.mxu0
  %4861 = vmatprep.subr.bf16.mxu0 0
  %4862 = vmatpush1.bf16.msra.mxu0 %v3405
  %4863 = vmatprep.subr.bf16.mxu0 0
  %4864 = vmatpush1.bf16.msra.mxu0 %v3406
  %4865 = vmatprep.subr.bf16.mxu0 0
  %4866 = vmatpush1.bf16.msra.mxu0 0
  %4867 = vmatprep.subr.bf16.mxu0 0
  %4868 = vmatpush1.bf16.msra.mxu0 0
  %4869 = vmatprep.subr.bf16.mxu0 0
  %4870 = vmatpush1.bf16.msra.mxu0 0
  %4871 = vmatprep.subr.bf16.mxu0 0
  %4872 = vmatpush1.bf16.msra.mxu0 0
  %4873 = vmatprep.subr.bf16.mxu0 0
  %4874 = vmatpush1.bf16.msra.mxu0 0
  %4875 = vmatprep.subr.bf16.mxu0 0
  %4876 = vmatpush1.bf16.msra.mxu0 0
  %4877 = vmatprep.subr.bf16.mxu0 0
  %4878 = vmatpush1.bf16.msra.mxu0 0
  %4879 = vmatprep.subr.bf16.mxu0 0
  %4880 = vmatpush1.bf16.msra.mxu0 0
  %4881 = vmatprep.subr.bf16.mxu0 0
  %4882 = vmatpush1.bf16.msra.mxu0 0
  %4883 = vmatprep.subr.bf16.mxu0 0
  %4884 = vmatpush1.bf16.msra.mxu0 0
  %4885 = vmatprep.subr.bf16.mxu0 0
  %4886 = vmatpush1.bf16.msra.mxu0 0
  %4887 = vmatprep.subr.bf16.mxu0 0
  %4888 = vmatpush1.bf16.msra.mxu0 0
  %4889 = vmatprep.subr.bf16.mxu0 0
  %4890 = vmatpush1.bf16.msra.mxu0 0
  %4891 = vmatprep.subr.bf16.mxu0 0
  %4892 = vmatpush1.bf16.msra.mxu0 0
  %4893 = vmatprep.mubr.bf16.mxu0 0
  %4894 = vmatmul.mubr.bf16.gmra.mrb[0].mxu0 %v4819
  %v4895 = vpop.f32.mrb[0].mxu0
  %v4896 = vadd.f32 %v4856, %v4895
  %v4897 = vpop.f32.mrb[0].mxu0
  %v4898 = vpop.f32.mrb[0].mxu0
  %v4899 = vpop.f32.mrb[0].mxu0
  %4900 = vdwg.mxu0
  %v4901 = vmax.f32 %v4896, 0.0
  %v4902 = vpack.c.bf16 %v4901, %v4901
  %4903 = vst.msk [vmem:[#allocation3 + $0xc] sm:$0xf] %vm3509, %v4902
  %v4904 = vld [vmem:[%s804 + $0x8] sm:$0xff]
  %v4905 = vld [vmem:[%s1007 + $0x8] sm:$0xff]
  %v4906 = vld [vmem:[%s1210 + $0x8] sm:$0xff]
  %v4908 = vunpack.c.l.b16 %v4904
  %v4909 = vunpack.c.h.b16 %v4904
  %v4910 = vpack.c.b16 %v4908, %v4908
  %v4911 = vpack.c.b16 %v4909, %v4909
  %4912 = vrot.lane.b32.xlu0 %v4910, 32
  %v4913 = vpop.permute.xlu0 %4912
  %4914 = vrot.lane.b32.xlu0 %v4911, 32
  %v4915 = vpop.permute.xlu0 %4914
  %v4916 = vsel %vm4433, %v4913, %v4915
  %v4918 = vunpack.c.l.b16 %v4905
  %v4919 = vunpack.c.h.b16 %v4905
  %v4920 = vpack.c.b16 %v4918, %v4918
  %v4921 = vpack.c.b16 %v4919, %v4919
  %v4923 = vunpack.c.l.b16 %v4906
  %v4924 = vunpack.c.h.b16 %v4906
  %v4925 = vpack.c.b16 %v4923, %v4923
  %v4926 = vpack.c.b16 %v4924, %v4924
  %4927 = vrot.lane.b32.xlu0 %v4925, 96
  %v4928 = vpop.permute.xlu0 %4927
  %4929 = vrot.lane.b32.xlu0 %v4926, 96
  %v4930 = vpop.permute.xlu0 %4929
  %v4931 = vsel %vm3637, %v4928, %v4930
  %v4934 = vsel %vm493, %v4916, %v4920
  %v4938 = vsel %vm3307, %v4921, %v4931
  %v4941 = vsel %vm3286, %v4930, 0
  %4943 = vmatprep.subr.bf16.mxu0 0
  %4944 = vmatpush1.bf16.msra.mxu0 %v3389
  %4945 = vmatprep.subr.bf16.mxu0 0
  %4946 = vmatpush1.bf16.msra.mxu0 %v3390
  %4947 = vmatprep.subr.bf16.mxu0 0
  %4948 = vmatpush1.bf16.msra.mxu0 %v3391
  %4949 = vmatprep.subr.bf16.mxu0 0
  %4950 = vmatpush1.bf16.msra.mxu0 %v3392
  %4951 = vmatprep.subr.bf16.mxu0 0
  %4952 = vmatpush1.bf16.msra.mxu0 %v3393
  %4953 = vmatprep.subr.bf16.mxu0 0
  %4954 = vmatpush1.bf16.msra.mxu0 %v3394
  %4955 = vmatprep.subr.bf16.mxu0 0
  %4956 = vmatpush1.bf16.msra.mxu0 %v3395
  %4957 = vmatprep.subr.bf16.mxu0 0
  %4958 = vmatpush1.bf16.msra.mxu0 %v3396
  %4959 = vmatprep.subr.bf16.mxu0 0
  %4960 = vmatpush1.bf16.msra.mxu0 %v3397
  %4961 = vmatprep.subr.bf16.mxu0 0
  %4962 = vmatpush1.bf16.msra.mxu0 %v3398
  %4963 = vmatprep.subr.bf16.mxu0 0
  %4964 = vmatpush1.bf16.msra.mxu0 %v3399
  %4965 = vmatprep.subr.bf16.mxu0 0
  %4966 = vmatpush1.bf16.msra.mxu0 %v3400
  %4967 = vmatprep.subr.bf16.mxu0 0
  %4968 = vmatpush1.bf16.msra.mxu0 %v3401
  %4969 = vmatprep.subr.bf16.mxu0 0
  %4970 = vmatpush1.bf16.msra.mxu0 %v3402
  %4971 = vmatprep.subr.bf16.mxu0 0
  %4972 = vmatpush1.bf16.msra.mxu0 %v3403
  %4973 = vmatprep.subr.bf16.mxu0 0
  %4974 = vmatpush1.bf16.msra.mxu0 %v3404
  %4975 = vmatprep.mubr.bf16.mxu0 %v4938
  %4976 = vmatmul.mubr.bf16.gmra.mrb[0].mxu0 %v4934
  %v4977 = vpop.f32.mrb[0].mxu0
  %v4978 = vadd.f32 %v3315, %v4977
  %v4979 = vpop.f32.mrb[0].mxu0
  %v4980 = vpop.f32.mrb[0].mxu0
  %v4981 = vpop.f32.mrb[0].mxu0
  %4982 = vdwg.mxu0
  %4983 = vmatprep.subr.bf16.mxu0 0
  %4984 = vmatpush1.bf16.msra.mxu0 %v3405
  %4985 = vmatprep.subr.bf16.mxu0 0
  %4986 = vmatpush1.bf16.msra.mxu0 %v3406
  %4987 = vmatprep.subr.bf16.mxu0 0
  %4988 = vmatpush1.bf16.msra.mxu0 0
  %4989 = vmatprep.subr.bf16.mxu0 0
  %4990 = vmatpush1.bf16.msra.mxu0 0
  %4991 = vmatprep.subr.bf16.mxu0 0
  %4992 = vmatpush1.bf16.msra.mxu0 0
  %4993 = vmatprep.subr.bf16.mxu0 0
  %4994 = vmatpush1.bf16.msra.mxu0 0
  %4995 = vmatprep.subr.bf16.mxu0 0
  %4996 = vmatpush1.bf16.msra.mxu0 0
  %4997 = vmatprep.subr.bf16.mxu0 0
  %4998 = vmatpush1.bf16.msra.mxu0 0
  %4999 = vmatprep.subr.bf16.mxu0 0
  %5000 = vmatpush1.bf16.msra.mxu0 0
  %5001 = vmatprep.subr.bf16.mxu0 0
  %5002 = vmatpush1.bf16.msra.mxu0 0
  %5003 = vmatprep.subr.bf16.mxu0 0
  %5004 = vmatpush1.bf16.msra.mxu0 0
  %5005 = vmatprep.subr.bf16.mxu0 0
  %5006 = vmatpush1.bf16.msra.mxu0 0
  %5007 = vmatprep.subr.bf16.mxu0 0
  %5008 = vmatpush1.bf16.msra.mxu0 0
  %5009 = vmatprep.subr.bf16.mxu0 0
  %5010 = vmatpush1.bf16.msra.mxu0 0
  %5011 = vmatprep.subr.bf16.mxu0 0
  %5012 = vmatpush1.bf16.msra.mxu0 0
  %5013 = vmatprep.subr.bf16.mxu0 0
  %5014 = vmatpush1.bf16.msra.mxu0 0
  %5015 = vmatprep.mubr.bf16.mxu0 0
  %5016 = vmatmul.mubr.bf16.gmra.mrb[0].mxu0 %v4941
  %v5017 = vpop.f32.mrb[0].mxu0
  %v5018 = vadd.f32 %v4978, %v5017
  %v5019 = vpop.f32.mrb[0].mxu0
  %v5020 = vpop.f32.mrb[0].mxu0
  %v5021 = vpop.f32.mrb[0].mxu0
  %5022 = vdwg.mxu0
  %v5023 = vmax.f32 %v5018, 0.0
  %v5024 = vpack.c.bf16 %v5023, %v5023
  %v5026 = vunpack.c.l.b16 %v5024
  %v5027 = vpack.c.b16 %v5026, %v5026
  %5028 = vrot.lane.b32.xlu0 %v5027, 32
  %v5029 = vpop.permute.xlu0 %5028
  %5031 = vst.msk [vmem:[#allocation3 + $0xc] sm:$0xf] %vm3619, %v5029
  %v5032 = vld [vmem:[%s1210] sm:$0xf]
  %v5034 = vunpack.c.l.b16 %v5032
  %v5035 = vpack.c.b16 %v5034, %v5034
  %5036 = vrot.lane.b32.xlu0 %v5035, 32
  %v5037 = vpop.permute.xlu0 %5036
  %v5039 = vsel %vm3286, 0, %v5037
  %v5040 = vld [vmem:[%s1413] sm:$0xf]
  %v5042 = vunpack.c.l.b16 %v5040
  %v5043 = vpack.c.b16 %v5042, %v5042
  %5044 = vrot.lane.b32.xlu0 %v5043, 32
  %v5045 = vpop.permute.xlu0 %5044
  %v5047 = vsel %vm3286, 0, %v5045
  %v5048 = vld [vmem:[%s1616] sm:$0xf]
  %v5050 = vunpack.c.l.b16 %v5048
  %v5051 = vpack.c.b16 %v5050, %v5050
  %5052 = vrot.lane.b32.xlu0 %v5051, 32
  %v5053 = vpop.permute.xlu0 %5052
  %v5055 = vsel %vm3286, 0, %v5053
  %5057 = vrot.lane.b32.xlu0 %v5047, 96
  %v5058 = vpop.permute.xlu0 %5057
  %5060 = vrot.lane.b32.xlu0 %v5055, 64
  %v5061 = vpop.permute.xlu0 %5060
  %v5063 = vsel %vm493, %v5039, %v5058
  %v5066 = vsel %vm3307, %v5058, %v5061
  %v5068 = vsel %vm3286, %v5061, 0
  %5070 = vmatprep.subr.bf16.mxu0 0
  %5071 = vmatpush1.bf16.msra.mxu0 %v3389
  %5072 = vmatprep.subr.bf16.mxu0 0
  %5073 = vmatpush1.bf16.msra.mxu0 %v3390
  %5074 = vmatprep.subr.bf16.mxu0 0
  %5075 = vmatpush1.bf16.msra.mxu0 %v3391
  %5076 = vmatprep.subr.bf16.mxu0 0
  %5077 = vmatpush1.bf16.msra.mxu0 %v3392
  %5078 = vmatprep.subr.bf16.mxu0 0
  %5079 = vmatpush1.bf16.msra.mxu0 %v3393
  %5080 = vmatprep.subr.bf16.mxu0 0
  %5081 = vmatpush1.bf16.msra.mxu0 %v3394
  %5082 = vmatprep.subr.bf16.mxu0 0
  %5083 = vmatpush1.bf16.msra.mxu0 %v3395
  %5084 = vmatprep.subr.bf16.mxu0 0
  %5085 = vmatpush1.bf16.msra.mxu0 %v3396
  %5086 = vmatprep.subr.bf16.mxu0 0
  %5087 = vmatpush1.bf16.msra.mxu0 %v3397
  %5088 = vmatprep.subr.bf16.mxu0 0
  %5089 = vmatpush1.bf16.msra.mxu0 %v3398
  %5090 = vmatprep.subr.bf16.mxu0 0
  %5091 = vmatpush1.bf16.msra.mxu0 %v3399
  %5092 = vmatprep.subr.bf16.mxu0 0
  %5093 = vmatpush1.bf16.msra.mxu0 %v3400
  %5094 = vmatprep.subr.bf16.mxu0 0
  %5095 = vmatpush1.bf16.msra.mxu0 %v3401
  %5096 = vmatprep.subr.bf16.mxu0 0
  %5097 = vmatpush1.bf16.msra.mxu0 %v3402
  %5098 = vmatprep.subr.bf16.mxu0 0
  %5099 = vmatpush1.bf16.msra.mxu0 %v3403
  %5100 = vmatprep.subr.bf16.mxu0 0
  %5101 = vmatpush1.bf16.msra.mxu0 %v3404
  %5102 = vmatprep.mubr.bf16.mxu0 %v5066
  %5103 = vmatmul.mubr.bf16.gmra.mrb[0].mxu0 %v5063
  %v5104 = vpop.f32.mrb[0].mxu0
  %v5105 = vadd.f32 %v3315, %v5104
  %v5106 = vpop.f32.mrb[0].mxu0
  %v5107 = vpop.f32.mrb[0].mxu0
  %v5108 = vpop.f32.mrb[0].mxu0
  %5109 = vdwg.mxu0
  %5110 = vmatprep.subr.bf16.mxu0 0
  %5111 = vmatpush1.bf16.msra.mxu0 %v3405
  %5112 = vmatprep.subr.bf16.mxu0 0
  %5113 = vmatpush1.bf16.msra.mxu0 %v3406
  %5114 = vmatprep.subr.bf16.mxu0 0
  %5115 = vmatpush1.bf16.msra.mxu0 0
  %5116 = vmatprep.subr.bf16.mxu0 0
  %5117 = vmatpush1.bf16.msra.mxu0 0
  %5118 = vmatprep.subr.bf16.mxu0 0
  %5119 = vmatpush1.bf16.msra.mxu0 0
  %5120 = vmatprep.subr.bf16.mxu0 0
  %5121 = vmatpush1.bf16.msra.mxu0 0
  %5122 = vmatprep.subr.bf16.mxu0 0
  %5123 = vmatpush1.bf16.msra.mxu0 0
  %5124 = vmatprep.subr.bf16.mxu0 0
  %5125 = vmatpush1.bf16.msra.mxu0 0
  %5126 = vmatprep.subr.bf16.mxu0 0
  %5127 = vmatpush1.bf16.msra.mxu0 0
  %5128 = vmatprep.subr.bf16.mxu0 0
  %5129 = vmatpush1.bf16.msra.mxu0 0
  %5130 = vmatprep.subr.bf16.mxu0 0
  %5131 = vmatpush1.bf16.msra.mxu0 0
  %5132 = vmatprep.subr.bf16.mxu0 0
  %5133 = vmatpush1.bf16.msra.mxu0 0
  %5134 = vmatprep.subr.bf16.mxu0 0
  %5135 = vmatpush1.bf16.msra.mxu0 0
  %5136 = vmatprep.subr.bf16.mxu0 0
  %5137 = vmatpush1.bf16.msra.mxu0 0
  %5138 = vmatprep.subr.bf16.mxu0 0
  %5139 = vmatpush1.bf16.msra.mxu0 0
  %5140 = vmatprep.subr.bf16.mxu0 0
  %5141 = vmatpush1.bf16.msra.mxu0 0
  %5142 = vmatprep.mubr.bf16.mxu0 0
  %5143 = vmatmul.mubr.bf16.gmra.mrb[0].mxu0 %v5068
  %v5144 = vpop.f32.mrb[0].mxu0
  %v5145 = vadd.f32 %v5105, %v5144
  %v5146 = vpop.f32.mrb[0].mxu0
  %v5147 = vpop.f32.mrb[0].mxu0
  %v5148 = vpop.f32.mrb[0].mxu0
  %5149 = vdwg.mxu0
  %v5150 = vmax.f32 %v5145, 0.0
  %v5151 = vpack.c.bf16 %v5150, %v5150
  %v5153 = vunpack.c.l.b16 %v5151
  %v5154 = vpack.c.b16 %v5153, %v5153
  %5155 = vrot.lane.b32.xlu0 %v5154, 64
  %v5156 = vpop.permute.xlu0 %5155
  %5158 = vst.msk [vmem:[#allocation3 + $0xc] sm:$0xf] %vm3737, %v5156
  %v5159 = vld [vmem:[%s1210] sm:$0xf]
  %v5160 = vld [vmem:[%s1413] sm:$0xf]
  %v5161 = vld [vmem:[%s1616] sm:$0xf]
  %v5163 = vunpack.c.l.b16 %v5159
  %v5164 = vpack.c.b16 %v5163, %v5163
  %5165 = vrot.lane.b32.xlu0 %v5164, 96
  %v5166 = vpop.permute.xlu0 %5165
  %v5168 = vunpack.c.l.b16 %v5160
  %v5169 = vpack.c.b16 %v5168, %v5168
  %5170 = vrot.lane.b32.xlu0 %v5169, 64
  %v5171 = vpop.permute.xlu0 %5170
  %v5173 = vunpack.c.l.b16 %v5161
  %v5174 = vpack.c.b16 %v5173, %v5173
  %5175 = vrot.lane.b32.xlu0 %v5174, 32
  %v5176 = vpop.permute.xlu0 %5175
  %v5179 = vsel %vm493, %v5166, %v5171
  %v5182 = vsel %vm3307, %v5171, %v5176
  %v5184 = vsel %vm3286, %v5176, 0
  %5186 = vmatprep.subr.bf16.mxu0 0
  %5187 = vmatpush1.bf16.msra.mxu0 %v3389
  %5188 = vmatprep.subr.bf16.mxu0 0
  %5189 = vmatpush1.bf16.msra.mxu0 %v3390
  %5190 = vmatprep.subr.bf16.mxu0 0
  %5191 = vmatpush1.bf16.msra.mxu0 %v3391
  %5192 = vmatprep.subr.bf16.mxu0 0
  %5193 = vmatpush1.bf16.msra.mxu0 %v3392
  %5194 = vmatprep.subr.bf16.mxu0 0
  %5195 = vmatpush1.bf16.msra.mxu0 %v3393
  %5196 = vmatprep.subr.bf16.mxu0 0
  %5197 = vmatpush1.bf16.msra.mxu0 %v3394
  %5198 = vmatprep.subr.bf16.mxu0 0
  %5199 = vmatpush1.bf16.msra.mxu0 %v3395
  %5200 = vmatprep.subr.bf16.mxu0 0
  %5201 = vmatpush1.bf16.msra.mxu0 %v3396
  %5202 = vmatprep.subr.bf16.mxu0 0
  %5203 = vmatpush1.bf16.msra.mxu0 %v3397
  %5204 = vmatprep.subr.bf16.mxu0 0
  %5205 = vmatpush1.bf16.msra.mxu0 %v3398
  %5206 = vmatprep.subr.bf16.mxu0 0
  %5207 = vmatpush1.bf16.msra.mxu0 %v3399
  %5208 = vmatprep.subr.bf16.mxu0 0
  %5209 = vmatpush1.bf16.msra.mxu0 %v3400
  %5210 = vmatprep.subr.bf16.mxu0 0
  %5211 = vmatpush1.bf16.msra.mxu0 %v3401
  %5212 = vmatprep.subr.bf16.mxu0 0
  %5213 = vmatpush1.bf16.msra.mxu0 %v3402
  %5214 = vmatprep.subr.bf16.mxu0 0
  %5215 = vmatpush1.bf16.msra.mxu0 %v3403
  %5216 = vmatprep.subr.bf16.mxu0 0
  %5217 = vmatpush1.bf16.msra.mxu0 %v3404
  %5218 = vmatprep.mubr.bf16.mxu0 %v5182
  %5219 = vmatmul.mubr.bf16.gmra.mrb[0].mxu0 %v5179
  %v5220 = vpop.f32.mrb[0].mxu0
  %v5221 = vadd.f32 %v3315, %v5220
  %v5222 = vpop.f32.mrb[0].mxu0
  %v5223 = vpop.f32.mrb[0].mxu0
  %v5224 = vpop.f32.mrb[0].mxu0
  %5225 = vdwg.mxu0
  %5226 = vmatprep.subr.bf16.mxu0 0
  %5227 = vmatpush1.bf16.msra.mxu0 %v3405
  %5228 = vmatprep.subr.bf16.mxu0 0
  %5229 = vmatpush1.bf16.msra.mxu0 %v3406
  %5230 = vmatprep.subr.bf16.mxu0 0
  %5231 = vmatpush1.bf16.msra.mxu0 0
  %5232 = vmatprep.subr.bf16.mxu0 0
  %5233 = vmatpush1.bf16.msra.mxu0 0
  %5234 = vmatprep.subr.bf16.mxu0 0
  %5235 = vmatpush1.bf16.msra.mxu0 0
  %5236 = vmatprep.subr.bf16.mxu0 0
  %5237 = vmatpush1.bf16.msra.mxu0 0
  %5238 = vmatprep.subr.bf16.mxu0 0
  %5239 = vmatpush1.bf16.msra.mxu0 0
  %5240 = vmatprep.subr.bf16.mxu0 0
  %5241 = vmatpush1.bf16.msra.mxu0 0
  %5242 = vmatprep.subr.bf16.mxu0 0
  %5243 = vmatpush1.bf16.msra.mxu0 0
  %5244 = vmatprep.subr.bf16.mxu0 0
  %5245 = vmatpush1.bf16.msra.mxu0 0
  %5246 = vmatprep.subr.bf16.mxu0 0
  %5247 = vmatpush1.bf16.msra.mxu0 0
  %5248 = vmatprep.subr.bf16.mxu0 0
  %5249 = vmatpush1.bf16.msra.mxu0 0
  %5250 = vmatprep.subr.bf16.mxu0 0
  %5251 = vmatpush1.bf16.msra.mxu0 0
  %5252 = vmatprep.subr.bf16.mxu0 0
  %5253 = vmatpush1.bf16.msra.mxu0 0
  %5254 = vmatprep.subr.bf16.mxu0 0
  %5255 = vmatpush1.bf16.msra.mxu0 0
  %5256 = vmatprep.subr.bf16.mxu0 0
  %5257 = vmatpush1.bf16.msra.mxu0 0
  %5258 = vmatprep.mubr.bf16.mxu0 0
  %5259 = vmatmul.mubr.bf16.gmra.mrb[0].mxu0 %v5184
  %v5260 = vpop.f32.mrb[0].mxu0
  %v5261 = vadd.f32 %v5221, %v5260
  %v5262 = vpop.f32.mrb[0].mxu0
  %v5263 = vpop.f32.mrb[0].mxu0
  %v5264 = vpop.f32.mrb[0].mxu0
  %5265 = vdwg.mxu0
  %v5266 = vmax.f32 %v5261, 0.0
  %v5267 = vpack.c.bf16 %v5266, %v5266
  %v5269 = vunpack.c.l.b16 %v5267
  %v5270 = vpack.c.b16 %v5269, %v5269
  %5271 = vrot.lane.b32.xlu0 %v5270, 96
  %v5272 = vpop.permute.xlu0 %5271
  %5274 = vst.msk [vmem:[#allocation3 + $0xc] sm:$0xf] %vm3847, %v5272
  %v5275 = vld [vmem:[%s1210] sm:$0xff]
  %v5276 = vld [vmem:[%s1413] sm:$0xff]
  %v5277 = vld [vmem:[%s1616] sm:$0xff]
  %v5279 = vunpack.c.l.b16 %v5275
  %v5280 = vunpack.c.h.b16 %v5275
  %v5281 = vpack.c.b16 %v5279, %v5279
  %v5282 = vpack.c.b16 %v5280, %v5280
  %5283 = vrot.lane.b32.xlu0 %v5281, 32
  %v5284 = vpop.permute.xlu0 %5283
  %5285 = vrot.lane.b32.xlu0 %v5282, 32
  %v5286 = vpop.permute.xlu0 %5285
  %v5287 = vsel %vm4433, %v5284, %v5286
  %v5289 = vunpack.c.l.b16 %v5276
  %v5290 = vunpack.c.h.b16 %v5276
  %v5291 = vpack.c.b16 %v5289, %v5289
  %v5292 = vpack.c.b16 %v5290, %v5290
  %v5294 = vunpack.c.l.b16 %v5277
  %v5295 = vunpack.c.h.b16 %v5277
  %v5296 = vpack.c.b16 %v5294, %v5294
  %v5297 = vpack.c.b16 %v5295, %v5295
  %5298 = vrot.lane.b32.xlu0 %v5296, 96
  %v5299 = vpop.permute.xlu0 %5298
  %5300 = vrot.lane.b32.xlu0 %v5297, 96
  %v5301 = vpop.permute.xlu0 %5300
  %v5302 = vsel %vm3637, %v5299, %v5301
  %v5305 = vsel %vm493, %v5287, %v5291
  %v5309 = vsel %vm3307, %v5292, %v5302
  %v5312 = vsel %vm3286, %v5301, 0
  %5314 = vmatprep.subr.bf16.mxu0 0
  %5315 = vmatpush1.bf16.msra.mxu0 %v3389
  %5316 = vmatprep.subr.bf16.mxu0 0
  %5317 = vmatpush1.bf16.msra.mxu0 %v3390
  %5318 = vmatprep.subr.bf16.mxu0 0
  %5319 = vmatpush1.bf16.msra.mxu0 %v3391
  %5320 = vmatprep.subr.bf16.mxu0 0
  %5321 = vmatpush1.bf16.msra.mxu0 %v3392
  %5322 = vmatprep.subr.bf16.mxu0 0
  %5323 = vmatpush1.bf16.msra.mxu0 %v3393
  %5324 = vmatprep.subr.bf16.mxu0 0
  %5325 = vmatpush1.bf16.msra.mxu0 %v3394
  %5326 = vmatprep.subr.bf16.mxu0 0
  %5327 = vmatpush1.bf16.msra.mxu0 %v3395
  %5328 = vmatprep.subr.bf16.mxu0 0
  %5329 = vmatpush1.bf16.msra.mxu0 %v3396
  %5330 = vmatprep.subr.bf16.mxu0 0
  %5331 = vmatpush1.bf16.msra.mxu0 %v3397
  %5332 = vmatprep.subr.bf16.mxu0 0
  %5333 = vmatpush1.bf16.msra.mxu0 %v3398
  %5334 = vmatprep.subr.bf16.mxu0 0
  %5335 = vmatpush1.bf16.msra.mxu0 %v3399
  %5336 = vmatprep.subr.bf16.mxu0 0
  %5337 = vmatpush1.bf16.msra.mxu0 %v3400
  %5338 = vmatprep.subr.bf16.mxu0 0
  %5339 = vmatpush1.bf16.msra.mxu0 %v3401
  %5340 = vmatprep.subr.bf16.mxu0 0
  %5341 = vmatpush1.bf16.msra.mxu0 %v3402
  %5342 = vmatprep.subr.bf16.mxu0 0
  %5343 = vmatpush1.bf16.msra.mxu0 %v3403
  %5344 = vmatprep.subr.bf16.mxu0 0
  %5345 = vmatpush1.bf16.msra.mxu0 %v3404
  %5346 = vmatprep.mubr.bf16.mxu0 %v5309
  %5347 = vmatmul.mubr.bf16.gmra.mrb[0].mxu0 %v5305
  %v5348 = vpop.f32.mrb[0].mxu0
  %v5349 = vadd.f32 %v3315, %v5348
  %v5350 = vpop.f32.mrb[0].mxu0
  %v5351 = vpop.f32.mrb[0].mxu0
  %v5352 = vpop.f32.mrb[0].mxu0
  %5353 = vdwg.mxu0
  %5354 = vmatprep.subr.bf16.mxu0 0
  %5355 = vmatpush1.bf16.msra.mxu0 %v3405
  %5356 = vmatprep.subr.bf16.mxu0 0
  %5357 = vmatpush1.bf16.msra.mxu0 %v3406
  %5358 = vmatprep.subr.bf16.mxu0 0
  %5359 = vmatpush1.bf16.msra.mxu0 0
  %5360 = vmatprep.subr.bf16.mxu0 0
  %5361 = vmatpush1.bf16.msra.mxu0 0
  %5362 = vmatprep.subr.bf16.mxu0 0
  %5363 = vmatpush1.bf16.msra.mxu0 0
  %5364 = vmatprep.subr.bf16.mxu0 0
  %5365 = vmatpush1.bf16.msra.mxu0 0
  %5366 = vmatprep.subr.bf16.mxu0 0
  %5367 = vmatpush1.bf16.msra.mxu0 0
  %5368 = vmatprep.subr.bf16.mxu0 0
  %5369 = vmatpush1.bf16.msra.mxu0 0
  %5370 = vmatprep.subr.bf16.mxu0 0
  %5371 = vmatpush1.bf16.msra.mxu0 0
  %5372 = vmatprep.subr.bf16.mxu0 0
  %5373 = vmatpush1.bf16.msra.mxu0 0
  %5374 = vmatprep.subr.bf16.mxu0 0
  %5375 = vmatpush1.bf16.msra.mxu0 0
  %5376 = vmatprep.subr.bf16.mxu0 0
  %5377 = vmatpush1.bf16.msra.mxu0 0
  %5378 = vmatprep.subr.bf16.mxu0 0
  %5379 = vmatpush1.bf16.msra.mxu0 0
  %5380 = vmatprep.subr.bf16.mxu0 0
  %5381 = vmatpush1.bf16.msra.mxu0 0
  %5382 = vmatprep.subr.bf16.mxu0 0
  %5383 = vmatpush1.bf16.msra.mxu0 0
  %5384 = vmatprep.subr.bf16.mxu0 0
  %5385 = vmatpush1.bf16.msra.mxu0 0
  %5386 = vmatprep.mubr.bf16.mxu0 0
  %5387 = vmatmul.mubr.bf16.gmra.mrb[0].mxu0 %v5312
  %v5388 = vpop.f32.mrb[0].mxu0
  %v5389 = vadd.f32 %v5349, %v5388
  %v5390 = vpop.f32.mrb[0].mxu0
  %v5391 = vpop.f32.mrb[0].mxu0
  %v5392 = vpop.f32.mrb[0].mxu0
  %5393 = vdwg.mxu0
  %v5394 = vmax.f32 %v5389, 0.0
  %v5395 = vpack.c.bf16 %v5394, %v5394
  %5396 = vst.msk [vmem:[#allocation3 + $0x10] sm:$0xf] %vm3509, %v5395
  %v5397 = vld [vmem:[%s1210 + $0x4] sm:$0xf]
  %v5398 = vld [vmem:[%s1413 + $0x4] sm:$0xf]
  %v5399 = vld [vmem:[%s1616 + $0x4] sm:$0xf]
  %v5401 = vunpack.c.l.b16 %v5397
  %v5402 = vpack.c.b16 %v5401, %v5401
  %5403 = vrot.lane.b32.xlu0 %v5402, 96
  %v5404 = vpop.permute.xlu0 %5403
  %v5406 = vunpack.c.l.b16 %v5398
  %v5407 = vpack.c.b16 %v5406, %v5406
  %5408 = vrot.lane.b32.xlu0 %v5407, 64
  %v5409 = vpop.permute.xlu0 %5408
  %v5411 = vunpack.c.l.b16 %v5399
  %v5412 = vpack.c.b16 %v5411, %v5411
  %5413 = vrot.lane.b32.xlu0 %v5412, 32
  %v5414 = vpop.permute.xlu0 %5413
  %v5417 = vsel %vm493, %v5404, %v5409
  %v5420 = vsel %vm3307, %v5409, %v5414
  %v5422 = vsel %vm3286, %v5414, 0
  %5424 = vmatprep.subr.bf16.mxu0 0
  %5425 = vmatpush1.bf16.msra.mxu0 %v3389
  %5426 = vmatprep.subr.bf16.mxu0 0
  %5427 = vmatpush1.bf16.msra.mxu0 %v3390
  %5428 = vmatprep.subr.bf16.mxu0 0
  %5429 = vmatpush1.bf16.msra.mxu0 %v3391
  %5430 = vmatprep.subr.bf16.mxu0 0
  %5431 = vmatpush1.bf16.msra.mxu0 %v3392
  %5432 = vmatprep.subr.bf16.mxu0 0
  %5433 = vmatpush1.bf16.msra.mxu0 %v3393
  %5434 = vmatprep.subr.bf16.mxu0 0
  %5435 = vmatpush1.bf16.msra.mxu0 %v3394
  %5436 = vmatprep.subr.bf16.mxu0 0
  %5437 = vmatpush1.bf16.msra.mxu0 %v3395
  %5438 = vmatprep.subr.bf16.mxu0 0
  %5439 = vmatpush1.bf16.msra.mxu0 %v3396
  %5440 = vmatprep.subr.bf16.mxu0 0
  %5441 = vmatpush1.bf16.msra.mxu0 %v3397
  %5442 = vmatprep.subr.bf16.mxu0 0
  %5443 = vmatpush1.bf16.msra.mxu0 %v3398
  %5444 = vmatprep.subr.bf16.mxu0 0
  %5445 = vmatpush1.bf16.msra.mxu0 %v3399
  %5446 = vmatprep.subr.bf16.mxu0 0
  %5447 = vmatpush1.bf16.msra.mxu0 %v3400
  %5448 = vmatprep.subr.bf16.mxu0 0
  %5449 = vmatpush1.bf16.msra.mxu0 %v3401
  %5450 = vmatprep.subr.bf16.mxu0 0
  %5451 = vmatpush1.bf16.msra.mxu0 %v3402
  %5452 = vmatprep.subr.bf16.mxu0 0
  %5453 = vmatpush1.bf16.msra.mxu0 %v3403
  %5454 = vmatprep.subr.bf16.mxu0 0
  %5455 = vmatpush1.bf16.msra.mxu0 %v3404
  %5456 = vmatprep.mubr.bf16.mxu0 %v5420
  %5457 = vmatmul.mubr.bf16.gmra.mrb[0].mxu0 %v5417
  %v5458 = vpop.f32.mrb[0].mxu0
  %v5459 = vadd.f32 %v3315, %v5458
  %v5460 = vpop.f32.mrb[0].mxu0
  %v5461 = vpop.f32.mrb[0].mxu0
  %v5462 = vpop.f32.mrb[0].mxu0
  %5463 = vdwg.mxu0
  %5464 = vmatprep.subr.bf16.mxu0 0
  %5465 = vmatpush1.bf16.msra.mxu0 %v3405
  %5466 = vmatprep.subr.bf16.mxu0 0
  %5467 = vmatpush1.bf16.msra.mxu0 %v3406
  %5468 = vmatprep.subr.bf16.mxu0 0
  %5469 = vmatpush1.bf16.msra.mxu0 0
  %5470 = vmatprep.subr.bf16.mxu0 0
  %5471 = vmatpush1.bf16.msra.mxu0 0
  %5472 = vmatprep.subr.bf16.mxu0 0
  %5473 = vmatpush1.bf16.msra.mxu0 0
  %5474 = vmatprep.subr.bf16.mxu0 0
  %5475 = vmatpush1.bf16.msra.mxu0 0
  %5476 = vmatprep.subr.bf16.mxu0 0
  %5477 = vmatpush1.bf16.msra.mxu0 0
  %5478 = vmatprep.subr.bf16.mxu0 0
  %5479 = vmatpush1.bf16.msra.mxu0 0
  %5480 = vmatprep.subr.bf16.mxu0 0
  %5481 = vmatpush1.bf16.msra.mxu0 0
  %5482 = vmatprep.subr.bf16.mxu0 0
  %5483 = vmatpush1.bf16.msra.mxu0 0
  %5484 = vmatprep.subr.bf16.mxu0 0
  %5485 = vmatpush1.bf16.msra.mxu0 0
  %5486 = vmatprep.subr.bf16.mxu0 0
  %5487 = vmatpush1.bf16.msra.mxu0 0
  %5488 = vmatprep.subr.bf16.mxu0 0
  %5489 = vmatpush1.bf16.msra.mxu0 0
  %5490 = vmatprep.subr.bf16.mxu0 0
  %5491 = vmatpush1.bf16.msra.mxu0 0
  %5492 = vmatprep.subr.bf16.mxu0 0
  %5493 = vmatpush1.bf16.msra.mxu0 0
  %5494 = vmatprep.subr.bf16.mxu0 0
  %5495 = vmatpush1.bf16.msra.mxu0 0
  %5496 = vmatprep.mubr.bf16.mxu0 0
  %5497 = vmatmul.mubr.bf16.gmra.mrb[0].mxu0 %v5422
  %v5498 = vpop.f32.mrb[0].mxu0
  %v5499 = vadd.f32 %v5459, %v5498
  %v5500 = vpop.f32.mrb[0].mxu0
  %v5501 = vpop.f32.mrb[0].mxu0
  %v5502 = vpop.f32.mrb[0].mxu0
  %5503 = vdwg.mxu0
  %v5504 = vmax.f32 %v5499, 0.0
  %v5505 = vpack.c.bf16 %v5504, %v5504
  %v5507 = vunpack.c.l.b16 %v5505
  %v5508 = vpack.c.b16 %v5507, %v5507
  %5509 = vrot.lane.b32.xlu0 %v5508, 32
  %v5510 = vpop.permute.xlu0 %5509
  %5512 = vst.msk [vmem:[#allocation3 + $0x10] sm:$0xf] %vm3619, %v5510
  %v5513 = vld [vmem:[%s1210 + $0x4] sm:$0xff]
  %v5514 = vld [vmem:[%s1413 + $0x4] sm:$0xff]
  %v5515 = vld [vmem:[%s1616 + $0x4] sm:$0xff]
  %v5517 = vunpack.c.l.b16 %v5513
  %v5518 = vunpack.c.h.b16 %v5513
  %v5519 = vpack.c.b16 %v5517, %v5517
  %v5520 = vpack.c.b16 %v5518, %v5518
  %5521 = vrot.lane.b32.xlu0 %v5519, 32
  %v5522 = vpop.permute.xlu0 %5521
  %5523 = vrot.lane.b32.xlu0 %v5520, 32
  %v5524 = vpop.permute.xlu0 %5523
  %v5525 = vsel %vm4433, %v5522, %v5524
  %v5527 = vunpack.c.l.b16 %v5514
  %v5528 = vunpack.c.h.b16 %v5514
  %v5529 = vpack.c.b16 %v5527, %v5527
  %v5530 = vpack.c.b16 %v5528, %v5528
  %v5532 = vunpack.c.l.b16 %v5515
  %v5533 = vunpack.c.h.b16 %v5515
  %v5534 = vpack.c.b16 %v5532, %v5532
  %v5535 = vpack.c.b16 %v5533, %v5533
  %5536 = vrot.lane.b32.xlu0 %v5534, 96
  %v5537 = vpop.permute.xlu0 %5536
  %5538 = vrot.lane.b32.xlu0 %v5535, 96
  %v5539 = vpop.permute.xlu0 %5538
  %v5540 = vsel %vm3637, %v5537, %v5539
  %v5543 = vsel %vm493, %v5525, %v5529
  %v5547 = vsel %vm3307, %v5530, %v5540
  %v5550 = vsel %vm3286, %v5539, 0
  %5552 = vmatprep.subr.bf16.mxu0 0
  %5553 = vmatpush1.bf16.msra.mxu0 %v3389
  %5554 = vmatprep.subr.bf16.mxu0 0
  %5555 = vmatpush1.bf16.msra.mxu0 %v3390
  %5556 = vmatprep.subr.bf16.mxu0 0
  %5557 = vmatpush1.bf16.msra.mxu0 %v3391
  %5558 = vmatprep.subr.bf16.mxu0 0
  %5559 = vmatpush1.bf16.msra.mxu0 %v3392
  %5560 = vmatprep.subr.bf16.mxu0 0
  %5561 = vmatpush1.bf16.msra.mxu0 %v3393
  %5562 = vmatprep.subr.bf16.mxu0 0
  %5563 = vmatpush1.bf16.msra.mxu0 %v3394
  %5564 = vmatprep.subr.bf16.mxu0 0
  %5565 = vmatpush1.bf16.msra.mxu0 %v3395
  %5566 = vmatprep.subr.bf16.mxu0 0
  %5567 = vmatpush1.bf16.msra.mxu0 %v3396
  %5568 = vmatprep.subr.bf16.mxu0 0
  %5569 = vmatpush1.bf16.msra.mxu0 %v3397
  %5570 = vmatprep.subr.bf16.mxu0 0
  %5571 = vmatpush1.bf16.msra.mxu0 %v3398
  %5572 = vmatprep.subr.bf16.mxu0 0
  %5573 = vmatpush1.bf16.msra.mxu0 %v3399
  %5574 = vmatprep.subr.bf16.mxu0 0
  %5575 = vmatpush1.bf16.msra.mxu0 %v3400
  %5576 = vmatprep.subr.bf16.mxu0 0
  %5577 = vmatpush1.bf16.msra.mxu0 %v3401
  %5578 = vmatprep.subr.bf16.mxu0 0
  %5579 = vmatpush1.bf16.msra.mxu0 %v3402
  %5580 = vmatprep.subr.bf16.mxu0 0
  %5581 = vmatpush1.bf16.msra.mxu0 %v3403
  %5582 = vmatprep.subr.bf16.mxu0 0
  %5583 = vmatpush1.bf16.msra.mxu0 %v3404
  %5584 = vmatprep.mubr.bf16.mxu0 %v5547
  %5585 = vmatmul.mubr.bf16.gmra.mrb[0].mxu0 %v5543
  %v5586 = vpop.f32.mrb[0].mxu0
  %v5587 = vadd.f32 %v3315, %v5586
  %v5588 = vpop.f32.mrb[0].mxu0
  %v5589 = vpop.f32.mrb[0].mxu0
  %v5590 = vpop.f32.mrb[0].mxu0
  %5591 = vdwg.mxu0
  %5592 = vmatprep.subr.bf16.mxu0 0
  %5593 = vmatpush1.bf16.msra.mxu0 %v3405
  %5594 = vmatprep.subr.bf16.mxu0 0
  %5595 = vmatpush1.bf16.msra.mxu0 %v3406
  %5596 = vmatprep.subr.bf16.mxu0 0
  %5597 = vmatpush1.bf16.msra.mxu0 0
  %5598 = vmatprep.subr.bf16.mxu0 0
  %5599 = vmatpush1.bf16.msra.mxu0 0
  %5600 = vmatprep.subr.bf16.mxu0 0
  %5601 = vmatpush1.bf16.msra.mxu0 0
  %5602 = vmatprep.subr.bf16.mxu0 0
  %5603 = vmatpush1.bf16.msra.mxu0 0
  %5604 = vmatprep.subr.bf16.mxu0 0
  %5605 = vmatpush1.bf16.msra.mxu0 0
  %5606 = vmatprep.subr.bf16.mxu0 0
  %5607 = vmatpush1.bf16.msra.mxu0 0
  %5608 = vmatprep.subr.bf16.mxu0 0
  %5609 = vmatpush1.bf16.msra.mxu0 0
  %5610 = vmatprep.subr.bf16.mxu0 0
  %5611 = vmatpush1.bf16.msra.mxu0 0
  %5612 = vmatprep.subr.bf16.mxu0 0
  %5613 = vmatpush1.bf16.msra.mxu0 0
  %5614 = vmatprep.subr.bf16.mxu0 0
  %5615 = vmatpush1.bf16.msra.mxu0 0
  %5616 = vmatprep.subr.bf16.mxu0 0
  %5617 = vmatpush1.bf16.msra.mxu0 0
  %5618 = vmatprep.subr.bf16.mxu0 0
  %5619 = vmatpush1.bf16.msra.mxu0 0
  %5620 = vmatprep.subr.bf16.mxu0 0
  %5621 = vmatpush1.bf16.msra.mxu0 0
  %5622 = vmatprep.subr.bf16.mxu0 0
  %5623 = vmatpush1.bf16.msra.mxu0 0
  %5624 = vmatprep.mubr.bf16.mxu0 0
  %5625 = vmatmul.mubr.bf16.gmra.mrb[0].mxu0 %v5550
  %v5626 = vpop.f32.mrb[0].mxu0
  %v5627 = vadd.f32 %v5587, %v5626
  %v5628 = vpop.f32.mrb[0].mxu0
  %v5629 = vpop.f32.mrb[0].mxu0
  %v5630 = vpop.f32.mrb[0].mxu0
  %5631 = vdwg.mxu0
  %v5632 = vmax.f32 %v5627, 0.0
  %v5633 = vpack.c.bf16 %v5632, %v5632
  %v5635 = vunpack.c.l.b16 %v5633
  %v5636 = vpack.c.b16 %v5635, %v5635
  %5637 = vrot.lane.b32.xlu0 %v5636, 64
  %v5638 = vpop.permute.xlu0 %5637
  %5640 = vst.msk [vmem:[#allocation3 + $0x10] sm:$0xf] %vm3737, %v5638
  %v5641 = vld [vmem:[%s1210 + $0x8] sm:$0xf]
  %v5642 = vld [vmem:[%s1413 + $0x8] sm:$0xf]
  %v5643 = vld [vmem:[%s1616 + $0x8] sm:$0xf]
  %v5645 = vunpack.c.l.b16 %v5641
  %v5646 = vpack.c.b16 %v5645, %v5645
  %5647 = vrot.lane.b32.xlu0 %v5646, 96
  %v5648 = vpop.permute.xlu0 %5647
  %v5650 = vunpack.c.l.b16 %v5642
  %v5651 = vpack.c.b16 %v5650, %v5650
  %5652 = vrot.lane.b32.xlu0 %v5651, 64
  %v5653 = vpop.permute.xlu0 %5652
  %v5655 = vunpack.c.l.b16 %v5643
  %v5656 = vpack.c.b16 %v5655, %v5655
  %5657 = vrot.lane.b32.xlu0 %v5656, 32
  %v5658 = vpop.permute.xlu0 %5657
  %v5661 = vsel %vm493, %v5648, %v5653
  %v5664 = vsel %vm3307, %v5653, %v5658
  %v5666 = vsel %vm3286, %v5658, 0
  %5668 = vmatprep.subr.bf16.mxu0 0
  %5669 = vmatpush1.bf16.msra.mxu0 %v3389
  %5670 = vmatprep.subr.bf16.mxu0 0
  %5671 = vmatpush1.bf16.msra.mxu0 %v3390
  %5672 = vmatprep.subr.bf16.mxu0 0
  %5673 = vmatpush1.bf16.msra.mxu0 %v3391
  %5674 = vmatprep.subr.bf16.mxu0 0
  %5675 = vmatpush1.bf16.msra.mxu0 %v3392
  %5676 = vmatprep.subr.bf16.mxu0 0
  %5677 = vmatpush1.bf16.msra.mxu0 %v3393
  %5678 = vmatprep.subr.bf16.mxu0 0
  %5679 = vmatpush1.bf16.msra.mxu0 %v3394
  %5680 = vmatprep.subr.bf16.mxu0 0
  %5681 = vmatpush1.bf16.msra.mxu0 %v3395
  %5682 = vmatprep.subr.bf16.mxu0 0
  %5683 = vmatpush1.bf16.msra.mxu0 %v3396
  %5684 = vmatprep.subr.bf16.mxu0 0
  %5685 = vmatpush1.bf16.msra.mxu0 %v3397
  %5686 = vmatprep.subr.bf16.mxu0 0
  %5687 = vmatpush1.bf16.msra.mxu0 %v3398
  %5688 = vmatprep.subr.bf16.mxu0 0
  %5689 = vmatpush1.bf16.msra.mxu0 %v3399
  %5690 = vmatprep.subr.bf16.mxu0 0
  %5691 = vmatpush1.bf16.msra.mxu0 %v3400
  %5692 = vmatprep.subr.bf16.mxu0 0
  %5693 = vmatpush1.bf16.msra.mxu0 %v3401
  %5694 = vmatprep.subr.bf16.mxu0 0
  %5695 = vmatpush1.bf16.msra.mxu0 %v3402
  %5696 = vmatprep.subr.bf16.mxu0 0
  %5697 = vmatpush1.bf16.msra.mxu0 %v3403
  %5698 = vmatprep.subr.bf16.mxu0 0
  %5699 = vmatpush1.bf16.msra.mxu0 %v3404
  %5700 = vmatprep.mubr.bf16.mxu0 %v5664
  %5701 = vmatmul.mubr.bf16.gmra.mrb[0].mxu0 %v5661
  %v5702 = vpop.f32.mrb[0].mxu0
  %v5703 = vadd.f32 %v3315, %v5702
  %v5704 = vpop.f32.mrb[0].mxu0
  %v5705 = vpop.f32.mrb[0].mxu0
  %v5706 = vpop.f32.mrb[0].mxu0
  %5707 = vdwg.mxu0
  %5708 = vmatprep.subr.bf16.mxu0 0
  %5709 = vmatpush1.bf16.msra.mxu0 %v3405
  %5710 = vmatprep.subr.bf16.mxu0 0
  %5711 = vmatpush1.bf16.msra.mxu0 %v3406
  %5712 = vmatprep.subr.bf16.mxu0 0
  %5713 = vmatpush1.bf16.msra.mxu0 0
  %5714 = vmatprep.subr.bf16.mxu0 0
  %5715 = vmatpush1.bf16.msra.mxu0 0
  %5716 = vmatprep.subr.bf16.mxu0 0
  %5717 = vmatpush1.bf16.msra.mxu0 0
  %5718 = vmatprep.subr.bf16.mxu0 0
  %5719 = vmatpush1.bf16.msra.mxu0 0
  %5720 = vmatprep.subr.bf16.mxu0 0
  %5721 = vmatpush1.bf16.msra.mxu0 0
  %5722 = vmatprep.subr.bf16.mxu0 0
  %5723 = vmatpush1.bf16.msra.mxu0 0
  %5724 = vmatprep.subr.bf16.mxu0 0
  %5725 = vmatpush1.bf16.msra.mxu0 0
  %5726 = vmatprep.subr.bf16.mxu0 0
  %5727 = vmatpush1.bf16.msra.mxu0 0
  %5728 = vmatprep.subr.bf16.mxu0 0
  %5729 = vmatpush1.bf16.msra.mxu0 0
  %5730 = vmatprep.subr.bf16.mxu0 0
  %5731 = vmatpush1.bf16.msra.mxu0 0
  %5732 = vmatprep.subr.bf16.mxu0 0
  %5733 = vmatpush1.bf16.msra.mxu0 0
  %5734 = vmatprep.subr.bf16.mxu0 0
  %5735 = vmatpush1.bf16.msra.mxu0 0
  %5736 = vmatprep.subr.bf16.mxu0 0
  %5737 = vmatpush1.bf16.msra.mxu0 0
  %5738 = vmatprep.subr.bf16.mxu0 0
  %5739 = vmatpush1.bf16.msra.mxu0 0
  %5740 = vmatprep.mubr.bf16.mxu0 0
  %5741 = vmatmul.mubr.bf16.gmra.mrb[0].mxu0 %v5666
  %v5742 = vpop.f32.mrb[0].mxu0
  %v5743 = vadd.f32 %v5703, %v5742
  %v5744 = vpop.f32.mrb[0].mxu0
  %v5745 = vpop.f32.mrb[0].mxu0
  %v5746 = vpop.f32.mrb[0].mxu0
  %5747 = vdwg.mxu0
  %v5748 = vmax.f32 %v5743, 0.0
  %v5749 = vpack.c.bf16 %v5748, %v5748
  %v5751 = vunpack.c.l.b16 %v5749
  %v5752 = vpack.c.b16 %v5751, %v5751
  %5753 = vrot.lane.b32.xlu0 %v5752, 96
  %v5754 = vpop.permute.xlu0 %5753
  %5756 = vst.msk [vmem:[#allocation3 + $0x10] sm:$0xf] %vm3847, %v5754
  %v5757 = vld [vmem:[%s1210 + $0x8] sm:$0xff]
  %v5758 = vld [vmem:[%s1413 + $0x8] sm:$0xff]
  %v5759 = vld [vmem:[%s1616 + $0x8] sm:$0xff]
  %v5761 = vunpack.c.l.b16 %v5757
  %v5762 = vunpack.c.h.b16 %v5757
  %v5763 = vpack.c.b16 %v5761, %v5761
  %v5764 = vpack.c.b16 %v5762, %v5762
  %5765 = vrot.lane.b32.xlu0 %v5763, 32
  %v5766 = vpop.permute.xlu0 %5765
  %5767 = vrot.lane.b32.xlu0 %v5764, 32
  %v5768 = vpop.permute.xlu0 %5767
  %v5769 = vsel %vm4433, %v5766, %v5768
  %v5771 = vunpack.c.l.b16 %v5758
  %v5772 = vunpack.c.h.b16 %v5758
  %v5773 = vpack.c.b16 %v5771, %v5771
  %v5774 = vpack.c.b16 %v5772, %v5772
  %v5776 = vunpack.c.l.b16 %v5759
  %v5777 = vunpack.c.h.b16 %v5759
  %v5778 = vpack.c.b16 %v5776, %v5776
  %v5779 = vpack.c.b16 %v5777, %v5777
  %5780 = vrot.lane.b32.xlu0 %v5778, 96
  %v5781 = vpop.permute.xlu0 %5780
  %5782 = vrot.lane.b32.xlu0 %v5779, 96
  %v5783 = vpop.permute.xlu0 %5782
  %v5784 = vsel %vm3637, %v5781, %v5783
  %v5787 = vsel %vm493, %v5769, %v5773
  %v5791 = vsel %vm3307, %v5774, %v5784
  %v5794 = vsel %vm3286, %v5783, 0
  %5796 = vmatprep.subr.bf16.mxu0 0
  %5797 = vmatpush1.bf16.msra.mxu0 %v3389
  %5798 = vmatprep.subr.bf16.mxu0 0
  %5799 = vmatpush1.bf16.msra.mxu0 %v3390
  %5800 = vmatprep.subr.bf16.mxu0 0
  %5801 = vmatpush1.bf16.msra.mxu0 %v3391
  %5802 = vmatprep.subr.bf16.mxu0 0
  %5803 = vmatpush1.bf16.msra.mxu0 %v3392
  %5804 = vmatprep.subr.bf16.mxu0 0
  %5805 = vmatpush1.bf16.msra.mxu0 %v3393
  %5806 = vmatprep.subr.bf16.mxu0 0
  %5807 = vmatpush1.bf16.msra.mxu0 %v3394
  %5808 = vmatprep.subr.bf16.mxu0 0
  %5809 = vmatpush1.bf16.msra.mxu0 %v3395
  %5810 = vmatprep.subr.bf16.mxu0 0
  %5811 = vmatpush1.bf16.msra.mxu0 %v3396
  %5812 = vmatprep.subr.bf16.mxu0 0
  %5813 = vmatpush1.bf16.msra.mxu0 %v3397
  %5814 = vmatprep.subr.bf16.mxu0 0
  %5815 = vmatpush1.bf16.msra.mxu0 %v3398
  %5816 = vmatprep.subr.bf16.mxu0 0
  %5817 = vmatpush1.bf16.msra.mxu0 %v3399
  %5818 = vmatprep.subr.bf16.mxu0 0
  %5819 = vmatpush1.bf16.msra.mxu0 %v3400
  %5820 = vmatprep.subr.bf16.mxu0 0
  %5821 = vmatpush1.bf16.msra.mxu0 %v3401
  %5822 = vmatprep.subr.bf16.mxu0 0
  %5823 = vmatpush1.bf16.msra.mxu0 %v3402
  %5824 = vmatprep.subr.bf16.mxu0 0
  %5825 = vmatpush1.bf16.msra.mxu0 %v3403
  %5826 = vmatprep.subr.bf16.mxu0 0
  %5827 = vmatpush1.bf16.msra.mxu0 %v3404
  %5828 = vmatprep.mubr.bf16.mxu0 %v5791
  %5829 = vmatmul.mubr.bf16.gmra.mrb[0].mxu0 %v5787
  %v5830 = vpop.f32.mrb[0].mxu0
  %v5831 = vadd.f32 %v3315, %v5830
  %v5832 = vpop.f32.mrb[0].mxu0
  %v5833 = vpop.f32.mrb[0].mxu0
  %v5834 = vpop.f32.mrb[0].mxu0
  %5835 = vdwg.mxu0
  %5836 = vmatprep.subr.bf16.mxu0 0
  %5837 = vmatpush1.bf16.msra.mxu0 %v3405
  %5838 = vmatprep.subr.bf16.mxu0 0
  %5839 = vmatpush1.bf16.msra.mxu0 %v3406
  %5840 = vmatprep.subr.bf16.mxu0 0
  %5841 = vmatpush1.bf16.msra.mxu0 0
  %5842 = vmatprep.subr.bf16.mxu0 0
  %5843 = vmatpush1.bf16.msra.mxu0 0
  %5844 = vmatprep.subr.bf16.mxu0 0
  %5845 = vmatpush1.bf16.msra.mxu0 0
  %5846 = vmatprep.subr.bf16.mxu0 0
  %5847 = vmatpush1.bf16.msra.mxu0 0
  %5848 = vmatprep.subr.bf16.mxu0 0
  %5849 = vmatpush1.bf16.msra.mxu0 0
  %5850 = vmatprep.subr.bf16.mxu0 0
  %5851 = vmatpush1.bf16.msra.mxu0 0
  %5852 = vmatprep.subr.bf16.mxu0 0
  %5853 = vmatpush1.bf16.msra.mxu0 0
  %5854 = vmatprep.subr.bf16.mxu0 0
  %5855 = vmatpush1.bf16.msra.mxu0 0
  %5856 = vmatprep.subr.bf16.mxu0 0
  %5857 = vmatpush1.bf16.msra.mxu0 0
  %5858 = vmatprep.subr.bf16.mxu0 0
  %5859 = vmatpush1.bf16.msra.mxu0 0
  %5860 = vmatprep.subr.bf16.mxu0 0
  %5861 = vmatpush1.bf16.msra.mxu0 0
  %5862 = vmatprep.subr.bf16.mxu0 0
  %5863 = vmatpush1.bf16.msra.mxu0 0
  %5864 = vmatprep.subr.bf16.mxu0 0
  %5865 = vmatpush1.bf16.msra.mxu0 0
  %5866 = vmatprep.subr.bf16.mxu0 0
  %5867 = vmatpush1.bf16.msra.mxu0 0
  %5868 = vmatprep.mubr.bf16.mxu0 0
  %5869 = vmatmul.mubr.bf16.gmra.mrb[0].mxu0 %v5794
  %v5870 = vpop.f32.mrb[0].mxu0
  %v5871 = vadd.f32 %v5831, %v5870
  %v5872 = vpop.f32.mrb[0].mxu0
  %v5873 = vpop.f32.mrb[0].mxu0
  %v5874 = vpop.f32.mrb[0].mxu0
  %5875 = vdwg.mxu0
  %v5876 = vmax.f32 %v5871, 0.0
  %v5877 = vpack.c.bf16 %v5876, %v5876
  %5878 = vst.msk [vmem:[#allocation3 + $0x14] sm:$0xf] %vm3509, %v5877
  %v5879 = vld [vmem:[%s1616] sm:$0xf]
  %v5881 = vunpack.c.l.b16 %v5879
  %v5882 = vpack.c.b16 %v5881, %v5881
  %5883 = vrot.lane.b32.xlu0 %v5882, 32
  %v5884 = vpop.permute.xlu0 %5883
  %v5886 = vsel %vm3286, 0, %v5884
  %v5887 = vld [vmem:[%s1819] sm:$0xf]
  %v5889 = vunpack.c.l.b16 %v5887
  %v5890 = vpack.c.b16 %v5889, %v5889
  %5891 = vrot.lane.b32.xlu0 %v5890, 32
  %v5892 = vpop.permute.xlu0 %5891
  %v5894 = vsel %vm3286, 0, %v5892
  %v5895 = vld [vmem:[%s2022] sm:$0xf]
  %v5897 = vunpack.c.l.b16 %v5895
  %v5898 = vpack.c.b16 %v5897, %v5897
  %5899 = vrot.lane.b32.xlu0 %v5898, 32
  %v5900 = vpop.permute.xlu0 %5899
  %v5902 = vsel %vm3286, 0, %v5900
  %5904 = vrot.lane.b32.xlu0 %v5894, 96
  %v5905 = vpop.permute.xlu0 %5904
  %5907 = vrot.lane.b32.xlu0 %v5902, 64
  %v5908 = vpop.permute.xlu0 %5907
  %v5910 = vsel %vm493, %v5886, %v5905
  %v5913 = vsel %vm3307, %v5905, %v5908
  %v5915 = vsel %vm3286, %v5908, 0
  %5917 = vmatprep.subr.bf16.mxu0 0
  %5918 = vmatpush1.bf16.msra.mxu0 %v3389
  %5919 = vmatprep.subr.bf16.mxu0 0
  %5920 = vmatpush1.bf16.msra.mxu0 %v3390
  %5921 = vmatprep.subr.bf16.mxu0 0
  %5922 = vmatpush1.bf16.msra.mxu0 %v3391
  %5923 = vmatprep.subr.bf16.mxu0 0
  %5924 = vmatpush1.bf16.msra.mxu0 %v3392
  %5925 = vmatprep.subr.bf16.mxu0 0
  %5926 = vmatpush1.bf16.msra.mxu0 %v3393
  %5927 = vmatprep.subr.bf16.mxu0 0
  %5928 = vmatpush1.bf16.msra.mxu0 %v3394
  %5929 = vmatprep.subr.bf16.mxu0 0
  %5930 = vmatpush1.bf16.msra.mxu0 %v3395
  %5931 = vmatprep.subr.bf16.mxu0 0
  %5932 = vmatpush1.bf16.msra.mxu0 %v3396
  %5933 = vmatprep.subr.bf16.mxu0 0
  %5934 = vmatpush1.bf16.msra.mxu0 %v3397
  %5935 = vmatprep.subr.bf16.mxu0 0
  %5936 = vmatpush1.bf16.msra.mxu0 %v3398
  %5937 = vmatprep.subr.bf16.mxu0 0
  %5938 = vmatpush1.bf16.msra.mxu0 %v3399
  %5939 = vmatprep.subr.bf16.mxu0 0
  %5940 = vmatpush1.bf16.msra.mxu0 %v3400
  %5941 = vmatprep.subr.bf16.mxu0 0
  %5942 = vmatpush1.bf16.msra.mxu0 %v3401
  %5943 = vmatprep.subr.bf16.mxu0 0
  %5944 = vmatpush1.bf16.msra.mxu0 %v3402
  %5945 = vmatprep.subr.bf16.mxu0 0
  %5946 = vmatpush1.bf16.msra.mxu0 %v3403
  %5947 = vmatprep.subr.bf16.mxu0 0
  %5948 = vmatpush1.bf16.msra.mxu0 %v3404
  %5949 = vmatprep.mubr.bf16.mxu0 %v5913
  %5950 = vmatmul.mubr.bf16.gmra.mrb[0].mxu0 %v5910
  %v5951 = vpop.f32.mrb[0].mxu0
  %v5952 = vadd.f32 %v3315, %v5951
  %v5953 = vpop.f32.mrb[0].mxu0
  %v5954 = vpop.f32.mrb[0].mxu0
  %v5955 = vpop.f32.mrb[0].mxu0
  %5956 = vdwg.mxu0
  %5957 = vmatprep.subr.bf16.mxu0 0
  %5958 = vmatpush1.bf16.msra.mxu0 %v3405
  %5959 = vmatprep.subr.bf16.mxu0 0
  %5960 = vmatpush1.bf16.msra.mxu0 %v3406
  %5961 = vmatprep.subr.bf16.mxu0 0
  %5962 = vmatpush1.bf16.msra.mxu0 0
  %5963 = vmatprep.subr.bf16.mxu0 0
  %5964 = vmatpush1.bf16.msra.mxu0 0
  %5965 = vmatprep.subr.bf16.mxu0 0
  %5966 = vmatpush1.bf16.msra.mxu0 0
  %5967 = vmatprep.subr.bf16.mxu0 0
  %5968 = vmatpush1.bf16.msra.mxu0 0
  %5969 = vmatprep.subr.bf16.mxu0 0
  %5970 = vmatpush1.bf16.msra.mxu0 0
  %5971 = vmatprep.subr.bf16.mxu0 0
  %5972 = vmatpush1.bf16.msra.mxu0 0
  %5973 = vmatprep.subr.bf16.mxu0 0
  %5974 = vmatpush1.bf16.msra.mxu0 0
  %5975 = vmatprep.subr.bf16.mxu0 0
  %5976 = vmatpush1.bf16.msra.mxu0 0
  %5977 = vmatprep.subr.bf16.mxu0 0
  %5978 = vmatpush1.bf16.msra.mxu0 0
  %5979 = vmatprep.subr.bf16.mxu0 0
  %5980 = vmatpush1.bf16.msra.mxu0 0
  %5981 = vmatprep.subr.bf16.mxu0 0
  %5982 = vmatpush1.bf16.msra.mxu0 0
  %5983 = vmatprep.subr.bf16.mxu0 0
  %5984 = vmatpush1.bf16.msra.mxu0 0
  %5985 = vmatprep.subr.bf16.mxu0 0
  %5986 = vmatpush1.bf16.msra.mxu0 0
  %5987 = vmatprep.subr.bf16.mxu0 0
  %5988 = vmatpush1.bf16.msra.mxu0 0
  %5989 = vmatprep.mubr.bf16.mxu0 0
  %5990 = vmatmul.mubr.bf16.gmra.mrb[0].mxu0 %v5915
  %v5991 = vpop.f32.mrb[0].mxu0
  %v5992 = vadd.f32 %v5952, %v5991
  %v5993 = vpop.f32.mrb[0].mxu0
  %v5994 = vpop.f32.mrb[0].mxu0
  %v5995 = vpop.f32.mrb[0].mxu0
  %5996 = vdwg.mxu0
  %v5997 = vmax.f32 %v5992, 0.0
  %v5998 = vpack.c.bf16 %v5997, %v5997
  %v6000 = vunpack.c.l.b16 %v5998
  %v6001 = vpack.c.b16 %v6000, %v6000
  %6002 = vrot.lane.b32.xlu0 %v6001, 32
  %v6003 = vpop.permute.xlu0 %6002
  %6005 = vst.msk [vmem:[#allocation3 + $0x14] sm:$0xf] %vm3619, %v6003
  %v6006 = vld [vmem:[%s1616] sm:$0xf]
  %v6007 = vld [vmem:[%s1819] sm:$0xf]
  %v6008 = vld [vmem:[%s2022] sm:$0xf]
  %v6010 = vunpack.c.l.b16 %v6006
  %v6011 = vpack.c.b16 %v6010, %v6010
  %6012 = vrot.lane.b32.xlu0 %v6011, 96
  %v6013 = vpop.permute.xlu0 %6012
  %v6015 = vunpack.c.l.b16 %v6007
  %v6016 = vpack.c.b16 %v6015, %v6015
  %6017 = vrot.lane.b32.xlu0 %v6016, 64
  %v6018 = vpop.permute.xlu0 %6017
  %v6020 = vunpack.c.l.b16 %v6008
  %v6021 = vpack.c.b16 %v6020, %v6020
  %6022 = vrot.lane.b32.xlu0 %v6021, 32
  %v6023 = vpop.permute.xlu0 %6022
  %v6026 = vsel %vm493, %v6013, %v6018
  %v6029 = vsel %vm3307, %v6018, %v6023
  %v6031 = vsel %vm3286, %v6023, 0
  %6033 = vmatprep.subr.bf16.mxu0 0
  %6034 = vmatpush1.bf16.msra.mxu0 %v3389
  %6035 = vmatprep.subr.bf16.mxu0 0
  %6036 = vmatpush1.bf16.msra.mxu0 %v3390
  %6037 = vmatprep.subr.bf16.mxu0 0
  %6038 = vmatpush1.bf16.msra.mxu0 %v3391
  %6039 = vmatprep.subr.bf16.mxu0 0
  %6040 = vmatpush1.bf16.msra.mxu0 %v3392
  %6041 = vmatprep.subr.bf16.mxu0 0
  %6042 = vmatpush1.bf16.msra.mxu0 %v3393
  %6043 = vmatprep.subr.bf16.mxu0 0
  %6044 = vmatpush1.bf16.msra.mxu0 %v3394
  %6045 = vmatprep.subr.bf16.mxu0 0
  %6046 = vmatpush1.bf16.msra.mxu0 %v3395
  %6047 = vmatprep.subr.bf16.mxu0 0
  %6048 = vmatpush1.bf16.msra.mxu0 %v3396
  %6049 = vmatprep.subr.bf16.mxu0 0
  %6050 = vmatpush1.bf16.msra.mxu0 %v3397
  %6051 = vmatprep.subr.bf16.mxu0 0
  %6052 = vmatpush1.bf16.msra.mxu0 %v3398
  %6053 = vmatprep.subr.bf16.mxu0 0
  %6054 = vmatpush1.bf16.msra.mxu0 %v3399
  %6055 = vmatprep.subr.bf16.mxu0 0
  %6056 = vmatpush1.bf16.msra.mxu0 %v3400
  %6057 = vmatprep.subr.bf16.mxu0 0
  %6058 = vmatpush1.bf16.msra.mxu0 %v3401
  %6059 = vmatprep.subr.bf16.mxu0 0
  %6060 = vmatpush1.bf16.msra.mxu0 %v3402
  %6061 = vmatprep.subr.bf16.mxu0 0
  %6062 = vmatpush1.bf16.msra.mxu0 %v3403
  %6063 = vmatprep.subr.bf16.mxu0 0
  %6064 = vmatpush1.bf16.msra.mxu0 %v3404
  %6065 = vmatprep.mubr.bf16.mxu0 %v6029
  %6066 = vmatmul.mubr.bf16.gmra.mrb[0].mxu0 %v6026
  %v6067 = vpop.f32.mrb[0].mxu0
  %v6068 = vadd.f32 %v3315, %v6067
  %v6069 = vpop.f32.mrb[0].mxu0
  %v6070 = vpop.f32.mrb[0].mxu0
  %v6071 = vpop.f32.mrb[0].mxu0
  %6072 = vdwg.mxu0
  %6073 = vmatprep.subr.bf16.mxu0 0
  %6074 = vmatpush1.bf16.msra.mxu0 %v3405
  %6075 = vmatprep.subr.bf16.mxu0 0
  %6076 = vmatpush1.bf16.msra.mxu0 %v3406
  %6077 = vmatprep.subr.bf16.mxu0 0
  %6078 = vmatpush1.bf16.msra.mxu0 0
  %6079 = vmatprep.subr.bf16.mxu0 0
  %6080 = vmatpush1.bf16.msra.mxu0 0
  %6081 = vmatprep.subr.bf16.mxu0 0
  %6082 = vmatpush1.bf16.msra.mxu0 0
  %6083 = vmatprep.subr.bf16.mxu0 0
  %6084 = vmatpush1.bf16.msra.mxu0 0
  %6085 = vmatprep.subr.bf16.mxu0 0
  %6086 = vmatpush1.bf16.msra.mxu0 0
  %6087 = vmatprep.subr.bf16.mxu0 0
  %6088 = vmatpush1.bf16.msra.mxu0 0
  %6089 = vmatprep.subr.bf16.mxu0 0
  %6090 = vmatpush1.bf16.msra.mxu0 0
  %6091 = vmatprep.subr.bf16.mxu0 0
  %6092 = vmatpush1.bf16.msra.mxu0 0
  %6093 = vmatprep.subr.bf16.mxu0 0
  %6094 = vmatpush1.bf16.msra.mxu0 0
  %6095 = vmatprep.subr.bf16.mxu0 0
  %6096 = vmatpush1.bf16.msra.mxu0 0
  %6097 = vmatprep.subr.bf16.mxu0 0
  %6098 = vmatpush1.bf16.msra.mxu0 0
  %6099 = vmatprep.subr.bf16.mxu0 0
  %6100 = vmatpush1.bf16.msra.mxu0 0
  %6101 = vmatprep.subr.bf16.mxu0 0
  %6102 = vmatpush1.bf16.msra.mxu0 0
  %6103 = vmatprep.subr.bf16.mxu0 0
  %6104 = vmatpush1.bf16.msra.mxu0 0
  %6105 = vmatprep.mubr.bf16.mxu0 0
  %6106 = vmatmul.mubr.bf16.gmra.mrb[0].mxu0 %v6031
  %v6107 = vpop.f32.mrb[0].mxu0
  %v6108 = vadd.f32 %v6068, %v6107
  %v6109 = vpop.f32.mrb[0].mxu0
  %v6110 = vpop.f32.mrb[0].mxu0
  %v6111 = vpop.f32.mrb[0].mxu0
  %6112 = vdwg.mxu0
  %v6113 = vmax.f32 %v6108, 0.0
  %v6114 = vpack.c.bf16 %v6113, %v6113
  %v6116 = vunpack.c.l.b16 %v6114
  %v6117 = vpack.c.b16 %v6116, %v6116
  %6118 = vrot.lane.b32.xlu0 %v6117, 64
  %v6119 = vpop.permute.xlu0 %6118
  %6121 = vst.msk [vmem:[#allocation3 + $0x14] sm:$0xf] %vm3737, %v6119
  %v6122 = vld [vmem:[%s1616] sm:$0xff]
  %v6123 = vld [vmem:[%s1819] sm:$0xff]
  %v6124 = vld [vmem:[%s2022] sm:$0xff]
  %v6126 = vunpack.c.l.b16 %v6122
  %v6127 = vunpack.c.h.b16 %v6122
  %v6128 = vpack.c.b16 %v6126, %v6126
  %v6129 = vpack.c.b16 %v6127, %v6127
  %6130 = vrot.lane.b32.xlu0 %v6128, 32
  %v6131 = vpop.permute.xlu0 %6130
  %6132 = vrot.lane.b32.xlu0 %v6129, 32
  %v6133 = vpop.permute.xlu0 %6132
  %v6134 = vsel %vm4433, %v6131, %v6133
  %v6136 = vunpack.c.l.b16 %v6123
  %v6137 = vunpack.c.h.b16 %v6123
  %v6138 = vpack.c.b16 %v6136, %v6136
  %v6139 = vpack.c.b16 %v6137, %v6137
  %v6141 = vunpack.c.l.b16 %v6124
  %v6142 = vunpack.c.h.b16 %v6124
  %v6143 = vpack.c.b16 %v6141, %v6141
  %v6144 = vpack.c.b16 %v6142, %v6142
  %6145 = vrot.lane.b32.xlu0 %v6143, 96
  %v6146 = vpop.permute.xlu0 %6145
  %6147 = vrot.lane.b32.xlu0 %v6144, 96
  %v6148 = vpop.permute.xlu0 %6147
  %v6149 = vsel %vm3637, %v6146, %v6148
  %v6152 = vsel %vm493, %v6134, %v6138
  %v6156 = vsel %vm3307, %v6139, %v6149
  %v6159 = vsel %vm3286, %v6148, 0
  %6161 = vmatprep.subr.bf16.mxu0 0
  %6162 = vmatpush1.bf16.msra.mxu0 %v3389
  %6163 = vmatprep.subr.bf16.mxu0 0
  %6164 = vmatpush1.bf16.msra.mxu0 %v3390
  %6165 = vmatprep.subr.bf16.mxu0 0
  %6166 = vmatpush1.bf16.msra.mxu0 %v3391
  %6167 = vmatprep.subr.bf16.mxu0 0
  %6168 = vmatpush1.bf16.msra.mxu0 %v3392
  %6169 = vmatprep.subr.bf16.mxu0 0
  %6170 = vmatpush1.bf16.msra.mxu0 %v3393
  %6171 = vmatprep.subr.bf16.mxu0 0
  %6172 = vmatpush1.bf16.msra.mxu0 %v3394
  %6173 = vmatprep.subr.bf16.mxu0 0
  %6174 = vmatpush1.bf16.msra.mxu0 %v3395
  %6175 = vmatprep.subr.bf16.mxu0 0
  %6176 = vmatpush1.bf16.msra.mxu0 %v3396
  %6177 = vmatprep.subr.bf16.mxu0 0
  %6178 = vmatpush1.bf16.msra.mxu0 %v3397
  %6179 = vmatprep.subr.bf16.mxu0 0
  %6180 = vmatpush1.bf16.msra.mxu0 %v3398
  %6181 = vmatprep.subr.bf16.mxu0 0
  %6182 = vmatpush1.bf16.msra.mxu0 %v3399
  %6183 = vmatprep.subr.bf16.mxu0 0
  %6184 = vmatpush1.bf16.msra.mxu0 %v3400
  %6185 = vmatprep.subr.bf16.mxu0 0
  %6186 = vmatpush1.bf16.msra.mxu0 %v3401
  %6187 = vmatprep.subr.bf16.mxu0 0
  %6188 = vmatpush1.bf16.msra.mxu0 %v3402
  %6189 = vmatprep.subr.bf16.mxu0 0
  %6190 = vmatpush1.bf16.msra.mxu0 %v3403
  %6191 = vmatprep.subr.bf16.mxu0 0
  %6192 = vmatpush1.bf16.msra.mxu0 %v3404
  %6193 = vmatprep.mubr.bf16.mxu0 %v6156
  %6194 = vmatmul.mubr.bf16.gmra.mrb[0].mxu0 %v6152
  %v6195 = vpop.f32.mrb[0].mxu0
  %v6196 = vadd.f32 %v3315, %v6195
  %v6197 = vpop.f32.mrb[0].mxu0
  %v6198 = vpop.f32.mrb[0].mxu0
  %v6199 = vpop.f32.mrb[0].mxu0
  %6200 = vdwg.mxu0
  %6201 = vmatprep.subr.bf16.mxu0 0
  %6202 = vmatpush1.bf16.msra.mxu0 %v3405
  %6203 = vmatprep.subr.bf16.mxu0 0
  %6204 = vmatpush1.bf16.msra.mxu0 %v3406
  %6205 = vmatprep.subr.bf16.mxu0 0
  %6206 = vmatpush1.bf16.msra.mxu0 0
  %6207 = vmatprep.subr.bf16.mxu0 0
  %6208 = vmatpush1.bf16.msra.mxu0 0
  %6209 = vmatprep.subr.bf16.mxu0 0
  %6210 = vmatpush1.bf16.msra.mxu0 0
  %6211 = vmatprep.subr.bf16.mxu0 0
  %6212 = vmatpush1.bf16.msra.mxu0 0
  %6213 = vmatprep.subr.bf16.mxu0 0
  %6214 = vmatpush1.bf16.msra.mxu0 0
  %6215 = vmatprep.subr.bf16.mxu0 0
  %6216 = vmatpush1.bf16.msra.mxu0 0
  %6217 = vmatprep.subr.bf16.mxu0 0
  %6218 = vmatpush1.bf16.msra.mxu0 0
  %6219 = vmatprep.subr.bf16.mxu0 0
  %6220 = vmatpush1.bf16.msra.mxu0 0
  %6221 = vmatprep.subr.bf16.mxu0 0
  %6222 = vmatpush1.bf16.msra.mxu0 0
  %6223 = vmatprep.subr.bf16.mxu0 0
  %6224 = vmatpush1.bf16.msra.mxu0 0
  %6225 = vmatprep.subr.bf16.mxu0 0
  %6226 = vmatpush1.bf16.msra.mxu0 0
  %6227 = vmatprep.subr.bf16.mxu0 0
  %6228 = vmatpush1.bf16.msra.mxu0 0
  %6229 = vmatprep.subr.bf16.mxu0 0
  %6230 = vmatpush1.bf16.msra.mxu0 0
  %6231 = vmatprep.subr.bf16.mxu0 0
  %6232 = vmatpush1.bf16.msra.mxu0 0
  %6233 = vmatprep.mubr.bf16.mxu0 0
  %6234 = vmatmul.mubr.bf16.gmra.mrb[0].mxu0 %v6159
  %v6235 = vpop.f32.mrb[0].mxu0
  %v6236 = vadd.f32 %v6196, %v6235
  %v6237 = vpop.f32.mrb[0].mxu0
  %v6238 = vpop.f32.mrb[0].mxu0
  %v6239 = vpop.f32.mrb[0].mxu0
  %6240 = vdwg.mxu0
  %v6241 = vmax.f32 %v6236, 0.0
  %v6242 = vpack.c.bf16 %v6241, %v6241
  %v6244 = vunpack.c.l.b16 %v6242
  %v6245 = vpack.c.b16 %v6244, %v6244
  %6246 = vrot.lane.b32.xlu0 %v6245, 96
  %v6247 = vpop.permute.xlu0 %6246
  %6249 = vst.msk [vmem:[#allocation3 + $0x14] sm:$0xf] %vm3847, %v6247
  %v6250 = vld [vmem:[%s1616 + $0x4] sm:$0xf]
  %v6251 = vld [vmem:[%s1819 + $0x4] sm:$0xf]
  %v6252 = vld [vmem:[%s2022 + $0x4] sm:$0xf]
  %v6254 = vunpack.c.l.b16 %v6250
  %v6255 = vpack.c.b16 %v6254, %v6254
  %6256 = vrot.lane.b32.xlu0 %v6255, 96
  %v6257 = vpop.permute.xlu0 %6256
  %v6259 = vunpack.c.l.b16 %v6251
  %v6260 = vpack.c.b16 %v6259, %v6259
  %6261 = vrot.lane.b32.xlu0 %v6260, 64
  %v6262 = vpop.permute.xlu0 %6261
  %v6264 = vunpack.c.l.b16 %v6252
  %v6265 = vpack.c.b16 %v6264, %v6264
  %6266 = vrot.lane.b32.xlu0 %v6265, 32
  %v6267 = vpop.permute.xlu0 %6266
  %v6270 = vsel %vm493, %v6257, %v6262
  %v6273 = vsel %vm3307, %v6262, %v6267
  %v6275 = vsel %vm3286, %v6267, 0
  %6277 = vmatprep.subr.bf16.mxu0 0
  %6278 = vmatpush1.bf16.msra.mxu0 %v3389
  %6279 = vmatprep.subr.bf16.mxu0 0
  %6280 = vmatpush1.bf16.msra.mxu0 %v3390
  %6281 = vmatprep.subr.bf16.mxu0 0
  %6282 = vmatpush1.bf16.msra.mxu0 %v3391
  %6283 = vmatprep.subr.bf16.mxu0 0
  %6284 = vmatpush1.bf16.msra.mxu0 %v3392
  %6285 = vmatprep.subr.bf16.mxu0 0
  %6286 = vmatpush1.bf16.msra.mxu0 %v3393
  %6287 = vmatprep.subr.bf16.mxu0 0
  %6288 = vmatpush1.bf16.msra.mxu0 %v3394
  %6289 = vmatprep.subr.bf16.mxu0 0
  %6290 = vmatpush1.bf16.msra.mxu0 %v3395
  %6291 = vmatprep.subr.bf16.mxu0 0
  %6292 = vmatpush1.bf16.msra.mxu0 %v3396
  %6293 = vmatprep.subr.bf16.mxu0 0
  %6294 = vmatpush1.bf16.msra.mxu0 %v3397
  %6295 = vmatprep.subr.bf16.mxu0 0
  %6296 = vmatpush1.bf16.msra.mxu0 %v3398
  %6297 = vmatprep.subr.bf16.mxu0 0
  %6298 = vmatpush1.bf16.msra.mxu0 %v3399
  %6299 = vmatprep.subr.bf16.mxu0 0
  %6300 = vmatpush1.bf16.msra.mxu0 %v3400
  %6301 = vmatprep.subr.bf16.mxu0 0
  %6302 = vmatpush1.bf16.msra.mxu0 %v3401
  %6303 = vmatprep.subr.bf16.mxu0 0
  %6304 = vmatpush1.bf16.msra.mxu0 %v3402
  %6305 = vmatprep.subr.bf16.mxu0 0
  %6306 = vmatpush1.bf16.msra.mxu0 %v3403
  %6307 = vmatprep.subr.bf16.mxu0 0
  %6308 = vmatpush1.bf16.msra.mxu0 %v3404
  %6309 = vmatprep.mubr.bf16.mxu0 %v6273
  %6310 = vmatmul.mubr.bf16.gmra.mrb[0].mxu0 %v6270
  %v6311 = vpop.f32.mrb[0].mxu0
  %v6312 = vadd.f32 %v3315, %v6311
  %v6313 = vpop.f32.mrb[0].mxu0
  %v6314 = vpop.f32.mrb[0].mxu0
  %v6315 = vpop.f32.mrb[0].mxu0
  %6316 = vdwg.mxu0
  %6317 = vmatprep.subr.bf16.mxu0 0
  %6318 = vmatpush1.bf16.msra.mxu0 %v3405
  %6319 = vmatprep.subr.bf16.mxu0 0
  %6320 = vmatpush1.bf16.msra.mxu0 %v3406
  %6321 = vmatprep.subr.bf16.mxu0 0
  %6322 = vmatpush1.bf16.msra.mxu0 0
  %6323 = vmatprep.subr.bf16.mxu0 0
  %6324 = vmatpush1.bf16.msra.mxu0 0
  %6325 = vmatprep.subr.bf16.mxu0 0
  %6326 = vmatpush1.bf16.msra.mxu0 0
  %6327 = vmatprep.subr.bf16.mxu0 0
  %6328 = vmatpush1.bf16.msra.mxu0 0
  %6329 = vmatprep.subr.bf16.mxu0 0
  %6330 = vmatpush1.bf16.msra.mxu0 0
  %6331 = vmatprep.subr.bf16.mxu0 0
  %6332 = vmatpush1.bf16.msra.mxu0 0
  %6333 = vmatprep.subr.bf16.mxu0 0
  %6334 = vmatpush1.bf16.msra.mxu0 0
  %6335 = vmatprep.subr.bf16.mxu0 0
  %6336 = vmatpush1.bf16.msra.mxu0 0
  %6337 = vmatprep.subr.bf16.mxu0 0
  %6338 = vmatpush1.bf16.msra.mxu0 0
  %6339 = vmatprep.subr.bf16.mxu0 0
  %6340 = vmatpush1.bf16.msra.mxu0 0
  %6341 = vmatprep.subr.bf16.mxu0 0
  %6342 = vmatpush1.bf16.msra.mxu0 0
  %6343 = vmatprep.subr.bf16.mxu0 0
  %6344 = vmatpush1.bf16.msra.mxu0 0
  %6345 = vmatprep.subr.bf16.mxu0 0
  %6346 = vmatpush1.bf16.msra.mxu0 0
  %6347 = vmatprep.subr.bf16.mxu0 0
  %6348 = vmatpush1.bf16.msra.mxu0 0
  %6349 = vmatprep.mubr.bf16.mxu0 0
  %6350 = vmatmul.mubr.bf16.gmra.mrb[0].mxu0 %v6275
  %v6351 = vpop.f32.mrb[0].mxu0
  %v6352 = vadd.f32 %v6312, %v6351
  %v6353 = vpop.f32.mrb[0].mxu0
  %v6354 = vpop.f32.mrb[0].mxu0
  %v6355 = vpop.f32.mrb[0].mxu0
  %6356 = vdwg.mxu0
  %v6357 = vmax.f32 %v6352, 0.0
  %v6358 = vpack.c.bf16 %v6357, %v6357
  %6359 = vst.msk [vmem:[#allocation3 + $0x18] sm:$0xf] %vm3509, %v6358
  %v6360 = vld [vmem:[%s1616 + $0x4] sm:$0xff]
  %v6361 = vld [vmem:[%s1819 + $0x4] sm:$0xff]
  %v6362 = vld [vmem:[%s2022 + $0x4] sm:$0xff]
  %v6364 = vunpack.c.l.b16 %v6360
  %v6365 = vunpack.c.h.b16 %v6360
  %v6366 = vpack.c.b16 %v6364, %v6364
  %v6367 = vpack.c.b16 %v6365, %v6365
  %6368 = vrot.lane.b32.xlu0 %v6366, 32
  %v6369 = vpop.permute.xlu0 %6368
  %6370 = vrot.lane.b32.xlu0 %v6367, 32
  %v6371 = vpop.permute.xlu0 %6370
  %v6372 = vsel %vm4433, %v6369, %v6371
  %v6374 = vunpack.c.l.b16 %v6361
  %v6375 = vunpack.c.h.b16 %v6361
  %v6376 = vpack.c.b16 %v6374, %v6374
  %v6377 = vpack.c.b16 %v6375, %v6375
  %v6379 = vunpack.c.l.b16 %v6362
  %v6380 = vunpack.c.h.b16 %v6362
  %v6381 = vpack.c.b16 %v6379, %v6379
  %v6382 = vpack.c.b16 %v6380, %v6380
  %6383 = vrot.lane.b32.xlu0 %v6381, 96
  %v6384 = vpop.permute.xlu0 %6383
  %6385 = vrot.lane.b32.xlu0 %v6382, 96
  %v6386 = vpop.permute.xlu0 %6385
  %v6387 = vsel %vm3637, %v6384, %v6386
  %v6390 = vsel %vm493, %v6372, %v6376
  %v6394 = vsel %vm3307, %v6377, %v6387
  %v6397 = vsel %vm3286, %v6386, 0
  %6399 = vmatprep.subr.bf16.mxu0 0
  %6400 = vmatpush1.bf16.msra.mxu0 %v3389
  %6401 = vmatprep.subr.bf16.mxu0 0
  %6402 = vmatpush1.bf16.msra.mxu0 %v3390
  %6403 = vmatprep.subr.bf16.mxu0 0
  %6404 = vmatpush1.bf16.msra.mxu0 %v3391
  %6405 = vmatprep.subr.bf16.mxu0 0
  %6406 = vmatpush1.bf16.msra.mxu0 %v3392
  %6407 = vmatprep.subr.bf16.mxu0 0
  %6408 = vmatpush1.bf16.msra.mxu0 %v3393
  %6409 = vmatprep.subr.bf16.mxu0 0
  %6410 = vmatpush1.bf16.msra.mxu0 %v3394
  %6411 = vmatprep.subr.bf16.mxu0 0
  %6412 = vmatpush1.bf16.msra.mxu0 %v3395
  %6413 = vmatprep.subr.bf16.mxu0 0
  %6414 = vmatpush1.bf16.msra.mxu0 %v3396
  %6415 = vmatprep.subr.bf16.mxu0 0
  %6416 = vmatpush1.bf16.msra.mxu0 %v3397
  %6417 = vmatprep.subr.bf16.mxu0 0
  %6418 = vmatpush1.bf16.msra.mxu0 %v3398
  %6419 = vmatprep.subr.bf16.mxu0 0
  %6420 = vmatpush1.bf16.msra.mxu0 %v3399
  %6421 = vmatprep.subr.bf16.mxu0 0
  %6422 = vmatpush1.bf16.msra.mxu0 %v3400
  %6423 = vmatprep.subr.bf16.mxu0 0
  %6424 = vmatpush1.bf16.msra.mxu0 %v3401
  %6425 = vmatprep.subr.bf16.mxu0 0
  %6426 = vmatpush1.bf16.msra.mxu0 %v3402
  %6427 = vmatprep.subr.bf16.mxu0 0
  %6428 = vmatpush1.bf16.msra.mxu0 %v3403
  %6429 = vmatprep.subr.bf16.mxu0 0
  %6430 = vmatpush1.bf16.msra.mxu0 %v3404
  %6431 = vmatprep.mubr.bf16.mxu0 %v6394
  %6432 = vmatmul.mubr.bf16.gmra.mrb[0].mxu0 %v6390
  %v6433 = vpop.f32.mrb[0].mxu0
  %v6434 = vadd.f32 %v3315, %v6433
  %v6435 = vpop.f32.mrb[0].mxu0
  %v6436 = vpop.f32.mrb[0].mxu0
  %v6437 = vpop.f32.mrb[0].mxu0
  %6438 = vdwg.mxu0
  %6439 = vmatprep.subr.bf16.mxu0 0
  %6440 = vmatpush1.bf16.msra.mxu0 %v3405
  %6441 = vmatprep.subr.bf16.mxu0 0
  %6442 = vmatpush1.bf16.msra.mxu0 %v3406
  %6443 = vmatprep.subr.bf16.mxu0 0
  %6444 = vmatpush1.bf16.msra.mxu0 0
  %6445 = vmatprep.subr.bf16.mxu0 0
  %6446 = vmatpush1.bf16.msra.mxu0 0
  %6447 = vmatprep.subr.bf16.mxu0 0
  %6448 = vmatpush1.bf16.msra.mxu0 0
  %6449 = vmatprep.subr.bf16.mxu0 0
  %6450 = vmatpush1.bf16.msra.mxu0 0
  %6451 = vmatprep.subr.bf16.mxu0 0
  %6452 = vmatpush1.bf16.msra.mxu0 0
  %6453 = vmatprep.subr.bf16.mxu0 0
  %6454 = vmatpush1.bf16.msra.mxu0 0
  %6455 = vmatprep.subr.bf16.mxu0 0
  %6456 = vmatpush1.bf16.msra.mxu0 0
  %6457 = vmatprep.subr.bf16.mxu0 0
  %6458 = vmatpush1.bf16.msra.mxu0 0
  %6459 = vmatprep.subr.bf16.mxu0 0
  %6460 = vmatpush1.bf16.msra.mxu0 0
  %6461 = vmatprep.subr.bf16.mxu0 0
  %6462 = vmatpush1.bf16.msra.mxu0 0
  %6463 = vmatprep.subr.bf16.mxu0 0
  %6464 = vmatpush1.bf16.msra.mxu0 0
  %6465 = vmatprep.subr.bf16.mxu0 0
  %6466 = vmatpush1.bf16.msra.mxu0 0
  %6467 = vmatprep.subr.bf16.mxu0 0
  %6468 = vmatpush1.bf16.msra.mxu0 0
  %6469 = vmatprep.subr.bf16.mxu0 0
  %6470 = vmatpush1.bf16.msra.mxu0 0
  %6471 = vmatprep.mubr.bf16.mxu0 0
  %6472 = vmatmul.mubr.bf16.gmra.mrb[0].mxu0 %v6397
  %v6473 = vpop.f32.mrb[0].mxu0
  %v6474 = vadd.f32 %v6434, %v6473
  %v6475 = vpop.f32.mrb[0].mxu0
  %v6476 = vpop.f32.mrb[0].mxu0
  %v6477 = vpop.f32.mrb[0].mxu0
  %6478 = vdwg.mxu0
  %v6479 = vmax.f32 %v6474, 0.0
  %v6480 = vpack.c.bf16 %v6479, %v6479
  %v6482 = vunpack.c.l.b16 %v6480
  %v6483 = vpack.c.b16 %v6482, %v6482
  %6484 = vrot.lane.b32.xlu0 %v6483, 32
  %v6485 = vpop.permute.xlu0 %6484
  %6487 = vst.msk [vmem:[#allocation3 + $0x18] sm:$0xf] %vm3619, %v6485
  %v6488 = vld [vmem:[%s1616 + $0x8] sm:$0xf]
  %v6489 = vld [vmem:[%s1819 + $0x8] sm:$0xf]
  %v6490 = vld [vmem:[%s2022 + $0x8] sm:$0xf]
  %v6492 = vunpack.c.l.b16 %v6488
  %v6493 = vpack.c.b16 %v6492, %v6492
  %6494 = vrot.lane.b32.xlu0 %v6493, 96
  %v6495 = vpop.permute.xlu0 %6494
  %v6497 = vunpack.c.l.b16 %v6489
  %v6498 = vpack.c.b16 %v6497, %v6497
  %6499 = vrot.lane.b32.xlu0 %v6498, 64
  %v6500 = vpop.permute.xlu0 %6499
  %v6502 = vunpack.c.l.b16 %v6490
  %v6503 = vpack.c.b16 %v6502, %v6502
  %6504 = vrot.lane.b32.xlu0 %v6503, 32
  %v6505 = vpop.permute.xlu0 %6504
  %v6508 = vsel %vm493, %v6495, %v6500
  %v6511 = vsel %vm3307, %v6500, %v6505
  %v6513 = vsel %vm3286, %v6505, 0
  %6515 = vmatprep.subr.bf16.mxu0 0
  %6516 = vmatpush1.bf16.msra.mxu0 %v3389
  %6517 = vmatprep.subr.bf16.mxu0 0
  %6518 = vmatpush1.bf16.msra.mxu0 %v3390
  %6519 = vmatprep.subr.bf16.mxu0 0
  %6520 = vmatpush1.bf16.msra.mxu0 %v3391
  %6521 = vmatprep.subr.bf16.mxu0 0
  %6522 = vmatpush1.bf16.msra.mxu0 %v3392
  %6523 = vmatprep.subr.bf16.mxu0 0
  %6524 = vmatpush1.bf16.msra.mxu0 %v3393
  %6525 = vmatprep.subr.bf16.mxu0 0
  %6526 = vmatpush1.bf16.msra.mxu0 %v3394
  %6527 = vmatprep.subr.bf16.mxu0 0
  %6528 = vmatpush1.bf16.msra.mxu0 %v3395
  %6529 = vmatprep.subr.bf16.mxu0 0
  %6530 = vmatpush1.bf16.msra.mxu0 %v3396
  %6531 = vmatprep.subr.bf16.mxu0 0
  %6532 = vmatpush1.bf16.msra.mxu0 %v3397
  %6533 = vmatprep.subr.bf16.mxu0 0
  %6534 = vmatpush1.bf16.msra.mxu0 %v3398
  %6535 = vmatprep.subr.bf16.mxu0 0
  %6536 = vmatpush1.bf16.msra.mxu0 %v3399
  %6537 = vmatprep.subr.bf16.mxu0 0
  %6538 = vmatpush1.bf16.msra.mxu0 %v3400
  %6539 = vmatprep.subr.bf16.mxu0 0
  %6540 = vmatpush1.bf16.msra.mxu0 %v3401
  %6541 = vmatprep.subr.bf16.mxu0 0
  %6542 = vmatpush1.bf16.msra.mxu0 %v3402
  %6543 = vmatprep.subr.bf16.mxu0 0
  %6544 = vmatpush1.bf16.msra.mxu0 %v3403
  %6545 = vmatprep.subr.bf16.mxu0 0
  %6546 = vmatpush1.bf16.msra.mxu0 %v3404
  %6547 = vmatprep.mubr.bf16.mxu0 %v6511
  %6548 = vmatmul.mubr.bf16.gmra.mrb[0].mxu0 %v6508
  %v6549 = vpop.f32.mrb[0].mxu0
  %v6550 = vadd.f32 %v3315, %v6549
  %v6551 = vpop.f32.mrb[0].mxu0
  %v6552 = vpop.f32.mrb[0].mxu0
  %v6553 = vpop.f32.mrb[0].mxu0
  %6554 = vdwg.mxu0
  %6555 = vmatprep.subr.bf16.mxu0 0
  %6556 = vmatpush1.bf16.msra.mxu0 %v3405
  %6557 = vmatprep.subr.bf16.mxu0 0
  %6558 = vmatpush1.bf16.msra.mxu0 %v3406
  %6559 = vmatprep.subr.bf16.mxu0 0
  %6560 = vmatpush1.bf16.msra.mxu0 0
  %6561 = vmatprep.subr.bf16.mxu0 0
  %6562 = vmatpush1.bf16.msra.mxu0 0
  %6563 = vmatprep.subr.bf16.mxu0 0
  %6564 = vmatpush1.bf16.msra.mxu0 0
  %6565 = vmatprep.subr.bf16.mxu0 0
  %6566 = vmatpush1.bf16.msra.mxu0 0
  %6567 = vmatprep.subr.bf16.mxu0 0
  %6568 = vmatpush1.bf16.msra.mxu0 0
  %6569 = vmatprep.subr.bf16.mxu0 0
  %6570 = vmatpush1.bf16.msra.mxu0 0
  %6571 = vmatprep.subr.bf16.mxu0 0
  %6572 = vmatpush1.bf16.msra.mxu0 0
  %6573 = vmatprep.subr.bf16.mxu0 0
  %6574 = vmatpush1.bf16.msra.mxu0 0
  %6575 = vmatprep.subr.bf16.mxu0 0
  %6576 = vmatpush1.bf16.msra.mxu0 0
  %6577 = vmatprep.subr.bf16.mxu0 0
  %6578 = vmatpush1.bf16.msra.mxu0 0
  %6579 = vmatprep.subr.bf16.mxu0 0
  %6580 = vmatpush1.bf16.msra.mxu0 0
  %6581 = vmatprep.subr.bf16.mxu0 0
  %6582 = vmatpush1.bf16.msra.mxu0 0
  %6583 = vmatprep.subr.bf16.mxu0 0
  %6584 = vmatpush1.bf16.msra.mxu0 0
  %6585 = vmatprep.subr.bf16.mxu0 0
  %6586 = vmatpush1.bf16.msra.mxu0 0
  %6587 = vmatprep.mubr.bf16.mxu0 0
  %6588 = vmatmul.mubr.bf16.gmra.mrb[0].mxu0 %v6513
  %v6589 = vpop.f32.mrb[0].mxu0
  %v6590 = vadd.f32 %v6550, %v6589
  %v6591 = vpop.f32.mrb[0].mxu0
  %v6592 = vpop.f32.mrb[0].mxu0
  %v6593 = vpop.f32.mrb[0].mxu0
  %6594 = vdwg.mxu0
  %v6595 = vmax.f32 %v6590, 0.0
  %v6596 = vpack.c.bf16 %v6595, %v6595
  %v6598 = vunpack.c.l.b16 %v6596
  %v6599 = vpack.c.b16 %v6598, %v6598
  %6600 = vrot.lane.b32.xlu0 %v6599, 64
  %v6601 = vpop.permute.xlu0 %6600
  %6603 = vst.msk [vmem:[#allocation3 + $0x18] sm:$0xf] %vm3737, %v6601
  %v6604 = vld [vmem:[%s1616 + $0x8] sm:$0xff]
  %v6605 = vld [vmem:[%s1819 + $0x8] sm:$0xff]
  %v6606 = vld [vmem:[%s2022 + $0x8] sm:$0xff]
  %v6608 = vunpack.c.l.b16 %v6604
  %v6609 = vunpack.c.h.b16 %v6604
  %v6610 = vpack.c.b16 %v6608, %v6608
  %v6611 = vpack.c.b16 %v6609, %v6609
  %6612 = vrot.lane.b32.xlu0 %v6610, 32
  %v6613 = vpop.permute.xlu0 %6612
  %6614 = vrot.lane.b32.xlu0 %v6611, 32
  %v6615 = vpop.permute.xlu0 %6614
  %v6616 = vsel %vm4433, %v6613, %v6615
  %v6618 = vunpack.c.l.b16 %v6605
  %v6619 = vunpack.c.h.b16 %v6605
  %v6620 = vpack.c.b16 %v6618, %v6618
  %v6621 = vpack.c.b16 %v6619, %v6619
  %v6623 = vunpack.c.l.b16 %v6606
  %v6624 = vunpack.c.h.b16 %v6606
  %v6625 = vpack.c.b16 %v6623, %v6623
  %v6626 = vpack.c.b16 %v6624, %v6624
  %6627 = vrot.lane.b32.xlu0 %v6625, 96
  %v6628 = vpop.permute.xlu0 %6627
  %6629 = vrot.lane.b32.xlu0 %v6626, 96
  %v6630 = vpop.permute.xlu0 %6629
  %v6631 = vsel %vm3637, %v6628, %v6630
  %v6634 = vsel %vm493, %v6616, %v6620
  %v6638 = vsel %vm3307, %v6621, %v6631
  %v6641 = vsel %vm3286, %v6630, 0
  %6643 = vmatprep.subr.bf16.mxu0 0
  %6644 = vmatpush1.bf16.msra.mxu0 %v3389
  %6645 = vmatprep.subr.bf16.mxu0 0
  %6646 = vmatpush1.bf16.msra.mxu0 %v3390
  %6647 = vmatprep.subr.bf16.mxu0 0
  %6648 = vmatpush1.bf16.msra.mxu0 %v3391
  %6649 = vmatprep.subr.bf16.mxu0 0
  %6650 = vmatpush1.bf16.msra.mxu0 %v3392
  %6651 = vmatprep.subr.bf16.mxu0 0
  %6652 = vmatpush1.bf16.msra.mxu0 %v3393
  %6653 = vmatprep.subr.bf16.mxu0 0
  %6654 = vmatpush1.bf16.msra.mxu0 %v3394
  %6655 = vmatprep.subr.bf16.mxu0 0
  %6656 = vmatpush1.bf16.msra.mxu0 %v3395
  %6657 = vmatprep.subr.bf16.mxu0 0
  %6658 = vmatpush1.bf16.msra.mxu0 %v3396
  %6659 = vmatprep.subr.bf16.mxu0 0
  %6660 = vmatpush1.bf16.msra.mxu0 %v3397
  %6661 = vmatprep.subr.bf16.mxu0 0
  %6662 = vmatpush1.bf16.msra.mxu0 %v3398
  %6663 = vmatprep.subr.bf16.mxu0 0
  %6664 = vmatpush1.bf16.msra.mxu0 %v3399
  %6665 = vmatprep.subr.bf16.mxu0 0
  %6666 = vmatpush1.bf16.msra.mxu0 %v3400
  %6667 = vmatprep.subr.bf16.mxu0 0
  %6668 = vmatpush1.bf16.msra.mxu0 %v3401
  %6669 = vmatprep.subr.bf16.mxu0 0
  %6670 = vmatpush1.bf16.msra.mxu0 %v3402
  %6671 = vmatprep.subr.bf16.mxu0 0
  %6672 = vmatpush1.bf16.msra.mxu0 %v3403
  %6673 = vmatprep.subr.bf16.mxu0 0
  %6674 = vmatpush1.bf16.msra.mxu0 %v3404
  %6675 = vmatprep.mubr.bf16.mxu0 %v6638
  %6676 = vmatmul.mubr.bf16.gmra.mrb[0].mxu0 %v6634
  %v6677 = vpop.f32.mrb[0].mxu0
  %v6678 = vadd.f32 %v3315, %v6677
  %v6679 = vpop.f32.mrb[0].mxu0
  %v6680 = vpop.f32.mrb[0].mxu0
  %v6681 = vpop.f32.mrb[0].mxu0
  %6682 = vdwg.mxu0
  %6683 = vmatprep.subr.bf16.mxu0 0
  %6684 = vmatpush1.bf16.msra.mxu0 %v3405
  %6685 = vmatprep.subr.bf16.mxu0 0
  %6686 = vmatpush1.bf16.msra.mxu0 %v3406
  %6687 = vmatprep.subr.bf16.mxu0 0
  %6688 = vmatpush1.bf16.msra.mxu0 0
  %6689 = vmatprep.subr.bf16.mxu0 0
  %6690 = vmatpush1.bf16.msra.mxu0 0
  %6691 = vmatprep.subr.bf16.mxu0 0
  %6692 = vmatpush1.bf16.msra.mxu0 0
  %6693 = vmatprep.subr.bf16.mxu0 0
  %6694 = vmatpush1.bf16.msra.mxu0 0
  %6695 = vmatprep.subr.bf16.mxu0 0
  %6696 = vmatpush1.bf16.msra.mxu0 0
  %6697 = vmatprep.subr.bf16.mxu0 0
  %6698 = vmatpush1.bf16.msra.mxu0 0
  %6699 = vmatprep.subr.bf16.mxu0 0
  %6700 = vmatpush1.bf16.msra.mxu0 0
  %6701 = vmatprep.subr.bf16.mxu0 0
  %6702 = vmatpush1.bf16.msra.mxu0 0
  %6703 = vmatprep.subr.bf16.mxu0 0
  %6704 = vmatpush1.bf16.msra.mxu0 0
  %6705 = vmatprep.subr.bf16.mxu0 0
  %6706 = vmatpush1.bf16.msra.mxu0 0
  %6707 = vmatprep.subr.bf16.mxu0 0
  %6708 = vmatpush1.bf16.msra.mxu0 0
  %6709 = vmatprep.subr.bf16.mxu0 0
  %6710 = vmatpush1.bf16.msra.mxu0 0
  %6711 = vmatprep.subr.bf16.mxu0 0
  %6712 = vmatpush1.bf16.msra.mxu0 0
  %6713 = vmatprep.subr.bf16.mxu0 0
  %6714 = vmatpush1.bf16.msra.mxu0 0
  %6715 = vmatprep.mubr.bf16.mxu0 0
  %6716 = vmatmul.mubr.bf16.gmra.mrb[0].mxu0 %v6641
  %v6717 = vpop.f32.mrb[0].mxu0
  %v6718 = vadd.f32 %v6678, %v6717
  %v6719 = vpop.f32.mrb[0].mxu0
  %v6720 = vpop.f32.mrb[0].mxu0
  %v6721 = vpop.f32.mrb[0].mxu0
  %6722 = vdwg.mxu0
  %v6723 = vmax.f32 %v6718, 0.0
  %v6724 = vpack.c.bf16 %v6723, %v6723
  %v6726 = vunpack.c.l.b16 %v6724
  %v6727 = vpack.c.b16 %v6726, %v6726
  %6728 = vrot.lane.b32.xlu0 %v6727, 96
  %v6729 = vpop.permute.xlu0 %6728
  %6731 = vst.msk [vmem:[#allocation3 + $0x18] sm:$0xf] %vm3847, %v6729
  %v6732 = vld [vmem:[%s2022] sm:$0xf]
  %v6734 = vunpack.c.l.b16 %v6732
  %v6735 = vpack.c.b16 %v6734, %v6734
  %6736 = vrot.lane.b32.xlu0 %v6735, 32
  %v6737 = vpop.permute.xlu0 %6736
  %v6739 = vsel %vm3286, 0, %v6737
  %v6740 = vld [vmem:[%s2225] sm:$0xf]
  %v6742 = vunpack.c.l.b16 %v6740
  %v6743 = vpack.c.b16 %v6742, %v6742
  %6744 = vrot.lane.b32.xlu0 %v6743, 32
  %v6745 = vpop.permute.xlu0 %6744
  %v6747 = vsel %vm3286, 0, %v6745
  %v6748 = vld [vmem:[%s2428] sm:$0xf]
  %v6750 = vunpack.c.l.b16 %v6748
  %v6751 = vpack.c.b16 %v6750, %v6750
  %6752 = vrot.lane.b32.xlu0 %v6751, 32
  %v6753 = vpop.permute.xlu0 %6752
  %v6755 = vsel %vm3286, 0, %v6753
  %6757 = vrot.lane.b32.xlu0 %v6747, 96
  %v6758 = vpop.permute.xlu0 %6757
  %6760 = vrot.lane.b32.xlu0 %v6755, 64
  %v6761 = vpop.permute.xlu0 %6760
  %v6763 = vsel %vm493, %v6739, %v6758
  %v6766 = vsel %vm3307, %v6758, %v6761
  %v6768 = vsel %vm3286, %v6761, 0
  %6770 = vmatprep.subr.bf16.mxu0 0
  %6771 = vmatpush1.bf16.msra.mxu0 %v3389
  %6772 = vmatprep.subr.bf16.mxu0 0
  %6773 = vmatpush1.bf16.msra.mxu0 %v3390
  %6774 = vmatprep.subr.bf16.mxu0 0
  %6775 = vmatpush1.bf16.msra.mxu0 %v3391
  %6776 = vmatprep.subr.bf16.mxu0 0
  %6777 = vmatpush1.bf16.msra.mxu0 %v3392
  %6778 = vmatprep.subr.bf16.mxu0 0
  %6779 = vmatpush1.bf16.msra.mxu0 %v3393
  %6780 = vmatprep.subr.bf16.mxu0 0
  %6781 = vmatpush1.bf16.msra.mxu0 %v3394
  %6782 = vmatprep.subr.bf16.mxu0 0
  %6783 = vmatpush1.bf16.msra.mxu0 %v3395
  %6784 = vmatprep.subr.bf16.mxu0 0
  %6785 = vmatpush1.bf16.msra.mxu0 %v3396
  %6786 = vmatprep.subr.bf16.mxu0 0
  %6787 = vmatpush1.bf16.msra.mxu0 %v3397
  %6788 = vmatprep.subr.bf16.mxu0 0
  %6789 = vmatpush1.bf16.msra.mxu0 %v3398
  %6790 = vmatprep.subr.bf16.mxu0 0
  %6791 = vmatpush1.bf16.msra.mxu0 %v3399
  %6792 = vmatprep.subr.bf16.mxu0 0
  %6793 = vmatpush1.bf16.msra.mxu0 %v3400
  %6794 = vmatprep.subr.bf16.mxu0 0
  %6795 = vmatpush1.bf16.msra.mxu0 %v3401
  %6796 = vmatprep.subr.bf16.mxu0 0
  %6797 = vmatpush1.bf16.msra.mxu0 %v3402
  %6798 = vmatprep.subr.bf16.mxu0 0
  %6799 = vmatpush1.bf16.msra.mxu0 %v3403
  %6800 = vmatprep.subr.bf16.mxu0 0
  %6801 = vmatpush1.bf16.msra.mxu0 %v3404
  %6802 = vmatprep.mubr.bf16.mxu0 %v6766
  %6803 = vmatmul.mubr.bf16.gmra.mrb[0].mxu0 %v6763
  %v6804 = vpop.f32.mrb[0].mxu0
  %v6805 = vadd.f32 %v3315, %v6804
  %v6806 = vpop.f32.mrb[0].mxu0
  %v6807 = vpop.f32.mrb[0].mxu0
  %v6808 = vpop.f32.mrb[0].mxu0
  %6809 = vdwg.mxu0
  %6810 = vmatprep.subr.bf16.mxu0 0
  %6811 = vmatpush1.bf16.msra.mxu0 %v3405
  %6812 = vmatprep.subr.bf16.mxu0 0
  %6813 = vmatpush1.bf16.msra.mxu0 %v3406
  %6814 = vmatprep.subr.bf16.mxu0 0
  %6815 = vmatpush1.bf16.msra.mxu0 0
  %6816 = vmatprep.subr.bf16.mxu0 0
  %6817 = vmatpush1.bf16.msra.mxu0 0
  %6818 = vmatprep.subr.bf16.mxu0 0
  %6819 = vmatpush1.bf16.msra.mxu0 0
  %6820 = vmatprep.subr.bf16.mxu0 0
  %6821 = vmatpush1.bf16.msra.mxu0 0
  %6822 = vmatprep.subr.bf16.mxu0 0
  %6823 = vmatpush1.bf16.msra.mxu0 0
  %6824 = vmatprep.subr.bf16.mxu0 0
  %6825 = vmatpush1.bf16.msra.mxu0 0
  %6826 = vmatprep.subr.bf16.mxu0 0
  %6827 = vmatpush1.bf16.msra.mxu0 0
  %6828 = vmatprep.subr.bf16.mxu0 0
  %6829 = vmatpush1.bf16.msra.mxu0 0
  %6830 = vmatprep.subr.bf16.mxu0 0
  %6831 = vmatpush1.bf16.msra.mxu0 0
  %6832 = vmatprep.subr.bf16.mxu0 0
  %6833 = vmatpush1.bf16.msra.mxu0 0
  %6834 = vmatprep.subr.bf16.mxu0 0
  %6835 = vmatpush1.bf16.msra.mxu0 0
  %6836 = vmatprep.subr.bf16.mxu0 0
  %6837 = vmatpush1.bf16.msra.mxu0 0
  %6838 = vmatprep.subr.bf16.mxu0 0
  %6839 = vmatpush1.bf16.msra.mxu0 0
  %6840 = vmatprep.subr.bf16.mxu0 0
  %6841 = vmatpush1.bf16.msra.mxu0 0
  %6842 = vmatprep.mubr.bf16.mxu0 0
  %6843 = vmatmul.mubr.bf16.gmra.mrb[0].mxu0 %v6768
  %v6844 = vpop.f32.mrb[0].mxu0
  %v6845 = vadd.f32 %v6805, %v6844
  %v6846 = vpop.f32.mrb[0].mxu0
  %v6847 = vpop.f32.mrb[0].mxu0
  %v6848 = vpop.f32.mrb[0].mxu0
  %6849 = vdwg.mxu0
  %v6850 = vmax.f32 %v6845, 0.0
  %v6851 = vpack.c.bf16 %v6850, %v6850
  %6852 = vst.msk [vmem:[#allocation3 + $0x1c] sm:$0xf] %vm3509, %v6851
  %v6853 = vld [vmem:[%s2022] sm:$0xf]
  %v6854 = vld [vmem:[%s2225] sm:$0xf]
  %v6855 = vld [vmem:[%s2428] sm:$0xf]
  %v6857 = vunpack.c.l.b16 %v6853
  %v6858 = vpack.c.b16 %v6857, %v6857
  %6859 = vrot.lane.b32.xlu0 %v6858, 96
  %v6860 = vpop.permute.xlu0 %6859
  %v6862 = vunpack.c.l.b16 %v6854
  %v6863 = vpack.c.b16 %v6862, %v6862
  %6864 = vrot.lane.b32.xlu0 %v6863, 64
  %v6865 = vpop.permute.xlu0 %6864
  %v6867 = vunpack.c.l.b16 %v6855
  %v6868 = vpack.c.b16 %v6867, %v6867
  %6869 = vrot.lane.b32.xlu0 %v6868, 32
  %v6870 = vpop.permute.xlu0 %6869
  %v6873 = vsel %vm493, %v6860, %v6865
  %v6876 = vsel %vm3307, %v6865, %v6870
  %v6878 = vsel %vm3286, %v6870, 0
  %6880 = vmatprep.subr.bf16.mxu0 0
  %6881 = vmatpush1.bf16.msra.mxu0 %v3389
  %6882 = vmatprep.subr.bf16.mxu0 0
  %6883 = vmatpush1.bf16.msra.mxu0 %v3390
  %6884 = vmatprep.subr.bf16.mxu0 0
  %6885 = vmatpush1.bf16.msra.mxu0 %v3391
  %6886 = vmatprep.subr.bf16.mxu0 0
  %6887 = vmatpush1.bf16.msra.mxu0 %v3392
  %6888 = vmatprep.subr.bf16.mxu0 0
  %6889 = vmatpush1.bf16.msra.mxu0 %v3393
  %6890 = vmatprep.subr.bf16.mxu0 0
  %6891 = vmatpush1.bf16.msra.mxu0 %v3394
  %6892 = vmatprep.subr.bf16.mxu0 0
  %6893 = vmatpush1.bf16.msra.mxu0 %v3395
  %6894 = vmatprep.subr.bf16.mxu0 0
  %6895 = vmatpush1.bf16.msra.mxu0 %v3396
  %6896 = vmatprep.subr.bf16.mxu0 0
  %6897 = vmatpush1.bf16.msra.mxu0 %v3397
  %6898 = vmatprep.subr.bf16.mxu0 0
  %6899 = vmatpush1.bf16.msra.mxu0 %v3398
  %6900 = vmatprep.subr.bf16.mxu0 0
  %6901 = vmatpush1.bf16.msra.mxu0 %v3399
  %6902 = vmatprep.subr.bf16.mxu0 0
  %6903 = vmatpush1.bf16.msra.mxu0 %v3400
  %6904 = vmatprep.subr.bf16.mxu0 0
  %6905 = vmatpush1.bf16.msra.mxu0 %v3401
  %6906 = vmatprep.subr.bf16.mxu0 0
  %6907 = vmatpush1.bf16.msra.mxu0 %v3402
  %6908 = vmatprep.subr.bf16.mxu0 0
  %6909 = vmatpush1.bf16.msra.mxu0 %v3403
  %6910 = vmatprep.subr.bf16.mxu0 0
  %6911 = vmatpush1.bf16.msra.mxu0 %v3404
  %6912 = vmatprep.mubr.bf16.mxu0 %v6876
  %6913 = vmatmul.mubr.bf16.gmra.mrb[0].mxu0 %v6873
  %v6914 = vpop.f32.mrb[0].mxu0
  %v6915 = vadd.f32 %v3315, %v6914
  %v6916 = vpop.f32.mrb[0].mxu0
  %v6917 = vpop.f32.mrb[0].mxu0
  %v6918 = vpop.f32.mrb[0].mxu0
  %6919 = vdwg.mxu0
  %6920 = vmatprep.subr.bf16.mxu0 0
  %6921 = vmatpush1.bf16.msra.mxu0 %v3405
  %6922 = vmatprep.subr.bf16.mxu0 0
  %6923 = vmatpush1.bf16.msra.mxu0 %v3406
  %6924 = vmatprep.subr.bf16.mxu0 0
  %6925 = vmatpush1.bf16.msra.mxu0 0
  %6926 = vmatprep.subr.bf16.mxu0 0
  %6927 = vmatpush1.bf16.msra.mxu0 0
  %6928 = vmatprep.subr.bf16.mxu0 0
  %6929 = vmatpush1.bf16.msra.mxu0 0
  %6930 = vmatprep.subr.bf16.mxu0 0
  %6931 = vmatpush1.bf16.msra.mxu0 0
  %6932 = vmatprep.subr.bf16.mxu0 0
  %6933 = vmatpush1.bf16.msra.mxu0 0
  %6934 = vmatprep.subr.bf16.mxu0 0
  %6935 = vmatpush1.bf16.msra.mxu0 0
  %6936 = vmatprep.subr.bf16.mxu0 0
  %6937 = vmatpush1.bf16.msra.mxu0 0
  %6938 = vmatprep.subr.bf16.mxu0 0
  %6939 = vmatpush1.bf16.msra.mxu0 0
  %6940 = vmatprep.subr.bf16.mxu0 0
  %6941 = vmatpush1.bf16.msra.mxu0 0
  %6942 = vmatprep.subr.bf16.mxu0 0
  %6943 = vmatpush1.bf16.msra.mxu0 0
  %6944 = vmatprep.subr.bf16.mxu0 0
  %6945 = vmatpush1.bf16.msra.mxu0 0
  %6946 = vmatprep.subr.bf16.mxu0 0
  %6947 = vmatpush1.bf16.msra.mxu0 0
  %6948 = vmatprep.subr.bf16.mxu0 0
  %6949 = vmatpush1.bf16.msra.mxu0 0
  %6950 = vmatprep.subr.bf16.mxu0 0
  %6951 = vmatpush1.bf16.msra.mxu0 0
  %6952 = vmatprep.mubr.bf16.mxu0 0
  %6953 = vmatmul.mubr.bf16.gmra.mrb[0].mxu0 %v6878
  %v6954 = vpop.f32.mrb[0].mxu0
  %v6955 = vadd.f32 %v6915, %v6954
  %v6956 = vpop.f32.mrb[0].mxu0
  %v6957 = vpop.f32.mrb[0].mxu0
  %v6958 = vpop.f32.mrb[0].mxu0
  %6959 = vdwg.mxu0
  %v6960 = vmax.f32 %v6955, 0.0
  %v6961 = vpack.c.bf16 %v6960, %v6960
  %v6963 = vunpack.c.l.b16 %v6961
  %v6964 = vpack.c.b16 %v6963, %v6963
  %6965 = vrot.lane.b32.xlu0 %v6964, 32
  %v6966 = vpop.permute.xlu0 %6965
  %6968 = vst.msk [vmem:[#allocation3 + $0x1c] sm:$0xf] %vm3619, %v6966
  %v6969 = vld [vmem:[%s2022] sm:$0xff]
  %v6970 = vld [vmem:[%s2225] sm:$0xff]
  %v6971 = vld [vmem:[%s2428] sm:$0xff]
  %v6973 = vunpack.c.l.b16 %v6969
  %v6974 = vunpack.c.h.b16 %v6969
  %v6975 = vpack.c.b16 %v6973, %v6973
  %v6976 = vpack.c.b16 %v6974, %v6974
  %6977 = vrot.lane.b32.xlu0 %v6975, 32
  %v6978 = vpop.permute.xlu0 %6977
  %6979 = vrot.lane.b32.xlu0 %v6976, 32
  %v6980 = vpop.permute.xlu0 %6979
  %v6981 = vsel %vm4433, %v6978, %v6980
  %v6983 = vunpack.c.l.b16 %v6970
  %v6984 = vunpack.c.h.b16 %v6970
  %v6985 = vpack.c.b16 %v6983, %v6983
  %v6986 = vpack.c.b16 %v6984, %v6984
  %v6988 = vunpack.c.l.b16 %v6971
  %v6989 = vunpack.c.h.b16 %v6971
  %v6990 = vpack.c.b16 %v6988, %v6988
  %v6991 = vpack.c.b16 %v6989, %v6989
  %6992 = vrot.lane.b32.xlu0 %v6990, 96
  %v6993 = vpop.permute.xlu0 %6992
  %6994 = vrot.lane.b32.xlu0 %v6991, 96
  %v6995 = vpop.permute.xlu0 %6994
  %v6996 = vsel %vm3637, %v6993, %v6995
  %v6999 = vsel %vm493, %v6981, %v6985
  %v7003 = vsel %vm3307, %v6986, %v6996
  %v7006 = vsel %vm3286, %v6995, 0
  %7008 = vmatprep.subr.bf16.mxu0 0
  %7009 = vmatpush1.bf16.msra.mxu0 %v3389
  %7010 = vmatprep.subr.bf16.mxu0 0
  %7011 = vmatpush1.bf16.msra.mxu0 %v3390
  %7012 = vmatprep.subr.bf16.mxu0 0
  %7013 = vmatpush1.bf16.msra.mxu0 %v3391
  %7014 = vmatprep.subr.bf16.mxu0 0
  %7015 = vmatpush1.bf16.msra.mxu0 %v3392
  %7016 = vmatprep.subr.bf16.mxu0 0
  %7017 = vmatpush1.bf16.msra.mxu0 %v3393
  %7018 = vmatprep.subr.bf16.mxu0 0
  %7019 = vmatpush1.bf16.msra.mxu0 %v3394
  %7020 = vmatprep.subr.bf16.mxu0 0
  %7021 = vmatpush1.bf16.msra.mxu0 %v3395
  %7022 = vmatprep.subr.bf16.mxu0 0
  %7023 = vmatpush1.bf16.msra.mxu0 %v3396
  %7024 = vmatprep.subr.bf16.mxu0 0
  %7025 = vmatpush1.bf16.msra.mxu0 %v3397
  %7026 = vmatprep.subr.bf16.mxu0 0
  %7027 = vmatpush1.bf16.msra.mxu0 %v3398
  %7028 = vmatprep.subr.bf16.mxu0 0
  %7029 = vmatpush1.bf16.msra.mxu0 %v3399
  %7030 = vmatprep.subr.bf16.mxu0 0
  %7031 = vmatpush1.bf16.msra.mxu0 %v3400
  %7032 = vmatprep.subr.bf16.mxu0 0
  %7033 = vmatpush1.bf16.msra.mxu0 %v3401
  %7034 = vmatprep.subr.bf16.mxu0 0
  %7035 = vmatpush1.bf16.msra.mxu0 %v3402
  %7036 = vmatprep.subr.bf16.mxu0 0
  %7037 = vmatpush1.bf16.msra.mxu0 %v3403
  %7038 = vmatprep.subr.bf16.mxu0 0
  %7039 = vmatpush1.bf16.msra.mxu0 %v3404
  %7040 = vmatprep.mubr.bf16.mxu0 %v7003
  %7041 = vmatmul.mubr.bf16.gmra.mrb[0].mxu0 %v6999
  %v7042 = vpop.f32.mrb[0].mxu0
  %v7043 = vadd.f32 %v3315, %v7042
  %v7044 = vpop.f32.mrb[0].mxu0
  %v7045 = vpop.f32.mrb[0].mxu0
  %v7046 = vpop.f32.mrb[0].mxu0
  %7047 = vdwg.mxu0
  %7048 = vmatprep.subr.bf16.mxu0 0
  %7049 = vmatpush1.bf16.msra.mxu0 %v3405
  %7050 = vmatprep.subr.bf16.mxu0 0
  %7051 = vmatpush1.bf16.msra.mxu0 %v3406
  %7052 = vmatprep.subr.bf16.mxu0 0
  %7053 = vmatpush1.bf16.msra.mxu0 0
  %7054 = vmatprep.subr.bf16.mxu0 0
  %7055 = vmatpush1.bf16.msra.mxu0 0
  %7056 = vmatprep.subr.bf16.mxu0 0
  %7057 = vmatpush1.bf16.msra.mxu0 0
  %7058 = vmatprep.subr.bf16.mxu0 0
  %7059 = vmatpush1.bf16.msra.mxu0 0
  %7060 = vmatprep.subr.bf16.mxu0 0
  %7061 = vmatpush1.bf16.msra.mxu0 0
  %7062 = vmatprep.subr.bf16.mxu0 0
  %7063 = vmatpush1.bf16.msra.mxu0 0
  %7064 = vmatprep.subr.bf16.mxu0 0
  %7065 = vmatpush1.bf16.msra.mxu0 0
  %7066 = vmatprep.subr.bf16.mxu0 0
  %7067 = vmatpush1.bf16.msra.mxu0 0
  %7068 = vmatprep.subr.bf16.mxu0 0
  %7069 = vmatpush1.bf16.msra.mxu0 0
  %7070 = vmatprep.subr.bf16.mxu0 0
  %7071 = vmatpush1.bf16.msra.mxu0 0
  %7072 = vmatprep.subr.bf16.mxu0 0
  %7073 = vmatpush1.bf16.msra.mxu0 0
  %7074 = vmatprep.subr.bf16.mxu0 0
  %7075 = vmatpush1.bf16.msra.mxu0 0
  %7076 = vmatprep.subr.bf16.mxu0 0
  %7077 = vmatpush1.bf16.msra.mxu0 0
  %7078 = vmatprep.subr.bf16.mxu0 0
  %7079 = vmatpush1.bf16.msra.mxu0 0
  %7080 = vmatprep.mubr.bf16.mxu0 0
  %7081 = vmatmul.mubr.bf16.gmra.mrb[0].mxu0 %v7006
  %v7082 = vpop.f32.mrb[0].mxu0
  %v7083 = vadd.f32 %v7043, %v7082
  %v7084 = vpop.f32.mrb[0].mxu0
  %v7085 = vpop.f32.mrb[0].mxu0
  %v7086 = vpop.f32.mrb[0].mxu0
  %7087 = vdwg.mxu0
  %v7088 = vmax.f32 %v7083, 0.0
  %v7089 = vpack.c.bf16 %v7088, %v7088
  %v7091 = vunpack.c.l.b16 %v7089
  %v7092 = vpack.c.b16 %v7091, %v7091
  %7093 = vrot.lane.b32.xlu0 %v7092, 64
  %v7094 = vpop.permute.xlu0 %7093
  %7096 = vst.msk [vmem:[#allocation3 + $0x1c] sm:$0xf] %vm3737, %v7094
  %v7097 = vld [vmem:[%s2022 + $0x4] sm:$0xf]
  %v7098 = vld [vmem:[%s2225 + $0x4] sm:$0xf]
  %v7099 = vld [vmem:[%s2428 + $0x4] sm:$0xf]
  %v7101 = vunpack.c.l.b16 %v7097
  %v7102 = vpack.c.b16 %v7101, %v7101
  %7103 = vrot.lane.b32.xlu0 %v7102, 96
  %v7104 = vpop.permute.xlu0 %7103
  %v7106 = vunpack.c.l.b16 %v7098
  %v7107 = vpack.c.b16 %v7106, %v7106
  %7108 = vrot.lane.b32.xlu0 %v7107, 64
  %v7109 = vpop.permute.xlu0 %7108
  %v7111 = vunpack.c.l.b16 %v7099
  %v7112 = vpack.c.b16 %v7111, %v7111
  %7113 = vrot.lane.b32.xlu0 %v7112, 32
  %v7114 = vpop.permute.xlu0 %7113
  %v7117 = vsel %vm493, %v7104, %v7109
  %v7120 = vsel %vm3307, %v7109, %v7114
  %v7122 = vsel %vm3286, %v7114, 0
  %7124 = vmatprep.subr.bf16.mxu0 0
  %7125 = vmatpush1.bf16.msra.mxu0 %v3389
  %7126 = vmatprep.subr.bf16.mxu0 0
  %7127 = vmatpush1.bf16.msra.mxu0 %v3390
  %7128 = vmatprep.subr.bf16.mxu0 0
  %7129 = vmatpush1.bf16.msra.mxu0 %v3391
  %7130 = vmatprep.subr.bf16.mxu0 0
  %7131 = vmatpush1.bf16.msra.mxu0 %v3392
  %7132 = vmatprep.subr.bf16.mxu0 0
  %7133 = vmatpush1.bf16.msra.mxu0 %v3393
  %7134 = vmatprep.subr.bf16.mxu0 0
  %7135 = vmatpush1.bf16.msra.mxu0 %v3394
  %7136 = vmatprep.subr.bf16.mxu0 0
  %7137 = vmatpush1.bf16.msra.mxu0 %v3395
  %7138 = vmatprep.subr.bf16.mxu0 0
  %7139 = vmatpush1.bf16.msra.mxu0 %v3396
  %7140 = vmatprep.subr.bf16.mxu0 0
  %7141 = vmatpush1.bf16.msra.mxu0 %v3397
  %7142 = vmatprep.subr.bf16.mxu0 0
  %7143 = vmatpush1.bf16.msra.mxu0 %v3398
  %7144 = vmatprep.subr.bf16.mxu0 0
  %7145 = vmatpush1.bf16.msra.mxu0 %v3399
  %7146 = vmatprep.subr.bf16.mxu0 0
  %7147 = vmatpush1.bf16.msra.mxu0 %v3400
  %7148 = vmatprep.subr.bf16.mxu0 0
  %7149 = vmatpush1.bf16.msra.mxu0 %v3401
  %7150 = vmatprep.subr.bf16.mxu0 0
  %7151 = vmatpush1.bf16.msra.mxu0 %v3402
  %7152 = vmatprep.subr.bf16.mxu0 0
  %7153 = vmatpush1.bf16.msra.mxu0 %v3403
  %7154 = vmatprep.subr.bf16.mxu0 0
  %7155 = vmatpush1.bf16.msra.mxu0 %v3404
  %7156 = vmatprep.mubr.bf16.mxu0 %v7120
  %7157 = vmatmul.mubr.bf16.gmra.mrb[0].mxu0 %v7117
  %v7158 = vpop.f32.mrb[0].mxu0
  %v7159 = vadd.f32 %v3315, %v7158
  %v7160 = vpop.f32.mrb[0].mxu0
  %v7161 = vpop.f32.mrb[0].mxu0
  %v7162 = vpop.f32.mrb[0].mxu0
  %7163 = vdwg.mxu0
  %7164 = vmatprep.subr.bf16.mxu0 0
  %7165 = vmatpush1.bf16.msra.mxu0 %v3405
  %7166 = vmatprep.subr.bf16.mxu0 0
  %7167 = vmatpush1.bf16.msra.mxu0 %v3406
  %7168 = vmatprep.subr.bf16.mxu0 0
  %7169 = vmatpush1.bf16.msra.mxu0 0
  %7170 = vmatprep.subr.bf16.mxu0 0
  %7171 = vmatpush1.bf16.msra.mxu0 0
  %7172 = vmatprep.subr.bf16.mxu0 0
  %7173 = vmatpush1.bf16.msra.mxu0 0
  %7174 = vmatprep.subr.bf16.mxu0 0
  %7175 = vmatpush1.bf16.msra.mxu0 0
  %7176 = vmatprep.subr.bf16.mxu0 0
  %7177 = vmatpush1.bf16.msra.mxu0 0
  %7178 = vmatprep.subr.bf16.mxu0 0
  %7179 = vmatpush1.bf16.msra.mxu0 0
  %7180 = vmatprep.subr.bf16.mxu0 0
  %7181 = vmatpush1.bf16.msra.mxu0 0
  %7182 = vmatprep.subr.bf16.mxu0 0
  %7183 = vmatpush1.bf16.msra.mxu0 0
  %7184 = vmatprep.subr.bf16.mxu0 0
  %7185 = vmatpush1.bf16.msra.mxu0 0
  %7186 = vmatprep.subr.bf16.mxu0 0
  %7187 = vmatpush1.bf16.msra.mxu0 0
  %7188 = vmatprep.subr.bf16.mxu0 0
  %7189 = vmatpush1.bf16.msra.mxu0 0
  %7190 = vmatprep.subr.bf16.mxu0 0
  %7191 = vmatpush1.bf16.msra.mxu0 0
  %7192 = vmatprep.subr.bf16.mxu0 0
  %7193 = vmatpush1.bf16.msra.mxu0 0
  %7194 = vmatprep.subr.bf16.mxu0 0
  %7195 = vmatpush1.bf16.msra.mxu0 0
  %7196 = vmatprep.mubr.bf16.mxu0 0
  %7197 = vmatmul.mubr.bf16.gmra.mrb[0].mxu0 %v7122
  %v7198 = vpop.f32.mrb[0].mxu0
  %v7199 = vadd.f32 %v7159, %v7198
  %v7200 = vpop.f32.mrb[0].mxu0
  %v7201 = vpop.f32.mrb[0].mxu0
  %v7202 = vpop.f32.mrb[0].mxu0
  %7203 = vdwg.mxu0
  %v7204 = vmax.f32 %v7199, 0.0
  %v7205 = vpack.c.bf16 %v7204, %v7204
  %v7207 = vunpack.c.l.b16 %v7205
  %v7208 = vpack.c.b16 %v7207, %v7207
  %7209 = vrot.lane.b32.xlu0 %v7208, 96
  %v7210 = vpop.permute.xlu0 %7209
  %7212 = vst.msk [vmem:[#allocation3 + $0x1c] sm:$0xf] %vm3847, %v7210
  %v7213 = vld [vmem:[%s2022 + $0x4] sm:$0xff]
  %v7214 = vld [vmem:[%s2225 + $0x4] sm:$0xff]
  %v7215 = vld [vmem:[%s2428 + $0x4] sm:$0xff]
  %v7217 = vunpack.c.l.b16 %v7213
  %v7218 = vunpack.c.h.b16 %v7213
  %v7219 = vpack.c.b16 %v7217, %v7217
  %v7220 = vpack.c.b16 %v7218, %v7218
  %7221 = vrot.lane.b32.xlu0 %v7219, 32
  %v7222 = vpop.permute.xlu0 %7221
  %7223 = vrot.lane.b32.xlu0 %v7220, 32
  %v7224 = vpop.permute.xlu0 %7223
  %v7225 = vsel %vm4433, %v7222, %v7224
  %v7227 = vunpack.c.l.b16 %v7214
  %v7228 = vunpack.c.h.b16 %v7214
  %v7229 = vpack.c.b16 %v7227, %v7227
  %v7230 = vpack.c.b16 %v7228, %v7228
  %v7232 = vunpack.c.l.b16 %v7215
  %v7233 = vunpack.c.h.b16 %v7215
  %v7234 = vpack.c.b16 %v7232, %v7232
  %v7235 = vpack.c.b16 %v7233, %v7233
  %7236 = vrot.lane.b32.xlu0 %v7234, 96
  %v7237 = vpop.permute.xlu0 %7236
  %7238 = vrot.lane.b32.xlu0 %v7235, 96
  %v7239 = vpop.permute.xlu0 %7238
  %v7240 = vsel %vm3637, %v7237, %v7239
  %v7243 = vsel %vm493, %v7225, %v7229
  %v7247 = vsel %vm3307, %v7230, %v7240
  %v7250 = vsel %vm3286, %v7239, 0
  %7252 = vmatprep.subr.bf16.mxu0 0
  %7253 = vmatpush1.bf16.msra.mxu0 %v3389
  %7254 = vmatprep.subr.bf16.mxu0 0
  %7255 = vmatpush1.bf16.msra.mxu0 %v3390
  %7256 = vmatprep.subr.bf16.mxu0 0
  %7257 = vmatpush1.bf16.msra.mxu0 %v3391
  %7258 = vmatprep.subr.bf16.mxu0 0
  %7259 = vmatpush1.bf16.msra.mxu0 %v3392
  %7260 = vmatprep.subr.bf16.mxu0 0
  %7261 = vmatpush1.bf16.msra.mxu0 %v3393
  %7262 = vmatprep.subr.bf16.mxu0 0
  %7263 = vmatpush1.bf16.msra.mxu0 %v3394
  %7264 = vmatprep.subr.bf16.mxu0 0
  %7265 = vmatpush1.bf16.msra.mxu0 %v3395
  %7266 = vmatprep.subr.bf16.mxu0 0
  %7267 = vmatpush1.bf16.msra.mxu0 %v3396
  %7268 = vmatprep.subr.bf16.mxu0 0
  %7269 = vmatpush1.bf16.msra.mxu0 %v3397
  %7270 = vmatprep.subr.bf16.mxu0 0
  %7271 = vmatpush1.bf16.msra.mxu0 %v3398
  %7272 = vmatprep.subr.bf16.mxu0 0
  %7273 = vmatpush1.bf16.msra.mxu0 %v3399
  %7274 = vmatprep.subr.bf16.mxu0 0
  %7275 = vmatpush1.bf16.msra.mxu0 %v3400
  %7276 = vmatprep.subr.bf16.mxu0 0
  %7277 = vmatpush1.bf16.msra.mxu0 %v3401
  %7278 = vmatprep.subr.bf16.mxu0 0
  %7279 = vmatpush1.bf16.msra.mxu0 %v3402
  %7280 = vmatprep.subr.bf16.mxu0 0
  %7281 = vmatpush1.bf16.msra.mxu0 %v3403
  %7282 = vmatprep.subr.bf16.mxu0 0
  %7283 = vmatpush1.bf16.msra.mxu0 %v3404
  %7284 = vmatprep.mubr.bf16.mxu0 %v7247
  %7285 = vmatmul.mubr.bf16.gmra.mrb[0].mxu0 %v7243
  %v7286 = vpop.f32.mrb[0].mxu0
  %v7287 = vadd.f32 %v3315, %v7286
  %v7288 = vpop.f32.mrb[0].mxu0
  %v7289 = vpop.f32.mrb[0].mxu0
  %v7290 = vpop.f32.mrb[0].mxu0
  %7291 = vdwg.mxu0
  %7292 = vmatprep.subr.bf16.mxu0 0
  %7293 = vmatpush1.bf16.msra.mxu0 %v3405
  %7294 = vmatprep.subr.bf16.mxu0 0
  %7295 = vmatpush1.bf16.msra.mxu0 %v3406
  %7296 = vmatprep.subr.bf16.mxu0 0
  %7297 = vmatpush1.bf16.msra.mxu0 0
  %7298 = vmatprep.subr.bf16.mxu0 0
  %7299 = vmatpush1.bf16.msra.mxu0 0
  %7300 = vmatprep.subr.bf16.mxu0 0
  %7301 = vmatpush1.bf16.msra.mxu0 0
  %7302 = vmatprep.subr.bf16.mxu0 0
  %7303 = vmatpush1.bf16.msra.mxu0 0
  %7304 = vmatprep.subr.bf16.mxu0 0
  %7305 = vmatpush1.bf16.msra.mxu0 0
  %7306 = vmatprep.subr.bf16.mxu0 0
  %7307 = vmatpush1.bf16.msra.mxu0 0
  %7308 = vmatprep.subr.bf16.mxu0 0
  %7309 = vmatpush1.bf16.msra.mxu0 0
  %7310 = vmatprep.subr.bf16.mxu0 0
  %7311 = vmatpush1.bf16.msra.mxu0 0
  %7312 = vmatprep.subr.bf16.mxu0 0
  %7313 = vmatpush1.bf16.msra.mxu0 0
  %7314 = vmatprep.subr.bf16.mxu0 0
  %7315 = vmatpush1.bf16.msra.mxu0 0
  %7316 = vmatprep.subr.bf16.mxu0 0
  %7317 = vmatpush1.bf16.msra.mxu0 0
  %7318 = vmatprep.subr.bf16.mxu0 0
  %7319 = vmatpush1.bf16.msra.mxu0 0
  %7320 = vmatprep.subr.bf16.mxu0 0
  %7321 = vmatpush1.bf16.msra.mxu0 0
  %7322 = vmatprep.subr.bf16.mxu0 0
  %7323 = vmatpush1.bf16.msra.mxu0 0
  %7324 = vmatprep.mubr.bf16.mxu0 0
  %7325 = vmatmul.mubr.bf16.gmra.mrb[0].mxu0 %v7250
  %v7326 = vpop.f32.mrb[0].mxu0
  %v7327 = vadd.f32 %v7287, %v7326
  %v7328 = vpop.f32.mrb[0].mxu0
  %v7329 = vpop.f32.mrb[0].mxu0
  %v7330 = vpop.f32.mrb[0].mxu0
  %7331 = vdwg.mxu0
  %v7332 = vmax.f32 %v7327, 0.0
  %v7333 = vpack.c.bf16 %v7332, %v7332
  %7334 = vst.msk [vmem:[#allocation3 + $0x20] sm:$0xf] %vm3509, %v7333
  %v7335 = vld [vmem:[%s2022 + $0x8] sm:$0xf]
  %v7336 = vld [vmem:[%s2225 + $0x8] sm:$0xf]
  %v7337 = vld [vmem:[%s2428 + $0x8] sm:$0xf]
  %v7339 = vunpack.c.l.b16 %v7335
  %v7340 = vpack.c.b16 %v7339, %v7339
  %7341 = vrot.lane.b32.xlu0 %v7340, 96
  %v7342 = vpop.permute.xlu0 %7341
  %v7344 = vunpack.c.l.b16 %v7336
  %v7345 = vpack.c.b16 %v7344, %v7344
  %7346 = vrot.lane.b32.xlu0 %v7345, 64
  %v7347 = vpop.permute.xlu0 %7346
  %v7349 = vunpack.c.l.b16 %v7337
  %v7350 = vpack.c.b16 %v7349, %v7349
  %7351 = vrot.lane.b32.xlu0 %v7350, 32
  %v7352 = vpop.permute.xlu0 %7351
  %v7355 = vsel %vm493, %v7342, %v7347
  %v7358 = vsel %vm3307, %v7347, %v7352
  %v7360 = vsel %vm3286, %v7352, 0
  %7362 = vmatprep.subr.bf16.mxu0 0
  %7363 = vmatpush1.bf16.msra.mxu0 %v3389
  %7364 = vmatprep.subr.bf16.mxu0 0
  %7365 = vmatpush1.bf16.msra.mxu0 %v3390
  %7366 = vmatprep.subr.bf16.mxu0 0
  %7367 = vmatpush1.bf16.msra.mxu0 %v3391
  %7368 = vmatprep.subr.bf16.mxu0 0
  %7369 = vmatpush1.bf16.msra.mxu0 %v3392
  %7370 = vmatprep.subr.bf16.mxu0 0
  %7371 = vmatpush1.bf16.msra.mxu0 %v3393
  %7372 = vmatprep.subr.bf16.mxu0 0
  %7373 = vmatpush1.bf16.msra.mxu0 %v3394
  %7374 = vmatprep.subr.bf16.mxu0 0
  %7375 = vmatpush1.bf16.msra.mxu0 %v3395
  %7376 = vmatprep.subr.bf16.mxu0 0
  %7377 = vmatpush1.bf16.msra.mxu0 %v3396
  %7378 = vmatprep.subr.bf16.mxu0 0
  %7379 = vmatpush1.bf16.msra.mxu0 %v3397
  %7380 = vmatprep.subr.bf16.mxu0 0
  %7381 = vmatpush1.bf16.msra.mxu0 %v3398
  %7382 = vmatprep.subr.bf16.mxu0 0
  %7383 = vmatpush1.bf16.msra.mxu0 %v3399
  %7384 = vmatprep.subr.bf16.mxu0 0
  %7385 = vmatpush1.bf16.msra.mxu0 %v3400
  %7386 = vmatprep.subr.bf16.mxu0 0
  %7387 = vmatpush1.bf16.msra.mxu0 %v3401
  %7388 = vmatprep.subr.bf16.mxu0 0
  %7389 = vmatpush1.bf16.msra.mxu0 %v3402
  %7390 = vmatprep.subr.bf16.mxu0 0
  %7391 = vmatpush1.bf16.msra.mxu0 %v3403
  %7392 = vmatprep.subr.bf16.mxu0 0
  %7393 = vmatpush1.bf16.msra.mxu0 %v3404
  %7394 = vmatprep.mubr.bf16.mxu0 %v7358
  %7395 = vmatmul.mubr.bf16.gmra.mrb[0].mxu0 %v7355
  %v7396 = vpop.f32.mrb[0].mxu0
  %v7397 = vadd.f32 %v3315, %v7396
  %v7398 = vpop.f32.mrb[0].mxu0
  %v7399 = vpop.f32.mrb[0].mxu0
  %v7400 = vpop.f32.mrb[0].mxu0
  %7401 = vdwg.mxu0
  %7402 = vmatprep.subr.bf16.mxu0 0
  %7403 = vmatpush1.bf16.msra.mxu0 %v3405
  %7404 = vmatprep.subr.bf16.mxu0 0
  %7405 = vmatpush1.bf16.msra.mxu0 %v3406
  %7406 = vmatprep.subr.bf16.mxu0 0
  %7407 = vmatpush1.bf16.msra.mxu0 0
  %7408 = vmatprep.subr.bf16.mxu0 0
  %7409 = vmatpush1.bf16.msra.mxu0 0
  %7410 = vmatprep.subr.bf16.mxu0 0
  %7411 = vmatpush1.bf16.msra.mxu0 0
  %7412 = vmatprep.subr.bf16.mxu0 0
  %7413 = vmatpush1.bf16.msra.mxu0 0
  %7414 = vmatprep.subr.bf16.mxu0 0
  %7415 = vmatpush1.bf16.msra.mxu0 0
  %7416 = vmatprep.subr.bf16.mxu0 0
  %7417 = vmatpush1.bf16.msra.mxu0 0
  %7418 = vmatprep.subr.bf16.mxu0 0
  %7419 = vmatpush1.bf16.msra.mxu0 0
  %7420 = vmatprep.subr.bf16.mxu0 0
  %7421 = vmatpush1.bf16.msra.mxu0 0
  %7422 = vmatprep.subr.bf16.mxu0 0
  %7423 = vmatpush1.bf16.msra.mxu0 0
  %7424 = vmatprep.subr.bf16.mxu0 0
  %7425 = vmatpush1.bf16.msra.mxu0 0
  %7426 = vmatprep.subr.bf16.mxu0 0
  %7427 = vmatpush1.bf16.msra.mxu0 0
  %7428 = vmatprep.subr.bf16.mxu0 0
  %7429 = vmatpush1.bf16.msra.mxu0 0
  %7430 = vmatprep.subr.bf16.mxu0 0
  %7431 = vmatpush1.bf16.msra.mxu0 0
  %7432 = vmatprep.subr.bf16.mxu0 0
  %7433 = vmatpush1.bf16.msra.mxu0 0
  %7434 = vmatprep.mubr.bf16.mxu0 0
  %7435 = vmatmul.mubr.bf16.gmra.mrb[0].mxu0 %v7360
  %v7436 = vpop.f32.mrb[0].mxu0
  %v7437 = vadd.f32 %v7397, %v7436
  %v7438 = vpop.f32.mrb[0].mxu0
  %v7439 = vpop.f32.mrb[0].mxu0
  %v7440 = vpop.f32.mrb[0].mxu0
  %7441 = vdwg.mxu0
  %v7442 = vmax.f32 %v7437, 0.0
  %v7443 = vpack.c.bf16 %v7442, %v7442
  %v7445 = vunpack.c.l.b16 %v7443
  %v7446 = vpack.c.b16 %v7445, %v7445
  %7447 = vrot.lane.b32.xlu0 %v7446, 32
  %v7448 = vpop.permute.xlu0 %7447
  %7450 = vst.msk [vmem:[#allocation3 + $0x20] sm:$0xf] %vm3619, %v7448
  %v7451 = vld [vmem:[%s2022 + $0x8] sm:$0xff]
  %v7452 = vld [vmem:[%s2225 + $0x8] sm:$0xff]
  %v7453 = vld [vmem:[%s2428 + $0x8] sm:$0xff]
  %v7455 = vunpack.c.l.b16 %v7451
  %v7456 = vunpack.c.h.b16 %v7451
  %v7457 = vpack.c.b16 %v7455, %v7455
  %v7458 = vpack.c.b16 %v7456, %v7456
  %7459 = vrot.lane.b32.xlu0 %v7457, 32
  %v7460 = vpop.permute.xlu0 %7459
  %7461 = vrot.lane.b32.xlu0 %v7458, 32
  %v7462 = vpop.permute.xlu0 %7461
  %v7463 = vsel %vm4433, %v7460, %v7462
  %v7465 = vunpack.c.l.b16 %v7452
  %v7466 = vunpack.c.h.b16 %v7452
  %v7467 = vpack.c.b16 %v7465, %v7465
  %v7468 = vpack.c.b16 %v7466, %v7466
  %v7470 = vunpack.c.l.b16 %v7453
  %v7471 = vunpack.c.h.b16 %v7453
  %v7472 = vpack.c.b16 %v7470, %v7470
  %v7473 = vpack.c.b16 %v7471, %v7471
  %7474 = vrot.lane.b32.xlu0 %v7472, 96
  %v7475 = vpop.permute.xlu0 %7474
  %7476 = vrot.lane.b32.xlu0 %v7473, 96
  %v7477 = vpop.permute.xlu0 %7476
  %v7478 = vsel %vm3637, %v7475, %v7477
  %v7481 = vsel %vm493, %v7463, %v7467
  %v7485 = vsel %vm3307, %v7468, %v7478
  %v7488 = vsel %vm3286, %v7477, 0
  %7490 = vmatprep.subr.bf16.mxu0 0
  %7491 = vmatpush1.bf16.msra.mxu0 %v3389
  %7492 = vmatprep.subr.bf16.mxu0 0
  %7493 = vmatpush1.bf16.msra.mxu0 %v3390
  %7494 = vmatprep.subr.bf16.mxu0 0
  %7495 = vmatpush1.bf16.msra.mxu0 %v3391
  %7496 = vmatprep.subr.bf16.mxu0 0
  %7497 = vmatpush1.bf16.msra.mxu0 %v3392
  %7498 = vmatprep.subr.bf16.mxu0 0
  %7499 = vmatpush1.bf16.msra.mxu0 %v3393
  %7500 = vmatprep.subr.bf16.mxu0 0
  %7501 = vmatpush1.bf16.msra.mxu0 %v3394
  %7502 = vmatprep.subr.bf16.mxu0 0
  %7503 = vmatpush1.bf16.msra.mxu0 %v3395
  %7504 = vmatprep.subr.bf16.mxu0 0
  %7505 = vmatpush1.bf16.msra.mxu0 %v3396
  %7506 = vmatprep.subr.bf16.mxu0 0
  %7507 = vmatpush1.bf16.msra.mxu0 %v3397
  %7508 = vmatprep.subr.bf16.mxu0 0
  %7509 = vmatpush1.bf16.msra.mxu0 %v3398
  %7510 = vmatprep.subr.bf16.mxu0 0
  %7511 = vmatpush1.bf16.msra.mxu0 %v3399
  %7512 = vmatprep.subr.bf16.mxu0 0
  %7513 = vmatpush1.bf16.msra.mxu0 %v3400
  %7514 = vmatprep.subr.bf16.mxu0 0
  %7515 = vmatpush1.bf16.msra.mxu0 %v3401
  %7516 = vmatprep.subr.bf16.mxu0 0
  %7517 = vmatpush1.bf16.msra.mxu0 %v3402
  %7518 = vmatprep.subr.bf16.mxu0 0
  %7519 = vmatpush1.bf16.msra.mxu0 %v3403
  %7520 = vmatprep.subr.bf16.mxu0 0
  %7521 = vmatpush1.bf16.msra.mxu0 %v3404
  %7522 = vmatprep.mubr.bf16.mxu0 %v7485
  %7523 = vmatmul.mubr.bf16.gmra.mrb[0].mxu0 %v7481
  %v7524 = vpop.f32.mrb[0].mxu0
  %v7525 = vadd.f32 %v3315, %v7524
  %v7526 = vpop.f32.mrb[0].mxu0
  %v7527 = vpop.f32.mrb[0].mxu0
  %v7528 = vpop.f32.mrb[0].mxu0
  %7529 = vdwg.mxu0
  %7530 = vmatprep.subr.bf16.mxu0 0
  %7531 = vmatpush1.bf16.msra.mxu0 %v3405
  %7532 = vmatprep.subr.bf16.mxu0 0
  %7533 = vmatpush1.bf16.msra.mxu0 %v3406
  %7534 = vmatprep.subr.bf16.mxu0 0
  %7535 = vmatpush1.bf16.msra.mxu0 0
  %7536 = vmatprep.subr.bf16.mxu0 0
  %7537 = vmatpush1.bf16.msra.mxu0 0
  %7538 = vmatprep.subr.bf16.mxu0 0
  %7539 = vmatpush1.bf16.msra.mxu0 0
  %7540 = vmatprep.subr.bf16.mxu0 0
  %7541 = vmatpush1.bf16.msra.mxu0 0
  %7542 = vmatprep.subr.bf16.mxu0 0
  %7543 = vmatpush1.bf16.msra.mxu0 0
  %7544 = vmatprep.subr.bf16.mxu0 0
  %7545 = vmatpush1.bf16.msra.mxu0 0
  %7546 = vmatprep.subr.bf16.mxu0 0
  %7547 = vmatpush1.bf16.msra.mxu0 0
  %7548 = vmatprep.subr.bf16.mxu0 0
  %7549 = vmatpush1.bf16.msra.mxu0 0
  %7550 = vmatprep.subr.bf16.mxu0 0
  %7551 = vmatpush1.bf16.msra.mxu0 0
  %7552 = vmatprep.subr.bf16.mxu0 0
  %7553 = vmatpush1.bf16.msra.mxu0 0
  %7554 = vmatprep.subr.bf16.mxu0 0
  %7555 = vmatpush1.bf16.msra.mxu0 0
  %7556 = vmatprep.subr.bf16.mxu0 0
  %7557 = vmatpush1.bf16.msra.mxu0 0
  %7558 = vmatprep.subr.bf16.mxu0 0
  %7559 = vmatpush1.bf16.msra.mxu0 0
  %7560 = vmatprep.subr.bf16.mxu0 0
  %7561 = vmatpush1.bf16.msra.mxu0 0
  %7562 = vmatprep.mubr.bf16.mxu0 0
  %7563 = vmatmul.mubr.bf16.gmra.mrb[0].mxu0 %v7488
  %v7564 = vpop.f32.mrb[0].mxu0
  %v7565 = vadd.f32 %v7525, %v7564
  %v7566 = vpop.f32.mrb[0].mxu0
  %v7567 = vpop.f32.mrb[0].mxu0
  %v7568 = vpop.f32.mrb[0].mxu0
  %7569 = vdwg.mxu0
  %v7570 = vmax.f32 %v7565, 0.0
  %v7571 = vpack.c.bf16 %v7570, %v7570
  %v7573 = vunpack.c.l.b16 %v7571
  %v7574 = vpack.c.b16 %v7573, %v7573
  %7575 = vrot.lane.b32.xlu0 %v7574, 64
  %v7576 = vpop.permute.xlu0 %7575
  %7578 = vst.msk [vmem:[#allocation3 + $0x20] sm:$0xf] %vm3737, %v7576
  %v7579 = vld [vmem:[%s2428] sm:$0xf]
  %v7581 = vunpack.c.l.b16 %v7579
  %v7582 = vpack.c.b16 %v7581, %v7581
  %7583 = vrot.lane.b32.xlu0 %v7582, 32
  %v7584 = vpop.permute.xlu0 %7583
  %v7586 = vsel %vm3286, 0, %v7584
  %v7587 = vld [vmem:[%s2631] sm:$0xf]
  %v7589 = vunpack.c.l.b16 %v7587
  %v7590 = vpack.c.b16 %v7589, %v7589
  %7591 = vrot.lane.b32.xlu0 %v7590, 32
  %v7592 = vpop.permute.xlu0 %7591
  %v7594 = vsel %vm3286, 0, %v7592
  %v7595 = vld [vmem:[%s2834] sm:$0xf]
  %v7597 = vunpack.c.l.b16 %v7595
  %v7598 = vpack.c.b16 %v7597, %v7597
  %7599 = vrot.lane.b32.xlu0 %v7598, 32
  %v7600 = vpop.permute.xlu0 %7599
  %v7602 = vsel %vm3286, 0, %v7600
  %7604 = vrot.lane.b32.xlu0 %v7594, 96
  %v7605 = vpop.permute.xlu0 %7604
  %7607 = vrot.lane.b32.xlu0 %v7602, 64
  %v7608 = vpop.permute.xlu0 %7607
  %v7610 = vsel %vm493, %v7586, %v7605
  %v7613 = vsel %vm3307, %v7605, %v7608
  %v7615 = vsel %vm3286, %v7608, 0
  %7617 = vmatprep.subr.bf16.mxu0 0
  %7618 = vmatpush1.bf16.msra.mxu0 %v3389
  %7619 = vmatprep.subr.bf16.mxu0 0
  %7620 = vmatpush1.bf16.msra.mxu0 %v3390
  %7621 = vmatprep.subr.bf16.mxu0 0
  %7622 = vmatpush1.bf16.msra.mxu0 %v3391
  %7623 = vmatprep.subr.bf16.mxu0 0
  %7624 = vmatpush1.bf16.msra.mxu0 %v3392
  %7625 = vmatprep.subr.bf16.mxu0 0
  %7626 = vmatpush1.bf16.msra.mxu0 %v3393
  %7627 = vmatprep.subr.bf16.mxu0 0
  %7628 = vmatpush1.bf16.msra.mxu0 %v3394
  %7629 = vmatprep.subr.bf16.mxu0 0
  %7630 = vmatpush1.bf16.msra.mxu0 %v3395
  %7631 = vmatprep.subr.bf16.mxu0 0
  %7632 = vmatpush1.bf16.msra.mxu0 %v3396
  %7633 = vmatprep.subr.bf16.mxu0 0
  %7634 = vmatpush1.bf16.msra.mxu0 %v3397
  %7635 = vmatprep.subr.bf16.mxu0 0
  %7636 = vmatpush1.bf16.msra.mxu0 %v3398
  %7637 = vmatprep.subr.bf16.mxu0 0
  %7638 = vmatpush1.bf16.msra.mxu0 %v3399
  %7639 = vmatprep.subr.bf16.mxu0 0
  %7640 = vmatpush1.bf16.msra.mxu0 %v3400
  %7641 = vmatprep.subr.bf16.mxu0 0
  %7642 = vmatpush1.bf16.msra.mxu0 %v3401
  %7643 = vmatprep.subr.bf16.mxu0 0
  %7644 = vmatpush1.bf16.msra.mxu0 %v3402
  %7645 = vmatprep.subr.bf16.mxu0 0
  %7646 = vmatpush1.bf16.msra.mxu0 %v3403
  %7647 = vmatprep.subr.bf16.mxu0 0
  %7648 = vmatpush1.bf16.msra.mxu0 %v3404
  %7649 = vmatprep.mubr.bf16.mxu0 %v7613
  %7650 = vmatmul.mubr.bf16.gmra.mrb[0].mxu0 %v7610
  %v7651 = vpop.f32.mrb[0].mxu0
  %v7652 = vadd.f32 %v3315, %v7651
  %v7653 = vpop.f32.mrb[0].mxu0
  %v7654 = vpop.f32.mrb[0].mxu0
  %v7655 = vpop.f32.mrb[0].mxu0
  %7656 = vdwg.mxu0
  %7657 = vmatprep.subr.bf16.mxu0 0
  %7658 = vmatpush1.bf16.msra.mxu0 %v3405
  %7659 = vmatprep.subr.bf16.mxu0 0
  %7660 = vmatpush1.bf16.msra.mxu0 %v3406
  %7661 = vmatprep.subr.bf16.mxu0 0
  %7662 = vmatpush1.bf16.msra.mxu0 0
  %7663 = vmatprep.subr.bf16.mxu0 0
  %7664 = vmatpush1.bf16.msra.mxu0 0
  %7665 = vmatprep.subr.bf16.mxu0 0
  %7666 = vmatpush1.bf16.msra.mxu0 0
  %7667 = vmatprep.subr.bf16.mxu0 0
  %7668 = vmatpush1.bf16.msra.mxu0 0
  %7669 = vmatprep.subr.bf16.mxu0 0
  %7670 = vmatpush1.bf16.msra.mxu0 0
  %7671 = vmatprep.subr.bf16.mxu0 0
  %7672 = vmatpush1.bf16.msra.mxu0 0
  %7673 = vmatprep.subr.bf16.mxu0 0
  %7674 = vmatpush1.bf16.msra.mxu0 0
  %7675 = vmatprep.subr.bf16.mxu0 0
  %7676 = vmatpush1.bf16.msra.mxu0 0
  %7677 = vmatprep.subr.bf16.mxu0 0
  %7678 = vmatpush1.bf16.msra.mxu0 0
  %7679 = vmatprep.subr.bf16.mxu0 0
  %7680 = vmatpush1.bf16.msra.mxu0 0
  %7681 = vmatprep.subr.bf16.mxu0 0
  %7682 = vmatpush1.bf16.msra.mxu0 0
  %7683 = vmatprep.subr.bf16.mxu0 0
  %7684 = vmatpush1.bf16.msra.mxu0 0
  %7685 = vmatprep.subr.bf16.mxu0 0
  %7686 = vmatpush1.bf16.msra.mxu0 0
  %7687 = vmatprep.subr.bf16.mxu0 0
  %7688 = vmatpush1.bf16.msra.mxu0 0
  %7689 = vmatprep.mubr.bf16.mxu0 0
  %7690 = vmatmul.mubr.bf16.gmra.mrb[0].mxu0 %v7615
  %v7691 = vpop.f32.mrb[0].mxu0
  %v7692 = vadd.f32 %v7652, %v7691
  %v7693 = vpop.f32.mrb[0].mxu0
  %v7694 = vpop.f32.mrb[0].mxu0
  %v7695 = vpop.f32.mrb[0].mxu0
  %7696 = vdwg.mxu0
  %v7697 = vmax.f32 %v7692, 0.0
  %v7698 = vpack.c.bf16 %v7697, %v7697
  %v7700 = vunpack.c.l.b16 %v7698
  %v7701 = vpack.c.b16 %v7700, %v7700
  %7702 = vrot.lane.b32.xlu0 %v7701, 96
  %v7703 = vpop.permute.xlu0 %7702
  %7705 = vst.msk [vmem:[#allocation3 + $0x20] sm:$0xf] %vm3847, %v7703
  %v7706 = vld [vmem:[%s2428] sm:$0xf]
  %v7707 = vld [vmem:[%s2631] sm:$0xf]
  %v7708 = vld [vmem:[%s2834] sm:$0xf]
  %v7710 = vunpack.c.l.b16 %v7706
  %v7711 = vpack.c.b16 %v7710, %v7710
  %7712 = vrot.lane.b32.xlu0 %v7711, 96
  %v7713 = vpop.permute.xlu0 %7712
  %v7715 = vunpack.c.l.b16 %v7707
  %v7716 = vpack.c.b16 %v7715, %v7715
  %7717 = vrot.lane.b32.xlu0 %v7716, 64
  %v7718 = vpop.permute.xlu0 %7717
  %v7720 = vunpack.c.l.b16 %v7708
  %v7721 = vpack.c.b16 %v7720, %v7720
  %7722 = vrot.lane.b32.xlu0 %v7721, 32
  %v7723 = vpop.permute.xlu0 %7722
  %v7726 = vsel %vm493, %v7713, %v7718
  %v7729 = vsel %vm3307, %v7718, %v7723
  %v7731 = vsel %vm3286, %v7723, 0
  %7733 = vmatprep.subr.bf16.mxu0 0
  %7734 = vmatpush1.bf16.msra.mxu0 %v3389
  %7735 = vmatprep.subr.bf16.mxu0 0
  %7736 = vmatpush1.bf16.msra.mxu0 %v3390
  %7737 = vmatprep.subr.bf16.mxu0 0
  %7738 = vmatpush1.bf16.msra.mxu0 %v3391
  %7739 = vmatprep.subr.bf16.mxu0 0
  %7740 = vmatpush1.bf16.msra.mxu0 %v3392
  %7741 = vmatprep.subr.bf16.mxu0 0
  %7742 = vmatpush1.bf16.msra.mxu0 %v3393
  %7743 = vmatprep.subr.bf16.mxu0 0
  %7744 = vmatpush1.bf16.msra.mxu0 %v3394
  %7745 = vmatprep.subr.bf16.mxu0 0
  %7746 = vmatpush1.bf16.msra.mxu0 %v3395
  %7747 = vmatprep.subr.bf16.mxu0 0
  %7748 = vmatpush1.bf16.msra.mxu0 %v3396
  %7749 = vmatprep.subr.bf16.mxu0 0
  %7750 = vmatpush1.bf16.msra.mxu0 %v3397
  %7751 = vmatprep.subr.bf16.mxu0 0
  %7752 = vmatpush1.bf16.msra.mxu0 %v3398
  %7753 = vmatprep.subr.bf16.mxu0 0
  %7754 = vmatpush1.bf16.msra.mxu0 %v3399
  %7755 = vmatprep.subr.bf16.mxu0 0
  %7756 = vmatpush1.bf16.msra.mxu0 %v3400
  %7757 = vmatprep.subr.bf16.mxu0 0
  %7758 = vmatpush1.bf16.msra.mxu0 %v3401
  %7759 = vmatprep.subr.bf16.mxu0 0
  %7760 = vmatpush1.bf16.msra.mxu0 %v3402
  %7761 = vmatprep.subr.bf16.mxu0 0
  %7762 = vmatpush1.bf16.msra.mxu0 %v3403
  %7763 = vmatprep.subr.bf16.mxu0 0
  %7764 = vmatpush1.bf16.msra.mxu0 %v3404
  %7765 = vmatprep.mubr.bf16.mxu0 %v7729
  %7766 = vmatmul.mubr.bf16.gmra.mrb[0].mxu0 %v7726
  %v7767 = vpop.f32.mrb[0].mxu0
  %v7768 = vadd.f32 %v3315, %v7767
  %v7769 = vpop.f32.mrb[0].mxu0
  %v7770 = vpop.f32.mrb[0].mxu0
  %v7771 = vpop.f32.mrb[0].mxu0
  %7772 = vdwg.mxu0
  %7773 = vmatprep.subr.bf16.mxu0 0
  %7774 = vmatpush1.bf16.msra.mxu0 %v3405
  %7775 = vmatprep.subr.bf16.mxu0 0
  %7776 = vmatpush1.bf16.msra.mxu0 %v3406
  %7777 = vmatprep.subr.bf16.mxu0 0
  %7778 = vmatpush1.bf16.msra.mxu0 0
  %7779 = vmatprep.subr.bf16.mxu0 0
  %7780 = vmatpush1.bf16.msra.mxu0 0
  %7781 = vmatprep.subr.bf16.mxu0 0
  %7782 = vmatpush1.bf16.msra.mxu0 0
  %7783 = vmatprep.subr.bf16.mxu0 0
  %7784 = vmatpush1.bf16.msra.mxu0 0
  %7785 = vmatprep.subr.bf16.mxu0 0
  %7786 = vmatpush1.bf16.msra.mxu0 0
  %7787 = vmatprep.subr.bf16.mxu0 0
  %7788 = vmatpush1.bf16.msra.mxu0 0
  %7789 = vmatprep.subr.bf16.mxu0 0
  %7790 = vmatpush1.bf16.msra.mxu0 0
  %7791 = vmatprep.subr.bf16.mxu0 0
  %7792 = vmatpush1.bf16.msra.mxu0 0
  %7793 = vmatprep.subr.bf16.mxu0 0
  %7794 = vmatpush1.bf16.msra.mxu0 0
  %7795 = vmatprep.subr.bf16.mxu0 0
  %7796 = vmatpush1.bf16.msra.mxu0 0
  %7797 = vmatprep.subr.bf16.mxu0 0
  %7798 = vmatpush1.bf16.msra.mxu0 0
  %7799 = vmatprep.subr.bf16.mxu0 0
  %7800 = vmatpush1.bf16.msra.mxu0 0
  %7801 = vmatprep.subr.bf16.mxu0 0
  %7802 = vmatpush1.bf16.msra.mxu0 0
  %7803 = vmatprep.subr.bf16.mxu0 0
  %7804 = vmatpush1.bf16.msra.mxu0 0
  %7805 = vmatprep.mubr.bf16.mxu0 0
  %7806 = vmatmul.mubr.bf16.gmra.mrb[0].mxu0 %v7731
  %v7807 = vpop.f32.mrb[0].mxu0
  %v7808 = vadd.f32 %v7768, %v7807
  %v7809 = vpop.f32.mrb[0].mxu0
  %v7810 = vpop.f32.mrb[0].mxu0
  %v7811 = vpop.f32.mrb[0].mxu0
  %7812 = vdwg.mxu0
  %v7813 = vmax.f32 %v7808, 0.0
  %v7814 = vpack.c.bf16 %v7813, %v7813
  %7815 = vst.msk [vmem:[#allocation3 + $0x24] sm:$0xf] %vm3509, %v7814
  %v7816 = vld [vmem:[%s2428] sm:$0xff]
  %v7817 = vld [vmem:[%s2631] sm:$0xff]
  %v7818 = vld [vmem:[%s2834] sm:$0xff]
  %v7820 = vunpack.c.l.b16 %v7816
  %v7821 = vunpack.c.h.b16 %v7816
  %v7822 = vpack.c.b16 %v7820, %v7820
  %v7823 = vpack.c.b16 %v7821, %v7821
  %7824 = vrot.lane.b32.xlu0 %v7822, 32
  %v7825 = vpop.permute.xlu0 %7824
  %7826 = vrot.lane.b32.xlu0 %v7823, 32
  %v7827 = vpop.permute.xlu0 %7826
  %v7828 = vsel %vm4433, %v7825, %v7827
  %v7830 = vunpack.c.l.b16 %v7817
  %v7831 = vunpack.c.h.b16 %v7817
  %v7832 = vpack.c.b16 %v7830, %v7830
  %v7833 = vpack.c.b16 %v7831, %v7831
  %v7835 = vunpack.c.l.b16 %v7818
  %v7836 = vunpack.c.h.b16 %v7818
  %v7837 = vpack.c.b16 %v7835, %v7835
  %v7838 = vpack.c.b16 %v7836, %v7836
  %7839 = vrot.lane.b32.xlu0 %v7837, 96
  %v7840 = vpop.permute.xlu0 %7839
  %7841 = vrot.lane.b32.xlu0 %v7838, 96
  %v7842 = vpop.permute.xlu0 %7841
  %v7843 = vsel %vm3637, %v7840, %v7842
  %v7846 = vsel %vm493, %v7828, %v7832
  %v7850 = vsel %vm3307, %v7833, %v7843
  %v7853 = vsel %vm3286, %v7842, 0
  %7855 = vmatprep.subr.bf16.mxu0 0
  %7856 = vmatpush1.bf16.msra.mxu0 %v3389
  %7857 = vmatprep.subr.bf16.mxu0 0
  %7858 = vmatpush1.bf16.msra.mxu0 %v3390
  %7859 = vmatprep.subr.bf16.mxu0 0
  %7860 = vmatpush1.bf16.msra.mxu0 %v3391
  %7861 = vmatprep.subr.bf16.mxu0 0
  %7862 = vmatpush1.bf16.msra.mxu0 %v3392
  %7863 = vmatprep.subr.bf16.mxu0 0
  %7864 = vmatpush1.bf16.msra.mxu0 %v3393
  %7865 = vmatprep.subr.bf16.mxu0 0
  %7866 = vmatpush1.bf16.msra.mxu0 %v3394
  %7867 = vmatprep.subr.bf16.mxu0 0
  %7868 = vmatpush1.bf16.msra.mxu0 %v3395
  %7869 = vmatprep.subr.bf16.mxu0 0
  %7870 = vmatpush1.bf16.msra.mxu0 %v3396
  %7871 = vmatprep.subr.bf16.mxu0 0
  %7872 = vmatpush1.bf16.msra.mxu0 %v3397
  %7873 = vmatprep.subr.bf16.mxu0 0
  %7874 = vmatpush1.bf16.msra.mxu0 %v3398
  %7875 = vmatprep.subr.bf16.mxu0 0
  %7876 = vmatpush1.bf16.msra.mxu0 %v3399
  %7877 = vmatprep.subr.bf16.mxu0 0
  %7878 = vmatpush1.bf16.msra.mxu0 %v3400
  %7879 = vmatprep.subr.bf16.mxu0 0
  %7880 = vmatpush1.bf16.msra.mxu0 %v3401
  %7881 = vmatprep.subr.bf16.mxu0 0
  %7882 = vmatpush1.bf16.msra.mxu0 %v3402
  %7883 = vmatprep.subr.bf16.mxu0 0
  %7884 = vmatpush1.bf16.msra.mxu0 %v3403
  %7885 = vmatprep.subr.bf16.mxu0 0
  %7886 = vmatpush1.bf16.msra.mxu0 %v3404
  %7887 = vmatprep.mubr.bf16.mxu0 %v7850
  %7888 = vmatmul.mubr.bf16.gmra.mrb[0].mxu0 %v7846
  %v7889 = vpop.f32.mrb[0].mxu0
  %v7890 = vadd.f32 %v3315, %v7889
  %v7891 = vpop.f32.mrb[0].mxu0
  %v7892 = vpop.f32.mrb[0].mxu0
  %v7893 = vpop.f32.mrb[0].mxu0
  %7894 = vdwg.mxu0
  %7895 = vmatprep.subr.bf16.mxu0 0
  %7896 = vmatpush1.bf16.msra.mxu0 %v3405
  %7897 = vmatprep.subr.bf16.mxu0 0
  %7898 = vmatpush1.bf16.msra.mxu0 %v3406
  %7899 = vmatprep.subr.bf16.mxu0 0
  %7900 = vmatpush1.bf16.msra.mxu0 0
  %7901 = vmatprep.subr.bf16.mxu0 0
  %7902 = vmatpush1.bf16.msra.mxu0 0
  %7903 = vmatprep.subr.bf16.mxu0 0
  %7904 = vmatpush1.bf16.msra.mxu0 0
  %7905 = vmatprep.subr.bf16.mxu0 0
  %7906 = vmatpush1.bf16.msra.mxu0 0
  %7907 = vmatprep.subr.bf16.mxu0 0
  %7908 = vmatpush1.bf16.msra.mxu0 0
  %7909 = vmatprep.subr.bf16.mxu0 0
  %7910 = vmatpush1.bf16.msra.mxu0 0
  %7911 = vmatprep.subr.bf16.mxu0 0
  %7912 = vmatpush1.bf16.msra.mxu0 0
  %7913 = vmatprep.subr.bf16.mxu0 0
  %7914 = vmatpush1.bf16.msra.mxu0 0
  %7915 = vmatprep.subr.bf16.mxu0 0
  %7916 = vmatpush1.bf16.msra.mxu0 0
  %7917 = vmatprep.subr.bf16.mxu0 0
  %7918 = vmatpush1.bf16.msra.mxu0 0
  %7919 = vmatprep.subr.bf16.mxu0 0
  %7920 = vmatpush1.bf16.msra.mxu0 0
  %7921 = vmatprep.subr.bf16.mxu0 0
  %7922 = vmatpush1.bf16.msra.mxu0 0
  %7923 = vmatprep.subr.bf16.mxu0 0
  %7924 = vmatpush1.bf16.msra.mxu0 0
  %7925 = vmatprep.subr.bf16.mxu0 0
  %7926 = vmatpush1.bf16.msra.mxu0 0
  %7927 = vmatprep.mubr.bf16.mxu0 0
  %7928 = vmatmul.mubr.bf16.gmra.mrb[0].mxu0 %v7853
  %v7929 = vpop.f32.mrb[0].mxu0
  %v7930 = vadd.f32 %v7890, %v7929
  %v7931 = vpop.f32.mrb[0].mxu0
  %v7932 = vpop.f32.mrb[0].mxu0
  %v7933 = vpop.f32.mrb[0].mxu0
  %7934 = vdwg.mxu0
  %v7935 = vmax.f32 %v7930, 0.0
  %v7936 = vpack.c.bf16 %v7935, %v7935
  %v7938 = vunpack.c.l.b16 %v7936
  %v7939 = vpack.c.b16 %v7938, %v7938
  %7940 = vrot.lane.b32.xlu0 %v7939, 32
  %v7941 = vpop.permute.xlu0 %7940
  %7943 = vst.msk [vmem:[#allocation3 + $0x24] sm:$0xf] %vm3619, %v7941
  %v7944 = vld [vmem:[%s2428 + $0x4] sm:$0xf]
  %v7945 = vld [vmem:[%s2631 + $0x4] sm:$0xf]
  %v7946 = vld [vmem:[%s2834 + $0x4] sm:$0xf]
  %v7948 = vunpack.c.l.b16 %v7944
  %v7949 = vpack.c.b16 %v7948, %v7948
  %7950 = vrot.lane.b32.xlu0 %v7949, 96
  %v7951 = vpop.permute.xlu0 %7950
  %v7953 = vunpack.c.l.b16 %v7945
  %v7954 = vpack.c.b16 %v7953, %v7953
  %7955 = vrot.lane.b32.xlu0 %v7954, 64
  %v7956 = vpop.permute.xlu0 %7955
  %v7958 = vunpack.c.l.b16 %v7946
  %v7959 = vpack.c.b16 %v7958, %v7958
  %7960 = vrot.lane.b32.xlu0 %v7959, 32
  %v7961 = vpop.permute.xlu0 %7960
  %v7964 = vsel %vm493, %v7951, %v7956
  %v7967 = vsel %vm3307, %v7956, %v7961
  %v7969 = vsel %vm3286, %v7961, 0
  %7971 = vmatprep.subr.bf16.mxu0 0
  %7972 = vmatpush1.bf16.msra.mxu0 %v3389
  %7973 = vmatprep.subr.bf16.mxu0 0
  %7974 = vmatpush1.bf16.msra.mxu0 %v3390
  %7975 = vmatprep.subr.bf16.mxu0 0
  %7976 = vmatpush1.bf16.msra.mxu0 %v3391
  %7977 = vmatprep.subr.bf16.mxu0 0
  %7978 = vmatpush1.bf16.msra.mxu0 %v3392
  %7979 = vmatprep.subr.bf16.mxu0 0
  %7980 = vmatpush1.bf16.msra.mxu0 %v3393
  %7981 = vmatprep.subr.bf16.mxu0 0
  %7982 = vmatpush1.bf16.msra.mxu0 %v3394
  %7983 = vmatprep.subr.bf16.mxu0 0
  %7984 = vmatpush1.bf16.msra.mxu0 %v3395
  %7985 = vmatprep.subr.bf16.mxu0 0
  %7986 = vmatpush1.bf16.msra.mxu0 %v3396
  %7987 = vmatprep.subr.bf16.mxu0 0
  %7988 = vmatpush1.bf16.msra.mxu0 %v3397
  %7989 = vmatprep.subr.bf16.mxu0 0
  %7990 = vmatpush1.bf16.msra.mxu0 %v3398
  %7991 = vmatprep.subr.bf16.mxu0 0
  %7992 = vmatpush1.bf16.msra.mxu0 %v3399
  %7993 = vmatprep.subr.bf16.mxu0 0
  %7994 = vmatpush1.bf16.msra.mxu0 %v3400
  %7995 = vmatprep.subr.bf16.mxu0 0
  %7996 = vmatpush1.bf16.msra.mxu0 %v3401
  %7997 = vmatprep.subr.bf16.mxu0 0
  %7998 = vmatpush1.bf16.msra.mxu0 %v3402
  %7999 = vmatprep.subr.bf16.mxu0 0
  %8000 = vmatpush1.bf16.msra.mxu0 %v3403
  %8001 = vmatprep.subr.bf16.mxu0 0
  %8002 = vmatpush1.bf16.msra.mxu0 %v3404
  %8003 = vmatprep.mubr.bf16.mxu0 %v7967
  %8004 = vmatmul.mubr.bf16.gmra.mrb[0].mxu0 %v7964
  %v8005 = vpop.f32.mrb[0].mxu0
  %v8006 = vadd.f32 %v3315, %v8005
  %v8007 = vpop.f32.mrb[0].mxu0
  %v8008 = vpop.f32.mrb[0].mxu0
  %v8009 = vpop.f32.mrb[0].mxu0
  %8010 = vdwg.mxu0
  %8011 = vmatprep.subr.bf16.mxu0 0
  %8012 = vmatpush1.bf16.msra.mxu0 %v3405
  %8013 = vmatprep.subr.bf16.mxu0 0
  %8014 = vmatpush1.bf16.msra.mxu0 %v3406
  %8015 = vmatprep.subr.bf16.mxu0 0
  %8016 = vmatpush1.bf16.msra.mxu0 0
  %8017 = vmatprep.subr.bf16.mxu0 0
  %8018 = vmatpush1.bf16.msra.mxu0 0
  %8019 = vmatprep.subr.bf16.mxu0 0
  %8020 = vmatpush1.bf16.msra.mxu0 0
  %8021 = vmatprep.subr.bf16.mxu0 0
  %8022 = vmatpush1.bf16.msra.mxu0 0
  %8023 = vmatprep.subr.bf16.mxu0 0
  %8024 = vmatpush1.bf16.msra.mxu0 0
  %8025 = vmatprep.subr.bf16.mxu0 0
  %8026 = vmatpush1.bf16.msra.mxu0 0
  %8027 = vmatprep.subr.bf16.mxu0 0
  %8028 = vmatpush1.bf16.msra.mxu0 0
  %8029 = vmatprep.subr.bf16.mxu0 0
  %8030 = vmatpush1.bf16.msra.mxu0 0
  %8031 = vmatprep.subr.bf16.mxu0 0
  %8032 = vmatpush1.bf16.msra.mxu0 0
  %8033 = vmatprep.subr.bf16.mxu0 0
  %8034 = vmatpush1.bf16.msra.mxu0 0
  %8035 = vmatprep.subr.bf16.mxu0 0
  %8036 = vmatpush1.bf16.msra.mxu0 0
  %8037 = vmatprep.subr.bf16.mxu0 0
  %8038 = vmatpush1.bf16.msra.mxu0 0
  %8039 = vmatprep.subr.bf16.mxu0 0
  %8040 = vmatpush1.bf16.msra.mxu0 0
  %8041 = vmatprep.subr.bf16.mxu0 0
  %8042 = vmatpush1.bf16.msra.mxu0 0
  %8043 = vmatprep.mubr.bf16.mxu0 0
  %8044 = vmatmul.mubr.bf16.gmra.mrb[0].mxu0 %v7969
  %v8045 = vpop.f32.mrb[0].mxu0
  %v8046 = vadd.f32 %v8006, %v8045
  %v8047 = vpop.f32.mrb[0].mxu0
  %v8048 = vpop.f32.mrb[0].mxu0
  %v8049 = vpop.f32.mrb[0].mxu0
  %8050 = vdwg.mxu0
  %v8051 = vmax.f32 %v8046, 0.0
  %v8052 = vpack.c.bf16 %v8051, %v8051
  %v8054 = vunpack.c.l.b16 %v8052
  %v8055 = vpack.c.b16 %v8054, %v8054
  %8056 = vrot.lane.b32.xlu0 %v8055, 64
  %v8057 = vpop.permute.xlu0 %8056
  %8059 = vst.msk [vmem:[#allocation3 + $0x24] sm:$0xf] %vm3737, %v8057
  %v8060 = vld [vmem:[%s2428 + $0x4] sm:$0xff]
  %v8061 = vld [vmem:[%s2631 + $0x4] sm:$0xff]
  %v8062 = vld [vmem:[%s2834 + $0x4] sm:$0xff]
  %v8064 = vunpack.c.l.b16 %v8060
  %v8065 = vunpack.c.h.b16 %v8060
  %v8066 = vpack.c.b16 %v8064, %v8064
  %v8067 = vpack.c.b16 %v8065, %v8065
  %8068 = vrot.lane.b32.xlu0 %v8066, 32
  %v8069 = vpop.permute.xlu0 %8068
  %8070 = vrot.lane.b32.xlu0 %v8067, 32
  %v8071 = vpop.permute.xlu0 %8070
  %v8072 = vsel %vm4433, %v8069, %v8071
  %v8074 = vunpack.c.l.b16 %v8061
  %v8075 = vunpack.c.h.b16 %v8061
  %v8076 = vpack.c.b16 %v8074, %v8074
  %v8077 = vpack.c.b16 %v8075, %v8075
  %v8079 = vunpack.c.l.b16 %v8062
  %v8080 = vunpack.c.h.b16 %v8062
  %v8081 = vpack.c.b16 %v8079, %v8079
  %v8082 = vpack.c.b16 %v8080, %v8080
  %8083 = vrot.lane.b32.xlu0 %v8081, 96
  %v8084 = vpop.permute.xlu0 %8083
  %8085 = vrot.lane.b32.xlu0 %v8082, 96
  %v8086 = vpop.permute.xlu0 %8085
  %v8087 = vsel %vm3637, %v8084, %v8086
  %v8090 = vsel %vm493, %v8072, %v8076
  %v8094 = vsel %vm3307, %v8077, %v8087
  %v8097 = vsel %vm3286, %v8086, 0
  %8099 = vmatprep.subr.bf16.mxu0 0
  %8100 = vmatpush1.bf16.msra.mxu0 %v3389
  %8101 = vmatprep.subr.bf16.mxu0 0
  %8102 = vmatpush1.bf16.msra.mxu0 %v3390
  %8103 = vmatprep.subr.bf16.mxu0 0
  %8104 = vmatpush1.bf16.msra.mxu0 %v3391
  %8105 = vmatprep.subr.bf16.mxu0 0
  %8106 = vmatpush1.bf16.msra.mxu0 %v3392
  %8107 = vmatprep.subr.bf16.mxu0 0
  %8108 = vmatpush1.bf16.msra.mxu0 %v3393
  %8109 = vmatprep.subr.bf16.mxu0 0
  %8110 = vmatpush1.bf16.msra.mxu0 %v3394
  %8111 = vmatprep.subr.bf16.mxu0 0
  %8112 = vmatpush1.bf16.msra.mxu0 %v3395
  %8113 = vmatprep.subr.bf16.mxu0 0
  %8114 = vmatpush1.bf16.msra.mxu0 %v3396
  %8115 = vmatprep.subr.bf16.mxu0 0
  %8116 = vmatpush1.bf16.msra.mxu0 %v3397
  %8117 = vmatprep.subr.bf16.mxu0 0
  %8118 = vmatpush1.bf16.msra.mxu0 %v3398
  %8119 = vmatprep.subr.bf16.mxu0 0
  %8120 = vmatpush1.bf16.msra.mxu0 %v3399
  %8121 = vmatprep.subr.bf16.mxu0 0
  %8122 = vmatpush1.bf16.msra.mxu0 %v3400
  %8123 = vmatprep.subr.bf16.mxu0 0
  %8124 = vmatpush1.bf16.msra.mxu0 %v3401
  %8125 = vmatprep.subr.bf16.mxu0 0
  %8126 = vmatpush1.bf16.msra.mxu0 %v3402
  %8127 = vmatprep.subr.bf16.mxu0 0
  %8128 = vmatpush1.bf16.msra.mxu0 %v3403
  %8129 = vmatprep.subr.bf16.mxu0 0
  %8130 = vmatpush1.bf16.msra.mxu0 %v3404
  %8131 = vmatprep.mubr.bf16.mxu0 %v8094
  %8132 = vmatmul.mubr.bf16.gmra.mrb[0].mxu0 %v8090
  %v8133 = vpop.f32.mrb[0].mxu0
  %v8134 = vadd.f32 %v3315, %v8133
  %v8135 = vpop.f32.mrb[0].mxu0
  %v8136 = vpop.f32.mrb[0].mxu0
  %v8137 = vpop.f32.mrb[0].mxu0
  %8138 = vdwg.mxu0
  %8139 = vmatprep.subr.bf16.mxu0 0
  %8140 = vmatpush1.bf16.msra.mxu0 %v3405
  %8141 = vmatprep.subr.bf16.mxu0 0
  %8142 = vmatpush1.bf16.msra.mxu0 %v3406
  %8143 = vmatprep.subr.bf16.mxu0 0
  %8144 = vmatpush1.bf16.msra.mxu0 0
  %8145 = vmatprep.subr.bf16.mxu0 0
  %8146 = vmatpush1.bf16.msra.mxu0 0
  %8147 = vmatprep.subr.bf16.mxu0 0
  %8148 = vmatpush1.bf16.msra.mxu0 0
  %8149 = vmatprep.subr.bf16.mxu0 0
  %8150 = vmatpush1.bf16.msra.mxu0 0
  %8151 = vmatprep.subr.bf16.mxu0 0
  %8152 = vmatpush1.bf16.msra.mxu0 0
  %8153 = vmatprep.subr.bf16.mxu0 0
  %8154 = vmatpush1.bf16.msra.mxu0 0
  %8155 = vmatprep.subr.bf16.mxu0 0
  %8156 = vmatpush1.bf16.msra.mxu0 0
  %8157 = vmatprep.subr.bf16.mxu0 0
  %8158 = vmatpush1.bf16.msra.mxu0 0
  %8159 = vmatprep.subr.bf16.mxu0 0
  %8160 = vmatpush1.bf16.msra.mxu0 0
  %8161 = vmatprep.subr.bf16.mxu0 0
  %8162 = vmatpush1.bf16.msra.mxu0 0
  %8163 = vmatprep.subr.bf16.mxu0 0
  %8164 = vmatpush1.bf16.msra.mxu0 0
  %8165 = vmatprep.subr.bf16.mxu0 0
  %8166 = vmatpush1.bf16.msra.mxu0 0
  %8167 = vmatprep.subr.bf16.mxu0 0
  %8168 = vmatpush1.bf16.msra.mxu0 0
  %8169 = vmatprep.subr.bf16.mxu0 0
  %8170 = vmatpush1.bf16.msra.mxu0 0
  %8171 = vmatprep.mubr.bf16.mxu0 0
  %8172 = vmatmul.mubr.bf16.gmra.mrb[0].mxu0 %v8097
  %v8173 = vpop.f32.mrb[0].mxu0
  %v8174 = vadd.f32 %v8134, %v8173
  %v8175 = vpop.f32.mrb[0].mxu0
  %v8176 = vpop.f32.mrb[0].mxu0
  %v8177 = vpop.f32.mrb[0].mxu0
  %8178 = vdwg.mxu0
  %v8179 = vmax.f32 %v8174, 0.0
  %v8180 = vpack.c.bf16 %v8179, %v8179
  %v8182 = vunpack.c.l.b16 %v8180
  %v8183 = vpack.c.b16 %v8182, %v8182
  %8184 = vrot.lane.b32.xlu0 %v8183, 96
  %v8185 = vpop.permute.xlu0 %8184
  %8187 = vst.msk [vmem:[#allocation3 + $0x24] sm:$0xf] %vm3847, %v8185
  %v8188 = vld [vmem:[%s2428 + $0x8] sm:$0xf]
  %v8189 = vld [vmem:[%s2631 + $0x8] sm:$0xf]
  %v8190 = vld [vmem:[%s2834 + $0x8] sm:$0xf]
  %v8192 = vunpack.c.l.b16 %v8188
  %v8193 = vpack.c.b16 %v8192, %v8192
  %8194 = vrot.lane.b32.xlu0 %v8193, 96
  %v8195 = vpop.permute.xlu0 %8194
  %v8197 = vunpack.c.l.b16 %v8189
  %v8198 = vpack.c.b16 %v8197, %v8197
  %8199 = vrot.lane.b32.xlu0 %v8198, 64
  %v8200 = vpop.permute.xlu0 %8199
  %v8202 = vunpack.c.l.b16 %v8190
  %v8203 = vpack.c.b16 %v8202, %v8202
  %8204 = vrot.lane.b32.xlu0 %v8203, 32
  %v8205 = vpop.permute.xlu0 %8204
  %v8208 = vsel %vm493, %v8195, %v8200
  %v8211 = vsel %vm3307, %v8200, %v8205
  %v8213 = vsel %vm3286, %v8205, 0
  %8215 = vmatprep.subr.bf16.mxu0 0
  %8216 = vmatpush1.bf16.msra.mxu0 %v3389
  %8217 = vmatprep.subr.bf16.mxu0 0
  %8218 = vmatpush1.bf16.msra.mxu0 %v3390
  %8219 = vmatprep.subr.bf16.mxu0 0
  %8220 = vmatpush1.bf16.msra.mxu0 %v3391
  %8221 = vmatprep.subr.bf16.mxu0 0
  %8222 = vmatpush1.bf16.msra.mxu0 %v3392
  %8223 = vmatprep.subr.bf16.mxu0 0
  %8224 = vmatpush1.bf16.msra.mxu0 %v3393
  %8225 = vmatprep.subr.bf16.mxu0 0
  %8226 = vmatpush1.bf16.msra.mxu0 %v3394
  %8227 = vmatprep.subr.bf16.mxu0 0
  %8228 = vmatpush1.bf16.msra.mxu0 %v3395
  %8229 = vmatprep.subr.bf16.mxu0 0
  %8230 = vmatpush1.bf16.msra.mxu0 %v3396
  %8231 = vmatprep.subr.bf16.mxu0 0
  %8232 = vmatpush1.bf16.msra.mxu0 %v3397
  %8233 = vmatprep.subr.bf16.mxu0 0
  %8234 = vmatpush1.bf16.msra.mxu0 %v3398
  %8235 = vmatprep.subr.bf16.mxu0 0
  %8236 = vmatpush1.bf16.msra.mxu0 %v3399
  %8237 = vmatprep.subr.bf16.mxu0 0
  %8238 = vmatpush1.bf16.msra.mxu0 %v3400
  %8239 = vmatprep.subr.bf16.mxu0 0
  %8240 = vmatpush1.bf16.msra.mxu0 %v3401
  %8241 = vmatprep.subr.bf16.mxu0 0
  %8242 = vmatpush1.bf16.msra.mxu0 %v3402
  %8243 = vmatprep.subr.bf16.mxu0 0
  %8244 = vmatpush1.bf16.msra.mxu0 %v3403
  %8245 = vmatprep.subr.bf16.mxu0 0
  %8246 = vmatpush1.bf16.msra.mxu0 %v3404
  %8247 = vmatprep.mubr.bf16.mxu0 %v8211
  %8248 = vmatmul.mubr.bf16.gmra.mrb[0].mxu0 %v8208
  %v8249 = vpop.f32.mrb[0].mxu0
  %v8250 = vadd.f32 %v3315, %v8249
  %v8251 = vpop.f32.mrb[0].mxu0
  %v8252 = vpop.f32.mrb[0].mxu0
  %v8253 = vpop.f32.mrb[0].mxu0
  %8254 = vdwg.mxu0
  %8255 = vmatprep.subr.bf16.mxu0 0
  %8256 = vmatpush1.bf16.msra.mxu0 %v3405
  %8257 = vmatprep.subr.bf16.mxu0 0
  %8258 = vmatpush1.bf16.msra.mxu0 %v3406
  %8259 = vmatprep.subr.bf16.mxu0 0
  %8260 = vmatpush1.bf16.msra.mxu0 0
  %8261 = vmatprep.subr.bf16.mxu0 0
  %8262 = vmatpush1.bf16.msra.mxu0 0
  %8263 = vmatprep.subr.bf16.mxu0 0
  %8264 = vmatpush1.bf16.msra.mxu0 0
  %8265 = vmatprep.subr.bf16.mxu0 0
  %8266 = vmatpush1.bf16.msra.mxu0 0
  %8267 = vmatprep.subr.bf16.mxu0 0
  %8268 = vmatpush1.bf16.msra.mxu0 0
  %8269 = vmatprep.subr.bf16.mxu0 0
  %8270 = vmatpush1.bf16.msra.mxu0 0
  %8271 = vmatprep.subr.bf16.mxu0 0
  %8272 = vmatpush1.bf16.msra.mxu0 0
  %8273 = vmatprep.subr.bf16.mxu0 0
  %8274 = vmatpush1.bf16.msra.mxu0 0
  %8275 = vmatprep.subr.bf16.mxu0 0
  %8276 = vmatpush1.bf16.msra.mxu0 0
  %8277 = vmatprep.subr.bf16.mxu0 0
  %8278 = vmatpush1.bf16.msra.mxu0 0
  %8279 = vmatprep.subr.bf16.mxu0 0
  %8280 = vmatpush1.bf16.msra.mxu0 0
  %8281 = vmatprep.subr.bf16.mxu0 0
  %8282 = vmatpush1.bf16.msra.mxu0 0
  %8283 = vmatprep.subr.bf16.mxu0 0
  %8284 = vmatpush1.bf16.msra.mxu0 0
  %8285 = vmatprep.subr.bf16.mxu0 0
  %8286 = vmatpush1.bf16.msra.mxu0 0
  %8287 = vmatprep.mubr.bf16.mxu0 0
  %8288 = vmatmul.mubr.bf16.gmra.mrb[0].mxu0 %v8213
  %v8289 = vpop.f32.mrb[0].mxu0
  %v8290 = vadd.f32 %v8250, %v8289
  %v8291 = vpop.f32.mrb[0].mxu0
  %v8292 = vpop.f32.mrb[0].mxu0
  %v8293 = vpop.f32.mrb[0].mxu0
  %8294 = vdwg.mxu0
  %v8295 = vmax.f32 %v8290, 0.0
  %v8296 = vpack.c.bf16 %v8295, %v8295
  %8297 = vst.msk [vmem:[#allocation3 + $0x28] sm:$0xf] %vm3509, %v8296
  %v8298 = vld [vmem:[%s2428 + $0x8] sm:$0xff]
  %v8299 = vld [vmem:[%s2631 + $0x8] sm:$0xff]
  %v8300 = vld [vmem:[%s2834 + $0x8] sm:$0xff]
  %v8302 = vunpack.c.l.b16 %v8298
  %v8303 = vunpack.c.h.b16 %v8298
  %v8304 = vpack.c.b16 %v8302, %v8302
  %v8305 = vpack.c.b16 %v8303, %v8303
  %8306 = vrot.lane.b32.xlu0 %v8304, 32
  %v8307 = vpop.permute.xlu0 %8306
  %8308 = vrot.lane.b32.xlu0 %v8305, 32
  %v8309 = vpop.permute.xlu0 %8308
  %v8310 = vsel %vm4433, %v8307, %v8309
  %v8312 = vunpack.c.l.b16 %v8299
  %v8313 = vunpack.c.h.b16 %v8299
  %v8314 = vpack.c.b16 %v8312, %v8312
  %v8315 = vpack.c.b16 %v8313, %v8313
  %v8317 = vunpack.c.l.b16 %v8300
  %v8318 = vunpack.c.h.b16 %v8300
  %v8319 = vpack.c.b16 %v8317, %v8317
  %v8320 = vpack.c.b16 %v8318, %v8318
  %8321 = vrot.lane.b32.xlu0 %v8319, 96
  %v8322 = vpop.permute.xlu0 %8321
  %8323 = vrot.lane.b32.xlu0 %v8320, 96
  %v8324 = vpop.permute.xlu0 %8323
  %v8325 = vsel %vm3637, %v8322, %v8324
  %v8328 = vsel %vm493, %v8310, %v8314
  %v8332 = vsel %vm3307, %v8315, %v8325
  %v8335 = vsel %vm3286, %v8324, 0
  %8337 = vmatprep.subr.bf16.mxu0 0
  %8338 = vmatpush1.bf16.msra.mxu0 %v3389
  %8339 = vmatprep.subr.bf16.mxu0 0
  %8340 = vmatpush1.bf16.msra.mxu0 %v3390
  %8341 = vmatprep.subr.bf16.mxu0 0
  %8342 = vmatpush1.bf16.msra.mxu0 %v3391
  %8343 = vmatprep.subr.bf16.mxu0 0
  %8344 = vmatpush1.bf16.msra.mxu0 %v3392
  %8345 = vmatprep.subr.bf16.mxu0 0
  %8346 = vmatpush1.bf16.msra.mxu0 %v3393
  %8347 = vmatprep.subr.bf16.mxu0 0
  %8348 = vmatpush1.bf16.msra.mxu0 %v3394
  %8349 = vmatprep.subr.bf16.mxu0 0
  %8350 = vmatpush1.bf16.msra.mxu0 %v3395
  %8351 = vmatprep.subr.bf16.mxu0 0
  %8352 = vmatpush1.bf16.msra.mxu0 %v3396
  %8353 = vmatprep.subr.bf16.mxu0 0
  %8354 = vmatpush1.bf16.msra.mxu0 %v3397
  %8355 = vmatprep.subr.bf16.mxu0 0
  %8356 = vmatpush1.bf16.msra.mxu0 %v3398
  %8357 = vmatprep.subr.bf16.mxu0 0
  %8358 = vmatpush1.bf16.msra.mxu0 %v3399
  %8359 = vmatprep.subr.bf16.mxu0 0
  %8360 = vmatpush1.bf16.msra.mxu0 %v3400
  %8361 = vmatprep.subr.bf16.mxu0 0
  %8362 = vmatpush1.bf16.msra.mxu0 %v3401
  %8363 = vmatprep.subr.bf16.mxu0 0
  %8364 = vmatpush1.bf16.msra.mxu0 %v3402
  %8365 = vmatprep.subr.bf16.mxu0 0
  %8366 = vmatpush1.bf16.msra.mxu0 %v3403
  %8367 = vmatprep.subr.bf16.mxu0 0
  %8368 = vmatpush1.bf16.msra.mxu0 %v3404
  %8369 = vmatprep.mubr.bf16.mxu0 %v8332
  %8370 = vmatmul.mubr.bf16.gmra.mrb[0].mxu0 %v8328
  %v8371 = vpop.f32.mrb[0].mxu0
  %v8372 = vadd.f32 %v3315, %v8371
  %v8373 = vpop.f32.mrb[0].mxu0
  %v8374 = vpop.f32.mrb[0].mxu0
  %v8375 = vpop.f32.mrb[0].mxu0
  %8376 = vdwg.mxu0
  %8377 = vmatprep.subr.bf16.mxu0 0
  %8378 = vmatpush1.bf16.msra.mxu0 %v3405
  %8379 = vmatprep.subr.bf16.mxu0 0
  %8380 = vmatpush1.bf16.msra.mxu0 %v3406
  %8381 = vmatprep.subr.bf16.mxu0 0
  %8382 = vmatpush1.bf16.msra.mxu0 0
  %8383 = vmatprep.subr.bf16.mxu0 0
  %8384 = vmatpush1.bf16.msra.mxu0 0
  %8385 = vmatprep.subr.bf16.mxu0 0
  %8386 = vmatpush1.bf16.msra.mxu0 0
  %8387 = vmatprep.subr.bf16.mxu0 0
  %8388 = vmatpush1.bf16.msra.mxu0 0
  %8389 = vmatprep.subr.bf16.mxu0 0
  %8390 = vmatpush1.bf16.msra.mxu0 0
  %8391 = vmatprep.subr.bf16.mxu0 0
  %8392 = vmatpush1.bf16.msra.mxu0 0
  %8393 = vmatprep.subr.bf16.mxu0 0
  %8394 = vmatpush1.bf16.msra.mxu0 0
  %8395 = vmatprep.subr.bf16.mxu0 0
  %8396 = vmatpush1.bf16.msra.mxu0 0
  %8397 = vmatprep.subr.bf16.mxu0 0
  %8398 = vmatpush1.bf16.msra.mxu0 0
  %8399 = vmatprep.subr.bf16.mxu0 0
  %8400 = vmatpush1.bf16.msra.mxu0 0
  %8401 = vmatprep.subr.bf16.mxu0 0
  %8402 = vmatpush1.bf16.msra.mxu0 0
  %8403 = vmatprep.subr.bf16.mxu0 0
  %8404 = vmatpush1.bf16.msra.mxu0 0
  %8405 = vmatprep.subr.bf16.mxu0 0
  %8406 = vmatpush1.bf16.msra.mxu0 0
  %8407 = vmatprep.subr.bf16.mxu0 0
  %8408 = vmatpush1.bf16.msra.mxu0 0
  %8409 = vmatprep.mubr.bf16.mxu0 0
  %8410 = vmatmul.mubr.bf16.gmra.mrb[0].mxu0 %v8335
  %v8411 = vpop.f32.mrb[0].mxu0
  %v8412 = vadd.f32 %v8372, %v8411
  %v8413 = vpop.f32.mrb[0].mxu0
  %v8414 = vpop.f32.mrb[0].mxu0
  %v8415 = vpop.f32.mrb[0].mxu0
  %8416 = vdwg.mxu0
  %v8417 = vmax.f32 %v8412, 0.0
  %v8418 = vpack.c.bf16 %v8417, %v8417
  %v8420 = vunpack.c.l.b16 %v8418
  %v8421 = vpack.c.b16 %v8420, %v8420
  %8422 = vrot.lane.b32.xlu0 %v8421, 32
  %v8423 = vpop.permute.xlu0 %8422
  %8425 = vst.msk [vmem:[#allocation3 + $0x28] sm:$0xf] %vm3619, %v8423
  %v8426 = vld [vmem:[%s2834] sm:$0xf]
  %v8428 = vunpack.c.l.b16 %v8426
  %v8429 = vpack.c.b16 %v8428, %v8428
  %8430 = vrot.lane.b32.xlu0 %v8429, 32
  %v8431 = vpop.permute.xlu0 %8430
  %v8433 = vsel %vm3286, 0, %v8431
  %v8434 = vld [vmem:[%s3037] sm:$0xf]
  %v8436 = vunpack.c.l.b16 %v8434
  %v8437 = vpack.c.b16 %v8436, %v8436
  %8438 = vrot.lane.b32.xlu0 %v8437, 32
  %v8439 = vpop.permute.xlu0 %8438
  %v8441 = vsel %vm3286, 0, %v8439
  %v8442 = vld [vmem:[%s3240] sm:$0xf]
  %v8444 = vunpack.c.l.b16 %v8442
  %v8445 = vpack.c.b16 %v8444, %v8444
  %8446 = vrot.lane.b32.xlu0 %v8445, 32
  %v8447 = vpop.permute.xlu0 %8446
  %v8449 = vsel %vm3286, 0, %v8447
  %8451 = vrot.lane.b32.xlu0 %v8441, 96
  %v8452 = vpop.permute.xlu0 %8451
  %8454 = vrot.lane.b32.xlu0 %v8449, 64
  %v8455 = vpop.permute.xlu0 %8454
  %v8457 = vsel %vm493, %v8433, %v8452
  %v8460 = vsel %vm3307, %v8452, %v8455
  %v8462 = vsel %vm3286, %v8455, 0
  %8464 = vmatprep.subr.bf16.mxu0 0
  %8465 = vmatpush1.bf16.msra.mxu0 %v3389
  %8466 = vmatprep.subr.bf16.mxu0 0
  %8467 = vmatpush1.bf16.msra.mxu0 %v3390
  %8468 = vmatprep.subr.bf16.mxu0 0
  %8469 = vmatpush1.bf16.msra.mxu0 %v3391
  %8470 = vmatprep.subr.bf16.mxu0 0
  %8471 = vmatpush1.bf16.msra.mxu0 %v3392
  %8472 = vmatprep.subr.bf16.mxu0 0
  %8473 = vmatpush1.bf16.msra.mxu0 %v3393
  %8474 = vmatprep.subr.bf16.mxu0 0
  %8475 = vmatpush1.bf16.msra.mxu0 %v3394
  %8476 = vmatprep.subr.bf16.mxu0 0
  %8477 = vmatpush1.bf16.msra.mxu0 %v3395
  %8478 = vmatprep.subr.bf16.mxu0 0
  %8479 = vmatpush1.bf16.msra.mxu0 %v3396
  %8480 = vmatprep.subr.bf16.mxu0 0
  %8481 = vmatpush1.bf16.msra.mxu0 %v3397
  %8482 = vmatprep.subr.bf16.mxu0 0
  %8483 = vmatpush1.bf16.msra.mxu0 %v3398
  %8484 = vmatprep.subr.bf16.mxu0 0
  %8485 = vmatpush1.bf16.msra.mxu0 %v3399
  %8486 = vmatprep.subr.bf16.mxu0 0
  %8487 = vmatpush1.bf16.msra.mxu0 %v3400
  %8488 = vmatprep.subr.bf16.mxu0 0
  %8489 = vmatpush1.bf16.msra.mxu0 %v3401
  %8490 = vmatprep.subr.bf16.mxu0 0
  %8491 = vmatpush1.bf16.msra.mxu0 %v3402
  %8492 = vmatprep.subr.bf16.mxu0 0
  %8493 = vmatpush1.bf16.msra.mxu0 %v3403
  %8494 = vmatprep.subr.bf16.mxu0 0
  %8495 = vmatpush1.bf16.msra.mxu0 %v3404
  %8496 = vmatprep.mubr.bf16.mxu0 %v8460
  %8497 = vmatmul.mubr.bf16.gmra.mrb[0].mxu0 %v8457
  %v8498 = vpop.f32.mrb[0].mxu0
  %v8499 = vadd.f32 %v3315, %v8498
  %v8500 = vpop.f32.mrb[0].mxu0
  %v8501 = vpop.f32.mrb[0].mxu0
  %v8502 = vpop.f32.mrb[0].mxu0
  %8503 = vdwg.mxu0
  %8504 = vmatprep.subr.bf16.mxu0 0
  %8505 = vmatpush1.bf16.msra.mxu0 %v3405
  %8506 = vmatprep.subr.bf16.mxu0 0
  %8507 = vmatpush1.bf16.msra.mxu0 %v3406
  %8508 = vmatprep.subr.bf16.mxu0 0
  %8509 = vmatpush1.bf16.msra.mxu0 0
  %8510 = vmatprep.subr.bf16.mxu0 0
  %8511 = vmatpush1.bf16.msra.mxu0 0
  %8512 = vmatprep.subr.bf16.mxu0 0
  %8513 = vmatpush1.bf16.msra.mxu0 0
  %8514 = vmatprep.subr.bf16.mxu0 0
  %8515 = vmatpush1.bf16.msra.mxu0 0
  %8516 = vmatprep.subr.bf16.mxu0 0
  %8517 = vmatpush1.bf16.msra.mxu0 0
  %8518 = vmatprep.subr.bf16.mxu0 0
  %8519 = vmatpush1.bf16.msra.mxu0 0
  %8520 = vmatprep.subr.bf16.mxu0 0
  %8521 = vmatpush1.bf16.msra.mxu0 0
  %8522 = vmatprep.subr.bf16.mxu0 0
  %8523 = vmatpush1.bf16.msra.mxu0 0
  %8524 = vmatprep.subr.bf16.mxu0 0
  %8525 = vmatpush1.bf16.msra.mxu0 0
  %8526 = vmatprep.subr.bf16.mxu0 0
  %8527 = vmatpush1.bf16.msra.mxu0 0
  %8528 = vmatprep.subr.bf16.mxu0 0
  %8529 = vmatpush1.bf16.msra.mxu0 0
  %8530 = vmatprep.subr.bf16.mxu0 0
  %8531 = vmatpush1.bf16.msra.mxu0 0
  %8532 = vmatprep.subr.bf16.mxu0 0
  %8533 = vmatpush1.bf16.msra.mxu0 0
  %8534 = vmatprep.subr.bf16.mxu0 0
  %8535 = vmatpush1.bf16.msra.mxu0 0
  %8536 = vmatprep.mubr.bf16.mxu0 0
  %8537 = vmatmul.mubr.bf16.gmra.mrb[0].mxu0 %v8462
  %v8538 = vpop.f32.mrb[0].mxu0
  %v8539 = vadd.f32 %v8499, %v8538
  %v8540 = vpop.f32.mrb[0].mxu0
  %v8541 = vpop.f32.mrb[0].mxu0
  %v8542 = vpop.f32.mrb[0].mxu0
  %8543 = vdwg.mxu0
  %v8544 = vmax.f32 %v8539, 0.0
  %v8545 = vpack.c.bf16 %v8544, %v8544
  %v8547 = vunpack.c.l.b16 %v8545
  %v8548 = vpack.c.b16 %v8547, %v8547
  %8549 = vrot.lane.b32.xlu0 %v8548, 64
  %v8550 = vpop.permute.xlu0 %8549
  %8552 = vst.msk [vmem:[#allocation3 + $0x28] sm:$0xf] %vm3737, %v8550
  %v8553 = vld [vmem:[%s2834] sm:$0xf]
  %v8554 = vld [vmem:[%s3037] sm:$0xf]
  %v8555 = vld [vmem:[%s3240] sm:$0xf]
  %v8557 = vunpack.c.l.b16 %v8553
  %v8558 = vpack.c.b16 %v8557, %v8557
  %8559 = vrot.lane.b32.xlu0 %v8558, 96
  %v8560 = vpop.permute.xlu0 %8559
  %v8562 = vunpack.c.l.b16 %v8554
  %v8563 = vpack.c.b16 %v8562, %v8562
  %8564 = vrot.lane.b32.xlu0 %v8563, 64
  %v8565 = vpop.permute.xlu0 %8564
  %v8567 = vunpack.c.l.b16 %v8555
  %v8568 = vpack.c.b16 %v8567, %v8567
  %8569 = vrot.lane.b32.xlu0 %v8568, 32
  %v8570 = vpop.permute.xlu0 %8569
  %v8573 = vsel %vm493, %v8560, %v8565
  %v8576 = vsel %vm3307, %v8565, %v8570
  %v8578 = vsel %vm3286, %v8570, 0
  %8580 = vmatprep.subr.bf16.mxu0 0
  %8581 = vmatpush1.bf16.msra.mxu0 %v3389
  %8582 = vmatprep.subr.bf16.mxu0 0
  %8583 = vmatpush1.bf16.msra.mxu0 %v3390
  %8584 = vmatprep.subr.bf16.mxu0 0
  %8585 = vmatpush1.bf16.msra.mxu0 %v3391
  %8586 = vmatprep.subr.bf16.mxu0 0
  %8587 = vmatpush1.bf16.msra.mxu0 %v3392
  %8588 = vmatprep.subr.bf16.mxu0 0
  %8589 = vmatpush1.bf16.msra.mxu0 %v3393
  %8590 = vmatprep.subr.bf16.mxu0 0
  %8591 = vmatpush1.bf16.msra.mxu0 %v3394
  %8592 = vmatprep.subr.bf16.mxu0 0
  %8593 = vmatpush1.bf16.msra.mxu0 %v3395
  %8594 = vmatprep.subr.bf16.mxu0 0
  %8595 = vmatpush1.bf16.msra.mxu0 %v3396
  %8596 = vmatprep.subr.bf16.mxu0 0
  %8597 = vmatpush1.bf16.msra.mxu0 %v3397
  %8598 = vmatprep.subr.bf16.mxu0 0
  %8599 = vmatpush1.bf16.msra.mxu0 %v3398
  %8600 = vmatprep.subr.bf16.mxu0 0
  %8601 = vmatpush1.bf16.msra.mxu0 %v3399
  %8602 = vmatprep.subr.bf16.mxu0 0
  %8603 = vmatpush1.bf16.msra.mxu0 %v3400
  %8604 = vmatprep.subr.bf16.mxu0 0
  %8605 = vmatpush1.bf16.msra.mxu0 %v3401
  %8606 = vmatprep.subr.bf16.mxu0 0
  %8607 = vmatpush1.bf16.msra.mxu0 %v3402
  %8608 = vmatprep.subr.bf16.mxu0 0
  %8609 = vmatpush1.bf16.msra.mxu0 %v3403
  %8610 = vmatprep.subr.bf16.mxu0 0
  %8611 = vmatpush1.bf16.msra.mxu0 %v3404
  %8612 = vmatprep.mubr.bf16.mxu0 %v8576
  %8613 = vmatmul.mubr.bf16.gmra.mrb[0].mxu0 %v8573
  %v8614 = vpop.f32.mrb[0].mxu0
  %v8615 = vadd.f32 %v3315, %v8614
  %v8616 = vpop.f32.mrb[0].mxu0
  %v8617 = vpop.f32.mrb[0].mxu0
  %v8618 = vpop.f32.mrb[0].mxu0
  %8619 = vdwg.mxu0
  %8620 = vmatprep.subr.bf16.mxu0 0
  %8621 = vmatpush1.bf16.msra.mxu0 %v3405
  %8622 = vmatprep.subr.bf16.mxu0 0
  %8623 = vmatpush1.bf16.msra.mxu0 %v3406
  %8624 = vmatprep.subr.bf16.mxu0 0
  %8625 = vmatpush1.bf16.msra.mxu0 0
  %8626 = vmatprep.subr.bf16.mxu0 0
  %8627 = vmatpush1.bf16.msra.mxu0 0
  %8628 = vmatprep.subr.bf16.mxu0 0
  %8629 = vmatpush1.bf16.msra.mxu0 0
  %8630 = vmatprep.subr.bf16.mxu0 0
  %8631 = vmatpush1.bf16.msra.mxu0 0
  %8632 = vmatprep.subr.bf16.mxu0 0
  %8633 = vmatpush1.bf16.msra.mxu0 0
  %8634 = vmatprep.subr.bf16.mxu0 0
  %8635 = vmatpush1.bf16.msra.mxu0 0
  %8636 = vmatprep.subr.bf16.mxu0 0
  %8637 = vmatpush1.bf16.msra.mxu0 0
  %8638 = vmatprep.subr.bf16.mxu0 0
  %8639 = vmatpush1.bf16.msra.mxu0 0
  %8640 = vmatprep.subr.bf16.mxu0 0
  %8641 = vmatpush1.bf16.msra.mxu0 0
  %8642 = vmatprep.subr.bf16.mxu0 0
  %8643 = vmatpush1.bf16.msra.mxu0 0
  %8644 = vmatprep.subr.bf16.mxu0 0
  %8645 = vmatpush1.bf16.msra.mxu0 0
  %8646 = vmatprep.subr.bf16.mxu0 0
  %8647 = vmatpush1.bf16.msra.mxu0 0
  %8648 = vmatprep.subr.bf16.mxu0 0
  %8649 = vmatpush1.bf16.msra.mxu0 0
  %8650 = vmatprep.subr.bf16.mxu0 0
  %8651 = vmatpush1.bf16.msra.mxu0 0
  %8652 = vmatprep.mubr.bf16.mxu0 0
  %8653 = vmatmul.mubr.bf16.gmra.mrb[0].mxu0 %v8578
  %v8654 = vpop.f32.mrb[0].mxu0
  %v8655 = vadd.f32 %v8615, %v8654
  %v8656 = vpop.f32.mrb[0].mxu0
  %v8657 = vpop.f32.mrb[0].mxu0
  %v8658 = vpop.f32.mrb[0].mxu0
  %8659 = vdwg.mxu0
  %v8660 = vmax.f32 %v8655, 0.0
  %v8661 = vpack.c.bf16 %v8660, %v8660
  %v8663 = vunpack.c.l.b16 %v8661
  %v8664 = vpack.c.b16 %v8663, %v8663
  %8665 = vrot.lane.b32.xlu0 %v8664, 96
  %v8666 = vpop.permute.xlu0 %8665
  %8668 = vst.msk [vmem:[#allocation3 + $0x28] sm:$0xf] %vm3847, %v8666
  %v8669 = vld [vmem:[%s2834] sm:$0xff]
  %v8670 = vld [vmem:[%s3037] sm:$0xff]
  %v8671 = vld [vmem:[%s3240] sm:$0xff]
  %v8673 = vunpack.c.l.b16 %v8669
  %v8674 = vunpack.c.h.b16 %v8669
  %v8675 = vpack.c.b16 %v8673, %v8673
  %v8676 = vpack.c.b16 %v8674, %v8674
  %8677 = vrot.lane.b32.xlu0 %v8675, 32
  %v8678 = vpop.permute.xlu0 %8677
  %8679 = vrot.lane.b32.xlu0 %v8676, 32
  %v8680 = vpop.permute.xlu0 %8679
  %v8681 = vsel %vm4433, %v8678, %v8680
  %v8683 = vunpack.c.l.b16 %v8670
  %v8684 = vunpack.c.h.b16 %v8670
  %v8685 = vpack.c.b16 %v8683, %v8683
  %v8686 = vpack.c.b16 %v8684, %v8684
  %v8688 = vunpack.c.l.b16 %v8671
  %v8689 = vunpack.c.h.b16 %v8671
  %v8690 = vpack.c.b16 %v8688, %v8688
  %v8691 = vpack.c.b16 %v8689, %v8689
  %8692 = vrot.lane.b32.xlu0 %v8690, 96
  %v8693 = vpop.permute.xlu0 %8692
  %8694 = vrot.lane.b32.xlu0 %v8691, 96
  %v8695 = vpop.permute.xlu0 %8694
  %v8696 = vsel %vm3637, %v8693, %v8695
  %v8699 = vsel %vm493, %v8681, %v8685
  %v8703 = vsel %vm3307, %v8686, %v8696
  %v8706 = vsel %vm3286, %v8695, 0
  %8708 = vmatprep.subr.bf16.mxu0 0
  %8709 = vmatpush1.bf16.msra.mxu0 %v3389
  %8710 = vmatprep.subr.bf16.mxu0 0
  %8711 = vmatpush1.bf16.msra.mxu0 %v3390
  %8712 = vmatprep.subr.bf16.mxu0 0
  %8713 = vmatpush1.bf16.msra.mxu0 %v3391
  %8714 = vmatprep.subr.bf16.mxu0 0
  %8715 = vmatpush1.bf16.msra.mxu0 %v3392
  %8716 = vmatprep.subr.bf16.mxu0 0
  %8717 = vmatpush1.bf16.msra.mxu0 %v3393
  %8718 = vmatprep.subr.bf16.mxu0 0
  %8719 = vmatpush1.bf16.msra.mxu0 %v3394
  %8720 = vmatprep.subr.bf16.mxu0 0
  %8721 = vmatpush1.bf16.msra.mxu0 %v3395
  %8722 = vmatprep.subr.bf16.mxu0 0
  %8723 = vmatpush1.bf16.msra.mxu0 %v3396
  %8724 = vmatprep.subr.bf16.mxu0 0
  %8725 = vmatpush1.bf16.msra.mxu0 %v3397
  %8726 = vmatprep.subr.bf16.mxu0 0
  %8727 = vmatpush1.bf16.msra.mxu0 %v3398
  %8728 = vmatprep.subr.bf16.mxu0 0
  %8729 = vmatpush1.bf16.msra.mxu0 %v3399
  %8730 = vmatprep.subr.bf16.mxu0 0
  %8731 = vmatpush1.bf16.msra.mxu0 %v3400
  %8732 = vmatprep.subr.bf16.mxu0 0
  %8733 = vmatpush1.bf16.msra.mxu0 %v3401
  %8734 = vmatprep.subr.bf16.mxu0 0
  %8735 = vmatpush1.bf16.msra.mxu0 %v3402
  %8736 = vmatprep.subr.bf16.mxu0 0
  %8737 = vmatpush1.bf16.msra.mxu0 %v3403
  %8738 = vmatprep.subr.bf16.mxu0 0
  %8739 = vmatpush1.bf16.msra.mxu0 %v3404
  %8740 = vmatprep.mubr.bf16.mxu0 %v8703
  %8741 = vmatmul.mubr.bf16.gmra.mrb[0].mxu0 %v8699
  %v8742 = vpop.f32.mrb[0].mxu0
  %v8743 = vadd.f32 %v3315, %v8742
  %v8744 = vpop.f32.mrb[0].mxu0
  %v8745 = vpop.f32.mrb[0].mxu0
  %v8746 = vpop.f32.mrb[0].mxu0
  %8747 = vdwg.mxu0
  %8748 = vmatprep.subr.bf16.mxu0 0
  %8749 = vmatpush1.bf16.msra.mxu0 %v3405
  %8750 = vmatprep.subr.bf16.mxu0 0
  %8751 = vmatpush1.bf16.msra.mxu0 %v3406
  %8752 = vmatprep.subr.bf16.mxu0 0
  %8753 = vmatpush1.bf16.msra.mxu0 0
  %8754 = vmatprep.subr.bf16.mxu0 0
  %8755 = vmatpush1.bf16.msra.mxu0 0
  %8756 = vmatprep.subr.bf16.mxu0 0
  %8757 = vmatpush1.bf16.msra.mxu0 0
  %8758 = vmatprep.subr.bf16.mxu0 0
  %8759 = vmatpush1.bf16.msra.mxu0 0
  %8760 = vmatprep.subr.bf16.mxu0 0
  %8761 = vmatpush1.bf16.msra.mxu0 0
  %8762 = vmatprep.subr.bf16.mxu0 0
  %8763 = vmatpush1.bf16.msra.mxu0 0
  %8764 = vmatprep.subr.bf16.mxu0 0
  %8765 = vmatpush1.bf16.msra.mxu0 0
  %8766 = vmatprep.subr.bf16.mxu0 0
  %8767 = vmatpush1.bf16.msra.mxu0 0
  %8768 = vmatprep.subr.bf16.mxu0 0
  %8769 = vmatpush1.bf16.msra.mxu0 0
  %8770 = vmatprep.subr.bf16.mxu0 0
  %8771 = vmatpush1.bf16.msra.mxu0 0
  %8772 = vmatprep.subr.bf16.mxu0 0
  %8773 = vmatpush1.bf16.msra.mxu0 0
  %8774 = vmatprep.subr.bf16.mxu0 0
  %8775 = vmatpush1.bf16.msra.mxu0 0
  %8776 = vmatprep.subr.bf16.mxu0 0
  %8777 = vmatpush1.bf16.msra.mxu0 0
  %8778 = vmatprep.subr.bf16.mxu0 0
  %8779 = vmatpush1.bf16.msra.mxu0 0
  %8780 = vmatprep.mubr.bf16.mxu0 0
  %8781 = vmatmul.mubr.bf16.gmra.mrb[0].mxu0 %v8706
  %v8782 = vpop.f32.mrb[0].mxu0
  %v8783 = vadd.f32 %v8743, %v8782
  %v8784 = vpop.f32.mrb[0].mxu0
  %v8785 = vpop.f32.mrb[0].mxu0
  %v8786 = vpop.f32.mrb[0].mxu0
  %8787 = vdwg.mxu0
  %v8788 = vmax.f32 %v8783, 0.0
  %v8789 = vpack.c.bf16 %v8788, %v8788
  %8790 = vst.msk [vmem:[#allocation3 + $0x2c] sm:$0xf] %vm3509, %v8789
  %v8791 = vld [vmem:[%s2834 + $0x4] sm:$0xf]
  %v8792 = vld [vmem:[%s3037 + $0x4] sm:$0xf]
  %v8793 = vld [vmem:[%s3240 + $0x4] sm:$0xf]
  %v8795 = vunpack.c.l.b16 %v8791
  %v8796 = vpack.c.b16 %v8795, %v8795
  %8797 = vrot.lane.b32.xlu0 %v8796, 96
  %v8798 = vpop.permute.xlu0 %8797
  %v8800 = vunpack.c.l.b16 %v8792
  %v8801 = vpack.c.b16 %v8800, %v8800
  %8802 = vrot.lane.b32.xlu0 %v8801, 64
  %v8803 = vpop.permute.xlu0 %8802
  %v8805 = vunpack.c.l.b16 %v8793
  %v8806 = vpack.c.b16 %v8805, %v8805
  %8807 = vrot.lane.b32.xlu0 %v8806, 32
  %v8808 = vpop.permute.xlu0 %8807
  %v8811 = vsel %vm493, %v8798, %v8803
  %v8814 = vsel %vm3307, %v8803, %v8808
  %v8816 = vsel %vm3286, %v8808, 0
  %8818 = vmatprep.subr.bf16.mxu0 0
  %8819 = vmatpush1.bf16.msra.mxu0 %v3389
  %8820 = vmatprep.subr.bf16.mxu0 0
  %8821 = vmatpush1.bf16.msra.mxu0 %v3390
  %8822 = vmatprep.subr.bf16.mxu0 0
  %8823 = vmatpush1.bf16.msra.mxu0 %v3391
  %8824 = vmatprep.subr.bf16.mxu0 0
  %8825 = vmatpush1.bf16.msra.mxu0 %v3392
  %8826 = vmatprep.subr.bf16.mxu0 0
  %8827 = vmatpush1.bf16.msra.mxu0 %v3393
  %8828 = vmatprep.subr.bf16.mxu0 0
  %8829 = vmatpush1.bf16.msra.mxu0 %v3394
  %8830 = vmatprep.subr.bf16.mxu0 0
  %8831 = vmatpush1.bf16.msra.mxu0 %v3395
  %8832 = vmatprep.subr.bf16.mxu0 0
  %8833 = vmatpush1.bf16.msra.mxu0 %v3396
  %8834 = vmatprep.subr.bf16.mxu0 0
  %8835 = vmatpush1.bf16.msra.mxu0 %v3397
  %8836 = vmatprep.subr.bf16.mxu0 0
  %8837 = vmatpush1.bf16.msra.mxu0 %v3398
  %8838 = vmatprep.subr.bf16.mxu0 0
  %8839 = vmatpush1.bf16.msra.mxu0 %v3399
  %8840 = vmatprep.subr.bf16.mxu0 0
  %8841 = vmatpush1.bf16.msra.mxu0 %v3400
  %8842 = vmatprep.subr.bf16.mxu0 0
  %8843 = vmatpush1.bf16.msra.mxu0 %v3401
  %8844 = vmatprep.subr.bf16.mxu0 0
  %8845 = vmatpush1.bf16.msra.mxu0 %v3402
  %8846 = vmatprep.subr.bf16.mxu0 0
  %8847 = vmatpush1.bf16.msra.mxu0 %v3403
  %8848 = vmatprep.subr.bf16.mxu0 0
  %8849 = vmatpush1.bf16.msra.mxu0 %v3404
  %8850 = vmatprep.mubr.bf16.mxu0 %v8814
  %8851 = vmatmul.mubr.bf16.gmra.mrb[0].mxu0 %v8811
  %v8852 = vpop.f32.mrb[0].mxu0
  %v8853 = vadd.f32 %v3315, %v8852
  %v8854 = vpop.f32.mrb[0].mxu0
  %v8855 = vpop.f32.mrb[0].mxu0
  %v8856 = vpop.f32.mrb[0].mxu0
  %8857 = vdwg.mxu0
  %8858 = vmatprep.subr.bf16.mxu0 0
  %8859 = vmatpush1.bf16.msra.mxu0 %v3405
  %8860 = vmatprep.subr.bf16.mxu0 0
  %8861 = vmatpush1.bf16.msra.mxu0 %v3406
  %8862 = vmatprep.subr.bf16.mxu0 0
  %8863 = vmatpush1.bf16.msra.mxu0 0
  %8864 = vmatprep.subr.bf16.mxu0 0
  %8865 = vmatpush1.bf16.msra.mxu0 0
  %8866 = vmatprep.subr.bf16.mxu0 0
  %8867 = vmatpush1.bf16.msra.mxu0 0
  %8868 = vmatprep.subr.bf16.mxu0 0
  %8869 = vmatpush1.bf16.msra.mxu0 0
  %8870 = vmatprep.subr.bf16.mxu0 0
  %8871 = vmatpush1.bf16.msra.mxu0 0
  %8872 = vmatprep.subr.bf16.mxu0 0
  %8873 = vmatpush1.bf16.msra.mxu0 0
  %8874 = vmatprep.subr.bf16.mxu0 0
  %8875 = vmatpush1.bf16.msra.mxu0 0
  %8876 = vmatprep.subr.bf16.mxu0 0
  %8877 = vmatpush1.bf16.msra.mxu0 0
  %8878 = vmatprep.subr.bf16.mxu0 0
  %8879 = vmatpush1.bf16.msra.mxu0 0
  %8880 = vmatprep.subr.bf16.mxu0 0
  %8881 = vmatpush1.bf16.msra.mxu0 0
  %8882 = vmatprep.subr.bf16.mxu0 0
  %8883 = vmatpush1.bf16.msra.mxu0 0
  %8884 = vmatprep.subr.bf16.mxu0 0
  %8885 = vmatpush1.bf16.msra.mxu0 0
  %8886 = vmatprep.subr.bf16.mxu0 0
  %8887 = vmatpush1.bf16.msra.mxu0 0
  %8888 = vmatprep.subr.bf16.mxu0 0
  %8889 = vmatpush1.bf16.msra.mxu0 0
  %8890 = vmatprep.mubr.bf16.mxu0 0
  %8891 = vmatmul.mubr.bf16.gmra.mrb[0].mxu0 %v8816
  %v8892 = vpop.f32.mrb[0].mxu0
  %v8893 = vadd.f32 %v8853, %v8892
  %v8894 = vpop.f32.mrb[0].mxu0
  %v8895 = vpop.f32.mrb[0].mxu0
  %v8896 = vpop.f32.mrb[0].mxu0
  %8897 = vdwg.mxu0
  %v8898 = vmax.f32 %v8893, 0.0
  %v8899 = vpack.c.bf16 %v8898, %v8898
  %v8901 = vunpack.c.l.b16 %v8899
  %v8902 = vpack.c.b16 %v8901, %v8901
  %8903 = vrot.lane.b32.xlu0 %v8902, 32
  %v8904 = vpop.permute.xlu0 %8903
  %8906 = vst.msk [vmem:[#allocation3 + $0x2c] sm:$0xf] %vm3619, %v8904
  %v8907 = vld [vmem:[%s2834 + $0x4] sm:$0xff]
  %v8908 = vld [vmem:[%s3037 + $0x4] sm:$0xff]
  %v8909 = vld [vmem:[%s3240 + $0x4] sm:$0xff]
  %v8911 = vunpack.c.l.b16 %v8907
  %v8912 = vunpack.c.h.b16 %v8907
  %v8913 = vpack.c.b16 %v8911, %v8911
  %v8914 = vpack.c.b16 %v8912, %v8912
  %8915 = vrot.lane.b32.xlu0 %v8913, 32
  %v8916 = vpop.permute.xlu0 %8915
  %8917 = vrot.lane.b32.xlu0 %v8914, 32
  %v8918 = vpop.permute.xlu0 %8917
  %v8919 = vsel %vm4433, %v8916, %v8918
  %v8921 = vunpack.c.l.b16 %v8908
  %v8922 = vunpack.c.h.b16 %v8908
  %v8923 = vpack.c.b16 %v8921, %v8921
  %v8924 = vpack.c.b16 %v8922, %v8922
  %v8926 = vunpack.c.l.b16 %v8909
  %v8927 = vunpack.c.h.b16 %v8909
  %v8928 = vpack.c.b16 %v8926, %v8926
  %v8929 = vpack.c.b16 %v8927, %v8927
  %8930 = vrot.lane.b32.xlu0 %v8928, 96
  %v8931 = vpop.permute.xlu0 %8930
  %8932 = vrot.lane.b32.xlu0 %v8929, 96
  %v8933 = vpop.permute.xlu0 %8932
  %v8934 = vsel %vm3637, %v8931, %v8933
  %v8937 = vsel %vm493, %v8919, %v8923
  %v8941 = vsel %vm3307, %v8924, %v8934
  %v8944 = vsel %vm3286, %v8933, 0
  %8946 = vmatprep.subr.bf16.mxu0 0
  %8947 = vmatpush1.bf16.msra.mxu0 %v3389
  %8948 = vmatprep.subr.bf16.mxu0 0
  %8949 = vmatpush1.bf16.msra.mxu0 %v3390
  %8950 = vmatprep.subr.bf16.mxu0 0
  %8951 = vmatpush1.bf16.msra.mxu0 %v3391
  %8952 = vmatprep.subr.bf16.mxu0 0
  %8953 = vmatpush1.bf16.msra.mxu0 %v3392
  %8954 = vmatprep.subr.bf16.mxu0 0
  %8955 = vmatpush1.bf16.msra.mxu0 %v3393
  %8956 = vmatprep.subr.bf16.mxu0 0
  %8957 = vmatpush1.bf16.msra.mxu0 %v3394
  %8958 = vmatprep.subr.bf16.mxu0 0
  %8959 = vmatpush1.bf16.msra.mxu0 %v3395
  %8960 = vmatprep.subr.bf16.mxu0 0
  %8961 = vmatpush1.bf16.msra.mxu0 %v3396
  %8962 = vmatprep.subr.bf16.mxu0 0
  %8963 = vmatpush1.bf16.msra.mxu0 %v3397
  %8964 = vmatprep.subr.bf16.mxu0 0
  %8965 = vmatpush1.bf16.msra.mxu0 %v3398
  %8966 = vmatprep.subr.bf16.mxu0 0
  %8967 = vmatpush1.bf16.msra.mxu0 %v3399
  %8968 = vmatprep.subr.bf16.mxu0 0
  %8969 = vmatpush1.bf16.msra.mxu0 %v3400
  %8970 = vmatprep.subr.bf16.mxu0 0
  %8971 = vmatpush1.bf16.msra.mxu0 %v3401
  %8972 = vmatprep.subr.bf16.mxu0 0
  %8973 = vmatpush1.bf16.msra.mxu0 %v3402
  %8974 = vmatprep.subr.bf16.mxu0 0
  %8975 = vmatpush1.bf16.msra.mxu0 %v3403
  %8976 = vmatprep.subr.bf16.mxu0 0
  %8977 = vmatpush1.bf16.msra.mxu0 %v3404
  %8978 = vmatprep.mubr.bf16.mxu0 %v8941
  %8979 = vmatmul.mubr.bf16.gmra.mrb[0].mxu0 %v8937
  %v8980 = vpop.f32.mrb[0].mxu0
  %v8981 = vadd.f32 %v3315, %v8980
  %v8982 = vpop.f32.mrb[0].mxu0
  %v8983 = vpop.f32.mrb[0].mxu0
  %v8984 = vpop.f32.mrb[0].mxu0
  %8985 = vdwg.mxu0
  %8986 = vmatprep.subr.bf16.mxu0 0
  %8987 = vmatpush1.bf16.msra.mxu0 %v3405
  %8988 = vmatprep.subr.bf16.mxu0 0
  %8989 = vmatpush1.bf16.msra.mxu0 %v3406
  %8990 = vmatprep.subr.bf16.mxu0 0
  %8991 = vmatpush1.bf16.msra.mxu0 0
  %8992 = vmatprep.subr.bf16.mxu0 0
  %8993 = vmatpush1.bf16.msra.mxu0 0
  %8994 = vmatprep.subr.bf16.mxu0 0
  %8995 = vmatpush1.bf16.msra.mxu0 0
  %8996 = vmatprep.subr.bf16.mxu0 0
  %8997 = vmatpush1.bf16.msra.mxu0 0
  %8998 = vmatprep.subr.bf16.mxu0 0
  %8999 = vmatpush1.bf16.msra.mxu0 0
  %9000 = vmatprep.subr.bf16.mxu0 0
  %9001 = vmatpush1.bf16.msra.mxu0 0
  %9002 = vmatprep.subr.bf16.mxu0 0
  %9003 = vmatpush1.bf16.msra.mxu0 0
  %9004 = vmatprep.subr.bf16.mxu0 0
  %9005 = vmatpush1.bf16.msra.mxu0 0
  %9006 = vmatprep.subr.bf16.mxu0 0
  %9007 = vmatpush1.bf16.msra.mxu0 0
  %9008 = vmatprep.subr.bf16.mxu0 0
  %9009 = vmatpush1.bf16.msra.mxu0 0
  %9010 = vmatprep.subr.bf16.mxu0 0
  %9011 = vmatpush1.bf16.msra.mxu0 0
  %9012 = vmatprep.subr.bf16.mxu0 0
  %9013 = vmatpush1.bf16.msra.mxu0 0
  %9014 = vmatprep.subr.bf16.mxu0 0
  %9015 = vmatpush1.bf16.msra.mxu0 0
  %9016 = vmatprep.subr.bf16.mxu0 0
  %9017 = vmatpush1.bf16.msra.mxu0 0
  %9018 = vmatprep.mubr.bf16.mxu0 0
  %9019 = vmatmul.mubr.bf16.gmra.mrb[0].mxu0 %v8944
  %v9020 = vpop.f32.mrb[0].mxu0
  %v9021 = vadd.f32 %v8981, %v9020
  %v9022 = vpop.f32.mrb[0].mxu0
  %v9023 = vpop.f32.mrb[0].mxu0
  %v9024 = vpop.f32.mrb[0].mxu0
  %9025 = vdwg.mxu0
  %v9026 = vmax.f32 %v9021, 0.0
  %v9027 = vpack.c.bf16 %v9026, %v9026
  %v9029 = vunpack.c.l.b16 %v9027
  %v9030 = vpack.c.b16 %v9029, %v9029
  %9031 = vrot.lane.b32.xlu0 %v9030, 64
  %v9032 = vpop.permute.xlu0 %9031
  %9034 = vst.msk [vmem:[#allocation3 + $0x2c] sm:$0xf] %vm3737, %v9032
  %v9035 = vld [vmem:[%s2834 + $0x8] sm:$0xf]
  %v9036 = vld [vmem:[%s3037 + $0x8] sm:$0xf]
  %v9037 = vld [vmem:[%s3240 + $0x8] sm:$0xf]
  %v9039 = vunpack.c.l.b16 %v9035
  %v9040 = vpack.c.b16 %v9039, %v9039
  %9041 = vrot.lane.b32.xlu0 %v9040, 96
  %v9042 = vpop.permute.xlu0 %9041
  %v9044 = vunpack.c.l.b16 %v9036
  %v9045 = vpack.c.b16 %v9044, %v9044
  %9046 = vrot.lane.b32.xlu0 %v9045, 64
  %v9047 = vpop.permute.xlu0 %9046
  %v9049 = vunpack.c.l.b16 %v9037
  %v9050 = vpack.c.b16 %v9049, %v9049
  %9051 = vrot.lane.b32.xlu0 %v9050, 32
  %v9052 = vpop.permute.xlu0 %9051
  %v9055 = vsel %vm493, %v9042, %v9047
  %v9058 = vsel %vm3307, %v9047, %v9052
  %v9060 = vsel %vm3286, %v9052, 0
  %9062 = vmatprep.subr.bf16.mxu0 0
  %9063 = vmatpush1.bf16.msra.mxu0 %v3389
  %9064 = vmatprep.subr.bf16.mxu0 0
  %9065 = vmatpush1.bf16.msra.mxu0 %v3390
  %9066 = vmatprep.subr.bf16.mxu0 0
  %9067 = vmatpush1.bf16.msra.mxu0 %v3391
  %9068 = vmatprep.subr.bf16.mxu0 0
  %9069 = vmatpush1.bf16.msra.mxu0 %v3392
  %9070 = vmatprep.subr.bf16.mxu0 0
  %9071 = vmatpush1.bf16.msra.mxu0 %v3393
  %9072 = vmatprep.subr.bf16.mxu0 0
  %9073 = vmatpush1.bf16.msra.mxu0 %v3394
  %9074 = vmatprep.subr.bf16.mxu0 0
  %9075 = vmatpush1.bf16.msra.mxu0 %v3395
  %9076 = vmatprep.subr.bf16.mxu0 0
  %9077 = vmatpush1.bf16.msra.mxu0 %v3396
  %9078 = vmatprep.subr.bf16.mxu0 0
  %9079 = vmatpush1.bf16.msra.mxu0 %v3397
  %9080 = vmatprep.subr.bf16.mxu0 0
  %9081 = vmatpush1.bf16.msra.mxu0 %v3398
  %9082 = vmatprep.subr.bf16.mxu0 0
  %9083 = vmatpush1.bf16.msra.mxu0 %v3399
  %9084 = vmatprep.subr.bf16.mxu0 0
  %9085 = vmatpush1.bf16.msra.mxu0 %v3400
  %9086 = vmatprep.subr.bf16.mxu0 0
  %9087 = vmatpush1.bf16.msra.mxu0 %v3401
  %9088 = vmatprep.subr.bf16.mxu0 0
  %9089 = vmatpush1.bf16.msra.mxu0 %v3402
  %9090 = vmatprep.subr.bf16.mxu0 0
  %9091 = vmatpush1.bf16.msra.mxu0 %v3403
  %9092 = vmatprep.subr.bf16.mxu0 0
  %9093 = vmatpush1.bf16.msra.mxu0 %v3404
  %9094 = vmatprep.mubr.bf16.mxu0 %v9058
  %9095 = vmatmul.mubr.bf16.gmra.mrb[0].mxu0 %v9055
  %v9096 = vpop.f32.mrb[0].mxu0
  %v9097 = vadd.f32 %v3315, %v9096
  %v9098 = vpop.f32.mrb[0].mxu0
  %v9099 = vpop.f32.mrb[0].mxu0
  %v9100 = vpop.f32.mrb[0].mxu0
  %9101 = vdwg.mxu0
  %9102 = vmatprep.subr.bf16.mxu0 0
  %9103 = vmatpush1.bf16.msra.mxu0 %v3405
  %9104 = vmatprep.subr.bf16.mxu0 0
  %9105 = vmatpush1.bf16.msra.mxu0 %v3406
  %9106 = vmatprep.subr.bf16.mxu0 0
  %9107 = vmatpush1.bf16.msra.mxu0 0
  %9108 = vmatprep.subr.bf16.mxu0 0
  %9109 = vmatpush1.bf16.msra.mxu0 0
  %9110 = vmatprep.subr.bf16.mxu0 0
  %9111 = vmatpush1.bf16.msra.mxu0 0
  %9112 = vmatprep.subr.bf16.mxu0 0
  %9113 = vmatpush1.bf16.msra.mxu0 0
  %9114 = vmatprep.subr.bf16.mxu0 0
  %9115 = vmatpush1.bf16.msra.mxu0 0
  %9116 = vmatprep.subr.bf16.mxu0 0
  %9117 = vmatpush1.bf16.msra.mxu0 0
  %9118 = vmatprep.subr.bf16.mxu0 0
  %9119 = vmatpush1.bf16.msra.mxu0 0
  %9120 = vmatprep.subr.bf16.mxu0 0
  %9121 = vmatpush1.bf16.msra.mxu0 0
  %9122 = vmatprep.subr.bf16.mxu0 0
  %9123 = vmatpush1.bf16.msra.mxu0 0
  %9124 = vmatprep.subr.bf16.mxu0 0
  %9125 = vmatpush1.bf16.msra.mxu0 0
  %9126 = vmatprep.subr.bf16.mxu0 0
  %9127 = vmatpush1.bf16.msra.mxu0 0
  %9128 = vmatprep.subr.bf16.mxu0 0
  %9129 = vmatpush1.bf16.msra.mxu0 0
  %9130 = vmatprep.subr.bf16.mxu0 0
  %9131 = vmatpush1.bf16.msra.mxu0 0
  %9132 = vmatprep.subr.bf16.mxu0 0
  %9133 = vmatpush1.bf16.msra.mxu0 0
  %9134 = vmatprep.mubr.bf16.mxu0 0
  %9135 = vmatmul.mubr.bf16.gmra.mrb[0].mxu0 %v9060
  %v9136 = vpop.f32.mrb[0].mxu0
  %v9137 = vadd.f32 %v9097, %v9136
  %v9138 = vpop.f32.mrb[0].mxu0
  %v9139 = vpop.f32.mrb[0].mxu0
  %v9140 = vpop.f32.mrb[0].mxu0
  %9141 = vdwg.mxu0
  %v9142 = vmax.f32 %v9137, 0.0
  %v9143 = vpack.c.bf16 %v9142, %v9142
  %v9145 = vunpack.c.l.b16 %v9143
  %v9146 = vpack.c.b16 %v9145, %v9145
  %9147 = vrot.lane.b32.xlu0 %v9146, 96
  %v9148 = vpop.permute.xlu0 %9147
  %9150 = vst.msk [vmem:[#allocation3 + $0x2c] sm:$0xf] %vm3847, %v9148
  %v9151 = vld [vmem:[%s2834 + $0x8] sm:$0xff]
  %v9152 = vld [vmem:[%s3037 + $0x8] sm:$0xff]
  %v9153 = vld [vmem:[%s3240 + $0x8] sm:$0xff]
  %v9155 = vunpack.c.l.b16 %v9151
  %v9156 = vunpack.c.h.b16 %v9151
  %v9157 = vpack.c.b16 %v9155, %v9155
  %v9158 = vpack.c.b16 %v9156, %v9156
  %9159 = vrot.lane.b32.xlu0 %v9157, 32
  %v9160 = vpop.permute.xlu0 %9159
  %9161 = vrot.lane.b32.xlu0 %v9158, 32
  %v9162 = vpop.permute.xlu0 %9161
  %v9163 = vsel %vm4433, %v9160, %v9162
  %v9165 = vunpack.c.l.b16 %v9152
  %v9166 = vunpack.c.h.b16 %v9152
  %v9167 = vpack.c.b16 %v9165, %v9165
  %v9168 = vpack.c.b16 %v9166, %v9166
  %v9170 = vunpack.c.l.b16 %v9153
  %v9171 = vunpack.c.h.b16 %v9153
  %v9172 = vpack.c.b16 %v9170, %v9170
  %v9173 = vpack.c.b16 %v9171, %v9171
  %9174 = vrot.lane.b32.xlu0 %v9172, 96
  %v9175 = vpop.permute.xlu0 %9174
  %9176 = vrot.lane.b32.xlu0 %v9173, 96
  %v9177 = vpop.permute.xlu0 %9176
  %v9178 = vsel %vm3637, %v9175, %v9177
  %v9181 = vsel %vm493, %v9163, %v9167
  %v9185 = vsel %vm3307, %v9168, %v9178
  %v9188 = vsel %vm3286, %v9177, 0
  %9190 = vmatprep.subr.bf16.mxu0 0
  %9191 = vmatpush1.bf16.msra.mxu0 %v3389
  %9192 = vmatprep.subr.bf16.mxu0 0
  %9193 = vmatpush1.bf16.msra.mxu0 %v3390
  %9194 = vmatprep.subr.bf16.mxu0 0
  %9195 = vmatpush1.bf16.msra.mxu0 %v3391
  %9196 = vmatprep.subr.bf16.mxu0 0
  %9197 = vmatpush1.bf16.msra.mxu0 %v3392
  %9198 = vmatprep.subr.bf16.mxu0 0
  %9199 = vmatpush1.bf16.msra.mxu0 %v3393
  %9200 = vmatprep.subr.bf16.mxu0 0
  %9201 = vmatpush1.bf16.msra.mxu0 %v3394
  %9202 = vmatprep.subr.bf16.mxu0 0
  %9203 = vmatpush1.bf16.msra.mxu0 %v3395
  %9204 = vmatprep.subr.bf16.mxu0 0
  %9205 = vmatpush1.bf16.msra.mxu0 %v3396
  %9206 = vmatprep.subr.bf16.mxu0 0
  %9207 = vmatpush1.bf16.msra.mxu0 %v3397
  %9208 = vmatprep.subr.bf16.mxu0 0
  %9209 = vmatpush1.bf16.msra.mxu0 %v3398
  %9210 = vmatprep.subr.bf16.mxu0 0
  %9211 = vmatpush1.bf16.msra.mxu0 %v3399
  %9212 = vmatprep.subr.bf16.mxu0 0
  %9213 = vmatpush1.bf16.msra.mxu0 %v3400
  %9214 = vmatprep.subr.bf16.mxu0 0
  %9215 = vmatpush1.bf16.msra.mxu0 %v3401
  %9216 = vmatprep.subr.bf16.mxu0 0
  %9217 = vmatpush1.bf16.msra.mxu0 %v3402
  %9218 = vmatprep.subr.bf16.mxu0 0
  %9219 = vmatpush1.bf16.msra.mxu0 %v3403
  %9220 = vmatprep.subr.bf16.mxu0 0
  %9221 = vmatpush1.bf16.msra.mxu0 %v3404
  %9222 = vmatprep.mubr.bf16.mxu0 %v9185
  %9223 = vmatmul.mubr.bf16.gmra.mrb[0].mxu0 %v9181
  %v9224 = vpop.f32.mrb[0].mxu0
  %v9225 = vadd.f32 %v3315, %v9224
  %v9226 = vpop.f32.mrb[0].mxu0
  %v9227 = vpop.f32.mrb[0].mxu0
  %v9228 = vpop.f32.mrb[0].mxu0
  %9229 = vdwg.mxu0
  %9230 = vmatprep.subr.bf16.mxu0 0
  %9231 = vmatpush1.bf16.msra.mxu0 %v3405
  %9232 = vmatprep.subr.bf16.mxu0 0
  %9233 = vmatpush1.bf16.msra.mxu0 %v3406
  %9234 = vmatprep.subr.bf16.mxu0 0
  %9235 = vmatpush1.bf16.msra.mxu0 0
  %9236 = vmatprep.subr.bf16.mxu0 0
  %9237 = vmatpush1.bf16.msra.mxu0 0
  %9238 = vmatprep.subr.bf16.mxu0 0
  %9239 = vmatpush1.bf16.msra.mxu0 0
  %9240 = vmatprep.subr.bf16.mxu0 0
  %9241 = vmatpush1.bf16.msra.mxu0 0
  %9242 = vmatprep.subr.bf16.mxu0 0
  %9243 = vmatpush1.bf16.msra.mxu0 0
  %9244 = vmatprep.subr.bf16.mxu0 0
  %9245 = vmatpush1.bf16.msra.mxu0 0
  %9246 = vmatprep.subr.bf16.mxu0 0
  %9247 = vmatpush1.bf16.msra.mxu0 0
  %9248 = vmatprep.subr.bf16.mxu0 0
  %9249 = vmatpush1.bf16.msra.mxu0 0
  %9250 = vmatprep.subr.bf16.mxu0 0
  %9251 = vmatpush1.bf16.msra.mxu0 0
  %9252 = vmatprep.subr.bf16.mxu0 0
  %9253 = vmatpush1.bf16.msra.mxu0 0
  %9254 = vmatprep.subr.bf16.mxu0 0
  %9255 = vmatpush1.bf16.msra.mxu0 0
  %9256 = vmatprep.subr.bf16.mxu0 0
  %9257 = vmatpush1.bf16.msra.mxu0 0
  %9258 = vmatprep.subr.bf16.mxu0 0
  %9259 = vmatpush1.bf16.msra.mxu0 0
  %9260 = vmatprep.subr.bf16.mxu0 0
  %9261 = vmatpush1.bf16.msra.mxu0 0
  %9262 = vmatprep.mubr.bf16.mxu0 0
  %9263 = vmatmul.mubr.bf16.gmra.mrb[0].mxu0 %v9188
  %v9264 = vpop.f32.mrb[0].mxu0
  %v9265 = vadd.f32 %v9225, %v9264
  %v9266 = vpop.f32.mrb[0].mxu0
  %v9267 = vpop.f32.mrb[0].mxu0
  %v9268 = vpop.f32.mrb[0].mxu0
  %9269 = vdwg.mxu0
  %v9270 = vmax.f32 %v9265, 0.0
  %v9271 = vpack.c.bf16 %v9270, %v9270
  %9272 = vst.msk [vmem:[#allocation3 + $0x30] sm:$0xf] %vm3509, %v9271
  %v9273 = vld [vmem:[#allocation3] sm:$0xff]
  %v9274 = vld [vmem:[#allocation3 + $0x8] sm:$0xff]
  %v9275 = vld [vmem:[#allocation3 + $0x10] sm:$0xff]
  %v9276 = vld [vmem:[#allocation3 + $0x18] sm:$0xff]
  %v9277 = vld [vmem:[#allocation3 + $0x20] sm:$0xff]
  %v9278 = vld [vmem:[#allocation3 + $0x28] sm:$0xff]
  %v9279 = vld [vmem:[#allocation3 + $0x30] sm:$0xf]
  %v9280 = vld [vmem:[%s5] sm:$0xf]
  %v9281 = vld [vmem:[%s5 + $0x4] sm:$0xf]
  %v9282 = vld [vmem:[%s5 + $0x8] sm:$0xf]
  %v9283 = vld [vmem:[%s5 + $0xc] sm:$0xf]
  %v9284 = vld [vmem:[%s5 + $0x10] sm:$0xf]
  %v9285 = vld [vmem:[%s5 + $0x14] sm:$0xf]
  %v9286 = vld [vmem:[%s5 + $0x18] sm:$0xf]
  %v9287 = vld [vmem:[%s5 + $0x1c] sm:$0xf]
  %v9288 = vld [vmem:[%s5 + $0x20] sm:$0xf]
  %v9289 = vld [vmem:[%s5 + $0x24] sm:$0xf]
  %v9290 = vld [vmem:[%s5 + $0x28] sm:$0xf]
  %v9291 = vld [vmem:[%s5 + $0x2c] sm:$0xf]
  %v9292 = vld [vmem:[%s5 + $0x30] sm:$0xf]
  %v9293 = vld [vmem:[%s5 + $0x34] sm:$0xf]
  %v9294 = vld [vmem:[%s5 + $0x38] sm:$0xf]
  %v9295 = vld [vmem:[%s5 + $0x3c] sm:$0xf]
  %v9296 = vld [vmem:[%s5 + $0x40] sm:$0xf]
  %v9297 = vld [vmem:[%s5 + $0x44] sm:$0xf]
  %v9298 = vld [vmem:[%s5 + $0x48] sm:$0xf]
  %v9299 = vld [vmem:[%s5 + $0x4c] sm:$0xf]
  %v9300 = vld [vmem:[%s5 + $0x50] sm:$0xf]
  %v9301 = vld [vmem:[%s5 + $0x54] sm:$0xf]
  %v9302 = vld [vmem:[%s5 + $0x58] sm:$0xf]
  %v9303 = vld [vmem:[%s5 + $0x5c] sm:$0xf]
  %v9304 = vld [vmem:[%s5 + $0x60] sm:$0xf]
  %v9305 = vld [vmem:[%s5 + $0x64] sm:$0xf]
  %v9306 = vld [vmem:[%s5 + $0x68] sm:$0xf]
  %v9307 = vld [vmem:[%s5 + $0x6c] sm:$0xf]
  %v9308 = vld [vmem:[%s5 + $0x70] sm:$0xf]
  %v9309 = vld [vmem:[%s5 + $0x74] sm:$0xf]
  %v9310 = vld [vmem:[%s5 + $0x78] sm:$0xf]
  %v9311 = vld [vmem:[%s5 + $0x7c] sm:$0xf]
  %v9312 = vld [vmem:[%s5 + $0x80] sm:$0xf]
  %v9313 = vld [vmem:[%s5 + $0x84] sm:$0xf]
  %v9314 = vld [vmem:[%s5 + $0x88] sm:$0xf]
  %v9315 = vld [vmem:[%s5 + $0x8c] sm:$0xf]
  %v9316 = vld [vmem:[%s5 + $0x90] sm:$0xf]
  %v9317 = vld [vmem:[%s5 + $0x94] sm:$0xf]
  %v9318 = vld [vmem:[%s5 + $0x98] sm:$0xf]
  %v9319 = vld [vmem:[%s5 + $0x9c] sm:$0xf]
  %v9320 = vld [vmem:[%s5 + $0xa0] sm:$0xf]
  %v9321 = vld [vmem:[%s5 + $0xa4] sm:$0xf]
  %v9322 = vld [vmem:[%s5 + $0xa8] sm:$0xf]
  %v9323 = vld [vmem:[%s5 + $0xac] sm:$0xf]
  %v9324 = vld [vmem:[%s5 + $0xb0] sm:$0xf]
  %v9325 = vld [vmem:[%s5 + $0xb4] sm:$0xf]
  %v9326 = vld [vmem:[%s5 + $0xb8] sm:$0xf]
  %v9327 = vld [vmem:[%s5 + $0xbc] sm:$0xf]
  %v9328 = vld [vmem:[%s5 + $0xc0] sm:$0xf]
  %v9329 = vld [vmem:[%s5 + $0xc4] sm:$0xf]
  %v9330 = vld [vmem:[%s5 + $0xc8] sm:$0xf]
  %v9331 = vld [vmem:[%s5 + $0xcc] sm:$0xf]
  %v9332 = vld [vmem:[%s5 + $0xd0] sm:$0xf]
  %v9333 = vld [vmem:[%s5 + $0xd4] sm:$0xf]
  %v9334 = vld [vmem:[%s5 + $0xd8] sm:$0xf]
  %v9335 = vld [vmem:[%s5 + $0xdc] sm:$0xf]
  %v9336 = vld [vmem:[%s5 + $0xe0] sm:$0xf]
  %v9337 = vld [vmem:[%s5 + $0xe4] sm:$0xf]
  %v9338 = vld [vmem:[%s5 + $0xe8] sm:$0xf]
  %v9339 = vld [vmem:[%s5 + $0xec] sm:$0xf]
  %v9340 = vld [vmem:[%s5 + $0xf0] sm:$0xf]
  %v9341 = vld [vmem:[%s5 + $0xf4] sm:$0xf]
  %v9342 = vld [vmem:[%s5 + $0xf8] sm:$0xf]
  %v9343 = vld [vmem:[%s5 + $0xfc] sm:$0xf]
  %v9344 = vld [vmem:[%s5 + $0x100] sm:$0xf]
  %v9345 = vld [vmem:[%s5 + $0x104] sm:$0xf]
  %v9346 = vld [vmem:[%s5 + $0x108] sm:$0xf]
  %v9347 = vld [vmem:[%s5 + $0x10c] sm:$0xf]
  %v9348 = vld [vmem:[%s5 + $0x110] sm:$0xf]
  %v9349 = vld [vmem:[%s5 + $0x114] sm:$0xf]
  %v9350 = vld [vmem:[%s5 + $0x118] sm:$0xf]
  %v9351 = vld [vmem:[%s5 + $0x11c] sm:$0xf]
  %v9352 = vld [vmem:[%s5 + $0x120] sm:$0xf]
  %v9353 = vld [vmem:[%s5 + $0x124] sm:$0xf]
  %v9354 = vld [vmem:[%s5 + $0x128] sm:$0xf]
  %v9355 = vld [vmem:[%s5 + $0x12c] sm:$0xf]
  %v9356 = vld [vmem:[%s5 + $0x130] sm:$0xf]
  %v9357 = vld [vmem:[%s5 + $0x134] sm:$0xf]
  %v9358 = vld [vmem:[%s5 + $0x138] sm:$0xf]
  %v9359 = vld [vmem:[%s5 + $0x13c] sm:$0xf]
  %v9360 = vld [vmem:[%s5 + $0x140] sm:$0xf]
  %v9361 = vld [vmem:[%s5 + $0x144] sm:$0xf]
  %v9362 = vld [vmem:[%s5 + $0x148] sm:$0xf]
  %v9363 = vld [vmem:[%s5 + $0x14c] sm:$0xf]
  %v9364 = vld [vmem:[%s5 + $0x150] sm:$0xf]
  %v9365 = vld [vmem:[%s5 + $0x154] sm:$0xf]
  %v9366 = vld [vmem:[%s5 + $0x158] sm:$0xf]
  %v9367 = vld [vmem:[%s5 + $0x15c] sm:$0xf]
  %v9368 = vld [vmem:[%s5 + $0x160] sm:$0xf]
  %v9369 = vld [vmem:[%s5 + $0x164] sm:$0xf]
  %v9370 = vld [vmem:[%s5 + $0x168] sm:$0xf]
  %v9371 = vld [vmem:[%s5 + $0x16c] sm:$0xf]
  %v9372 = vld [vmem:[%s5 + $0x170] sm:$0xf]
  %v9373 = vld [vmem:[%s5 + $0x174] sm:$0xf]
  %v9374 = vld [vmem:[%s5 + $0x178] sm:$0xf]
  %v9375 = vld [vmem:[%s5 + $0x17c] sm:$0xf]
  %v9376 = vld [vmem:[%s5 + $0x180] sm:$0xf]
  %v9377 = vld [vmem:[%s5 + $0x184] sm:$0xf]
  %v9378 = vld [vmem:[%s5 + $0x188] sm:$0xf]
  %v9379 = vld [vmem:[%s5 + $0x18c] sm:$0xf]
  %v9380 = vld [vmem:[%s5 + $0x190] sm:$0xf]
  %v9381 = vld [vmem:[%s5 + $0x194] sm:$0xf]
  %v9382 = vld [vmem:[%s5 + $0x198] sm:$0xf]
  %v9383 = vld [vmem:[%s5 + $0x19c] sm:$0xf]
  %v9384 = vld [vmem:[%s5 + $0x1a0] sm:$0xf]
  %v9385 = vld [vmem:[%s5 + $0x1a4] sm:$0xf]
  %v9386 = vld [vmem:[%s5 + $0x1a8] sm:$0xf]
  %v9387 = vld [vmem:[%s5 + $0x1ac] sm:$0xf]
  %v9388 = vld [vmem:[%s5 + $0x1b0] sm:$0xf]
  %v9389 = vld [vmem:[%s5 + $0x1b4] sm:$0xf]
  %v9390 = vld [vmem:[%s5 + $0x1b8] sm:$0xf]
  %v9391 = vld [vmem:[%s5 + $0x1bc] sm:$0xf]
  %v9392 = vld [vmem:[%s5 + $0x1c0] sm:$0xf]
  %v9393 = vld [vmem:[%s5 + $0x1c4] sm:$0xf]
  %v9394 = vld [vmem:[%s5 + $0x1c8] sm:$0xf]
  %v9395 = vld [vmem:[%s5 + $0x1cc] sm:$0xf]
  %v9396 = vld [vmem:[%s5 + $0x1d0] sm:$0xf]
  %v9397 = vld [vmem:[%s5 + $0x1d4] sm:$0xf]
  %v9398 = vld [vmem:[%s5 + $0x1d8] sm:$0xf]
  %v9399 = vld [vmem:[%s5 + $0x1dc] sm:$0xf]
  %v9400 = vld [vmem:[%s5 + $0x1e0] sm:$0xf]
  %v9401 = vld [vmem:[%s5 + $0x1e4] sm:$0xf]
  %v9402 = vld [vmem:[%s5 + $0x1e8] sm:$0xf]
  %v9403 = vld [vmem:[%s5 + $0x1ec] sm:$0xf]
  %v9404 = vld [vmem:[%s5 + $0x1f0] sm:$0xf]
  %v9405 = vld [vmem:[%s5 + $0x1f4] sm:$0xf]
  %v9406 = vld [vmem:[%s5 + $0x1f8] sm:$0xf]
  %v9407 = vld [vmem:[%s5 + $0x1fc] sm:$0xf]
  %v9408 = vld [vmem:[%s5 + $0x200] sm:$0xf]
  %v9409 = vld [vmem:[%s5 + $0x204] sm:$0xf]
  %v9410 = vld [vmem:[%s5 + $0x208] sm:$0xf]
  %v9411 = vld [vmem:[%s5 + $0x20c] sm:$0xf]
  %v9412 = vld [vmem:[%s5 + $0x210] sm:$0xf]
  %v9413 = vld [vmem:[%s5 + $0x214] sm:$0xf]
  %v9414 = vld [vmem:[%s5 + $0x218] sm:$0xf]
  %v9415 = vld [vmem:[%s5 + $0x21c] sm:$0xf]
  %v9416 = vld [vmem:[%s5 + $0x220] sm:$0xf]
  %v9417 = vld [vmem:[%s5 + $0x224] sm:$0xf]
  %v9418 = vld [vmem:[%s5 + $0x228] sm:$0xf]
  %v9419 = vld [vmem:[%s5 + $0x22c] sm:$0xf]
  %v9420 = vld [vmem:[%s5 + $0x230] sm:$0xf]
  %v9421 = vld [vmem:[%s5 + $0x234] sm:$0xf]
  %v9422 = vld [vmem:[%s5 + $0x238] sm:$0xf]
  %v9423 = vld [vmem:[%s5 + $0x23c] sm:$0xf]
  %v9424 = vld [vmem:[%s5 + $0x240] sm:$0xf]
  %v9425 = vld [vmem:[%s5 + $0x244] sm:$0xf]
  %v9426 = vld [vmem:[%s5 + $0x248] sm:$0xf]
  %v9427 = vld [vmem:[%s5 + $0x24c] sm:$0xf]
  %v9428 = vld [vmem:[%s5 + $0x250] sm:$0xf]
  %v9429 = vld [vmem:[%s5 + $0x254] sm:$0xf]
  %v9430 = vld [vmem:[%s5 + $0x258] sm:$0xf]
  %v9431 = vld [vmem:[%s5 + $0x25c] sm:$0xf]
  %v9432 = vld [vmem:[%s5 + $0x260] sm:$0xf]
  %v9433 = vld [vmem:[%s5 + $0x264] sm:$0xf]
  %v9434 = vld [vmem:[%s5 + $0x268] sm:$0xf]
  %v9435 = vld [vmem:[%s5 + $0x26c] sm:$0xf]
  %v9436 = vld [vmem:[%s5 + $0x270] sm:$0xf]
  %v9437 = vld [vmem:[%s5 + $0x274] sm:$0xf]
  %v9438 = vld [vmem:[%s5 + $0x278] sm:$0xf]
  %v9439 = vld [vmem:[%s5 + $0x27c] sm:$0xf]
  %v9440 = vld [vmem:[%s5 + $0x280] sm:$0xf]
  %v9441 = vld [vmem:[%s5 + $0x284] sm:$0xf]
  %v9442 = vld [vmem:[%s5 + $0x288] sm:$0xf]
  %v9443 = vld [vmem:[%s5 + $0x28c] sm:$0xf]
  %v9444 = vld [vmem:[%s5 + $0x290] sm:$0xf]
  %v9445 = vld [vmem:[%s5 + $0x294] sm:$0xf]
  %v9446 = vld [vmem:[%s5 + $0x298] sm:$0xf]
  %v9447 = vld [vmem:[%s5 + $0x29c] sm:$0xf]
  %v9448 = vld [vmem:[%s5 + $0x2a0] sm:$0xf]
  %v9449 = vld [vmem:[%s5 + $0x2a4] sm:$0xf]
  %v9450 = vld [vmem:[%s5 + $0x2a8] sm:$0xf]
  %v9451 = vld [vmem:[%s5 + $0x2ac] sm:$0xf]
  %v9452 = vld [vmem:[%s5 + $0x2b0] sm:$0xf]
  %v9453 = vld [vmem:[%s5 + $0x2b4] sm:$0xf]
  %v9454 = vld [vmem:[%s5 + $0x2b8] sm:$0xf]
  %v9455 = vld [vmem:[%s5 + $0x2bc] sm:$0xf]
  %v9456 = vld [vmem:[%s5 + $0x2c0] sm:$0xf]
  %v9457 = vld [vmem:[%s5 + $0x2c4] sm:$0xf]
  %v9458 = vld [vmem:[%s5 + $0x2c8] sm:$0xf]
  %v9459 = vld [vmem:[%s5 + $0x2cc] sm:$0xf]
  %v9460 = vld [vmem:[%s5 + $0x2d0] sm:$0xf]
  %v9461 = vld [vmem:[%s5 + $0x2d4] sm:$0xf]
  %v9462 = vld [vmem:[%s5 + $0x2d8] sm:$0xf]
  %v9463 = vld [vmem:[%s5 + $0x2dc] sm:$0xf]
  %v9464 = vld [vmem:[%s5 + $0x2e0] sm:$0xf]
  %v9465 = vld [vmem:[%s5 + $0x2e4] sm:$0xf]
  %v9466 = vld [vmem:[%s5 + $0x2e8] sm:$0xf]
  %v9467 = vld [vmem:[%s5 + $0x2ec] sm:$0xf]
  %v9468 = vld [vmem:[%s5 + $0x2f0] sm:$0xf]
  %v9469 = vld [vmem:[%s5 + $0x2f4] sm:$0xf]
  %v9470 = vld [vmem:[%s5 + $0x2f8] sm:$0xf]
  %v9471 = vld [vmem:[%s5 + $0x2fc] sm:$0xf]
  %v9472 = vld [vmem:[%s5 + $0x300] sm:$0xf]
  %v9473 = vld [vmem:[%s5 + $0x304] sm:$0xf]
  %v9474 = vld [vmem:[%s5 + $0x308] sm:$0xf]
  %v9475 = vld [vmem:[%s5 + $0x30c] sm:$0xf]
  %v9476 = vld [vmem:[%s6] sm:$0x1]
  %v9478 = vlaneseq
  %v9479 = vshrl.u32 %v9478, 7
  %v9480 = vsub.s32 0, %v9479
  %v9481 = vrot.slane %v9476, %v9480
  %v9490 = vunpack.c.l.b16 %v9273
  %v9491 = vunpack.c.h.b16 %v9273
  %v9492 = vunpack.c.l.b16 %v9274
  %v9493 = vunpack.c.h.b16 %v9274
  %v9494 = vunpack.c.l.b16 %v9275
  %v9495 = vunpack.c.h.b16 %v9275
  %v9496 = vunpack.c.l.b16 %v9276
  %v9497 = vunpack.c.h.b16 %v9276
  %v9498 = vunpack.c.l.b16 %v9277
  %v9499 = vunpack.c.h.b16 %v9277
  %v9500 = vunpack.c.l.b16 %v9278
  %v9501 = vunpack.c.h.b16 %v9278
  %v9502 = vunpack.c.l.b16 %v9279
  %v9503 = vpack.c.b16 %v9490, %v9490
  %v9504 = vpack.c.b16 %v9491, %v9491
  %v9505 = vpack.c.b16 %v9492, %v9492
  %v9506 = vpack.c.b16 %v9493, %v9493
  %v9507 = vpack.c.b16 %v9494, %v9494
  %v9508 = vpack.c.b16 %v9495, %v9495
  %v9509 = vpack.c.b16 %v9496, %v9496
  %v9510 = vpack.c.b16 %v9497, %v9497
  %v9511 = vpack.c.b16 %v9498, %v9498
  %v9512 = vpack.c.b16 %v9499, %v9499
  %v9513 = vpack.c.b16 %v9500, %v9500
  %v9514 = vpack.c.b16 %v9501, %v9501
  %v9515 = vpack.c.b16 %v9502, %v9502
  %v9724 = vunpack.c.l.b16 %v9280
  %v9725 = vunpack.c.l.b16 %v9281
  %v9726 = vunpack.c.l.b16 %v9282
  %v9727 = vunpack.c.l.b16 %v9283
  %v9728 = vunpack.c.l.b16 %v9284
  %v9729 = vunpack.c.l.b16 %v9285
  %v9730 = vunpack.c.l.b16 %v9286
  %v9731 = vunpack.c.l.b16 %v9287
  %v9732 = vunpack.c.l.b16 %v9288
  %v9733 = vunpack.c.l.b16 %v9289
  %v9734 = vunpack.c.l.b16 %v9290
  %v9735 = vunpack.c.l.b16 %v9291
  %v9736 = vunpack.c.l.b16 %v9292
  %v9737 = vunpack.c.l.b16 %v9293
  %v9738 = vunpack.c.l.b16 %v9294
  %v9739 = vunpack.c.l.b16 %v9295
  %v9740 = vunpack.c.l.b16 %v9296
  %v9741 = vunpack.c.l.b16 %v9297
  %v9742 = vunpack.c.l.b16 %v9298
  %v9743 = vunpack.c.l.b16 %v9299
  %v9744 = vunpack.c.l.b16 %v9300
  %v9745 = vunpack.c.l.b16 %v9301
  %v9746 = vunpack.c.l.b16 %v9302
  %v9747 = vunpack.c.l.b16 %v9303
  %v9748 = vunpack.c.l.b16 %v9304
  %v9749 = vunpack.c.l.b16 %v9305
  %v9750 = vunpack.c.l.b16 %v9306
  %v9751 = vunpack.c.l.b16 %v9307
  %v9752 = vunpack.c.l.b16 %v9308
  %v9753 = vunpack.c.l.b16 %v9309
  %v9754 = vunpack.c.l.b16 %v9310
  %v9755 = vunpack.c.l.b16 %v9311
  %v9756 = vunpack.c.l.b16 %v9312
  %v9757 = vunpack.c.l.b16 %v9313
  %v9758 = vunpack.c.l.b16 %v9314
  %v9759 = vunpack.c.l.b16 %v9315
  %v9760 = vunpack.c.l.b16 %v9316
  %v9761 = vunpack.c.l.b16 %v9317
  %v9762 = vunpack.c.l.b16 %v9318
  %v9763 = vunpack.c.l.b16 %v9319
  %v9764 = vunpack.c.l.b16 %v9320
  %v9765 = vunpack.c.l.b16 %v9321
  %v9766 = vunpack.c.l.b16 %v9322
  %v9767 = vunpack.c.l.b16 %v9323
  %v9768 = vunpack.c.l.b16 %v9324
  %v9769 = vunpack.c.l.b16 %v9325
  %v9770 = vunpack.c.l.b16 %v9326
  %v9771 = vunpack.c.l.b16 %v9327
  %v9772 = vunpack.c.l.b16 %v9328
  %v9773 = vunpack.c.l.b16 %v9329
  %v9774 = vunpack.c.l.b16 %v9330
  %v9775 = vunpack.c.l.b16 %v9331
  %v9776 = vunpack.c.l.b16 %v9332
  %v9777 = vunpack.c.l.b16 %v9333
  %v9778 = vunpack.c.l.b16 %v9334
  %v9779 = vunpack.c.l.b16 %v9335
  %v9780 = vunpack.c.l.b16 %v9336
  %v9781 = vunpack.c.l.b16 %v9337
  %v9782 = vunpack.c.l.b16 %v9338
  %v9783 = vunpack.c.l.b16 %v9339
  %v9784 = vunpack.c.l.b16 %v9340
  %v9785 = vunpack.c.l.b16 %v9341
  %v9786 = vunpack.c.l.b16 %v9342
  %v9787 = vunpack.c.l.b16 %v9343
  %v9788 = vunpack.c.l.b16 %v9344
  %v9789 = vunpack.c.l.b16 %v9345
  %v9790 = vunpack.c.l.b16 %v9346
  %v9791 = vunpack.c.l.b16 %v9347
  %v9792 = vunpack.c.l.b16 %v9348
  %v9793 = vunpack.c.l.b16 %v9349
  %v9794 = vunpack.c.l.b16 %v9350
  %v9795 = vunpack.c.l.b16 %v9351
  %v9796 = vunpack.c.l.b16 %v9352
  %v9797 = vunpack.c.l.b16 %v9353
  %v9798 = vunpack.c.l.b16 %v9354
  %v9799 = vunpack.c.l.b16 %v9355
  %v9800 = vunpack.c.l.b16 %v9356
  %v9801 = vunpack.c.l.b16 %v9357
  %v9802 = vunpack.c.l.b16 %v9358
  %v9803 = vunpack.c.l.b16 %v9359
  %v9804 = vunpack.c.l.b16 %v9360
  %v9805 = vunpack.c.l.b16 %v9361
  %v9806 = vunpack.c.l.b16 %v9362
  %v9807 = vunpack.c.l.b16 %v9363
  %v9808 = vunpack.c.l.b16 %v9364
  %v9809 = vunpack.c.l.b16 %v9365
  %v9810 = vunpack.c.l.b16 %v9366
  %v9811 = vunpack.c.l.b16 %v9367
  %v9812 = vunpack.c.l.b16 %v9368
  %v9813 = vunpack.c.l.b16 %v9369
  %v9814 = vunpack.c.l.b16 %v9370
  %v9815 = vunpack.c.l.b16 %v9371
  %v9816 = vunpack.c.l.b16 %v9372
  %v9817 = vunpack.c.l.b16 %v9373
  %v9818 = vunpack.c.l.b16 %v9374
  %v9819 = vunpack.c.l.b16 %v9375
  %v9820 = vunpack.c.l.b16 %v9376
  %v9821 = vunpack.c.l.b16 %v9377
  %v9822 = vunpack.c.l.b16 %v9378
  %v9823 = vunpack.c.l.b16 %v9379
  %v9824 = vunpack.c.l.b16 %v9380
  %v9825 = vunpack.c.l.b16 %v9381
  %v9826 = vunpack.c.l.b16 %v9382
  %v9827 = vunpack.c.l.b16 %v9383
  %v9828 = vunpack.c.l.b16 %v9384
  %v9829 = vunpack.c.l.b16 %v9385
  %v9830 = vunpack.c.l.b16 %v9386
  %v9831 = vunpack.c.l.b16 %v9387
  %v9832 = vunpack.c.l.b16 %v9388
  %v9833 = vunpack.c.l.b16 %v9389
  %v9834 = vunpack.c.l.b16 %v9390
  %v9835 = vunpack.c.l.b16 %v9391
  %v9836 = vunpack.c.l.b16 %v9392
  %v9837 = vunpack.c.l.b16 %v9393
  %v9838 = vunpack.c.l.b16 %v9394
  %v9839 = vunpack.c.l.b16 %v9395
  %v9840 = vunpack.c.l.b16 %v9396
  %v9841 = vunpack.c.l.b16 %v9397
  %v9842 = vunpack.c.l.b16 %v9398
  %v9843 = vunpack.c.l.b16 %v9399
  %v9844 = vunpack.c.l.b16 %v9400
  %v9845 = vunpack.c.l.b16 %v9401
  %v9846 = vunpack.c.l.b16 %v9402
  %v9847 = vunpack.c.l.b16 %v9403
  %v9848 = vunpack.c.l.b16 %v9404
  %v9849 = vunpack.c.l.b16 %v9405
  %v9850 = vunpack.c.l.b16 %v9406
  %v9851 = vunpack.c.l.b16 %v9407
  %v9852 = vunpack.c.l.b16 %v9408
  %v9853 = vunpack.c.l.b16 %v9409
  %v9854 = vunpack.c.l.b16 %v9410
  %v9855 = vunpack.c.l.b16 %v9411
  %v9856 = vunpack.c.l.b16 %v9412
  %v9857 = vunpack.c.l.b16 %v9413
  %v9858 = vunpack.c.l.b16 %v9414
  %v9859 = vunpack.c.l.b16 %v9415
  %v9860 = vunpack.c.l.b16 %v9416
  %v9861 = vunpack.c.l.b16 %v9417
  %v9862 = vunpack.c.l.b16 %v9418
  %v9863 = vunpack.c.l.b16 %v9419
  %v9864 = vunpack.c.l.b16 %v9420
  %v9865 = vunpack.c.l.b16 %v9421
  %v9866 = vunpack.c.l.b16 %v9422
  %v9867 = vunpack.c.l.b16 %v9423
  %v9868 = vunpack.c.l.b16 %v9424
  %v9869 = vunpack.c.l.b16 %v9425
  %v9870 = vunpack.c.l.b16 %v9426
  %v9871 = vunpack.c.l.b16 %v9427
  %v9872 = vunpack.c.l.b16 %v9428
  %v9873 = vunpack.c.l.b16 %v9429
  %v9874 = vunpack.c.l.b16 %v9430
  %v9875 = vunpack.c.l.b16 %v9431
  %v9876 = vunpack.c.l.b16 %v9432
  %v9877 = vunpack.c.l.b16 %v9433
  %v9878 = vunpack.c.l.b16 %v9434
  %v9879 = vunpack.c.l.b16 %v9435
  %v9880 = vunpack.c.l.b16 %v9436
  %v9881 = vunpack.c.l.b16 %v9437
  %v9882 = vunpack.c.l.b16 %v9438
  %v9883 = vunpack.c.l.b16 %v9439
  %v9884 = vunpack.c.l.b16 %v9440
  %v9885 = vunpack.c.l.b16 %v9441
  %v9886 = vunpack.c.l.b16 %v9442
  %v9887 = vunpack.c.l.b16 %v9443
  %v9888 = vunpack.c.l.b16 %v9444
  %v9889 = vunpack.c.l.b16 %v9445
  %v9890 = vunpack.c.l.b16 %v9446
  %v9891 = vunpack.c.l.b16 %v9447
  %v9892 = vunpack.c.l.b16 %v9448
  %v9893 = vunpack.c.l.b16 %v9449
  %v9894 = vunpack.c.l.b16 %v9450
  %v9895 = vunpack.c.l.b16 %v9451
  %v9896 = vunpack.c.l.b16 %v9452
  %v9897 = vunpack.c.l.b16 %v9453
  %v9898 = vunpack.c.l.b16 %v9454
  %v9899 = vunpack.c.l.b16 %v9455
  %v9900 = vunpack.c.l.b16 %v9456
  %v9901 = vunpack.c.l.b16 %v9457
  %v9902 = vunpack.c.l.b16 %v9458
  %v9903 = vunpack.c.l.b16 %v9459
  %v9904 = vunpack.c.l.b16 %v9460
  %v9905 = vunpack.c.l.b16 %v9461
  %v9906 = vunpack.c.l.b16 %v9462
  %v9907 = vunpack.c.l.b16 %v9463
  %v9908 = vunpack.c.l.b16 %v9464
  %v9909 = vunpack.c.l.b16 %v9465
  %v9910 = vunpack.c.l.b16 %v9466
  %v9911 = vunpack.c.l.b16 %v9467
  %v9912 = vunpack.c.l.b16 %v9468
  %v9913 = vunpack.c.l.b16 %v9469
  %v9914 = vunpack.c.l.b16 %v9470
  %v9915 = vunpack.c.l.b16 %v9471
  %v9916 = vunpack.c.l.b16 %v9472
  %v9917 = vunpack.c.l.b16 %v9473
  %v9918 = vunpack.c.l.b16 %v9474
  %v9919 = vunpack.c.l.b16 %v9475
  %v9920 = vpack.c.b16 %v9725, %v9724
  %v9921 = vpack.c.b16 %v9727, %v9726
  %v9922 = vpack.c.b16 %v9729, %v9728
  %v9923 = vpack.c.b16 %v9731, %v9730
  %v9924 = vpack.c.b16 %v9733, %v9732
  %v9925 = vpack.c.b16 %v9735, %v9734
  %v9926 = vpack.c.b16 %v9737, %v9736
  %v9927 = vpack.c.b16 %v9739, %v9738
  %v9928 = vpack.c.b16 %v9741, %v9740
  %v9929 = vpack.c.b16 %v9743, %v9742
  %v9930 = vpack.c.b16 %v9745, %v9744
  %v9931 = vpack.c.b16 %v9747, %v9746
  %v9932 = vpack.c.b16 %v9749, %v9748
  %v9933 = vpack.c.b16 %v9751, %v9750
  %v9934 = vpack.c.b16 %v9753, %v9752
  %v9935 = vpack.c.b16 %v9755, %v9754
  %v9936 = vpack.c.b16 %v9757, %v9756
  %v9937 = vpack.c.b16 %v9759, %v9758
  %v9938 = vpack.c.b16 %v9761, %v9760
  %v9939 = vpack.c.b16 %v9763, %v9762
  %v9940 = vpack.c.b16 %v9765, %v9764
  %v9941 = vpack.c.b16 %v9767, %v9766
  %v9942 = vpack.c.b16 %v9769, %v9768
  %v9943 = vpack.c.b16 %v9771, %v9770
  %v9944 = vpack.c.b16 %v9773, %v9772
  %v9945 = vpack.c.b16 %v9775, %v9774
  %v9946 = vpack.c.b16 %v9777, %v9776
  %v9947 = vpack.c.b16 %v9779, %v9778
  %v9948 = vpack.c.b16 %v9781, %v9780
  %v9949 = vpack.c.b16 %v9783, %v9782
  %v9950 = vpack.c.b16 %v9785, %v9784
  %v9951 = vpack.c.b16 %v9787, %v9786
  %v9952 = vpack.c.b16 %v9789, %v9788
  %v9953 = vpack.c.b16 %v9791, %v9790
  %v9954 = vpack.c.b16 %v9793, %v9792
  %v9955 = vpack.c.b16 %v9795, %v9794
  %v9956 = vpack.c.b16 %v9797, %v9796
  %v9957 = vpack.c.b16 %v9799, %v9798
  %v9958 = vpack.c.b16 %v9801, %v9800
  %v9959 = vpack.c.b16 %v9803, %v9802
  %v9960 = vpack.c.b16 %v9805, %v9804
  %v9961 = vpack.c.b16 %v9807, %v9806
  %v9962 = vpack.c.b16 %v9809, %v9808
  %v9963 = vpack.c.b16 %v9811, %v9810
  %v9964 = vpack.c.b16 %v9813, %v9812
  %v9965 = vpack.c.b16 %v9815, %v9814
  %v9966 = vpack.c.b16 %v9817, %v9816
  %v9967 = vpack.c.b16 %v9819, %v9818
  %v9968 = vpack.c.b16 %v9821, %v9820
  %v9969 = vpack.c.b16 %v9823, %v9822
  %v9970 = vpack.c.b16 %v9825, %v9824
  %v9971 = vpack.c.b16 %v9827, %v9826
  %v9972 = vpack.c.b16 %v9829, %v9828
  %v9973 = vpack.c.b16 %v9831, %v9830
  %v9974 = vpack.c.b16 %v9833, %v9832
  %v9975 = vpack.c.b16 %v9835, %v9834
  %v9976 = vpack.c.b16 %v9837, %v9836
  %v9977 = vpack.c.b16 %v9839, %v9838
  %v9978 = vpack.c.b16 %v9841, %v9840
  %v9979 = vpack.c.b16 %v9843, %v9842
  %v9980 = vpack.c.b16 %v9845, %v9844
  %v9981 = vpack.c.b16 %v9847, %v9846
  %v9982 = vpack.c.b16 %v9849, %v9848
  %v9983 = vpack.c.b16 %v9851, %v9850
  %v9984 = vpack.c.b16 %v9853, %v9852
  %v9985 = vpack.c.b16 %v9855, %v9854
  %v9986 = vpack.c.b16 %v9857, %v9856
  %v9987 = vpack.c.b16 %v9859, %v9858
  %v9988 = vpack.c.b16 %v9861, %v9860
  %v9989 = vpack.c.b16 %v9863, %v9862
  %v9990 = vpack.c.b16 %v9865, %v9864
  %v9991 = vpack.c.b16 %v9867, %v9866
  %v9992 = vpack.c.b16 %v9869, %v9868
  %v9993 = vpack.c.b16 %v9871, %v9870
  %v9994 = vpack.c.b16 %v9873, %v9872
  %v9995 = vpack.c.b16 %v9875, %v9874
  %v9996 = vpack.c.b16 %v9877, %v9876
  %v9997 = vpack.c.b16 %v9879, %v9878
  %v9998 = vpack.c.b16 %v9881, %v9880
  %v9999 = vpack.c.b16 %v9883, %v9882
  %v10000 = vpack.c.b16 %v9885, %v9884
  %v10001 = vpack.c.b16 %v9887, %v9886
  %v10002 = vpack.c.b16 %v9889, %v9888
  %v10003 = vpack.c.b16 %v9891, %v9890
  %v10004 = vpack.c.b16 %v9893, %v9892
  %v10005 = vpack.c.b16 %v9895, %v9894
  %v10006 = vpack.c.b16 %v9897, %v9896
  %v10007 = vpack.c.b16 %v9899, %v9898
  %v10008 = vpack.c.b16 %v9901, %v9900
  %v10009 = vpack.c.b16 %v9903, %v9902
  %v10010 = vpack.c.b16 %v9905, %v9904
  %v10011 = vpack.c.b16 %v9907, %v9906
  %v10012 = vpack.c.b16 %v9909, %v9908
  %v10013 = vpack.c.b16 %v9911, %v9910
  %v10014 = vpack.c.b16 %v9913, %v9912
  %v10015 = vpack.c.b16 %v9915, %v9914
  %v10016 = vpack.c.b16 %v9917, %v9916
  %v10017 = vpack.c.b16 %v9919, %v9918
  %v10117 = vsel %vm3286, %v9515, 0
  %10119 = vmatprep.subr.bf16.mxu0 0
  %10120 = vmatpush1.bf16.msra.mxu0 %v9920
  %10121 = vmatprep.subr.bf16.mxu0 0
  %10122 = vmatpush1.bf16.msra.mxu0 %v9921
  %10123 = vmatprep.subr.bf16.mxu0 0
  %10124 = vmatpush1.bf16.msra.mxu0 %v9922
  %10125 = vmatprep.subr.bf16.mxu0 0
  %10126 = vmatpush1.bf16.msra.mxu0 %v9923
  %10127 = vmatprep.subr.bf16.mxu0 0
  %10128 = vmatpush1.bf16.msra.mxu0 %v9924
  %10129 = vmatprep.subr.bf16.mxu0 0
  %10130 = vmatpush1.bf16.msra.mxu0 %v9925
  %10131 = vmatprep.subr.bf16.mxu0 0
  %10132 = vmatpush1.bf16.msra.mxu0 %v9926
  %10133 = vmatprep.subr.bf16.mxu0 0
  %10134 = vmatpush1.bf16.msra.mxu0 %v9927
  %10135 = vmatprep.subr.bf16.mxu0 0
  %10136 = vmatpush1.bf16.msra.mxu0 %v9928
  %10137 = vmatprep.subr.bf16.mxu0 0
  %10138 = vmatpush1.bf16.msra.mxu0 %v9929
  %10139 = vmatprep.subr.bf16.mxu0 0
  %10140 = vmatpush1.bf16.msra.mxu0 %v9930
  %10141 = vmatprep.subr.bf16.mxu0 0
  %10142 = vmatpush1.bf16.msra.mxu0 %v9931
  %10143 = vmatprep.subr.bf16.mxu0 0
  %10144 = vmatpush1.bf16.msra.mxu0 %v9932
  %10145 = vmatprep.subr.bf16.mxu0 0
  %10146 = vmatpush1.bf16.msra.mxu0 %v9933
  %10147 = vmatprep.subr.bf16.mxu0 0
  %10148 = vmatpush1.bf16.msra.mxu0 %v9934
  %10149 = vmatprep.subr.bf16.mxu0 0
  %10150 = vmatpush1.bf16.msra.mxu0 %v9935
  %10151 = vmatprep.mubr.bf16.mxu0 %v9504
  %10152 = vmatmul.mubr.bf16.gmra.mrb[0].mxu0 %v9503
  %v10153 = vpop.f32.mrb[0].mxu0
  %v10154 = vadd.f32 %v9481, %v10153
  %v10155 = vpop.f32.mrb[0].mxu0
  %v10156 = vpop.f32.mrb[0].mxu0
  %v10157 = vpop.f32.mrb[0].mxu0
  %10158 = vdwg.mxu0
  %10159 = vmatprep.subr.bf16.mxu0 0
  %10160 = vmatpush1.bf16.msra.mxu0 %v9936
  %10161 = vmatprep.subr.bf16.mxu0 0
  %10162 = vmatpush1.bf16.msra.mxu0 %v9937
  %10163 = vmatprep.subr.bf16.mxu0 0
  %10164 = vmatpush1.bf16.msra.mxu0 %v9938
  %10165 = vmatprep.subr.bf16.mxu0 0
  %10166 = vmatpush1.bf16.msra.mxu0 %v9939
  %10167 = vmatprep.subr.bf16.mxu0 0
  %10168 = vmatpush1.bf16.msra.mxu0 %v9940
  %10169 = vmatprep.subr.bf16.mxu0 0
  %10170 = vmatpush1.bf16.msra.mxu0 %v9941
  %10171 = vmatprep.subr.bf16.mxu0 0
  %10172 = vmatpush1.bf16.msra.mxu0 %v9942
  %10173 = vmatprep.subr.bf16.mxu0 0
  %10174 = vmatpush1.bf16.msra.mxu0 %v9943
  %10175 = vmatprep.subr.bf16.mxu0 0
  %10176 = vmatpush1.bf16.msra.mxu0 %v9944
  %10177 = vmatprep.subr.bf16.mxu0 0
  %10178 = vmatpush1.bf16.msra.mxu0 %v9945
  %10179 = vmatprep.subr.bf16.mxu0 0
  %10180 = vmatpush1.bf16.msra.mxu0 %v9946
  %10181 = vmatprep.subr.bf16.mxu0 0
  %10182 = vmatpush1.bf16.msra.mxu0 %v9947
  %10183 = vmatprep.subr.bf16.mxu0 0
  %10184 = vmatpush1.bf16.msra.mxu0 %v9948
  %10185 = vmatprep.subr.bf16.mxu0 0
  %10186 = vmatpush1.bf16.msra.mxu0 %v9949
  %10187 = vmatprep.subr.bf16.mxu0 0
  %10188 = vmatpush1.bf16.msra.mxu0 %v9950
  %10189 = vmatprep.subr.bf16.mxu0 0
  %10190 = vmatpush1.bf16.msra.mxu0 %v9951
  %10191 = vmatprep.mubr.bf16.mxu0 %v9506
  %10192 = vmatmul.mubr.bf16.gmra.mrb[0].mxu0 %v9505
  %v10193 = vpop.f32.mrb[0].mxu0
  %v10194 = vadd.f32 %v10154, %v10193
  %v10195 = vpop.f32.mrb[0].mxu0
  %v10196 = vpop.f32.mrb[0].mxu0
  %v10197 = vpop.f32.mrb[0].mxu0
  %10198 = vdwg.mxu0
  %10199 = vmatprep.subr.bf16.mxu0 0
  %10200 = vmatpush1.bf16.msra.mxu0 %v9952
  %10201 = vmatprep.subr.bf16.mxu0 0
  %10202 = vmatpush1.bf16.msra.mxu0 %v9953
  %10203 = vmatprep.subr.bf16.mxu0 0
  %10204 = vmatpush1.bf16.msra.mxu0 %v9954
  %10205 = vmatprep.subr.bf16.mxu0 0
  %10206 = vmatpush1.bf16.msra.mxu0 %v9955
  %10207 = vmatprep.subr.bf16.mxu0 0
  %10208 = vmatpush1.bf16.msra.mxu0 %v9956
  %10209 = vmatprep.subr.bf16.mxu0 0
  %10210 = vmatpush1.bf16.msra.mxu0 %v9957
  %10211 = vmatprep.subr.bf16.mxu0 0
  %10212 = vmatpush1.bf16.msra.mxu0 %v9958
  %10213 = vmatprep.subr.bf16.mxu0 0
  %10214 = vmatpush1.bf16.msra.mxu0 %v9959
  %10215 = vmatprep.subr.bf16.mxu0 0
  %10216 = vmatpush1.bf16.msra.mxu0 %v9960
  %10217 = vmatprep.subr.bf16.mxu0 0
  %10218 = vmatpush1.bf16.msra.mxu0 %v9961
  %10219 = vmatprep.subr.bf16.mxu0 0
  %10220 = vmatpush1.bf16.msra.mxu0 %v9962
  %10221 = vmatprep.subr.bf16.mxu0 0
  %10222 = vmatpush1.bf16.msra.mxu0 %v9963
  %10223 = vmatprep.subr.bf16.mxu0 0
  %10224 = vmatpush1.bf16.msra.mxu0 %v9964
  %10225 = vmatprep.subr.bf16.mxu0 0
  %10226 = vmatpush1.bf16.msra.mxu0 %v9965
  %10227 = vmatprep.subr.bf16.mxu0 0
  %10228 = vmatpush1.bf16.msra.mxu0 %v9966
  %10229 = vmatprep.subr.bf16.mxu0 0
  %10230 = vmatpush1.bf16.msra.mxu0 %v9967
  %10231 = vmatprep.mubr.bf16.mxu0 %v9508
  %10232 = vmatmul.mubr.bf16.gmra.mrb[0].mxu0 %v9507
  %v10233 = vpop.f32.mrb[0].mxu0
  %v10234 = vadd.f32 %v10194, %v10233
  %v10235 = vpop.f32.mrb[0].mxu0
  %v10236 = vpop.f32.mrb[0].mxu0
  %v10237 = vpop.f32.mrb[0].mxu0
  %10238 = vdwg.mxu0
  %10239 = vmatprep.subr.bf16.mxu0 0
  %10240 = vmatpush1.bf16.msra.mxu0 %v9968
  %10241 = vmatprep.subr.bf16.mxu0 0
  %10242 = vmatpush1.bf16.msra.mxu0 %v9969
  %10243 = vmatprep.subr.bf16.mxu0 0
  %10244 = vmatpush1.bf16.msra.mxu0 %v9970
  %10245 = vmatprep.subr.bf16.mxu0 0
  %10246 = vmatpush1.bf16.msra.mxu0 %v9971
  %10247 = vmatprep.subr.bf16.mxu0 0
  %10248 = vmatpush1.bf16.msra.mxu0 %v9972
  %10249 = vmatprep.subr.bf16.mxu0 0
  %10250 = vmatpush1.bf16.msra.mxu0 %v9973
  %10251 = vmatprep.subr.bf16.mxu0 0
  %10252 = vmatpush1.bf16.msra.mxu0 %v9974
  %10253 = vmatprep.subr.bf16.mxu0 0
  %10254 = vmatpush1.bf16.msra.mxu0 %v9975
  %10255 = vmatprep.subr.bf16.mxu0 0
  %10256 = vmatpush1.bf16.msra.mxu0 %v9976
  %10257 = vmatprep.subr.bf16.mxu0 0
  %10258 = vmatpush1.bf16.msra.mxu0 %v9977
  %10259 = vmatprep.subr.bf16.mxu0 0
  %10260 = vmatpush1.bf16.msra.mxu0 %v9978
  %10261 = vmatprep.subr.bf16.mxu0 0
  %10262 = vmatpush1.bf16.msra.mxu0 %v9979
  %10263 = vmatprep.subr.bf16.mxu0 0
  %10264 = vmatpush1.bf16.msra.mxu0 %v9980
  %10265 = vmatprep.subr.bf16.mxu0 0
  %10266 = vmatpush1.bf16.msra.mxu0 %v9981
  %10267 = vmatprep.subr.bf16.mxu0 0
  %10268 = vmatpush1.bf16.msra.mxu0 %v9982
  %10269 = vmatprep.subr.bf16.mxu0 0
  %10270 = vmatpush1.bf16.msra.mxu0 %v9983
  %10271 = vmatprep.mubr.bf16.mxu0 %v9510
  %10272 = vmatmul.mubr.bf16.gmra.mrb[0].mxu0 %v9509
  %v10273 = vpop.f32.mrb[0].mxu0
  %v10274 = vadd.f32 %v10234, %v10273
  %v10275 = vpop.f32.mrb[0].mxu0
  %v10276 = vpop.f32.mrb[0].mxu0
  %v10277 = vpop.f32.mrb[0].mxu0
  %10278 = vdwg.mxu0
  %10279 = vmatprep.subr.bf16.mxu0 0
  %10280 = vmatpush1.bf16.msra.mxu0 %v9984
  %10281 = vmatprep.subr.bf16.mxu0 0
  %10282 = vmatpush1.bf16.msra.mxu0 %v9985
  %10283 = vmatprep.subr.bf16.mxu0 0
  %10284 = vmatpush1.bf16.msra.mxu0 %v9986
  %10285 = vmatprep.subr.bf16.mxu0 0
  %10286 = vmatpush1.bf16.msra.mxu0 %v9987
  %10287 = vmatprep.subr.bf16.mxu0 0
  %10288 = vmatpush1.bf16.msra.mxu0 %v9988
  %10289 = vmatprep.subr.bf16.mxu0 0
  %10290 = vmatpush1.bf16.msra.mxu0 %v9989
  %10291 = vmatprep.subr.bf16.mxu0 0
  %10292 = vmatpush1.bf16.msra.mxu0 %v9990
  %10293 = vmatprep.subr.bf16.mxu0 0
  %10294 = vmatpush1.bf16.msra.mxu0 %v9991
  %10295 = vmatprep.subr.bf16.mxu0 0
  %10296 = vmatpush1.bf16.msra.mxu0 %v9992
  %10297 = vmatprep.subr.bf16.mxu0 0
  %10298 = vmatpush1.bf16.msra.mxu0 %v9993
  %10299 = vmatprep.subr.bf16.mxu0 0
  %10300 = vmatpush1.bf16.msra.mxu0 %v9994
  %10301 = vmatprep.subr.bf16.mxu0 0
  %10302 = vmatpush1.bf16.msra.mxu0 %v9995
  %10303 = vmatprep.subr.bf16.mxu0 0
  %10304 = vmatpush1.bf16.msra.mxu0 %v9996
  %10305 = vmatprep.subr.bf16.mxu0 0
  %10306 = vmatpush1.bf16.msra.mxu0 %v9997
  %10307 = vmatprep.subr.bf16.mxu0 0
  %10308 = vmatpush1.bf16.msra.mxu0 %v9998
  %10309 = vmatprep.subr.bf16.mxu0 0
  %10310 = vmatpush1.bf16.msra.mxu0 %v9999
  %10311 = vmatprep.mubr.bf16.mxu0 %v9512
  %10312 = vmatmul.mubr.bf16.gmra.mrb[0].mxu0 %v9511
  %v10313 = vpop.f32.mrb[0].mxu0
  %v10314 = vadd.f32 %v10274, %v10313
  %v10315 = vpop.f32.mrb[0].mxu0
  %v10316 = vpop.f32.mrb[0].mxu0
  %v10317 = vpop.f32.mrb[0].mxu0
  %10318 = vdwg.mxu0
  %10319 = vmatprep.subr.bf16.mxu0 0
  %10320 = vmatpush1.bf16.msra.mxu0 %v10000
  %10321 = vmatprep.subr.bf16.mxu0 0
  %10322 = vmatpush1.bf16.msra.mxu0 %v10001
  %10323 = vmatprep.subr.bf16.mxu0 0
  %10324 = vmatpush1.bf16.msra.mxu0 %v10002
  %10325 = vmatprep.subr.bf16.mxu0 0
  %10326 = vmatpush1.bf16.msra.mxu0 %v10003
  %10327 = vmatprep.subr.bf16.mxu0 0
  %10328 = vmatpush1.bf16.msra.mxu0 %v10004
  %10329 = vmatprep.subr.bf16.mxu0 0
  %10330 = vmatpush1.bf16.msra.mxu0 %v10005
  %10331 = vmatprep.subr.bf16.mxu0 0
  %10332 = vmatpush1.bf16.msra.mxu0 %v10006
  %10333 = vmatprep.subr.bf16.mxu0 0
  %10334 = vmatpush1.bf16.msra.mxu0 %v10007
  %10335 = vmatprep.subr.bf16.mxu0 0
  %10336 = vmatpush1.bf16.msra.mxu0 %v10008
  %10337 = vmatprep.subr.bf16.mxu0 0
  %10338 = vmatpush1.bf16.msra.mxu0 %v10009
  %10339 = vmatprep.subr.bf16.mxu0 0
  %10340 = vmatpush1.bf16.msra.mxu0 %v10010
  %10341 = vmatprep.subr.bf16.mxu0 0
  %10342 = vmatpush1.bf16.msra.mxu0 %v10011
  %10343 = vmatprep.subr.bf16.mxu0 0
  %10344 = vmatpush1.bf16.msra.mxu0 %v10012
  %10345 = vmatprep.subr.bf16.mxu0 0
  %10346 = vmatpush1.bf16.msra.mxu0 %v10013
  %10347 = vmatprep.subr.bf16.mxu0 0
  %10348 = vmatpush1.bf16.msra.mxu0 %v10014
  %10349 = vmatprep.subr.bf16.mxu0 0
  %10350 = vmatpush1.bf16.msra.mxu0 %v10015
  %10351 = vmatprep.mubr.bf16.mxu0 %v9514
  %10352 = vmatmul.mubr.bf16.gmra.mrb[0].mxu0 %v9513
  %v10353 = vpop.f32.mrb[0].mxu0
  %v10354 = vadd.f32 %v10314, %v10353
  %v10355 = vpop.f32.mrb[0].mxu0
  %v10356 = vpop.f32.mrb[0].mxu0
  %v10357 = vpop.f32.mrb[0].mxu0
  %10358 = vdwg.mxu0
  %10359 = vmatprep.subr.bf16.mxu0 0
  %10360 = vmatpush1.bf16.msra.mxu0 %v10016
  %10361 = vmatprep.subr.bf16.mxu0 0
  %10362 = vmatpush1.bf16.msra.mxu0 %v10017
  %10363 = vmatprep.subr.bf16.mxu0 0
  %10364 = vmatpush1.bf16.msra.mxu0 0
  %10365 = vmatprep.subr.bf16.mxu0 0
  %10366 = vmatpush1.bf16.msra.mxu0 0
  %10367 = vmatprep.subr.bf16.mxu0 0
  %10368 = vmatpush1.bf16.msra.mxu0 0
  %10369 = vmatprep.subr.bf16.mxu0 0
  %10370 = vmatpush1.bf16.msra.mxu0 0
  %10371 = vmatprep.subr.bf16.mxu0 0
  %10372 = vmatpush1.bf16.msra.mxu0 0
  %10373 = vmatprep.subr.bf16.mxu0 0
  %10374 = vmatpush1.bf16.msra.mxu0 0
  %10375 = vmatprep.subr.bf16.mxu0 0
  %10376 = vmatpush1.bf16.msra.mxu0 0
  %10377 = vmatprep.subr.bf16.mxu0 0
  %10378 = vmatpush1.bf16.msra.mxu0 0
  %10379 = vmatprep.subr.bf16.mxu0 0
  %10380 = vmatpush1.bf16.msra.mxu0 0
  %10381 = vmatprep.subr.bf16.mxu0 0
  %10382 = vmatpush1.bf16.msra.mxu0 0
  %10383 = vmatprep.subr.bf16.mxu0 0
  %10384 = vmatpush1.bf16.msra.mxu0 0
  %10385 = vmatprep.subr.bf16.mxu0 0
  %10386 = vmatpush1.bf16.msra.mxu0 0
  %10387 = vmatprep.subr.bf16.mxu0 0
  %10388 = vmatpush1.bf16.msra.mxu0 0
  %10389 = vmatprep.subr.bf16.mxu0 0
  %10390 = vmatpush1.bf16.msra.mxu0 0
  %10391 = vmatprep.mubr.bf16.mxu0 0
  %10392 = vmatmul.mubr.bf16.gmra.mrb[0].mxu0 %v10117
  %v10393 = vpop.f32.mrb[0].mxu0
  %v10394 = vadd.f32 %v10354, %v10393
  %v10395 = vpop.f32.mrb[0].mxu0
  %v10396 = vpop.f32.mrb[0].mxu0
  %v10397 = vpop.f32.mrb[0].mxu0
  %10398 = vdwg.mxu0
  %v10399 = vmax.f32 %v10394, 0.0
  %v10400 = vpack.c.bf16 %v10399, %v10399
  %v10401 = vld [vmem:[%s7] sm:$0xf]
  %v10402 = vld [vmem:[%s7 + $0x4] sm:$0xf]
  %v10403 = vld [vmem:[%s7 + $0x8] sm:$0xf]
  %v10404 = vld [vmem:[%s7 + $0xc] sm:$0xf]
  %v10405 = vld [vmem:[%s7 + $0x10] sm:$0xf]
  %v10406 = vld [vmem:[%s7 + $0x14] sm:$0xf]
  %v10407 = vld [vmem:[%s7 + $0x18] sm:$0xf]
  %v10408 = vld [vmem:[%s7 + $0x1c] sm:$0xf]
  %v10409 = vld [vmem:[%s7 + $0x20] sm:$0xf]
  %v10410 = vld [vmem:[%s7 + $0x24] sm:$0xf]
  %v10411 = vld [vmem:[%s7 + $0x28] sm:$0xf]
  %v10412 = vld [vmem:[%s7 + $0x2c] sm:$0xf]
  %v10413 = vld [vmem:[%s7 + $0x30] sm:$0xf]
  %v10414 = vld [vmem:[%s7 + $0x34] sm:$0xf]
  %v10415 = vld [vmem:[%s7 + $0x38] sm:$0xf]
  %v10416 = vld [vmem:[%s7 + $0x3c] sm:$0xf]
  %v10417 = vld [vmem:[%s8] sm:$0x1]
  %v10419 = vlaneseq
  %v10420 = vshrl.u32 %v10419, 7
  %v10421 = vsub.s32 0, %v10420
  %v10422 = vrot.slane %v10417, %v10421
  %v10440 = vunpack.c.l.b16 %v10401
  %v10441 = vunpack.c.l.b16 %v10402
  %v10442 = vunpack.c.l.b16 %v10403
  %v10443 = vunpack.c.l.b16 %v10404
  %v10444 = vunpack.c.l.b16 %v10405
  %v10445 = vunpack.c.l.b16 %v10406
  %v10446 = vunpack.c.l.b16 %v10407
  %v10447 = vunpack.c.l.b16 %v10408
  %v10448 = vunpack.c.l.b16 %v10409
  %v10449 = vunpack.c.l.b16 %v10410
  %v10450 = vunpack.c.l.b16 %v10411
  %v10451 = vunpack.c.l.b16 %v10412
  %v10452 = vunpack.c.l.b16 %v10413
  %v10453 = vunpack.c.l.b16 %v10414
  %v10454 = vunpack.c.l.b16 %v10415
  %v10455 = vunpack.c.l.b16 %v10416
  %v10456 = vpack.c.b16 %v10441, %v10440
  %v10457 = vpack.c.b16 %v10443, %v10442
  %v10458 = vpack.c.b16 %v10445, %v10444
  %v10459 = vpack.c.b16 %v10447, %v10446
  %v10460 = vpack.c.b16 %v10449, %v10448
  %v10461 = vpack.c.b16 %v10451, %v10450
  %v10462 = vpack.c.b16 %v10453, %v10452
  %v10463 = vpack.c.b16 %v10455, %v10454
  %10472 = vmatprep.subr.bf16.mxu0 0
  %10473 = vmatpush1.bf16.msra.mxu0 %v10456
  %10474 = vmatprep.subr.bf16.mxu0 0
  %10475 = vmatpush1.bf16.msra.mxu0 %v10457
  %10476 = vmatprep.subr.bf16.mxu0 0
  %10477 = vmatpush1.bf16.msra.mxu0 %v10458
  %10478 = vmatprep.subr.bf16.mxu0 0
  %10479 = vmatpush1.bf16.msra.mxu0 %v10459
  %10480 = vmatprep.subr.bf16.mxu0 0
  %10481 = vmatpush1.bf16.msra.mxu0 %v10460
  %10482 = vmatprep.subr.bf16.mxu0 0
  %10483 = vmatpush1.bf16.msra.mxu0 %v10461
  %10484 = vmatprep.subr.bf16.mxu0 0
  %10485 = vmatpush1.bf16.msra.mxu0 %v10462
  %10486 = vmatprep.subr.bf16.mxu0 0
  %10487 = vmatpush1.bf16.msra.mxu0 %v10463
  %10488 = vmatprep.subr.bf16.mxu0 0
  %10489 = vmatpush1.bf16.msra.mxu0 0
  %10490 = vmatprep.subr.bf16.mxu0 0
  %10491 = vmatpush1.bf16.msra.mxu0 0
  %10492 = vmatprep.subr.bf16.mxu0 0
  %10493 = vmatpush1.bf16.msra.mxu0 0
  %10494 = vmatprep.subr.bf16.mxu0 0
  %10495 = vmatpush1.bf16.msra.mxu0 0
  %10496 = vmatprep.subr.bf16.mxu0 0
  %10497 = vmatpush1.bf16.msra.mxu0 0
  %10498 = vmatprep.subr.bf16.mxu0 0
  %10499 = vmatpush1.bf16.msra.mxu0 0
  %10500 = vmatprep.subr.bf16.mxu0 0
  %10501 = vmatpush1.bf16.msra.mxu0 0
  %10502 = vmatprep.subr.bf16.mxu0 0
  %10503 = vmatpush1.bf16.msra.mxu0 0
  %10504 = vmatprep.mubr.bf16.mxu0 0
  %10505 = vmatmul.mubr.bf16.gmra.mrb[0].mxu0 %v10400
  %v10506 = vpop.f32.mrb[0].mxu0
  %v10507 = vadd.f32 %v10422, %v10506
  %v10508 = vpop.f32.mrb[0].mxu0
  %v10509 = vpop.f32.mrb[0].mxu0
  %v10510 = vpop.f32.mrb[0].mxu0
  %10511 = vdwg.mxu0
  %v10512 = vmax.f32 %v10507, 0.0
  %vm10513 = vcmask 80896
  %10514 = vst.msk [vmem:[%s9] sm:$0xff] %vm10513, %v10512
  // Predicated region
  $region38: #{cnn_forward.1} parent=0 // pred_check
    _
  $region39: #{cnn_forward.1} parent=0 // pred_check_branch
    %10516 = sbr.rel (0) target = $region41
  $region40: #{cnn_forward.1} parent=0 // pred_region
    _
  $region41: #{cnn_forward.1} parent=0 // pred_fallthru
    _
  // Predicated region
  $region42: #{cnn_forward.1} parent=0 // pred_check
    _
  $region43: #{cnn_forward.1} parent=0 // pred_check_branch
    %10518 = sbr.rel (0) target = $region45
  $region44: #{cnn_forward.1} parent=0 // pred_region
    _
  $region45: #{cnn_forward.1} parent=0 // pred_fallthru
    _

</llo_original>
